<compile_context>
chip_gen: v6e
topology: v6e:2x2x1
jax: 0.10.0
libtpu: 0.0.40
codegen_flags: <defaults>
</compile_context>

<pallas_src>
import functools
import math

import jax
import jax.numpy as jnp
from jax.experimental import pallas as pl
from jax.experimental.pallas import tpu as pltpu


_PARALLEL = pltpu.CompilerParams(dimension_semantics=("parallel",))


def _row_tile(m):
    """Row-tile size: aim for >=2 tiles (v7x dual TensorCore), multiple of 8."""
    t = 256 if m > 256 else -(-m // 2)
    t = max(8, ((t + 7) // 8) * 8)
    return min(t, ((m + 7) // 8) * 8)


# ----------------------------- Pallas kernels ------------------------------


def _linear_kernel(x_ref, w_ref, b_ref, o_ref, *, activation):
    x = x_ref[...].astype(jnp.float32)
    w = w_ref[...].astype(jnp.float32)
    y = jnp.dot(x, w, preferred_element_type=jnp.float32) + b_ref[...].astype(jnp.float32)
    if activation == "relu":
        y = jnp.maximum(y, 0.0)
    o_ref[...] = y.astype(o_ref.dtype)


def _embed_kernel(x_ref, w_ref, b_ref, pos_ref, o_ref):
    # linear patch embedding + bias + learned positional embedding, one batch / step
    x = x_ref[0].astype(jnp.float32)                     # (N, Cin)
    y = jnp.dot(x, w_ref[...].astype(jnp.float32), preferred_element_type=jnp.float32)
    y = y + b_ref[...].astype(jnp.float32) + pos_ref[0].astype(jnp.float32)
    o_ref[0] = y.astype(o_ref.dtype)


def _mha_kernel(q_ref, k_ref, v_ref, o_ref, p_ref, *, scale):
    # one batch element, all heads per grid step
    q = q_ref[0].astype(jnp.float32)                     # (H, Nq, Dh)
    k = k_ref[0].astype(jnp.float32)                     # (H, Nk, Dh)
    v = v_ref[0].astype(jnp.float32)                     # (H, Nk, Dh)
    s = jnp.einsum("hqd,hkd->hqk", q, k, preferred_element_type=jnp.float32) * scale
    m = jnp.max(s, axis=-1, keepdims=True)
    e = jnp.exp(s - m)
    l = jnp.sum(e, axis=-1, keepdims=True)
    p = e * pl.reciprocal(l, approx=True)                # EUP reciprocal, not VALU divide
    o = jnp.einsum("hqk,hkd->hqd", p, v, preferred_element_type=jnp.float32)
    o_ref[0] = o.astype(o_ref.dtype)
    p_ref[0] = p.astype(p_ref.dtype)


def _fusion_norm_kernel(x_ref, sa_ref, ca_ref, wos_ref, bos_ref, woc_ref, boc_ref,
                        w1a_ref, w1b_ref, b1_ref, w2_ref, b2_ref, g_ref, be_ref,
                        o_ref, *, eps):
    # fused: attention output projections + residual adds + FeatureFusion
    #        (fc1 + ReLU + fc2) + LayerNorm(norm1); intermediates never leave VMEM.
    f32 = jnp.float32
    x = x_ref[...].astype(f32)
    sa = jnp.dot(sa_ref[...].astype(f32), wos_ref[...].astype(f32),
                 preferred_element_type=f32) + bos_ref[...].astype(f32)
    ca = jnp.dot(ca_ref[...].astype(f32), woc_ref[...].astype(f32),
                 preferred_element_type=f32) + boc_ref[...].astype(f32)
    nx = x + sa                                          # new_x = x + self_attn(x)
    rx = x + ca                                          # ref_x = x + cross_attn(x, ref)
    # cat([nx, rx]) @ W1 == nx @ W1[:d] + rx @ W1[d:]
    h = (jnp.dot(nx, w1a_ref[...].astype(f32), preferred_element_type=f32)
         + jnp.dot(rx, w1b_ref[...].astype(f32), preferred_element_type=f32)
         + b1_ref[...].astype(f32))
    h = jnp.maximum(h, 0.0)
    y = jnp.dot(h, w2_ref[...].astype(f32), preferred_element_type=f32) + b2_ref[...].astype(f32)
    mu = jnp.mean(y, axis=-1, keepdims=True)
    yc = y - mu
    var = jnp.mean(yc * yc, axis=-1, keepdims=True)
    o = yc * jax.lax.rsqrt(var + eps) * g_ref[...].astype(f32) + be_ref[...].astype(f32)
    o_ref[...] = o.astype(o_ref.dtype)


def _dwconv_gelu_kernel(x_ref, w_ref, b_ref, o_ref, *, H, W):
    # x_ref block: (1, H+2, W+2, C) zero-padded NHWC tile; depthwise 3x3, stride 1.
    x = x_ref[0].astype(jnp.float32)                     # (H+2, W+2, C)
    C = x.shape[-1]
    acc = jnp.zeros((H, W, C), jnp.float32)
    for dy in range(3):
        for dx in range(3):
            acc = acc + x[dy:dy + H, dx:dx + W, :] * w_ref[dy, dx].astype(jnp.float32)
    acc = acc + b_ref[...].astype(jnp.float32)
    # exact GELU (torch nn.GELU default)
    y = 0.5 * acc * (1.0 + jax.lax.erf(acc * (1.0 / math.sqrt(2.0))))
    o_ref[0] = y.astype(o_ref.dtype)


def _ffn_out_norm_kernel(h_ref, med_ref, s_ref, x1_ref, w2_ref, b2_ref, g_ref, be_ref,
                         o_ref, *, eps):
    # fused: median-scaling add + fc2 + residual + LayerNorm(norm2)
    f32 = jnp.float32
    h = h_ref[0].astype(f32)                             # (N, dff)
    h = h + s_ref[...].astype(f32) * med_ref[0].astype(f32)
    y = jnp.dot(h, w2_ref[...].astype(f32), preferred_element_type=f32) + b2_ref[...].astype(f32)
    y = y + x1_ref[0].astype(f32)
    mu = jnp.mean(y, axis=-1, keepdims=True)
    yc = y - mu
    var = jnp.mean(yc * yc, axis=-1, keepdims=True)
    o = yc * jax.lax.rsqrt(var + eps) * g_ref[...].astype(f32) + be_ref[...].astype(f32)
    o_ref[0] = o.astype(o_ref.dtype)


def _norm_linear_kernel(x_ref, g_ref, be_ref, w_ref, b_ref, o_ref, *, eps):
    # fused: encoder LayerNorm + output projection
    f32 = jnp.float32
    x = x_ref[...].astype(f32)
    mu = jnp.mean(x, axis=-1, keepdims=True)
    xc = x - mu
    var = jnp.mean(xc * xc, axis=-1, keepdims=True)
    y = xc * jax.lax.rsqrt(var + eps) * g_ref[...].astype(f32) + be_ref[...].astype(f32)
    o = jnp.dot(y, w_ref[...].astype(f32), preferred_element_type=f32) + b_ref[...].astype(f32)
    o_ref[...] = o.astype(o_ref.dtype)


# ----------------------------- Pallas wrappers -----------------------------


def linear(x, w, b, activation=None):
    shp = x.shape
    K = shp[-1]
    x2 = x.reshape(-1, K)
    M = x2.shape[0]
    N = w.shape[1]
    tm = _row_tile(M)
    out = pl.pallas_call(
        functools.partial(_linear_kernel, activation=activation),
        grid=(pl.cdiv(M, tm),),
        in_specs=[
            pl.BlockSpec((tm, K), lambda i: (i, 0)),
            pl.BlockSpec((K, N), lambda i: (0, 0)),
            pl.BlockSpec((1, N), lambda i: (0, 0)),
        ],
        out_specs=pl.BlockSpec((tm, N), lambda i: (i, 0)),
        out_shape=jax.ShapeDtypeStruct((M, N), x.dtype),
        compiler_params=_PARALLEL,
    )(x2, w, b.reshape(1, N))
    return out.reshape(*shp[:-1], N)


def embedding2d(p, x_nchw):
    B, C, H, W = x_nchw.shape
    N = H * W
    D = p["w"].shape[1]
    tokens = x_nchw.reshape(B, C, N).transpose(0, 2, 1)  # (B, N, C)
    return pl.pallas_call(
        _embed_kernel,
        grid=(B,),
        in_specs=[
            pl.BlockSpec((1, N, C), lambda b: (b, 0, 0)),
            pl.BlockSpec((C, D), lambda b: (0, 0)),
            pl.BlockSpec((1, D), lambda b: (0, 0)),
            pl.BlockSpec((1, N, D), lambda b: (0, 0, 0)),
        ],
        out_specs=pl.BlockSpec((1, N, D), lambda b: (b, 0, 0)),
        out_shape=jax.ShapeDtypeStruct((B, N, D), x_nchw.dtype),
        compiler_params=_PARALLEL,
    )(tokens, p["w"], p["b"].reshape(1, D), p["pos"])


def _split_heads(t, n_heads):
    B, N, D = t.shape
    Dh = D // n_heads
    return t.reshape(B, N, n_heads, Dh).transpose(0, 2, 1, 3)    # (B, H, N, Dh)


def mha(q, k, v, n_heads):
    """q: (B,N,D); k/v: (Bk,N,D), Bk in {1,B}. Returns (ctx (B,N,D), probs (B,H,N,N))."""
    B, Nq, D = q.shape
    Bk, Nk, _ = k.shape
    Dh = D // n_heads
    qh = _split_heads(q, n_heads)
    kh = _split_heads(k, n_heads)
    vh = _split_heads(v, n_heads)
    scale = 1.0 / math.sqrt(Dh)
    kv_idx = (lambda b: (b, 0, 0, 0)) if Bk == B else (lambda b: (0, 0, 0, 0))

    out, probs = pl.pallas_call(
        functools.partial(_mha_kernel, scale=scale),
        grid=(B,),
        in_specs=[
            pl.BlockSpec((1, n_heads, Nq, Dh), lambda b: (b, 0, 0, 0)),
            pl.BlockSpec((1, n_heads, Nk, Dh), kv_idx),
            pl.BlockSpec((1, n_heads, Nk, Dh), kv_idx),
        ],
        out_specs=[
            pl.BlockSpec((1, n_heads, Nq, Dh), lambda b: (b, 0, 0, 0)),
            pl.BlockSpec((1, n_heads, Nq, Nk), lambda b: (b, 0, 0, 0)),
        ],
        out_shape=[
            jax.ShapeDtypeStruct((B, n_heads, Nq, Dh), q.dtype),
            jax.ShapeDtypeStruct((B, n_heads, Nq, Nk), jnp.float32),
        ],
        compiler_params=_PARALLEL,
    )(qh, kh, vh)
    ctx = out.transpose(0, 2, 1, 3).reshape(B, Nq, D)
    return ctx, probs


def fusion_block(x, sa_ctx, ca_ctx, p, eps=1e-5):
    B, N, D = x.shape
    dff = p["fusion_fc1_w"].shape[1]
    M = B * N
    tm = _row_tile(M)
    w1a = p["fusion_fc1_w"][:D]
    w1b = p["fusion_fc1_w"][D:]
    row = lambda i: (i, 0)
    full = lambda i: (0, 0)
    out = pl.pallas_call(
        functools.partial(_fusion_norm_kernel, eps=eps),
        grid=(pl.cdiv(M, tm),),
        in_specs=[
            pl.BlockSpec((tm, D), row),                  # x (residual base)
            pl.BlockSpec((tm, D), row),                  # self-attn context (pre-Wo)
            pl.BlockSpec((tm, D), row),                  # cross-attn context (pre-Wo)
            pl.BlockSpec((D, D), full), pl.BlockSpec((1, D), full),     # Wo_self, bo_self
            pl.BlockSpec((D, D), full), pl.BlockSpec((1, D), full),     # Wo_cross, bo_cross
            pl.BlockSpec((D, dff), full), pl.BlockSpec((D, dff), full),  # W1 halves
            pl.BlockSpec((1, dff), full),
            pl.BlockSpec((dff, D), full), pl.BlockSpec((1, D), full),    # W2, b2
            pl.BlockSpec((1, D), full), pl.BlockSpec((1, D), full),      # norm1 gamma/beta
        ],
        out_specs=pl.BlockSpec((tm, D), row),
        out_shape=jax.ShapeDtypeStruct((M, D), x.dtype),
        compiler_params=_PARALLEL,
    )(
        x.reshape(M, D), sa_ctx.reshape(M, D), ca_ctx.reshape(M, D),
        p["self_attn"]["wo"], p["self_attn"]["bo"].reshape(1, D),
        p["cross_attn"]["wo"], p["cross_attn"]["bo"].reshape(1, D),
        w1a, w1b, p["fusion_fc1_b"].reshape(1, dff),
        p["fusion_fc2_w"], p["fusion_fc2_b"].reshape(1, D),
        p["norm1_g"].reshape(1, D), p["norm1_b"].reshape(1, D),
    )
    return out.reshape(B, N, D)


def dwconv_gelu(x_tokens, w, b, H, W):
    """DWConv(dim, 3x3, groups=dim, pad=1) followed by exact GELU; tokens (B,N,C)."""
    B, N, C = x_tokens.shape
    x = x_tokens.reshape(B, H, W, C)                     # NHWC
    xp = jnp.pad(x, ((0, 0), (1, 1), (1, 1), (0, 0)))
    out = pl.pallas_call(
        functools.partial(_dwconv_gelu_kernel, H=H, W=W),
        grid=(B,),
        in_specs=[
            pl.BlockSpec((1, H + 2, W + 2, C), lambda i: (i, 0, 0, 0)),
            pl.BlockSpec((3, 3, 1, C), lambda i: (0, 0, 0, 0)),
            pl.BlockSpec((1, 1, C), lambda i: (0, 0, 0)),
        ],
        out_specs=pl.BlockSpec((1, H, W, C), lambda i: (i, 0, 0, 0)),
        out_shape=jax.ShapeDtypeStruct((B, H, W, C), x_tokens.dtype),
        compiler_params=_PARALLEL,
    )(xp, w, b.reshape(1, 1, C))
    return out.reshape(B, N, C)


def ffn_out_norm(h, med, x1, p_ffn, g, be, eps=1e-5):
    B, N, dff = h.shape
    D = x1.shape[-1]
    full = lambda b: (0, 0)
    return pl.pallas_call(
        functools.partial(_ffn_out_norm_kernel, eps=eps),
        grid=(B,),
        in_specs=[
            pl.BlockSpec((1, N, dff), lambda b: (b, 0, 0)),
            pl.BlockSpec((1, 1, dff), lambda b: (b, 0, 0)),
            pl.BlockSpec((1, dff), full),
            pl.BlockSpec((1, N, D), lambda b: (b, 0, 0)),
            pl.BlockSpec((dff, D), full),
            pl.BlockSpec((1, D), full),
            pl.BlockSpec((1, D), full),
            pl.BlockSpec((1, D), full),
        ],
        out_specs=pl.BlockSpec((1, N, D), lambda b: (b, 0, 0)),
        out_shape=jax.ShapeDtypeStruct((B, N, D), x1.dtype),
        compiler_params=_PARALLEL,
    )(h, med, p_ffn["scaling"].reshape(1, dff), x1, p_ffn["fc2_w"],
      p_ffn["fc2_b"].reshape(1, D), g.reshape(1, D), be.reshape(1, D))


def norm_linear(x, g, be, w, b, eps=1e-5):
    shp = x.shape
    D = shp[-1]
    x2 = x.reshape(-1, D)
    M = x2.shape[0]
    No = w.shape[1]
    tm = _row_tile(M)
    row = lambda i: (i, 0)
    full = lambda i: (0, 0)
    out = pl.pallas_call(
        functools.partial(_norm_linear_kernel, eps=eps),
        grid=(pl.cdiv(M, tm),),
        in_specs=[
            pl.BlockSpec((tm, D), row),
            pl.BlockSpec((1, D), full),
            pl.BlockSpec((1, D), full),
            pl.BlockSpec((D, No), full),
            pl.BlockSpec((1, No), full),
        ],
        out_specs=pl.BlockSpec((tm, No), row),
        out_shape=jax.ShapeDtypeStruct((M, No), x.dtype),
        compiler_params=_PARALLEL,
    )(x2, g.reshape(1, D), be.reshape(1, D), w, b.reshape(1, No))
    return out.reshape(*shp[:-1], No)


# ----------------------------- model (glue) --------------------------------


def encoder_layer(p, x, ref_emb, n_heads, H, W):
    # with_intra=True, with_inter=True path; dropout = 0.0 (identity).
    B, N, D = x.shape
    sa_p, ca_p = p["self_attn"], p["cross_attn"]

    # one fused matmul for self q/k/v and cross q (all act on x)
    w_qkvq = jnp.concatenate([sa_p["wq"], sa_p["wk"], sa_p["wv"], ca_p["wq"]], axis=1)
    b_qkvq = jnp.concatenate([sa_p["bq"], sa_p["bk"], sa_p["bv"], ca_p["bq"]], axis=0)
    proj = linear(x, w_qkvq, b_qkvq)                     # (B, N, 4D)
    q_s = proj[..., 0 * D:1 * D]
    k_s = proj[..., 1 * D:2 * D]
    v_s = proj[..., 2 * D:3 * D]
    q_c = proj[..., 3 * D:4 * D]

    # cross k/v projected once on the un-tiled (batch-1) reference embedding
    w_kv = jnp.concatenate([ca_p["wk"], ca_p["wv"]], axis=1)
    b_kv = jnp.concatenate([ca_p["bk"], ca_p["bv"]], axis=0)
    kv = linear(ref_emb, w_kv, b_kv)                     # (1, N, 2D)
    k_c, v_c = kv[..., :D], kv[..., D:]

    self_ctx, intra_corr = mha(q_s, k_s, v_s, n_heads)
    cross_ctx, inter_corr = mha(q_c, k_c, v_c, n_heads)

    # output projections + residuals + FeatureFusion + norm1, all fused
    x1 = fusion_block(x, self_ctx, cross_ctx, p)

    # FFN: fc1 -> dwconv+GELU -> median scaling -> fc2 (+residual+norm2 fused)
    ffn = p["ffn"]
    h = linear(x1, ffn["fc1_w"], ffn["fc1_b"])
    h = dwconv_gelu(h, ffn["dw_w"], ffn["dw_b"], H, W)
    mid = (N - 1) // 2
    med = jnp.sort(h, axis=1)[:, mid:mid + 1, :]         # torch.median = lower median
    out = ffn_out_norm(h, med, x1, ffn, p["norm2_g"], p["norm2_b"])
    return out, intra_corr, None, inter_corr, None


def ed_forward(params, x, ref_feats, cfg):
    H = W = cfg["h"]
    emb = embedding2d(params["embedding"], x)

    # reference features are identical across the batch -> embed ONCE (batch 1)
    ref = ref_feats.T.reshape(1, cfg["in_channels"], H, W)
    ref_emb = embedding2d(params["ref_embedding"], ref)  # (1, N, d)

    intra_corrs, intra_targets, inter_corrs, inter_targets = [], [], [], []
    e = emb
    for lp in params["layers"]:
        e, ic, it, xc, xt = encoder_layer(lp, e, ref_emb, cfg["n_heads"], H, W)
        intra_corrs.append(ic)
        intra_targets.append(it)
        inter_corrs.append(xc)
        inter_targets.append(xt)

    # encoder norm + projection fused in one kernel
    x_out = norm_linear(e, params["enc_norm_g"], params["enc_norm_b"],
                        params["proj_w"], params["proj_b"])
    return x_out, intra_corrs, intra_targets, inter_corrs, inter_targets


# ----------------------------- params --------------------------------------


def init_params(key, cfg):
    d, dff = cfg["d_model"], cfg["d_ff"]
    cin, cout = cfg["in_channels"], cfg["out_channels"]
    N, L = cfg["seq_len"], cfg["n_layers"]
    kit = iter(jax.random.split(key, 16 + 32 * L))

    def lin(fi, fo):
        w = jax.random.normal(next(kit), (fi, fo), jnp.float32) * (1.0 / math.sqrt(fi))
        return w, jnp.zeros((fo,), jnp.float32)

    def attn_params():
        p = {}
        for nm in ("q", "k", "v", "o"):
            w, b = lin(d, d)
            p["w" + nm], p["b" + nm] = w, b
        return p

    params = {}
    ew, eb = lin(cin, d)
    params["embedding"] = dict(
        w=ew, b=eb, pos=0.02 * jax.random.normal(next(kit), (1, N, d), jnp.float32))
    rw, rb = lin(cin, d)
    params["ref_embedding"] = dict(
        w=rw, b=rb, pos=0.02 * jax.random.normal(next(kit), (1, N, d), jnp.float32))

    layers = []
    for _ in range(L):
        lp = {"self_attn": attn_params(), "cross_attn": attn_params()}
        f1w, f1b = lin(2 * d, dff)
        f2w, f2b = lin(dff, d)
        lp.update(fusion_fc1_w=f1w, fusion_fc1_b=f1b, fusion_fc2_w=f2w, fusion_fc2_b=f2b)
        lp["norm1_g"], lp["norm1_b"] = jnp.ones((d,), jnp.float32), jnp.zeros((d,), jnp.float32)
        lp["norm2_g"], lp["norm2_b"] = jnp.ones((d,), jnp.float32), jnp.zeros((d,), jnp.float32)
        c1w, c1b = lin(d, dff)
        c2w, c2b = lin(dff, d)
        dw = jax.random.normal(next(kit), (3, 3, 1, dff), jnp.float32) * (1.0 / 3.0)
        lp["ffn"] = dict(
            fc1_w=c1w, fc1_b=c1b, fc2_w=c2w, fc2_b=c2b,
            dw_w=dw, dw_b=jnp.zeros((dff,), jnp.float32),
            scaling=jnp.ones((dff,), jnp.float32))
        layers.append(lp)
    params["layers"] = layers

    params["enc_norm_g"] = jnp.ones((d,), jnp.float32)
    params["enc_norm_b"] = jnp.zeros((d,), jnp.float32)
    pw, pb = lin(d, cout)
    params["proj_w"], params["proj_b"] = pw, pb
    return params


# ----------------------------- main -----------------------------------------


if __name__ == "__main__":
    cfg = dict(seq_len=64, in_channels=4, out_channels=4,
               d_model=32, n_heads=4, n_layers=2, d_ff=128, h=8)

    key = jax.random.PRNGKey(0)
    pkey, xkey, rkey = jax.random.split(key, 3)
    params = init_params(pkey, cfg)

    B = 2
    x = jax.random.normal(xkey, (B, cfg["in_channels"], cfg["h"], cfg["h"]), jnp.float32)
    # deterministic stand-in for the pickled reference features: (seq_len, in_channels)
    ref_feats = jax.random.normal(rkey, (cfg["seq_len"], cfg["in_channels"]), jnp.float32)

    fwd = jax.jit(functools.partial(ed_forward, cfg=cfg))
    x_out, intra_corrs, intra_tgts, inter_corrs, inter_tgts = fwd(params, x, ref_feats)

    jax.block_until_ready(x_out)
    jax.block_until_ready(intra_corrs)
    jax.block_until_ready(inter_corrs)

    assert x_out.shape == (B, cfg["seq_len"], cfg["out_channels"])
    assert len(intra_corrs) == cfg["n_layers"] and len(inter_corrs) == cfg["n_layers"]
    assert intra_corrs[0].shape == (B, cfg["n_heads"], cfg["seq_len"], cfg["seq_len"])
    print("KERNEL_OK")
</pallas_src>

<mosaic_0001>
module attributes {stable_mosaic.version = 11 : i64} {
  func.func @_embed_kernel(%arg0: i32, %arg1: memref<1x64x4xf32, #tpu.memory_space<vmem>>, %arg2: memref<4x32xf32, #tpu.memory_space<vmem>>, %arg3: memref<1x32xf32, #tpu.memory_space<vmem>>, %arg4: memref<1x64x32xf32, #tpu.memory_space<vmem>>, %arg5: memref<1x64x32xf32, #tpu.memory_space<vmem>>) attributes {dimension_semantics = [#tpu.dimension_semantics<parallel>], iteration_bounds = array<i64: 2>, scalar_prefetch = 0 : i64, scratch_operands = 0 : i64, tpu.core_type = #tpu.core_type<tc>, window_params = [{transform_indices = @transform_0, window_bounds = array<i64: 1, 64, 4>}, {pipeline_mode = #tpu.pipeline_mode<synchronous>, transform_indices = @transform_1, window_bounds = array<i64: 4, 32>}, {pipeline_mode = #tpu.pipeline_mode<synchronous>, transform_indices = @transform_2, window_bounds = array<i64: 1, 32>}, {pipeline_mode = #tpu.pipeline_mode<synchronous>, transform_indices = @transform_3, window_bounds = array<i64: 1, 64, 32>}, {transform_indices = @transform_4, window_bounds = array<i64: 1, 64, 32>}]} {
    %c0 = arith.constant 0 : index
    %c0_0 = arith.constant 0 : index
    %c0_1 = arith.constant 0 : index
    %0 = vector.load %arg1[%c0, %c0_0, %c0_1] : memref<1x64x4xf32, #tpu.memory_space<vmem>>, vector<1x64x4xf32>
    %1 = vector.shape_cast %0 : vector<1x64x4xf32> to vector<64x4xf32>
    %c0_2 = arith.constant 0 : index
    %c0_3 = arith.constant 0 : index
    %2 = vector.load %arg2[%c0_2, %c0_3] : memref<4x32xf32, #tpu.memory_space<vmem>>, vector<4x32xf32>
    %cst = arith.constant dense<0.000000e+00> : vector<64x32xf32>
    %3 = tpu.matmul %1, %2, %cst {dimension_numbers = #tpu.dot_dimension_numbers<[1], [0], [0], [1], [0, 0, 1, 1], [], []>} : vector<64x4xf32>, vector<4x32xf32>, vector<64x32xf32> -> vector<64x32xf32>
    %c0_4 = arith.constant 0 : index
    %c0_5 = arith.constant 0 : index
    %4 = vector.load %arg3[%c0_4, %c0_5] : memref<1x32xf32, #tpu.memory_space<vmem>>, vector<1x32xf32>
    %5 = vector.broadcast %4 : vector<1x32xf32> to vector<64x32xf32>
    %6 = arith.addf %3, %5 : vector<64x32xf32>
    %c0_6 = arith.constant 0 : index
    %c0_7 = arith.constant 0 : index
    %c0_8 = arith.constant 0 : index
    %7 = vector.load %arg4[%c0_6, %c0_7, %c0_8] : memref<1x64x32xf32, #tpu.memory_space<vmem>>, vector<1x64x32xf32>
    %8 = vector.shape_cast %7 : vector<1x64x32xf32> to vector<64x32xf32>
    %9 = arith.addf %6, %8 : vector<64x32xf32>
    %c0_9 = arith.constant 0 : index
    %c0_10 = arith.constant 0 : index
    %c0_11 = arith.constant 0 : index
    %10 = vector.load %arg5[%c0_9, %c0_10, %c0_11] : memref<1x64x32xf32, #tpu.memory_space<vmem>>, vector<1x64x32xf32>
    %11 = vector.shape_cast %10 : vector<1x64x32xf32> to vector<64x32xf32>
    %12 = vector.shape_cast %9 : vector<64x32xf32> to vector<1x64x32xf32>
    tpu.vector_store %arg5[%c0_9, %c0_10, %c0_11], %12 {strides = array<i32>} : memref<1x64x32xf32, #tpu.memory_space<vmem>>, vector<1x64x32xf32>,
    return
  }
  func.func @transform_0(%arg0: i32) -> (i32, i32, i32) {
    %c0_i32 = arith.constant 0 : i32
    %c0_i32_0 = arith.constant 0 : i32
    %c0_i32_1 = arith.constant 0 : i32
    return %arg0, %c0_i32, %c0_i32_0 : i32, i32, i32
  }
  func.func @transform_1(%arg0: i32) -> (i32, i32) {
    %c0_i32 = arith.constant 0 : i32
    %c0_i32_0 = arith.constant 0 : i32
    %c0_i32_1 = arith.constant 0 : i32
    return %c0_i32, %c0_i32_0 : i32, i32
  }
  func.func @transform_2(%arg0: i32) -> (i32, i32) {
    %c0_i32 = arith.constant 0 : i32
    %c0_i32_0 = arith.constant 0 : i32
    %c0_i32_1 = arith.constant 0 : i32
    return %c0_i32, %c0_i32_0 : i32, i32
  }
  func.func @transform_3(%arg0: i32) -> (i32, i32, i32) {
    %c0_i32 = arith.constant 0 : i32
    %c0_i32_0 = arith.constant 0 : i32
    %c0_i32_1 = arith.constant 0 : i32
    %c0_i32_2 = arith.constant 0 : i32
    return %c0_i32, %c0_i32_0, %c0_i32_1 : i32, i32, i32
  }
  func.func @transform_4(%arg0: i32) -> (i32, i32, i32) {
    %c0_i32 = arith.constant 0 : i32
    %c0_i32_0 = arith.constant 0 : i32
    %c0_i32_1 = arith.constant 0 : i32
    return %arg0, %c0_i32, %c0_i32_0 : i32, i32, i32
  }
}

module attributes {stable_mosaic.version = 11 : i64} {
  func.func @_linear_kernel(%arg0: i32, %arg1: memref<64x32xf32, #tpu.memory_space<vmem>>, %arg2: memref<32x128xf32, #tpu.memory_space<vmem>>, %arg3: memref<1x128xf32, #tpu.memory_space<vmem>>, %arg4: memref<64x128xf32, #tpu.memory_space<vmem>>) attributes {dimension_semantics = [#tpu.dimension_semantics<parallel>], iteration_bounds = array<i64: 2>, scalar_prefetch = 0 : i64, scratch_operands = 0 : i64, tpu.core_type = #tpu.core_type<tc>, window_params = [{transform_indices = @transform_0, window_bounds = array<i64: 64, 32>}, {pipeline_mode = #tpu.pipeline_mode<synchronous>, transform_indices = @transform_1, window_bounds = array<i64: 32, 128>}, {pipeline_mode = #tpu.pipeline_mode<synchronous>, transform_indices = @transform_2, window_bounds = array<i64: 1, 128>}, {transform_indices = @transform_3, window_bounds = array<i64: 64, 128>}]} {
    %c0 = arith.constant 0 : index
    %c0_0 = arith.constant 0 : index
    %0 = vector.load %arg1[%c0, %c0_0] : memref<64x32xf32, #tpu.memory_space<vmem>>, vector<64x32xf32>
    %c0_1 = arith.constant 0 : index
    %c0_2 = arith.constant 0 : index
    %1 = vector.load %arg2[%c0_1, %c0_2] : memref<32x128xf32, #tpu.memory_space<vmem>>, vector<32x128xf32>
    %cst = arith.constant dense<0.000000e+00> : vector<64x128xf32>
    %2 = tpu.matmul %0, %1, %cst {dimension_numbers = #tpu.dot_dimension_numbers<[1], [0], [0], [1], [0, 0, 1, 1], [], []>} : vector<64x32xf32>, vector<32x128xf32>, vector<64x128xf32> -> vector<64x128xf32>
    %c0_3 = arith.constant 0 : index
    %c0_4 = arith.constant 0 : index
    %3 = vector.load %arg3[%c0_3, %c0_4] : memref<1x128xf32, #tpu.memory_space<vmem>>, vector<1x128xf32>
    %4 = vector.broadcast %3 : vector<1x128xf32> to vector<64x128xf32>
    %5 = arith.addf %2, %4 : vector<64x128xf32>
    %c0_5 = arith.constant 0 : index
    %c0_6 = arith.constant 0 : index
    %6 = vector.load %arg4[%c0_5, %c0_6] : memref<64x128xf32, #tpu.memory_space<vmem>>, vector<64x128xf32>
    tpu.vector_store %arg4[%c0_5, %c0_6], %5 {strides = array<i32>} : memref<64x128xf32, #tpu.memory_space<vmem>>, vector<64x128xf32>,
    return
  }
  func.func @transform_0(%arg0: i32) -> (i32, i32) {
    %c0_i32 = arith.constant 0 : i32
    %c0_i32_0 = arith.constant 0 : i32
    return %arg0, %c0_i32 : i32, i32
  }
  func.func @transform_1(%arg0: i32) -> (i32, i32) {
    %c0_i32 = arith.constant 0 : i32
    %c0_i32_0 = arith.constant 0 : i32
    %c0_i32_1 = arith.constant 0 : i32
    return %c0_i32, %c0_i32_0 : i32, i32
  }
  func.func @transform_2(%arg0: i32) -> (i32, i32) {
    %c0_i32 = arith.constant 0 : i32
    %c0_i32_0 = arith.constant 0 : i32
    %c0_i32_1 = arith.constant 0 : i32
    return %c0_i32, %c0_i32_0 : i32, i32
  }
  func.func @transform_3(%arg0: i32) -> (i32, i32) {
    %c0_i32 = arith.constant 0 : i32
    %c0_i32_0 = arith.constant 0 : i32
    return %arg0, %c0_i32 : i32, i32
  }
}

module attributes {stable_mosaic.version = 11 : i64} {
  func.func @_mha_kernel(%arg0: i32, %arg1: memref<1x4x64x8xf32, #tpu.memory_space<vmem>>, %arg2: memref<1x4x64x8xf32, #tpu.memory_space<vmem>>, %arg3: memref<1x4x64x8xf32, #tpu.memory_space<vmem>>, %arg4: memref<1x4x64x8xf32, #tpu.memory_space<vmem>>, %arg5: memref<1x4x64x64xf32, #tpu.memory_space<vmem>>) attributes {dimension_semantics = [#tpu.dimension_semantics<parallel>], iteration_bounds = array<i64: 2>, scalar_prefetch = 0 : i64, scratch_operands = 0 : i64, tpu.core_type = #tpu.core_type<tc>, window_params = [{transform_indices = @transform_0, window_bounds = array<i64: 1, 4, 64, 8>}, {transform_indices = @transform_1, window_bounds = array<i64: 1, 4, 64, 8>}, {transform_indices = @transform_2, window_bounds = array<i64: 1, 4, 64, 8>}, {transform_indices = @transform_3, window_bounds = array<i64: 1, 4, 64, 8>}, {transform_indices = @transform_4, window_bounds = array<i64: 1, 4, 64, 64>}]} {
    %c0 = arith.constant 0 : index
    %c0_0 = arith.constant 0 : index
    %c0_1 = arith.constant 0 : index
    %c0_2 = arith.constant 0 : index
    %0 = vector.load %arg1[%c0, %c0_0, %c0_1, %c0_2] : memref<1x4x64x8xf32, #tpu.memory_space<vmem>>, vector<1x4x64x8xf32>
    %1 = vector.shape_cast %0 : vector<1x4x64x8xf32> to vector<4x64x8xf32>
    %c0_3 = arith.constant 0 : index
    %c0_4 = arith.constant 0 : index
    %c0_5 = arith.constant 0 : index
    %c0_6 = arith.constant 0 : index
    %2 = vector.load %arg2[%c0_3, %c0_4, %c0_5, %c0_6] : memref<1x4x64x8xf32, #tpu.memory_space<vmem>>, vector<1x4x64x8xf32>
    %3 = vector.shape_cast %2 : vector<1x4x64x8xf32> to vector<4x64x8xf32>
    %c0_7 = arith.constant 0 : index
    %c0_8 = arith.constant 0 : index
    %c0_9 = arith.constant 0 : index
    %c0_10 = arith.constant 0 : index
    %4 = vector.load %arg3[%c0_7, %c0_8, %c0_9, %c0_10] : memref<1x4x64x8xf32, #tpu.memory_space<vmem>>, vector<1x4x64x8xf32>
    %5 = vector.shape_cast %4 : vector<1x4x64x8xf32> to vector<4x64x8xf32>
    "tpu.trace_start"() <{level = 10 : i32, message = "hqd,hkd->hqk"}> : () -> ()
    %cst = arith.constant dense<0.000000e+00> : vector<4x64x64xf32>
    %6 = tpu.matmul %1, %3, %cst {dimension_numbers = #tpu.dot_dimension_numbers<[2], [2], [1], [1], [0, 0, 0, 1, 1, 1], [0], [0]>} : vector<4x64x8xf32>, vector<4x64x8xf32>, vector<4x64x64xf32> -> vector<4x64x64xf32>
    "tpu.trace_stop"() : () -> ()
    %cst_11 = arith.constant 0.353553385 : f32
    %7 = vector.broadcast %cst_11 : f32 to vector<4x64x64xf32>
    %8 = arith.mulf %6, %7 : vector<4x64x64xf32>
    %cst_12 = arith.constant dense<0xFF800000> : vector<4x64xf32>
    %9 = vector.multi_reduction <maximumf>, %8, %cst_12 [2] : vector<4x64x64xf32> to vector<4x64xf32>
    %10 = vector.shape_cast %9 : vector<4x64xf32> to vector<4x64x1xf32>
    %11 = vector.broadcast %10 : vector<4x64x1xf32> to vector<4x64x64xf32>
    %12 = arith.subf %8, %11 : vector<4x64x64xf32>
    %13 = math.exp %12 : vector<4x64x64xf32>
    %cst_13 = arith.constant dense<0.000000e+00> : vector<4x64xf32>
    %14 = vector.multi_reduction <add>, %13, %cst_13 [2] : vector<4x64x64xf32> to vector<4x64xf32>
    %15 = vector.shape_cast %14 : vector<4x64xf32> to vector<4x64x1xf32>
    %16 = tpu.reciprocal %15 {approx = true} : vector<4x64x1xf32> -> vector<4x64x1xf32>
    %17 = vector.broadcast %16 : vector<4x64x1xf32> to vector<4x64x64xf32>
    %18 = arith.mulf %13, %17 : vector<4x64x64xf32>
    "tpu.trace_start"() <{level = 10 : i32, message = "hqk,hkd->hqd"}> : () -> ()
    %cst_14 = arith.constant dense<0.000000e+00> : vector<4x64x8xf32>
    %19 = tpu.matmul %18, %5, %cst_14 {dimension_numbers = #tpu.dot_dimension_numbers<[2], [1], [1], [2], [0, 0, 0, 1, 1, 2], [0], [0]>} : vector<4x64x64xf32>, vector<4x64x8xf32>, vector<4x64x8xf32> -> vector<4x64x8xf32>
    "tpu.trace_stop"() : () -> ()
    %c0_15 = arith.constant 0 : index
    %c0_16 = arith.constant 0 : index
    %c0_17 = arith.constant 0 : index
    %c0_18 = arith.constant 0 : index
    %20 = vector.load %arg4[%c0_15, %c0_16, %c0_17, %c0_18] : memref<1x4x64x8xf32, #tpu.memory_space<vmem>>, vector<1x4x64x8xf32>
    %21 = vector.shape_cast %20 : vector<1x4x64x8xf32> to vector<4x64x8xf32>
    %22 = vector.shape_cast %19 : vector<4x64x8xf32> to vector<1x4x64x8xf32>
    tpu.vector_store %arg4[%c0_15, %c0_16, %c0_17, %c0_18], %22 {strides = array<i32>} : memref<1x4x64x8xf32, #tpu.memory_space<vmem>>, vector<1x4x64x8xf32>,
    %c0_19 = arith.constant 0 : index
    %c0_20 = arith.constant 0 : index
    %c0_21 = arith.constant 0 : index
    %c0_22 = arith.constant 0 : index
    %23 = vector.load %arg5[%c0_19, %c0_20, %c0_21, %c0_22] : memref<1x4x64x64xf32, #tpu.memory_space<vmem>>, vector<1x4x64x64xf32>
    %24 = vector.shape_cast %23 : vector<1x4x64x64xf32> to vector<4x64x64xf32>
    %25 = vector.shape_cast %18 : vector<4x64x64xf32> to vector<1x4x64x64xf32>
    tpu.vector_store %arg5[%c0_19, %c0_20, %c0_21, %c0_22], %25 {strides = array<i32>} : memref<1x4x64x64xf32, #tpu.memory_space<vmem>>, vector<1x4x64x64xf32>,
    return
  }
  func.func @transform_0(%arg0: i32) -> (i32, i32, i32, i32) {
    %c0_i32 = arith.constant 0 : i32
    %c0_i32_0 = arith.constant 0 : i32
    %c0_i32_1 = arith.constant 0 : i32
    %c0_i32_2 = arith.constant 0 : i32
    return %arg0, %c0_i32, %c0_i32_0, %c0_i32_1 : i32, i32, i32, i32
  }
  func.func @transform_1(%arg0: i32) -> (i32, i32, i32, i32) {
    %c0_i32 = arith.constant 0 : i32
    %c0_i32_0 = arith.constant 0 : i32
    %c0_i32_1 = arith.constant 0 : i32
    %c0_i32_2 = arith.constant 0 : i32
    return %arg0, %c0_i32, %c0_i32_0, %c0_i32_1 : i32, i32, i32, i32
  }
  func.func @transform_2(%arg0: i32) -> (i32, i32, i32, i32) {
    %c0_i32 = arith.constant 0 : i32
    %c0_i32_0 = arith.constant 0 : i32
    %c0_i32_1 = arith.constant 0 : i32
    %c0_i32_2 = arith.constant 0 : i32
    return %arg0, %c0_i32, %c0_i32_0, %c0_i32_1 : i32, i32, i32, i32
  }
  func.func @transform_3(%arg0: i32) -> (i32, i32, i32, i32) {
    %c0_i32 = arith.constant 0 : i32
    %c0_i32_0 = arith.constant 0 : i32
    %c0_i32_1 = arith.constant 0 : i32
    %c0_i32_2 = arith.constant 0 : i32
    return %arg0, %c0_i32, %c0_i32_0, %c0_i32_1 : i32, i32, i32, i32
  }
  func.func @transform_4(%arg0: i32) -> (i32, i32, i32, i32) {
    %c0_i32 = arith.constant 0 : i32
    %c0_i32_0 = arith.constant 0 : i32
    %c0_i32_1 = arith.constant 0 : i32
    %c0_i32_2 = arith.constant 0 : i32
    return %arg0, %c0_i32, %c0_i32_0, %c0_i32_1 : i32, i32, i32, i32
  }
}

module attributes {stable_mosaic.version = 11 : i64} {
  func.func @_embed_kernel(%arg0: i32, %arg1: memref<1x64x4xf32, #tpu.memory_space<vmem>>, %arg2: memref<4x32xf32, #tpu.memory_space<vmem>>, %arg3: memref<1x32xf32, #tpu.memory_space<vmem>>, %arg4: memref<1x64x32xf32, #tpu.memory_space<vmem>>, %arg5: memref<1x64x32xf32, #tpu.memory_space<vmem>>) attributes {dimension_semantics = [#tpu.dimension_semantics<parallel>], iteration_bounds = array<i64: 1>, scalar_prefetch = 0 : i64, scratch_operands = 0 : i64, tpu.core_type = #tpu.core_type<tc>, window_params = [{transform_indices = @transform_0, window_bounds = array<i64: 1, 64, 4>}, {pipeline_mode = #tpu.pipeline_mode<synchronous>, transform_indices = @transform_1, window_bounds = array<i64: 4, 32>}, {pipeline_mode = #tpu.pipeline_mode<synchronous>, transform_indices = @transform_2, window_bounds = array<i64: 1, 32>}, {pipeline_mode = #tpu.pipeline_mode<synchronous>, transform_indices = @transform_3, window_bounds = array<i64: 1, 64, 32>}, {transform_indices = @transform_4, window_bounds = array<i64: 1, 64, 32>}]} {
    %c0 = arith.constant 0 : index
    %c0_0 = arith.constant 0 : index
    %c0_1 = arith.constant 0 : index
    %0 = vector.load %arg1[%c0, %c0_0, %c0_1] : memref<1x64x4xf32, #tpu.memory_space<vmem>>, vector<1x64x4xf32>
    %1 = vector.shape_cast %0 : vector<1x64x4xf32> to vector<64x4xf32>
    %c0_2 = arith.constant 0 : index
    %c0_3 = arith.constant 0 : index
    %2 = vector.load %arg2[%c0_2, %c0_3] : memref<4x32xf32, #tpu.memory_space<vmem>>, vector<4x32xf32>
    %cst = arith.constant dense<0.000000e+00> : vector<64x32xf32>
    %3 = tpu.matmul %1, %2, %cst {dimension_numbers = #tpu.dot_dimension_numbers<[1], [0], [0], [1], [0, 0, 1, 1], [], []>} : vector<64x4xf32>, vector<4x32xf32>, vector<64x32xf32> -> vector<64x32xf32>
    %c0_4 = arith.constant 0 : index
    %c0_5 = arith.constant 0 : index
    %4 = vector.load %arg3[%c0_4, %c0_5] : memref<1x32xf32, #tpu.memory_space<vmem>>, vector<1x32xf32>
    %5 = vector.broadcast %4 : vector<1x32xf32> to vector<64x32xf32>
    %6 = arith.addf %3, %5 : vector<64x32xf32>
    %c0_6 = arith.constant 0 : index
    %c0_7 = arith.constant 0 : index
    %c0_8 = arith.constant 0 : index
    %7 = vector.load %arg4[%c0_6, %c0_7, %c0_8] : memref<1x64x32xf32, #tpu.memory_space<vmem>>, vector<1x64x32xf32>
    %8 = vector.shape_cast %7 : vector<1x64x32xf32> to vector<64x32xf32>
    %9 = arith.addf %6, %8 : vector<64x32xf32>
    %c0_9 = arith.constant 0 : index
    %c0_10 = arith.constant 0 : index
    %c0_11 = arith.constant 0 : index
    %10 = vector.load %arg5[%c0_9, %c0_10, %c0_11] : memref<1x64x32xf32, #tpu.memory_space<vmem>>, vector<1x64x32xf32>
    %11 = vector.shape_cast %10 : vector<1x64x32xf32> to vector<64x32xf32>
    %12 = vector.shape_cast %9 : vector<64x32xf32> to vector<1x64x32xf32>
    tpu.vector_store %arg5[%c0_9, %c0_10, %c0_11], %12 {strides = array<i32>} : memref<1x64x32xf32, #tpu.memory_space<vmem>>, vector<1x64x32xf32>,
    return
  }
  func.func @transform_0(%arg0: i32) -> (i32, i32, i32) {
    %c0_i32 = arith.constant 0 : i32
    %c0_i32_0 = arith.constant 0 : i32
    %c0_i32_1 = arith.constant 0 : i32
    return %arg0, %c0_i32, %c0_i32_0 : i32, i32, i32
  }
  func.func @transform_1(%arg0: i32) -> (i32, i32) {
    %c0_i32 = arith.constant 0 : i32
    %c0_i32_0 = arith.constant 0 : i32
    %c0_i32_1 = arith.constant 0 : i32
    return %c0_i32, %c0_i32_0 : i32, i32
  }
  func.func @transform_2(%arg0: i32) -> (i32, i32) {
    %c0_i32 = arith.constant 0 : i32
    %c0_i32_0 = arith.constant 0 : i32
    %c0_i32_1 = arith.constant 0 : i32
    return %c0_i32, %c0_i32_0 : i32, i32
  }
  func.func @transform_3(%arg0: i32) -> (i32, i32, i32) {
    %c0_i32 = arith.constant 0 : i32
    %c0_i32_0 = arith.constant 0 : i32
    %c0_i32_1 = arith.constant 0 : i32
    %c0_i32_2 = arith.constant 0 : i32
    return %c0_i32, %c0_i32_0, %c0_i32_1 : i32, i32, i32
  }
  func.func @transform_4(%arg0: i32) -> (i32, i32, i32) {
    %c0_i32 = arith.constant 0 : i32
    %c0_i32_0 = arith.constant 0 : i32
    %c0_i32_1 = arith.constant 0 : i32
    return %arg0, %c0_i32, %c0_i32_0 : i32, i32, i32
  }
}

module attributes {stable_mosaic.version = 11 : i64} {
  func.func @_linear_kernel(%arg0: i32, %arg1: memref<32x32xf32, #tpu.memory_space<vmem>>, %arg2: memref<32x64xf32, #tpu.memory_space<vmem>>, %arg3: memref<1x64xf32, #tpu.memory_space<vmem>>, %arg4: memref<32x64xf32, #tpu.memory_space<vmem>>) attributes {dimension_semantics = [#tpu.dimension_semantics<parallel>], iteration_bounds = array<i64: 2>, scalar_prefetch = 0 : i64, scratch_operands = 0 : i64, tpu.core_type = #tpu.core_type<tc>, window_params = [{transform_indices = @transform_0, window_bounds = array<i64: 32, 32>}, {pipeline_mode = #tpu.pipeline_mode<synchronous>, transform_indices = @transform_1, window_bounds = array<i64: 32, 64>}, {pipeline_mode = #tpu.pipeline_mode<synchronous>, transform_indices = @transform_2, window_bounds = array<i64: 1, 64>}, {transform_indices = @transform_3, window_bounds = array<i64: 32, 64>}]} {
    %c0 = arith.constant 0 : index
    %c0_0 = arith.constant 0 : index
    %0 = vector.load %arg1[%c0, %c0_0] : memref<32x32xf32, #tpu.memory_space<vmem>>, vector<32x32xf32>
    %c0_1 = arith.constant 0 : index
    %c0_2 = arith.constant 0 : index
    %1 = vector.load %arg2[%c0_1, %c0_2] : memref<32x64xf32, #tpu.memory_space<vmem>>, vector<32x64xf32>
    %cst = arith.constant dense<0.000000e+00> : vector<32x64xf32>
    %2 = tpu.matmul %0, %1, %cst {dimension_numbers = #tpu.dot_dimension_numbers<[1], [0], [0], [1], [0, 0, 1, 1], [], []>} : vector<32x32xf32>, vector<32x64xf32>, vector<32x64xf32> -> vector<32x64xf32>
    %c0_3 = arith.constant 0 : index
    %c0_4 = arith.constant 0 : index
    %3 = vector.load %arg3[%c0_3, %c0_4] : memref<1x64xf32, #tpu.memory_space<vmem>>, vector<1x64xf32>
    %4 = vector.broadcast %3 : vector<1x64xf32> to vector<32x64xf32>
    %5 = arith.addf %2, %4 : vector<32x64xf32>
    %c0_5 = arith.constant 0 : index
    %c0_6 = arith.constant 0 : index
    %6 = vector.load %arg4[%c0_5, %c0_6] : memref<32x64xf32, #tpu.memory_space<vmem>>, vector<32x64xf32>
    tpu.vector_store %arg4[%c0_5, %c0_6], %5 {strides = array<i32>} : memref<32x64xf32, #tpu.memory_space<vmem>>, vector<32x64xf32>,
    return
  }
  func.func @transform_0(%arg0: i32) -> (i32, i32) {
    %c0_i32 = arith.constant 0 : i32
    %c0_i32_0 = arith.constant 0 : i32
    return %arg0, %c0_i32 : i32, i32
  }
  func.func @transform_1(%arg0: i32) -> (i32, i32) {
    %c0_i32 = arith.constant 0 : i32
    %c0_i32_0 = arith.constant 0 : i32
    %c0_i32_1 = arith.constant 0 : i32
    return %c0_i32, %c0_i32_0 : i32, i32
  }
  func.func @transform_2(%arg0: i32) -> (i32, i32) {
    %c0_i32 = arith.constant 0 : i32
    %c0_i32_0 = arith.constant 0 : i32
    %c0_i32_1 = arith.constant 0 : i32
    return %c0_i32, %c0_i32_0 : i32, i32
  }
  func.func @transform_3(%arg0: i32) -> (i32, i32) {
    %c0_i32 = arith.constant 0 : i32
    %c0_i32_0 = arith.constant 0 : i32
    return %arg0, %c0_i32 : i32, i32
  }
}

module attributes {stable_mosaic.version = 11 : i64} {
  func.func @_mha_kernel(%arg0: i32, %arg1: memref<1x4x64x8xf32, #tpu.memory_space<vmem>>, %arg2: memref<1x4x64x8xf32, #tpu.memory_space<vmem>>, %arg3: memref<1x4x64x8xf32, #tpu.memory_space<vmem>>, %arg4: memref<1x4x64x8xf32, #tpu.memory_space<vmem>>, %arg5: memref<1x4x64x64xf32, #tpu.memory_space<vmem>>) attributes {dimension_semantics = [#tpu.dimension_semantics<parallel>], iteration_bounds = array<i64: 2>, scalar_prefetch = 0 : i64, scratch_operands = 0 : i64, tpu.core_type = #tpu.core_type<tc>, window_params = [{transform_indices = @transform_0, window_bounds = array<i64: 1, 4, 64, 8>}, {pipeline_mode = #tpu.pipeline_mode<synchronous>, transform_indices = @transform_1, window_bounds = array<i64: 1, 4, 64, 8>}, {pipeline_mode = #tpu.pipeline_mode<synchronous>, transform_indices = @transform_2, window_bounds = array<i64: 1, 4, 64, 8>}, {transform_indices = @transform_3, window_bounds = array<i64: 1, 4, 64, 8>}, {transform_indices = @transform_4, window_bounds = array<i64: 1, 4, 64, 64>}]} {
    %c0 = arith.constant 0 : index
    %c0_0 = arith.constant 0 : index
    %c0_1 = arith.constant 0 : index
    %c0_2 = arith.constant 0 : index
    %0 = vector.load %arg1[%c0, %c0_0, %c0_1, %c0_2] : memref<1x4x64x8xf32, #tpu.memory_space<vmem>>, vector<1x4x64x8xf32>
    %1 = vector.shape_cast %0 : vector<1x4x64x8xf32> to vector<4x64x8xf32>
    %c0_3 = arith.constant 0 : index
    %c0_4 = arith.constant 0 : index
    %c0_5 = arith.constant 0 : index
    %c0_6 = arith.constant 0 : index
    %2 = vector.load %arg2[%c0_3, %c0_4, %c0_5, %c0_6] : memref<1x4x64x8xf32, #tpu.memory_space<vmem>>, vector<1x4x64x8xf32>
    %3 = vector.shape_cast %2 : vector<1x4x64x8xf32> to vector<4x64x8xf32>
    %c0_7 = arith.constant 0 : index
    %c0_8 = arith.constant 0 : index
    %c0_9 = arith.constant 0 : index
    %c0_10 = arith.constant 0 : index
    %4 = vector.load %arg3[%c0_7, %c0_8, %c0_9, %c0_10] : memref<1x4x64x8xf32, #tpu.memory_space<vmem>>, vector<1x4x64x8xf32>
    %5 = vector.shape_cast %4 : vector<1x4x64x8xf32> to vector<4x64x8xf32>
    "tpu.trace_start"() <{level = 10 : i32, message = "hqd,hkd->hqk"}> : () -> ()
    %cst = arith.constant dense<0.000000e+00> : vector<4x64x64xf32>
    %6 = tpu.matmul %1, %3, %cst {dimension_numbers = #tpu.dot_dimension_numbers<[2], [2], [1], [1], [0, 0, 0, 1, 1, 1], [0], [0]>} : vector<4x64x8xf32>, vector<4x64x8xf32>, vector<4x64x64xf32> -> vector<4x64x64xf32>
    "tpu.trace_stop"() : () -> ()
    %cst_11 = arith.constant 0.353553385 : f32
    %7 = vector.broadcast %cst_11 : f32 to vector<4x64x64xf32>
    %8 = arith.mulf %6, %7 : vector<4x64x64xf32>
    %cst_12 = arith.constant dense<0xFF800000> : vector<4x64xf32>
    %9 = vector.multi_reduction <maximumf>, %8, %cst_12 [2] : vector<4x64x64xf32> to vector<4x64xf32>
    %10 = vector.shape_cast %9 : vector<4x64xf32> to vector<4x64x1xf32>
    %11 = vector.broadcast %10 : vector<4x64x1xf32> to vector<4x64x64xf32>
    %12 = arith.subf %8, %11 : vector<4x64x64xf32>
    %13 = math.exp %12 : vector<4x64x64xf32>
    %cst_13 = arith.constant dense<0.000000e+00> : vector<4x64xf32>
    %14 = vector.multi_reduction <add>, %13, %cst_13 [2] : vector<4x64x64xf32> to vector<4x64xf32>
    %15 = vector.shape_cast %14 : vector<4x64xf32> to vector<4x64x1xf32>
    %16 = tpu.reciprocal %15 {approx = true} : vector<4x64x1xf32> -> vector<4x64x1xf32>
    %17 = vector.broadcast %16 : vector<4x64x1xf32> to vector<4x64x64xf32>
    %18 = arith.mulf %13, %17 : vector<4x64x64xf32>
    "tpu.trace_start"() <{level = 10 : i32, message = "hqk,hkd->hqd"}> : () -> ()
    %cst_14 = arith.constant dense<0.000000e+00> : vector<4x64x8xf32>
    %19 = tpu.matmul %18, %5, %cst_14 {dimension_numbers = #tpu.dot_dimension_numbers<[2], [1], [1], [2], [0, 0, 0, 1, 1, 2], [0], [0]>} : vector<4x64x64xf32>, vector<4x64x8xf32>, vector<4x64x8xf32> -> vector<4x64x8xf32>
    "tpu.trace_stop"() : () -> ()
    %c0_15 = arith.constant 0 : index
    %c0_16 = arith.constant 0 : index
    %c0_17 = arith.constant 0 : index
    %c0_18 = arith.constant 0 : index
    %20 = vector.load %arg4[%c0_15, %c0_16, %c0_17, %c0_18] : memref<1x4x64x8xf32, #tpu.memory_space<vmem>>, vector<1x4x64x8xf32>
    %21 = vector.shape_cast %20 : vector<1x4x64x8xf32> to vector<4x64x8xf32>
    %22 = vector.shape_cast %19 : vector<4x64x8xf32> to vector<1x4x64x8xf32>
    tpu.vector_store %arg4[%c0_15, %c0_16, %c0_17, %c0_18], %22 {strides = array<i32>} : memref<1x4x64x8xf32, #tpu.memory_space<vmem>>, vector<1x4x64x8xf32>,
    %c0_19 = arith.constant 0 : index
    %c0_20 = arith.constant 0 : index
    %c0_21 = arith.constant 0 : index
    %c0_22 = arith.constant 0 : index
    %23 = vector.load %arg5[%c0_19, %c0_20, %c0_21, %c0_22] : memref<1x4x64x64xf32, #tpu.memory_space<vmem>>, vector<1x4x64x64xf32>
    %24 = vector.shape_cast %23 : vector<1x4x64x64xf32> to vector<4x64x64xf32>
    %25 = vector.shape_cast %18 : vector<4x64x64xf32> to vector<1x4x64x64xf32>
    tpu.vector_store %arg5[%c0_19, %c0_20, %c0_21, %c0_22], %25 {strides = array<i32>} : memref<1x4x64x64xf32, #tpu.memory_space<vmem>>, vector<1x4x64x64xf32>,
    return
  }
  func.func @transform_0(%arg0: i32) -> (i32, i32, i32, i32) {
    %c0_i32 = arith.constant 0 : i32
    %c0_i32_0 = arith.constant 0 : i32
    %c0_i32_1 = arith.constant 0 : i32
    %c0_i32_2 = arith.constant 0 : i32
    return %arg0, %c0_i32, %c0_i32_0, %c0_i32_1 : i32, i32, i32, i32
  }
  func.func @transform_1(%arg0: i32) -> (i32, i32, i32, i32) {
    %c0_i32 = arith.constant 0 : i32
    %c0_i32_0 = arith.constant 0 : i32
    %c0_i32_1 = arith.constant 0 : i32
    %c0_i32_2 = arith.constant 0 : i32
    %c0_i32_3 = arith.constant 0 : i32
    return %c0_i32, %c0_i32_0, %c0_i32_1, %c0_i32_2 : i32, i32, i32, i32
  }
  func.func @transform_2(%arg0: i32) -> (i32, i32, i32, i32) {
    %c0_i32 = arith.constant 0 : i32
    %c0_i32_0 = arith.constant 0 : i32
    %c0_i32_1 = arith.constant 0 : i32
    %c0_i32_2 = arith.constant 0 : i32
    %c0_i32_3 = arith.constant 0 : i32
    return %c0_i32, %c0_i32_0, %c0_i32_1, %c0_i32_2 : i32, i32, i32, i32
  }
  func.func @transform_3(%arg0: i32) -> (i32, i32, i32, i32) {
    %c0_i32 = arith.constant 0 : i32
    %c0_i32_0 = arith.constant 0 : i32
    %c0_i32_1 = arith.constant 0 : i32
    %c0_i32_2 = arith.constant 0 : i32
    return %arg0, %c0_i32, %c0_i32_0, %c0_i32_1 : i32, i32, i32, i32
  }
  func.func @transform_4(%arg0: i32) -> (i32, i32, i32, i32) {
    %c0_i32 = arith.constant 0 : i32
    %c0_i32_0 = arith.constant 0 : i32
    %c0_i32_1 = arith.constant 0 : i32
    %c0_i32_2 = arith.constant 0 : i32
    return %arg0, %c0_i32, %c0_i32_0, %c0_i32_1 : i32, i32, i32, i32
  }
}

module attributes {stable_mosaic.version = 11 : i64} {
  func.func @_fusion_norm_kernel(%arg0: i32, %arg1: memref<64x32xf32, #tpu.memory_space<vmem>>, %arg2: memref<64x32xf32, #tpu.memory_space<vmem>>, %arg3: memref<64x32xf32, #tpu.memory_space<vmem>>, %arg4: memref<32x32xf32, #tpu.memory_space<vmem>>, %arg5: memref<1x32xf32, #tpu.memory_space<vmem>>, %arg6: memref<32x32xf32, #tpu.memory_space<vmem>>, %arg7: memref<1x32xf32, #tpu.memory_space<vmem>>, %arg8: memref<32x128xf32, #tpu.memory_space<vmem>>, %arg9: memref<32x128xf32, #tpu.memory_space<vmem>>, %arg10: memref<1x128xf32, #tpu.memory_space<vmem>>, %arg11: memref<128x32xf32, #tpu.memory_space<vmem>>, %arg12: memref<1x32xf32, #tpu.memory_space<vmem>>, %arg13: memref<1x32xf32, #tpu.memory_space<vmem>>, %arg14: memref<1x32xf32, #tpu.memory_space<vmem>>, %arg15: memref<64x32xf32, #tpu.memory_space<vmem>>) attributes {dimension_semantics = [#tpu.dimension_semantics<parallel>], iteration_bounds = array<i64: 2>, scalar_prefetch = 0 : i64, scratch_operands = 0 : i64, tpu.core_type = #tpu.core_type<tc>, window_params = [{transform_indices = @transform_0, window_bounds = array<i64: 64, 32>}, {transform_indices = @transform_1, window_bounds = array<i64: 64, 32>}, {transform_indices = @transform_2, window_bounds = array<i64: 64, 32>}, {pipeline_mode = #tpu.pipeline_mode<synchronous>, transform_indices = @transform_3, window_bounds = array<i64: 32, 32>}, {pipeline_mode = #tpu.pipeline_mode<synchronous>, transform_indices = @transform_4, window_bounds = array<i64: 1, 32>}, {pipeline_mode = #tpu.pipeline_mode<synchronous>, transform_indices = @transform_5, window_bounds = array<i64: 32, 32>}, {pipeline_mode = #tpu.pipeline_mode<synchronous>, transform_indices = @transform_6, window_bounds = array<i64: 1, 32>}, {pipeline_mode = #tpu.pipeline_mode<synchronous>, transform_indices = @transform_7, window_bounds = array<i64: 32, 128>}, {pipeline_mode = #tpu.pipeline_mode<synchronous>, transform_indices = @transform_8, window_bounds = array<i64: 32, 128>}, {pipeline_mode = #tpu.pipeline_mode<synchronous>, transform_indices = @transform_9, window_bounds = array<i64: 1, 128>}, {pipeline_mode = #tpu.pipeline_mode<synchronous>, transform_indices = @transform_10, window_bounds = array<i64: 128, 32>}, {pipeline_mode = #tpu.pipeline_mode<synchronous>, transform_indices = @transform_11, window_bounds = array<i64: 1, 32>}, {pipeline_mode = #tpu.pipeline_mode<synchronous>, transform_indices = @transform_12, window_bounds = array<i64: 1, 32>}, {pipeline_mode = #tpu.pipeline_mode<synchronous>, transform_indices = @transform_13, window_bounds = array<i64: 1, 32>}, {transform_indices = @transform_14, window_bounds = array<i64: 64, 32>}]} {
    %c0 = arith.constant 0 : index
    %c0_0 = arith.constant 0 : index
    %0 = vector.load %arg1[%c0, %c0_0] : memref<64x32xf32, #tpu.memory_space<vmem>>, vector<64x32xf32>
    %c0_1 = arith.constant 0 : index
    %c0_2 = arith.constant 0 : index
    %1 = vector.load %arg2[%c0_1, %c0_2] : memref<64x32xf32, #tpu.memory_space<vmem>>, vector<64x32xf32>
    %c0_3 = arith.constant 0 : index
    %c0_4 = arith.constant 0 : index
    %2 = vector.load %arg4[%c0_3, %c0_4] : memref<32x32xf32, #tpu.memory_space<vmem>>, vector<32x32xf32>
    %cst = arith.constant dense<0.000000e+00> : vector<64x32xf32>
    %3 = tpu.matmul %1, %2, %cst {dimension_numbers = #tpu.dot_dimension_numbers<[1], [0], [0], [1], [0, 0, 1, 1], [], []>} : vector<64x32xf32>, vector<32x32xf32>, vector<64x32xf32> -> vector<64x32xf32>
    %c0_5 = arith.constant 0 : index
    %c0_6 = arith.constant 0 : index
    %4 = vector.load %arg5[%c0_5, %c0_6] : memref<1x32xf32, #tpu.memory_space<vmem>>, vector<1x32xf32>
    %5 = vector.broadcast %4 : vector<1x32xf32> to vector<64x32xf32>
    %6 = arith.addf %3, %5 : vector<64x32xf32>
    %c0_7 = arith.constant 0 : index
    %c0_8 = arith.constant 0 : index
    %7 = vector.load %arg3[%c0_7, %c0_8] : memref<64x32xf32, #tpu.memory_space<vmem>>, vector<64x32xf32>
    %c0_9 = arith.constant 0 : index
    %c0_10 = arith.constant 0 : index
    %8 = vector.load %arg6[%c0_9, %c0_10] : memref<32x32xf32, #tpu.memory_space<vmem>>, vector<32x32xf32>
    %cst_11 = arith.constant dense<0.000000e+00> : vector<64x32xf32>
    %9 = tpu.matmul %7, %8, %cst_11 {dimension_numbers = #tpu.dot_dimension_numbers<[1], [0], [0], [1], [0, 0, 1, 1], [], []>} : vector<64x32xf32>, vector<32x32xf32>, vector<64x32xf32> -> vector<64x32xf32>
    %c0_12 = arith.constant 0 : index
    %c0_13 = arith.constant 0 : index
    %10 = vector.load %arg7[%c0_12, %c0_13] : memref<1x32xf32, #tpu.memory_space<vmem>>, vector<1x32xf32>
    %11 = vector.broadcast %10 : vector<1x32xf32> to vector<64x32xf32>
    %12 = arith.addf %9, %11 : vector<64x32xf32>
    %13 = arith.addf %0, %6 : vector<64x32xf32>
    %14 = arith.addf %0, %12 : vector<64x32xf32>
    %c0_14 = arith.constant 0 : index
    %c0_15 = arith.constant 0 : index
    %15 = vector.load %arg8[%c0_14, %c0_15] : memref<32x128xf32, #tpu.memory_space<vmem>>, vector<32x128xf32>
    %cst_16 = arith.constant dense<0.000000e+00> : vector<64x128xf32>
    %16 = tpu.matmul %13, %15, %cst_16 {dimension_numbers = #tpu.dot_dimension_numbers<[1], [0], [0], [1], [0, 0, 1, 1], [], []>} : vector<64x32xf32>, vector<32x128xf32>, vector<64x128xf32> -> vector<64x128xf32>
    %c0_17 = arith.constant 0 : index
    %c0_18 = arith.constant 0 : index
    %17 = vector.load %arg9[%c0_17, %c0_18] : memref<32x128xf32, #tpu.memory_space<vmem>>, vector<32x128xf32>
    %cst_19 = arith.constant dense<0.000000e+00> : vector<64x128xf32>
    %18 = tpu.matmul %14, %17, %cst_19 {dimension_numbers = #tpu.dot_dimension_numbers<[1], [0], [0], [1], [0, 0, 1, 1], [], []>} : vector<64x32xf32>, vector<32x128xf32>, vector<64x128xf32> -> vector<64x128xf32>
    %19 = arith.addf %16, %18 : vector<64x128xf32>
    %c0_20 = arith.constant 0 : index
    %c0_21 = arith.constant 0 : index
    %20 = vector.load %arg10[%c0_20, %c0_21] : memref<1x128xf32, #tpu.memory_space<vmem>>, vector<1x128xf32>
    %21 = vector.broadcast %20 : vector<1x128xf32> to vector<64x128xf32>
    %22 = arith.addf %19, %21 : vector<64x128xf32>
    %cst_22 = arith.constant 0.000000e+00 : f32
    %23 = vector.broadcast %cst_22 : f32 to vector<64x128xf32>
    %24 = arith.maximumf %22, %23 : vector<64x128xf32>
    %c0_23 = arith.constant 0 : index
    %c0_24 = arith.constant 0 : index
    %25 = vector.load %arg11[%c0_23, %c0_24] : memref<128x32xf32, #tpu.memory_space<vmem>>, vector<128x32xf32>
    %cst_25 = arith.constant dense<0.000000e+00> : vector<64x32xf32>
    %26 = tpu.matmul %24, %25, %cst_25 {dimension_numbers = #tpu.dot_dimension_numbers<[1], [0], [0], [1], [0, 0, 1, 1], [], []>} : vector<64x128xf32>, vector<128x32xf32>, vector<64x32xf32> -> vector<64x32xf32>
    %c0_26 = arith.constant 0 : index
    %c0_27 = arith.constant 0 : index
    %27 = vector.load %arg12[%c0_26, %c0_27] : memref<1x32xf32, #tpu.memory_space<vmem>>, vector<1x32xf32>
    %28 = vector.broadcast %27 : vector<1x32xf32> to vector<64x32xf32>
    %29 = arith.addf %26, %28 : vector<64x32xf32>
    %cst_28 = arith.constant dense<0.000000e+00> : vector<64xf32>
    %30 = vector.multi_reduction <add>, %29, %cst_28 [1] : vector<64x32xf32> to vector<64xf32>
    %31 = vector.shape_cast %30 : vector<64xf32> to vector<64x1xf32>
    %cst_29 = arith.constant 3.200000e+01 : f32
    %32 = vector.broadcast %cst_29 : f32 to vector<64x1xf32>
    %33 = arith.divf %31, %32 : vector<64x1xf32>
    %34 = vector.broadcast %33 : vector<64x1xf32> to vector<64x32xf32>
    %35 = arith.subf %29, %34 : vector<64x32xf32>
    %36 = arith.mulf %35, %35 : vector<64x32xf32>
    %cst_30 = arith.constant dense<0.000000e+00> : vector<64xf32>
    %37 = vector.multi_reduction <add>, %36, %cst_30 [1] : vector<64x32xf32> to vector<64xf32>
    %38 = vector.shape_cast %37 : vector<64xf32> to vector<64x1xf32>
    %cst_31 = arith.constant 3.200000e+01 : f32
    %39 = vector.broadcast %cst_31 : f32 to vector<64x1xf32>
    %40 = arith.divf %38, %39 : vector<64x1xf32>
    %cst_32 = arith.constant 9.99999974E-6 : f32
    %41 = vector.broadcast %cst_32 : f32 to vector<64x1xf32>
    %42 = arith.addf %40, %41 : vector<64x1xf32>
    %43 = math.rsqrt %42 : vector<64x1xf32>
    %44 = vector.broadcast %43 : vector<64x1xf32> to vector<64x32xf32>
    %45 = arith.mulf %35, %44 : vector<64x32xf32>
    %c0_33 = arith.constant 0 : index
    %c0_34 = arith.constant 0 : index
    %46 = vector.load %arg13[%c0_33, %c0_34] : memref<1x32xf32, #tpu.memory_space<vmem>>, vector<1x32xf32>
    %47 = vector.broadcast %46 : vector<1x32xf32> to vector<64x32xf32>
    %48 = arith.mulf %45, %47 : vector<64x32xf32>
    %c0_35 = arith.constant 0 : index
    %c0_36 = arith.constant 0 : index
    %49 = vector.load %arg14[%c0_35, %c0_36] : memref<1x32xf32, #tpu.memory_space<vmem>>, vector<1x32xf32>
    %50 = vector.broadcast %49 : vector<1x32xf32> to vector<64x32xf32>
    %51 = arith.addf %48, %50 : vector<64x32xf32>
    %c0_37 = arith.constant 0 : index
    %c0_38 = arith.constant 0 : index
    %52 = vector.load %arg15[%c0_37, %c0_38] : memref<64x32xf32, #tpu.memory_space<vmem>>, vector<64x32xf32>
    tpu.vector_store %arg15[%c0_37, %c0_38], %51 {strides = array<i32>} : memref<64x32xf32, #tpu.memory_space<vmem>>, vector<64x32xf32>,
    return
  }
  func.func @transform_0(%arg0: i32) -> (i32, i32) {
    %c0_i32 = arith.constant 0 : i32
    %c0_i32_0 = arith.constant 0 : i32
    return %arg0, %c0_i32 : i32, i32
  }
  func.func @transform_1(%arg0: i32) -> (i32, i32) {
    %c0_i32 = arith.constant 0 : i32
    %c0_i32_0 = arith.constant 0 : i32
    return %arg0, %c0_i32 : i32, i32
  }
  func.func @transform_2(%arg0: i32) -> (i32, i32) {
    %c0_i32 = arith.constant 0 : i32
    %c0_i32_0 = arith.constant 0 : i32
    return %arg0, %c0_i32 : i32, i32
  }
  func.func @transform_3(%arg0: i32) -> (i32, i32) {
    %c0_i32 = arith.constant 0 : i32
    %c0_i32_0 = arith.constant 0 : i32
    %c0_i32_1 = arith.constant 0 : i32
    return %c0_i32, %c0_i32_0 : i32, i32
  }
  func.func @transform_4(%arg0: i32) -> (i32, i32) {
    %c0_i32 = arith.constant 0 : i32
    %c0_i32_0 = arith.constant 0 : i32
    %c0_i32_1 = arith.constant 0 : i32
    return %c0_i32, %c0_i32_0 : i32, i32
  }
  func.func @transform_5(%arg0: i32) -> (i32, i32) {
    %c0_i32 = arith.constant 0 : i32
    %c0_i32_0 = arith.constant 0 : i32
    %c0_i32_1 = arith.constant 0 : i32
    return %c0_i32, %c0_i32_0 : i32, i32
  }
  func.func @transform_6(%arg0: i32) -> (i32, i32) {
    %c0_i32 = arith.constant 0 : i32
    %c0_i32_0 = arith.constant 0 : i32
    %c0_i32_1 = arith.constant 0 : i32
    return %c0_i32, %c0_i32_0 : i32, i32
  }
  func.func @transform_7(%arg0: i32) -> (i32, i32) {
    %c0_i32 = arith.constant 0 : i32
    %c0_i32_0 = arith.constant 0 : i32
    %c0_i32_1 = arith.constant 0 : i32
    return %c0_i32, %c0_i32_0 : i32, i32
  }
  func.func @transform_8(%arg0: i32) -> (i32, i32) {
    %c0_i32 = arith.constant 0 : i32
    %c0_i32_0 = arith.constant 0 : i32
    %c0_i32_1 = arith.constant 0 : i32
    return %c0_i32, %c0_i32_0 : i32, i32
  }
  func.func @transform_9(%arg0: i32) -> (i32, i32) {
    %c0_i32 = arith.constant 0 : i32
    %c0_i32_0 = arith.constant 0 : i32
    %c0_i32_1 = arith.constant 0 : i32
    return %c0_i32, %c0_i32_0 : i32, i32
  }
  func.func @transform_10(%arg0: i32) -> (i32, i32) {
    %c0_i32 = arith.constant 0 : i32
    %c0_i32_0 = arith.constant 0 : i32
    %c0_i32_1 = arith.constant 0 : i32
    return %c0_i32, %c0_i32_0 : i32, i32
  }
  func.func @transform_11(%arg0: i32) -> (i32, i32) {
    %c0_i32 = arith.constant 0 : i32
    %c0_i32_0 = arith.constant 0 : i32
    %c0_i32_1 = arith.constant 0 : i32
    return %c0_i32, %c0_i32_0 : i32, i32
  }
  func.func @transform_12(%arg0: i32) -> (i32, i32) {
    %c0_i32 = arith.constant 0 : i32
    %c0_i32_0 = arith.constant 0 : i32
    %c0_i32_1 = arith.constant 0 : i32
    return %c0_i32, %c0_i32_0 : i32, i32
  }
  func.func @transform_13(%arg0: i32) -> (i32, i32) {
    %c0_i32 = arith.constant 0 : i32
    %c0_i32_0 = arith.constant 0 : i32
    %c0_i32_1 = arith.constant 0 : i32
    return %c0_i32, %c0_i32_0 : i32, i32
  }
  func.func @transform_14(%arg0: i32) -> (i32, i32) {
    %c0_i32 = arith.constant 0 : i32
    %c0_i32_0 = arith.constant 0 : i32
    return %arg0, %c0_i32 : i32, i32
  }
}

module attributes {stable_mosaic.version = 11 : i64} {
  func.func @_dwconv_gelu_kernel(%arg0: i32, %arg1: memref<1x10x10x128xf32, #tpu.memory_space<vmem>>, %arg2: memref<3x3x1x128xf32, #tpu.memory_space<vmem>>, %arg3: memref<1x1x128xf32, #tpu.memory_space<vmem>>, %arg4: memref<1x8x8x128xf32, #tpu.memory_space<vmem>>) attributes {dimension_semantics = [#tpu.dimension_semantics<parallel>], iteration_bounds = array<i64: 2>, scalar_prefetch = 0 : i64, scratch_operands = 0 : i64, tpu.core_type = #tpu.core_type<tc>, window_params = [{transform_indices = @transform_0, window_bounds = array<i64: 1, 10, 10, 128>}, {pipeline_mode = #tpu.pipeline_mode<synchronous>, transform_indices = @transform_1, window_bounds = array<i64: 3, 3, 1, 128>}, {pipeline_mode = #tpu.pipeline_mode<synchronous>, transform_indices = @transform_2, window_bounds = array<i64: 1, 1, 128>}, {transform_indices = @transform_3, window_bounds = array<i64: 1, 8, 8, 128>}]} {
    %c0 = arith.constant 0 : index
    %c0_0 = arith.constant 0 : index
    %c0_1 = arith.constant 0 : index
    %c0_2 = arith.constant 0 : index
    %0 = vector.load %arg1[%c0, %c0_0, %c0_1, %c0_2] : memref<1x10x10x128xf32, #tpu.memory_space<vmem>>, vector<1x10x10x128xf32>
    %1 = vector.shape_cast %0 : vector<1x10x10x128xf32> to vector<10x10x128xf32>
    %cst = arith.constant 0.000000e+00 : f32
    %2 = vector.broadcast %cst : f32 to vector<8x8x128xf32>
    %3 = vector.extract_strided_slice %1 {offsets = [0, 0, 0], sizes = [8, 8, 128], strides = [1, 1, 1]} : vector<10x10x128xf32> to vector<8x8x128xf32>
    %c0_3 = arith.constant 0 : index
    %c0_4 = arith.constant 0 : index
    %c0_5 = arith.constant 0 : index
    %c0_6 = arith.constant 0 : index
    %4 = vector.load %arg2[%c0_3, %c0_4, %c0_5, %c0_6] : memref<3x3x1x128xf32, #tpu.memory_space<vmem>>, vector<1x1x1x128xf32>
    %5 = vector.shape_cast %4 : vector<1x1x1x128xf32> to vector<1x128xf32>
    %6 = vector.shape_cast %5 : vector<1x128xf32> to vector<1x1x128xf32>
    %7 = vector.broadcast %6 : vector<1x1x128xf32> to vector<8x8x128xf32>
    %8 = arith.mulf %3, %7 : vector<8x8x128xf32>
    %9 = arith.addf %2, %8 : vector<8x8x128xf32>
    %10 = vector.extract_strided_slice %1 {offsets = [0, 1, 0], sizes = [8, 8, 128], strides = [1, 1, 1]} : vector<10x10x128xf32> to vector<8x8x128xf32>
    %c0_7 = arith.constant 0 : index
    %c1 = arith.constant 1 : index
    %c0_8 = arith.constant 0 : index
    %c0_9 = arith.constant 0 : index
    %11 = vector.load %arg2[%c0_7, %c1, %c0_8, %c0_9] : memref<3x3x1x128xf32, #tpu.memory_space<vmem>>, vector<1x1x1x128xf32>
    %12 = vector.shape_cast %11 : vector<1x1x1x128xf32> to vector<1x128xf32>
    %13 = vector.shape_cast %12 : vector<1x128xf32> to vector<1x1x128xf32>
    %14 = vector.broadcast %13 : vector<1x1x128xf32> to vector<8x8x128xf32>
    %15 = arith.mulf %10, %14 : vector<8x8x128xf32>
    %16 = arith.addf %9, %15 : vector<8x8x128xf32>
    %17 = vector.extract_strided_slice %1 {offsets = [0, 2, 0], sizes = [8, 8, 128], strides = [1, 1, 1]} : vector<10x10x128xf32> to vector<8x8x128xf32>
    %c0_10 = arith.constant 0 : index
    %c2 = arith.constant 2 : index
    %c0_11 = arith.constant 0 : index
    %c0_12 = arith.constant 0 : index
    %18 = vector.load %arg2[%c0_10, %c2, %c0_11, %c0_12] : memref<3x3x1x128xf32, #tpu.memory_space<vmem>>, vector<1x1x1x128xf32>
    %19 = vector.shape_cast %18 : vector<1x1x1x128xf32> to vector<1x128xf32>
    %20 = vector.shape_cast %19 : vector<1x128xf32> to vector<1x1x128xf32>
    %21 = vector.broadcast %20 : vector<1x1x128xf32> to vector<8x8x128xf32>
    %22 = arith.mulf %17, %21 : vector<8x8x128xf32>
    %23 = arith.addf %16, %22 : vector<8x8x128xf32>
    %24 = vector.extract_strided_slice %1 {offsets = [1, 0, 0], sizes = [8, 8, 128], strides = [1, 1, 1]} : vector<10x10x128xf32> to vector<8x8x128xf32>
    %c1_13 = arith.constant 1 : index
    %c0_14 = arith.constant 0 : index
    %c0_15 = arith.constant 0 : index
    %c0_16 = arith.constant 0 : index
    %25 = vector.load %arg2[%c1_13, %c0_14, %c0_15, %c0_16] : memref<3x3x1x128xf32, #tpu.memory_space<vmem>>, vector<1x1x1x128xf32>
    %26 = vector.shape_cast %25 : vector<1x1x1x128xf32> to vector<1x128xf32>
    %27 = vector.shape_cast %26 : vector<1x128xf32> to vector<1x1x128xf32>
    %28 = vector.broadcast %27 : vector<1x1x128xf32> to vector<8x8x128xf32>
    %29 = arith.mulf %24, %28 : vector<8x8x128xf32>
    %30 = arith.addf %23, %29 : vector<8x8x128xf32>
    %31 = vector.extract_strided_slice %1 {offsets = [1, 1, 0], sizes = [8, 8, 128], strides = [1, 1, 1]} : vector<10x10x128xf32> to vector<8x8x128xf32>
    %c1_17 = arith.constant 1 : index
    %c1_18 = arith.constant 1 : index
    %c0_19 = arith.constant 0 : index
    %c0_20 = arith.constant 0 : index
    %32 = vector.load %arg2[%c1_17, %c1_18, %c0_19, %c0_20] : memref<3x3x1x128xf32, #tpu.memory_space<vmem>>, vector<1x1x1x128xf32>
    %33 = vector.shape_cast %32 : vector<1x1x1x128xf32> to vector<1x128xf32>
    %34 = vector.shape_cast %33 : vector<1x128xf32> to vector<1x1x128xf32>
    %35 = vector.broadcast %34 : vector<1x1x128xf32> to vector<8x8x128xf32>
    %36 = arith.mulf %31, %35 : vector<8x8x128xf32>
    %37 = arith.addf %30, %36 : vector<8x8x128xf32>
    %38 = vector.extract_strided_slice %1 {offsets = [1, 2, 0], sizes = [8, 8, 128], strides = [1, 1, 1]} : vector<10x10x128xf32> to vector<8x8x128xf32>
    %c1_21 = arith.constant 1 : index
    %c2_22 = arith.constant 2 : index
    %c0_23 = arith.constant 0 : index
    %c0_24 = arith.constant 0 : index
    %39 = vector.load %arg2[%c1_21, %c2_22, %c0_23, %c0_24] : memref<3x3x1x128xf32, #tpu.memory_space<vmem>>, vector<1x1x1x128xf32>
    %40 = vector.shape_cast %39 : vector<1x1x1x128xf32> to vector<1x128xf32>
    %41 = vector.shape_cast %40 : vector<1x128xf32> to vector<1x1x128xf32>
    %42 = vector.broadcast %41 : vector<1x1x128xf32> to vector<8x8x128xf32>
    %43 = arith.mulf %38, %42 : vector<8x8x128xf32>
    %44 = arith.addf %37, %43 : vector<8x8x128xf32>
    %45 = vector.extract_strided_slice %1 {offsets = [2, 0, 0], sizes = [8, 8, 128], strides = [1, 1, 1]} : vector<10x10x128xf32> to vector<8x8x128xf32>
    %c2_25 = arith.constant 2 : index
    %c0_26 = arith.constant 0 : index
    %c0_27 = arith.constant 0 : index
    %c0_28 = arith.constant 0 : index
    %46 = vector.load %arg2[%c2_25, %c0_26, %c0_27, %c0_28] : memref<3x3x1x128xf32, #tpu.memory_space<vmem>>, vector<1x1x1x128xf32>
    %47 = vector.shape_cast %46 : vector<1x1x1x128xf32> to vector<1x128xf32>
    %48 = vector.shape_cast %47 : vector<1x128xf32> to vector<1x1x128xf32>
    %49 = vector.broadcast %48 : vector<1x1x128xf32> to vector<8x8x128xf32>
    %50 = arith.mulf %45, %49 : vector<8x8x128xf32>
    %51 = arith.addf %44, %50 : vector<8x8x128xf32>
    %52 = vector.extract_strided_slice %1 {offsets = [2, 1, 0], sizes = [8, 8, 128], strides = [1, 1, 1]} : vector<10x10x128xf32> to vector<8x8x128xf32>
    %c2_29 = arith.constant 2 : index
    %c1_30 = arith.constant 1 : index
    %c0_31 = arith.constant 0 : index
    %c0_32 = arith.constant 0 : index
    %53 = vector.load %arg2[%c2_29, %c1_30, %c0_31, %c0_32] : memref<3x3x1x128xf32, #tpu.memory_space<vmem>>, vector<1x1x1x128xf32>
    %54 = vector.shape_cast %53 : vector<1x1x1x128xf32> to vector<1x128xf32>
    %55 = vector.shape_cast %54 : vector<1x128xf32> to vector<1x1x128xf32>
    %56 = vector.broadcast %55 : vector<1x1x128xf32> to vector<8x8x128xf32>
    %57 = arith.mulf %52, %56 : vector<8x8x128xf32>
    %58 = arith.addf %51, %57 : vector<8x8x128xf32>
    %59 = vector.extract_strided_slice %1 {offsets = [2, 2, 0], sizes = [8, 8, 128], strides = [1, 1, 1]} : vector<10x10x128xf32> to vector<8x8x128xf32>
    %c2_33 = arith.constant 2 : index
    %c2_34 = arith.constant 2 : index
    %c0_35 = arith.constant 0 : index
    %c0_36 = arith.constant 0 : index
    %60 = vector.load %arg2[%c2_33, %c2_34, %c0_35, %c0_36] : memref<3x3x1x128xf32, #tpu.memory_space<vmem>>, vector<1x1x1x128xf32>
    %61 = vector.shape_cast %60 : vector<1x1x1x128xf32> to vector<1x128xf32>
    %62 = vector.shape_cast %61 : vector<1x128xf32> to vector<1x1x128xf32>
    %63 = vector.broadcast %62 : vector<1x1x128xf32> to vector<8x8x128xf32>
    %64 = arith.mulf %59, %63 : vector<8x8x128xf32>
    %65 = arith.addf %58, %64 : vector<8x8x128xf32>
    %c0_37 = arith.constant 0 : index
    %c0_38 = arith.constant 0 : index
    %c0_39 = arith.constant 0 : index
    %66 = vector.load %arg3[%c0_37, %c0_38, %c0_39] : memref<1x1x128xf32, #tpu.memory_space<vmem>>, vector<1x1x128xf32>
    %67 = vector.broadcast %66 : vector<1x1x128xf32> to vector<8x8x128xf32>
    %68 = arith.addf %65, %67 : vector<8x8x128xf32>
    %cst_40 = arith.constant 5.000000e-01 : f32
    %69 = vector.broadcast %cst_40 : f32 to vector<8x8x128xf32>
    %70 = arith.mulf %69, %68 : vector<8x8x128xf32>
    %cst_41 = arith.constant 0.707106769 : f32
    %71 = vector.broadcast %cst_41 : f32 to vector<8x8x128xf32>
    %72 = arith.mulf %68, %71 : vector<8x8x128xf32>
    %73 = math.erf %72 : vector<8x8x128xf32>
    %cst_42 = arith.constant 1.000000e+00 : f32
    %74 = vector.broadcast %cst_42 : f32 to vector<8x8x128xf32>
    %75 = arith.addf %74, %73 : vector<8x8x128xf32>
    %76 = arith.mulf %70, %75 : vector<8x8x128xf32>
    %c0_43 = arith.constant 0 : index
    %c0_44 = arith.constant 0 : index
    %c0_45 = arith.constant 0 : index
    %c0_46 = arith.constant 0 : index
    %77 = vector.load %arg4[%c0_43, %c0_44, %c0_45, %c0_46] : memref<1x8x8x128xf32, #tpu.memory_space<vmem>>, vector<1x8x8x128xf32>
    %78 = vector.shape_cast %77 : vector<1x8x8x128xf32> to vector<8x8x128xf32>
    %79 = vector.shape_cast %76 : vector<8x8x128xf32> to vector<1x8x8x128xf32>
    tpu.vector_store %arg4[%c0_43, %c0_44, %c0_45, %c0_46], %79 {strides = array<i32>} : memref<1x8x8x128xf32, #tpu.memory_space<vmem>>, vector<1x8x8x128xf32>,
    return
  }
  func.func @transform_0(%arg0: i32) -> (i32, i32, i32, i32) {
    %c0_i32 = arith.constant 0 : i32
    %c0_i32_0 = arith.constant 0 : i32
    %c0_i32_1 = arith.constant 0 : i32
    %c0_i32_2 = arith.constant 0 : i32
    return %arg0, %c0_i32, %c0_i32_0, %c0_i32_1 : i32, i32, i32, i32
  }
  func.func @transform_1(%arg0: i32) -> (i32, i32, i32, i32) {
    %c0_i32 = arith.constant 0 : i32
    %c0_i32_0 = arith.constant 0 : i32
    %c0_i32_1 = arith.constant 0 : i32
    %c0_i32_2 = arith.constant 0 : i32
    %c0_i32_3 = arith.constant 0 : i32
    return %c0_i32, %c0_i32_0, %c0_i32_1, %c0_i32_2 : i32, i32, i32, i32
  }
  func.func @transform_2(%arg0: i32) -> (i32, i32, i32) {
    %c0_i32 = arith.constant 0 : i32
    %c0_i32_0 = arith.constant 0 : i32
    %c0_i32_1 = arith.constant 0 : i32
    %c0_i32_2 = arith.constant 0 : i32
    return %c0_i32, %c0_i32_0, %c0_i32_1 : i32, i32, i32
  }
  func.func @transform_3(%arg0: i32) -> (i32, i32, i32, i32) {
    %c0_i32 = arith.constant 0 : i32
    %c0_i32_0 = arith.constant 0 : i32
    %c0_i32_1 = arith.constant 0 : i32
    %c0_i32_2 = arith.constant 0 : i32
    return %arg0, %c0_i32, %c0_i32_0, %c0_i32_1 : i32, i32, i32, i32
  }
}

module attributes {stable_mosaic.version = 11 : i64} {
  func.func @_ffn_out_norm_kernel(%arg0: i32, %arg1: memref<1x64x128xf32, #tpu.memory_space<vmem>>, %arg2: memref<1x1x128xf32, #tpu.memory_space<vmem>>, %arg3: memref<1x128xf32, #tpu.memory_space<vmem>>, %arg4: memref<1x64x32xf32, #tpu.memory_space<vmem>>, %arg5: memref<128x32xf32, #tpu.memory_space<vmem>>, %arg6: memref<1x32xf32, #tpu.memory_space<vmem>>, %arg7: memref<1x32xf32, #tpu.memory_space<vmem>>, %arg8: memref<1x32xf32, #tpu.memory_space<vmem>>, %arg9: memref<1x64x32xf32, #tpu.memory_space<vmem>>) attributes {dimension_semantics = [#tpu.dimension_semantics<parallel>], iteration_bounds = array<i64: 2>, scalar_prefetch = 0 : i64, scratch_operands = 0 : i64, tpu.core_type = #tpu.core_type<tc>, window_params = [{transform_indices = @transform_0, window_bounds = array<i64: 1, 64, 128>}, {transform_indices = @transform_1, window_bounds = array<i64: 1, 1, 128>}, {pipeline_mode = #tpu.pipeline_mode<synchronous>, transform_indices = @transform_2, window_bounds = array<i64: 1, 128>}, {transform_indices = @transform_3, window_bounds = array<i64: 1, 64, 32>}, {pipeline_mode = #tpu.pipeline_mode<synchronous>, transform_indices = @transform_4, window_bounds = array<i64: 128, 32>}, {pipeline_mode = #tpu.pipeline_mode<synchronous>, transform_indices = @transform_5, window_bounds = array<i64: 1, 32>}, {pipeline_mode = #tpu.pipeline_mode<synchronous>, transform_indices = @transform_6, window_bounds = array<i64: 1, 32>}, {pipeline_mode = #tpu.pipeline_mode<synchronous>, transform_indices = @transform_7, window_bounds = array<i64: 1, 32>}, {transform_indices = @transform_8, window_bounds = array<i64: 1, 64, 32>}]} {
    %c0 = arith.constant 0 : index
    %c0_0 = arith.constant 0 : index
    %c0_1 = arith.constant 0 : index
    %0 = vector.load %arg1[%c0, %c0_0, %c0_1] : memref<1x64x128xf32, #tpu.memory_space<vmem>>, vector<1x64x128xf32>
    %1 = vector.shape_cast %0 : vector<1x64x128xf32> to vector<64x128xf32>
    %c0_2 = arith.constant 0 : index
    %c0_3 = arith.constant 0 : index
    %2 = vector.load %arg3[%c0_2, %c0_3] : memref<1x128xf32, #tpu.memory_space<vmem>>, vector<1x128xf32>
    %c0_4 = arith.constant 0 : index
    %c0_5 = arith.constant 0 : index
    %c0_6 = arith.constant 0 : index
    %3 = vector.load %arg2[%c0_4, %c0_5, %c0_6] : memref<1x1x128xf32, #tpu.memory_space<vmem>>, vector<1x1x128xf32>
    %4 = vector.shape_cast %3 : vector<1x1x128xf32> to vector<1x128xf32>
    %5 = arith.mulf %2, %4 : vector<1x128xf32>
    %6 = vector.broadcast %5 : vector<1x128xf32> to vector<64x128xf32>
    %7 = arith.addf %1, %6 : vector<64x128xf32>
    %c0_7 = arith.constant 0 : index
    %c0_8 = arith.constant 0 : index
    %8 = vector.load %arg5[%c0_7, %c0_8] : memref<128x32xf32, #tpu.memory_space<vmem>>, vector<128x32xf32>
    %cst = arith.constant dense<0.000000e+00> : vector<64x32xf32>
    %9 = tpu.matmul %7, %8, %cst {dimension_numbers = #tpu.dot_dimension_numbers<[1], [0], [0], [1], [0, 0, 1, 1], [], []>} : vector<64x128xf32>, vector<128x32xf32>, vector<64x32xf32> -> vector<64x32xf32>
    %c0_9 = arith.constant 0 : index
    %c0_10 = arith.constant 0 : index
    %10 = vector.load %arg6[%c0_9, %c0_10] : memref<1x32xf32, #tpu.memory_space<vmem>>, vector<1x32xf32>
    %11 = vector.broadcast %10 : vector<1x32xf32> to vector<64x32xf32>
    %12 = arith.addf %9, %11 : vector<64x32xf32>
    %c0_11 = arith.constant 0 : index
    %c0_12 = arith.constant 0 : index
    %c0_13 = arith.constant 0 : index
    %13 = vector.load %arg4[%c0_11, %c0_12, %c0_13] : memref<1x64x32xf32, #tpu.memory_space<vmem>>, vector<1x64x32xf32>
    %14 = vector.shape_cast %13 : vector<1x64x32xf32> to vector<64x32xf32>
    %15 = arith.addf %12, %14 : vector<64x32xf32>
    %cst_14 = arith.constant dense<0.000000e+00> : vector<64xf32>
    %16 = vector.multi_reduction <add>, %15, %cst_14 [1] : vector<64x32xf32> to vector<64xf32>
    %17 = vector.shape_cast %16 : vector<64xf32> to vector<64x1xf32>
    %cst_15 = arith.constant 3.200000e+01 : f32
    %18 = vector.broadcast %cst_15 : f32 to vector<64x1xf32>
    %19 = arith.divf %17, %18 : vector<64x1xf32>
    %20 = vector.broadcast %19 : vector<64x1xf32> to vector<64x32xf32>
    %21 = arith.subf %15, %20 : vector<64x32xf32>
    %22 = arith.mulf %21, %21 : vector<64x32xf32>
    %cst_16 = arith.constant dense<0.000000e+00> : vector<64xf32>
    %23 = vector.multi_reduction <add>, %22, %cst_16 [1] : vector<64x32xf32> to vector<64xf32>
    %24 = vector.shape_cast %23 : vector<64xf32> to vector<64x1xf32>
    %cst_17 = arith.constant 3.200000e+01 : f32
    %25 = vector.broadcast %cst_17 : f32 to vector<64x1xf32>
    %26 = arith.divf %24, %25 : vector<64x1xf32>
    %cst_18 = arith.constant 9.99999974E-6 : f32
    %27 = vector.broadcast %cst_18 : f32 to vector<64x1xf32>
    %28 = arith.addf %26, %27 : vector<64x1xf32>
    %29 = math.rsqrt %28 : vector<64x1xf32>
    %30 = vector.broadcast %29 : vector<64x1xf32> to vector<64x32xf32>
    %31 = arith.mulf %21, %30 : vector<64x32xf32>
    %c0_19 = arith.constant 0 : index
    %c0_20 = arith.constant 0 : index
    %32 = vector.load %arg7[%c0_19, %c0_20] : memref<1x32xf32, #tpu.memory_space<vmem>>, vector<1x32xf32>
    %33 = vector.broadcast %32 : vector<1x32xf32> to vector<64x32xf32>
    %34 = arith.mulf %31, %33 : vector<64x32xf32>
    %c0_21 = arith.constant 0 : index
    %c0_22 = arith.constant 0 : index
    %35 = vector.load %arg8[%c0_21, %c0_22] : memref<1x32xf32, #tpu.memory_space<vmem>>, vector<1x32xf32>
    %36 = vector.broadcast %35 : vector<1x32xf32> to vector<64x32xf32>
    %37 = arith.addf %34, %36 : vector<64x32xf32>
    %c0_23 = arith.constant 0 : index
    %c0_24 = arith.constant 0 : index
    %c0_25 = arith.constant 0 : index
    %38 = vector.load %arg9[%c0_23, %c0_24, %c0_25] : memref<1x64x32xf32, #tpu.memory_space<vmem>>, vector<1x64x32xf32>
    %39 = vector.shape_cast %38 : vector<1x64x32xf32> to vector<64x32xf32>
    %40 = vector.shape_cast %37 : vector<64x32xf32> to vector<1x64x32xf32>
    tpu.vector_store %arg9[%c0_23, %c0_24, %c0_25], %40 {strides = array<i32>} : memref<1x64x32xf32, #tpu.memory_space<vmem>>, vector<1x64x32xf32>,
    return
  }
  func.func @transform_0(%arg0: i32) -> (i32, i32, i32) {
    %c0_i32 = arith.constant 0 : i32
    %c0_i32_0 = arith.constant 0 : i32
    %c0_i32_1 = arith.constant 0 : i32
    return %arg0, %c0_i32, %c0_i32_0 : i32, i32, i32
  }
  func.func @transform_1(%arg0: i32) -> (i32, i32, i32) {
    %c0_i32 = arith.constant 0 : i32
    %c0_i32_0 = arith.constant 0 : i32
    %c0_i32_1 = arith.constant 0 : i32
    return %arg0, %c0_i32, %c0_i32_0 : i32, i32, i32
  }
  func.func @transform_2(%arg0: i32) -> (i32, i32) {
    %c0_i32 = arith.constant 0 : i32
    %c0_i32_0 = arith.constant 0 : i32
    %c0_i32_1 = arith.constant 0 : i32
    return %c0_i32, %c0_i32_0 : i32, i32
  }
  func.func @transform_3(%arg0: i32) -> (i32, i32, i32) {
    %c0_i32 = arith.constant 0 : i32
    %c0_i32_0 = arith.constant 0 : i32
    %c0_i32_1 = arith.constant 0 : i32
    return %arg0, %c0_i32, %c0_i32_0 : i32, i32, i32
  }
  func.func @transform_4(%arg0: i32) -> (i32, i32) {
    %c0_i32 = arith.constant 0 : i32
    %c0_i32_0 = arith.constant 0 : i32
    %c0_i32_1 = arith.constant 0 : i32
    return %c0_i32, %c0_i32_0 : i32, i32
  }
  func.func @transform_5(%arg0: i32) -> (i32, i32) {
    %c0_i32 = arith.constant 0 : i32
    %c0_i32_0 = arith.constant 0 : i32
    %c0_i32_1 = arith.constant 0 : i32
    return %c0_i32, %c0_i32_0 : i32, i32
  }
  func.func @transform_6(%arg0: i32) -> (i32, i32) {
    %c0_i32 = arith.constant 0 : i32
    %c0_i32_0 = arith.constant 0 : i32
    %c0_i32_1 = arith.constant 0 : i32
    return %c0_i32, %c0_i32_0 : i32, i32
  }
  func.func @transform_7(%arg0: i32) -> (i32, i32) {
    %c0_i32 = arith.constant 0 : i32
    %c0_i32_0 = arith.constant 0 : i32
    %c0_i32_1 = arith.constant 0 : i32
    return %c0_i32, %c0_i32_0 : i32, i32
  }
  func.func @transform_8(%arg0: i32) -> (i32, i32, i32) {
    %c0_i32 = arith.constant 0 : i32
    %c0_i32_0 = arith.constant 0 : i32
    %c0_i32_1 = arith.constant 0 : i32
    return %arg0, %c0_i32, %c0_i32_0 : i32, i32, i32
  }
}

module attributes {stable_mosaic.version = 11 : i64} {
  func.func @_norm_linear_kernel(%arg0: i32, %arg1: memref<64x32xf32, #tpu.memory_space<vmem>>, %arg2: memref<1x32xf32, #tpu.memory_space<vmem>>, %arg3: memref<1x32xf32, #tpu.memory_space<vmem>>, %arg4: memref<32x4xf32, #tpu.memory_space<vmem>>, %arg5: memref<1x4xf32, #tpu.memory_space<vmem>>, %arg6: memref<64x4xf32, #tpu.memory_space<vmem>>) attributes {dimension_semantics = [#tpu.dimension_semantics<parallel>], iteration_bounds = array<i64: 2>, scalar_prefetch = 0 : i64, scratch_operands = 0 : i64, tpu.core_type = #tpu.core_type<tc>, window_params = [{transform_indices = @transform_0, window_bounds = array<i64: 64, 32>}, {pipeline_mode = #tpu.pipeline_mode<synchronous>, transform_indices = @transform_1, window_bounds = array<i64: 1, 32>}, {pipeline_mode = #tpu.pipeline_mode<synchronous>, transform_indices = @transform_2, window_bounds = array<i64: 1, 32>}, {pipeline_mode = #tpu.pipeline_mode<synchronous>, transform_indices = @transform_3, window_bounds = array<i64: 32, 4>}, {pipeline_mode = #tpu.pipeline_mode<synchronous>, transform_indices = @transform_4, window_bounds = array<i64: 1, 4>}, {transform_indices = @transform_5, window_bounds = array<i64: 64, 4>}]} {
    %c0 = arith.constant 0 : index
    %c0_0 = arith.constant 0 : index
    %0 = vector.load %arg1[%c0, %c0_0] : memref<64x32xf32, #tpu.memory_space<vmem>>, vector<64x32xf32>
    %cst = arith.constant dense<0.000000e+00> : vector<64xf32>
    %1 = vector.multi_reduction <add>, %0, %cst [1] : vector<64x32xf32> to vector<64xf32>
    %2 = vector.shape_cast %1 : vector<64xf32> to vector<64x1xf32>
    %cst_1 = arith.constant 3.200000e+01 : f32
    %3 = vector.broadcast %cst_1 : f32 to vector<64x1xf32>
    %4 = arith.divf %2, %3 : vector<64x1xf32>
    %5 = vector.broadcast %4 : vector<64x1xf32> to vector<64x32xf32>
    %6 = arith.subf %0, %5 : vector<64x32xf32>
    %7 = arith.mulf %6, %6 : vector<64x32xf32>
    %cst_2 = arith.constant dense<0.000000e+00> : vector<64xf32>
    %8 = vector.multi_reduction <add>, %7, %cst_2 [1] : vector<64x32xf32> to vector<64xf32>
    %9 = vector.shape_cast %8 : vector<64xf32> to vector<64x1xf32>
    %cst_3 = arith.constant 3.200000e+01 : f32
    %10 = vector.broadcast %cst_3 : f32 to vector<64x1xf32>
    %11 = arith.divf %9, %10 : vector<64x1xf32>
    %cst_4 = arith.constant 9.99999974E-6 : f32
    %12 = vector.broadcast %cst_4 : f32 to vector<64x1xf32>
    %13 = arith.addf %11, %12 : vector<64x1xf32>
    %14 = math.rsqrt %13 : vector<64x1xf32>
    %15 = vector.broadcast %14 : vector<64x1xf32> to vector<64x32xf32>
    %16 = arith.mulf %6, %15 : vector<64x32xf32>
    %c0_5 = arith.constant 0 : index
    %c0_6 = arith.constant 0 : index
    %17 = vector.load %arg2[%c0_5, %c0_6] : memref<1x32xf32, #tpu.memory_space<vmem>>, vector<1x32xf32>
    %18 = vector.broadcast %17 : vector<1x32xf32> to vector<64x32xf32>
    %19 = arith.mulf %16, %18 : vector<64x32xf32>
    %c0_7 = arith.constant 0 : index
    %c0_8 = arith.constant 0 : index
    %20 = vector.load %arg3[%c0_7, %c0_8] : memref<1x32xf32, #tpu.memory_space<vmem>>, vector<1x32xf32>
    %21 = vector.broadcast %20 : vector<1x32xf32> to vector<64x32xf32>
    %22 = arith.addf %19, %21 : vector<64x32xf32>
    %c0_9 = arith.constant 0 : index
    %c0_10 = arith.constant 0 : index
    %23 = vector.load %arg4[%c0_9, %c0_10] : memref<32x4xf32, #tpu.memory_space<vmem>>, vector<32x4xf32>
    %cst_11 = arith.constant dense<0.000000e+00> : vector<64x4xf32>
    %24 = tpu.matmul %22, %23, %cst_11 {dimension_numbers = #tpu.dot_dimension_numbers<[1], [0], [0], [1], [0, 0, 1, 1], [], []>} : vector<64x32xf32>, vector<32x4xf32>, vector<64x4xf32> -> vector<64x4xf32>
    %c0_12 = arith.constant 0 : index
    %c0_13 = arith.constant 0 : index
    %25 = vector.load %arg5[%c0_12, %c0_13] : memref<1x4xf32, #tpu.memory_space<vmem>>, vector<1x4xf32>
    %26 = vector.broadcast %25 : vector<1x4xf32> to vector<64x4xf32>
    %27 = arith.addf %24, %26 : vector<64x4xf32>
    %c0_14 = arith.constant 0 : index
    %c0_15 = arith.constant 0 : index
    %28 = vector.load %arg6[%c0_14, %c0_15] : memref<64x4xf32, #tpu.memory_space<vmem>>, vector<64x4xf32>
    tpu.vector_store %arg6[%c0_14, %c0_15], %27 {strides = array<i32>} : memref<64x4xf32, #tpu.memory_space<vmem>>, vector<64x4xf32>,
    return
  }
  func.func @transform_0(%arg0: i32) -> (i32, i32) {
    %c0_i32 = arith.constant 0 : i32
    %c0_i32_0 = arith.constant 0 : i32
    return %arg0, %c0_i32 : i32, i32
  }
  func.func @transform_1(%arg0: i32) -> (i32, i32) {
    %c0_i32 = arith.constant 0 : i32
    %c0_i32_0 = arith.constant 0 : i32
    %c0_i32_1 = arith.constant 0 : i32
    return %c0_i32, %c0_i32_0 : i32, i32
  }
  func.func @transform_2(%arg0: i32) -> (i32, i32) {
    %c0_i32 = arith.constant 0 : i32
    %c0_i32_0 = arith.constant 0 : i32
    %c0_i32_1 = arith.constant 0 : i32
    return %c0_i32, %c0_i32_0 : i32, i32
  }
  func.func @transform_3(%arg0: i32) -> (i32, i32) {
    %c0_i32 = arith.constant 0 : i32
    %c0_i32_0 = arith.constant 0 : i32
    %c0_i32_1 = arith.constant 0 : i32
    return %c0_i32, %c0_i32_0 : i32, i32
  }
  func.func @transform_4(%arg0: i32) -> (i32, i32) {
    %c0_i32 = arith.constant 0 : i32
    %c0_i32_0 = arith.constant 0 : i32
    %c0_i32_1 = arith.constant 0 : i32
    return %c0_i32, %c0_i32_0 : i32, i32
  }
  func.func @transform_5(%arg0: i32) -> (i32, i32) {
    %c0_i32 = arith.constant 0 : i32
    %c0_i32_0 = arith.constant 0 : i32
    return %arg0, %c0_i32 : i32, i32
  }
}

</mosaic_0001>

<llo_original>
// kernel: ed_forward.21
$region0: #{ed_forward.21}
  #allocation0 [shape = 'u32[]', space=smem, size = 0x4, offset = 0x4, fixed_abs, tag = 'smem constant byte address 0x4 - core index']
  #allocation1 [shape = 'u32[144,128]{1,0:T(1,128)}', space=vmem, size = 0x12000, scoped, tag = 'internal scratch']
  %s0 = inlined_call_operand.vmem [shape: f32[128,32], index: 0, kind: input, shape index: {}]
  %s1 = inlined_call_operand.vmem [shape: f32[32,128], index: 1, kind: input, shape index: {}]
  %s2 = inlined_call_operand.vmem [shape: f32[1,128], index: 2, kind: input, shape index: {}]
  %s3 = inlined_call_operand.vmem [shape: f32[128,128], index: 3, kind: output, shape index: {}]
  %s4 = sld [smem:[#allocation0]]
  $region45: #{ed_forward.21} parent=0
    _
  %s6 = ssub.s32 1, %s4
  %s7 = scalar_select 0, %s6, %s4
  loop: start=0, step=1, limit=4
  $region2: #{ed_forward.21} parent=0 // loop_pre_header
    _
  $region3: #{ed_forward.21} parent=0 // loop_header
    %s9 = sphi 0, %s13
    %p10 = scmp.ge.s32.totalorder %s9, 4
    %s19 = sphi 0, %s21
    %s22 = sphi 0, %s19
    %s23 = sphi 0, %s22
    %s39 = sphi 0, %s23
    %s43 = sphi 0, %s43
    %s45 = sphi 0, %s43
    %s46 = sphi 0, %s45
    %s60 = sphi 0, %s46
    %s64 = sphi 0, %s64
    %s66 = sphi 0, %s64
    %s67 = sphi 0, %s66
    %s81 = sphi 0, %s67
    %s87 = sphi 0, %s89
    %s90 = sphi 0, %s87
    %s91 = sphi 0, %s90
    %s107 = sphi 0, %s91
  $region4: #{ed_forward.21} parent=0 // loop_header_branch
    %12 = sbr.rel (%p10) target = $region8
  $region5: #{ed_forward.21} parent=0 // loop_body
    %s14 = ssub.s32 %s9, 1
    %s15 = ssub.s32 %s9, 2
    %s16 = sadd.s32 %s9, 1
    %s17 = ssub.s32 %s9, %s16
    %p18 = scmp.eq.s32.totalorder %s17, 0
    %s20 = sadd.s32 %s19, 1
    %s21 = scalar_select %p18, %s19, %s20
    %p24 = pneg %p18
    %p25 = scmp.eq.s32.totalorder %s9, 1
    %p26 = por %p24, %p25
    %p27 = scmp.ne.s32.totalorder %s19, %s22
    %p28 = scmp.eq.s32.totalorder %s9, 0
    %p29 = por %p27, %p28
    %p30 = scmp.ne.s32.totalorder %s19, %s22
    %p31 = scmp.eq.s32.totalorder %s14, 1
    %p32 = por %p30, %p31
    %p33 = scmp.ne.s32.totalorder %s22, %s23
    %p34 = scmp.eq.s32.totalorder %s14, 0
    %p35 = por %p33, %p34
    %p36 = scmp.ne.s32.totalorder %s22, %s23
    %p37 = scmp.eq.s32.totalorder %s15, 1
    %p38 = por %p36, %p37
    %p40 = scmp.ne.s32.totalorder %s23, %s39
    %p41 = scmp.eq.s32.totalorder %s15, 0
    %p42 = por %p40, %p41
    %s44 = sadd.s32 %s43, 1
    %p47 = scmp.eq.s32.totalorder %s9, 1
    %p48 = scmp.ne.s32.totalorder %s43, %s45
    %p49 = scmp.eq.s32.totalorder %s9, 0
    %p50 = por %p48, %p49
    %p51 = scmp.ne.s32.totalorder %s43, %s45
    %p52 = scmp.eq.s32.totalorder %s14, 1
    %p53 = por %p51, %p52
    %p54 = scmp.ne.s32.totalorder %s45, %s46
    %p55 = scmp.eq.s32.totalorder %s14, 0
    %p56 = por %p54, %p55
    %p57 = scmp.ne.s32.totalorder %s45, %s46
    %p58 = scmp.eq.s32.totalorder %s15, 1
    %p59 = por %p57, %p58
    %p61 = scmp.ne.s32.totalorder %s46, %s60
    %p62 = scmp.eq.s32.totalorder %s15, 0
    %p63 = por %p61, %p62
    %s65 = sadd.s32 %s64, 1
    %p68 = scmp.eq.s32.totalorder %s9, 1
    %p69 = scmp.ne.s32.totalorder %s64, %s66
    %p70 = scmp.eq.s32.totalorder %s9, 0
    %p71 = por %p69, %p70
    %p72 = scmp.ne.s32.totalorder %s64, %s66
    %p73 = scmp.eq.s32.totalorder %s14, 1
    %p74 = por %p72, %p73
    %p75 = scmp.ne.s32.totalorder %s66, %s67
    %p76 = scmp.eq.s32.totalorder %s14, 0
    %p77 = por %p75, %p76
    %p78 = scmp.ne.s32.totalorder %s66, %s67
    %p79 = scmp.eq.s32.totalorder %s15, 1
    %p80 = por %p78, %p79
    %p82 = scmp.ne.s32.totalorder %s67, %s81
    %p83 = scmp.eq.s32.totalorder %s15, 0
    %p84 = por %p82, %p83
    %s85 = ssub.s32 %s9, %s16
    %p86 = scmp.eq.s32.totalorder %s85, 0
    %s88 = sadd.s32 %s87, 1
    %s89 = scalar_select %p86, %s87, %s88
    %p92 = pneg %p86
    %p93 = scmp.eq.s32.totalorder %s9, 1
    %p94 = por %p92, %p93
    %p95 = scmp.ne.s32.totalorder %s87, %s90
    %p96 = scmp.eq.s32.totalorder %s9, 0
    %p97 = por %p95, %p96
    %p98 = scmp.ne.s32.totalorder %s87, %s90
    %p99 = scmp.eq.s32.totalorder %s14, 1
    %p100 = por %p98, %p99
    %p101 = scmp.ne.s32.totalorder %s90, %s91
    %p102 = scmp.eq.s32.totalorder %s14, 0
    %p103 = por %p101, %p102
    %p104 = scmp.ne.s32.totalorder %s90, %s91
    %p105 = scmp.eq.s32.totalorder %s15, 1
    %p106 = por %p104, %p105
    %p108 = scmp.ne.s32.totalorder %s91, %s107
    %p109 = scmp.eq.s32.totalorder %s15, 0
    %p110 = por %p108, %p109
    %p111 = scmp.le.s32.totalorder 1, %s9
    %p112 = scmp.lt.s32.totalorder %s9, 3
    %p113 = pnand %p111, %p112
    %p114 = pneg %p113
    // Predicated region
    $region9: #{ed_forward.21} parent=5 // pred_check
      _
    $region10: #{ed_forward.21} parent=5 // pred_check_branch
      %116 = sbr.rel (%p113) target = $region12
    $region11: #{ed_forward.21} parent=5 // pred_region
      %s117 = ssub.s32 %s9, 1
      // Predicated region
      $region13: #{ed_forward.21} parent=11 // pred_check
        %p118 = pneg %p56
      $region14: #{ed_forward.21} parent=11 // pred_check_branch
        %120 = sbr.rel (%p118) target = $region16
      $region15: #{ed_forward.21} parent=11 // pred_region
        _
      $region16: #{ed_forward.21} parent=11 // pred_fallthru
        _
      // Predicated region
      $region17: #{ed_forward.21} parent=11 // pred_check
        %p121 = pneg %p77
      $region18: #{ed_forward.21} parent=11 // pred_check_branch
        %123 = sbr.rel (%p121) target = $region20
      $region19: #{ed_forward.21} parent=11 // pred_region
        _
      $region20: #{ed_forward.21} parent=11 // pred_fallthru
        _
    $region12: #{ed_forward.21} parent=5 // pred_fallthru
      _
    %p124 = scmp.lt.s32.totalorder %s9, 2
    // Predicated region
    $region21: #{ed_forward.21} parent=5 // pred_check
      %p125 = pneg %p124
    $region22: #{ed_forward.21} parent=5 // pred_check_branch
      %127 = sbr.rel (%p125) target = $region24
    $region23: #{ed_forward.21} parent=5 // pred_region
      // Predicated region
      $region25: #{ed_forward.21} parent=23 // pred_check
        %p128 = pneg %p29
      $region26: #{ed_forward.21} parent=23 // pred_check_branch
        %130 = sbr.rel (%p128) target = $region28
      $region27: #{ed_forward.21} parent=23 // pred_region
        %s131 = smul.u32 8, %s9
        %p132 = scmp.lt.s32.totalorder %s131, 15
        %s133 = scalar_select %p132, %s131, 15
        %s134 = smul.addr %s133, 8
        %s135 = scalar_lea.vmem %s0, %s134
        %s136 = smul.u32 8, %s9
      $region28: #{ed_forward.21} parent=23 // pred_fallthru
        _
    $region24: #{ed_forward.21} parent=5 // pred_fallthru
      _
    %p137 = scmp.le.s32.totalorder 1, %s9
    %p138 = scmp.lt.s32.totalorder %s9, 3
    %p139 = pnand %p137, %p138
    %p140 = pneg %p139
    // Predicated region
    $region29: #{ed_forward.21} parent=5 // pred_check
      _
    $region30: #{ed_forward.21} parent=5 // pred_check_branch
      %142 = sbr.rel (%p139) target = $region32
    $region31: #{ed_forward.21} parent=5 // pred_region
      %s143 = ssub.s32 %s9, 1
      %s144 = smul.u32 8, %s14
      %p145 = scmp.lt.s32.totalorder %s144, 15
      %s146 = scalar_select %p145, %s144, 15
      %s147 = smul.addr %s146, 8
      %s148 = scalar_lea.vmem %s0, %s147
      %p149 = pneg %p35
      %p150 = pneg %p32
      %p151 = pneg %p56
      %p152 = pneg %p53
      %p153 = pneg %p77
      %p154 = pneg %p74
      %p155 = pneg %p103
      %p156 = pneg %p100
      %s157 = smul.u32 8, %s14
      %p158 = scmp.lt.s32.totalorder %s157, 15
      %s159 = scalar_select %p158, %s157, 15
      %s160 = smul.addr %s159, 8
      %s161 = scalar_lea.vmem %s3, %s160
      %s162 = smul.u32 8, %s14
      %p163 = scmp.lt.s32.totalorder %s162, 15
      %s164 = scalar_select %p163, %s162, 15
      %s165 = smul.addr %s164, 8
      %s166 = scalar_lea.vmem %s0, %s165
      %s167 = smul.u32 8, %s14
      %s168 = smul.u32 8, %s14
      %p169 = scmp.lt.s32.totalorder %s168, 15
      %s170 = scalar_select %p169, %s168, 15
      %s171 = smul.addr %s170, 8
      %s172 = scalar_lea.vmem %s3, %s171
      %s173 = smul.u32 8, %s14
      %v174 = vld [vmem:[%s166] sm:$0xff]
      %v175 = vld [vmem:[%s166 + $0x8] sm:$0xff]
      %v176 = vld [vmem:[%s166 + $0x10] sm:$0xff]
      %v177 = vld [vmem:[%s166 + $0x18] sm:$0xff]
      %v178 = vld [vmem:[%s166 + $0x20] sm:$0xff]
      %v179 = vld [vmem:[%s166 + $0x28] sm:$0xff]
      %v180 = vld [vmem:[%s166 + $0x30] sm:$0xff]
      %v181 = vld [vmem:[%s166 + $0x38] sm:$0xff]
      %v182 = vld [vmem:[%s1] sm:$0xff]
      %v183 = vld [vmem:[%s1 + $0x8] sm:$0xff]
      %v184 = vld [vmem:[%s1 + $0x10] sm:$0xff]
      %v185 = vld [vmem:[%s1 + $0x18] sm:$0xff]
      %v186 = vld [vmem:[%s2] sm:$0x1]
      %v188 = vlaneseq
      %v189 = vshrl.u32 %v188, 7
      %v190 = vsub.s32 0, %v189
      %v191 = vrot.slane %v186, %v190
      %vm193 = vcmask 261120
      %v195 = vsel %vm193, %v174, 0
      %v198 = vsel %vm193, %v175, 0
      %v201 = vsel %vm193, %v176, 0
      %v204 = vsel %vm193, %v177, 0
      %v207 = vsel %vm193, %v178, 0
      %v210 = vsel %vm193, %v179, 0
      %v213 = vsel %vm193, %v180, 0
      %v216 = vsel %vm193, %v181, 0
      %218 = vmatprep.subr.mxu0 0.0
      %219 = vmatpush1.msra.mxu0 0.0
      %220 = vmatprep.subr.mxu0 0.0
      %221 = vmatpush1.msra.mxu0 0.0
      %222 = vmatprep.subr.mxu0 0.0
      %223 = vmatpush1.msra.mxu0 0.0
      %224 = vmatprep.subr.mxu0 0.0
      %225 = vmatpush1.msra.mxu0 0.0
      %226 = vmatprep.subr.mxu0 0.0
      %227 = vmatpush1.msra.mxu0 0.0
      %228 = vmatprep.subr.mxu0 0.0
      %229 = vmatpush1.msra.mxu0 0.0
      %230 = vmatprep.subr.mxu0 0.0
      %231 = vmatpush1.msra.mxu0 0.0
      %232 = vmatprep.subr.mxu0 0.0
      %233 = vmatpush1.msra.mxu0 0.0
      %234 = vmatprep.subr.mxu0 0.0
      %235 = vmatpush1.msra.mxu0 0.0
      %236 = vmatprep.subr.mxu0 0.0
      %237 = vmatpush1.msra.mxu0 0.0
      %238 = vmatprep.subr.mxu0 0.0
      %239 = vmatpush1.msra.mxu0 0.0
      %240 = vmatprep.subr.mxu0 0.0
      %241 = vmatpush1.msra.mxu0 0.0
      %242 = vmatprep.subr.mxu0 0.0
      %243 = vmatpush1.msra.mxu0 %v185
      %244 = vmatprep.subr.mxu0 0.0
      %245 = vmatpush1.msra.mxu0 %v184
      %246 = vmatprep.subr.mxu0 0.0
      %247 = vmatpush1.msra.mxu0 %v183
      %248 = vmatprep.subr.mxu0 0.0
      %249 = vmatpush1.msra.mxu0 %v182
      %250 = vmatprep.subr.mxu0 0.0
      %251 = vmatpush2.msra.mxu0 0.0
      %252 = vmatprep.subr.mxu0 0.0
      %253 = vmatpush2.msra.mxu0 0.0
      %254 = vmatprep.subr.mxu0 0.0
      %255 = vmatpush2.msra.mxu0 0.0
      %256 = vmatprep.subr.mxu0 0.0
      %257 = vmatpush2.msra.mxu0 0.0
      %258 = vmatprep.subr.mxu0 0.0
      %259 = vmatpush2.msra.mxu0 0.0
      %260 = vmatprep.subr.mxu0 0.0
      %261 = vmatpush2.msra.mxu0 0.0
      %262 = vmatprep.subr.mxu0 0.0
      %263 = vmatpush2.msra.mxu0 0.0
      %264 = vmatprep.subr.mxu0 0.0
      %265 = vmatpush2.msra.mxu0 0.0
      %266 = vmatprep.subr.mxu0 0.0
      %267 = vmatpush2.msra.mxu0 0.0
      %268 = vmatprep.subr.mxu0 0.0
      %269 = vmatpush2.msra.mxu0 0.0
      %270 = vmatprep.subr.mxu0 0.0
      %271 = vmatpush2.msra.mxu0 0.0
      %272 = vmatprep.subr.mxu0 0.0
      %273 = vmatpush2.msra.mxu0 0.0
      %274 = vmatprep.subr.mxu0 0.0
      %275 = vmatpush2.msra.mxu0 0.0
      %276 = vmatprep.subr.mxu0 0.0
      %277 = vmatpush2.msra.mxu0 0.0
      %278 = vmatprep.subr.mxu0 0.0
      %279 = vmatpush2.msra.mxu0 0.0
      %280 = vmatprep.subr.mxu0 0.0
      %281 = vmatpush2.msra.mxu0 0.0
      %282 = vmatprep.mubr.f32.mxu0 0.0
      %283 = vmatmul.mubr.f32.gmra.mxu0 %v195
      %v284 = vpop.f32.mrf.mxu0
      %v285 = vadd.f32 %v191, %v284
      %v286 = vpop.f32.mrf.mxu0
      %287 = vmatprep.mubr.f32.mxu0 0.0
      %288 = vmatmul.mubr.f32.gmra.mxu0 %v198
      %v289 = vpop.f32.mrf.mxu0
      %v290 = vadd.f32 %v191, %v289
      %v291 = vpop.f32.mrf.mxu0
      %292 = vmatprep.mubr.f32.mxu0 0.0
      %293 = vmatmul.mubr.f32.gmra.mxu0 %v201
      %v294 = vpop.f32.mrf.mxu0
      %v295 = vadd.f32 %v191, %v294
      %v296 = vpop.f32.mrf.mxu0
      %297 = vmatprep.mubr.f32.mxu0 0.0
      %298 = vmatmul.mubr.f32.gmra.mxu0 %v204
      %v299 = vpop.f32.mrf.mxu0
      %v300 = vadd.f32 %v191, %v299
      %v301 = vpop.f32.mrf.mxu0
      %302 = vmatprep.mubr.f32.mxu0 0.0
      %303 = vmatmul.mubr.f32.gmra.mxu0 %v207
      %v304 = vpop.f32.mrf.mxu0
      %v305 = vadd.f32 %v191, %v304
      %v306 = vpop.f32.mrf.mxu0
      %307 = vmatprep.mubr.f32.mxu0 0.0
      %308 = vmatmul.mubr.f32.gmra.mxu0 %v210
      %v309 = vpop.f32.mrf.mxu0
      %v310 = vadd.f32 %v191, %v309
      %v311 = vpop.f32.mrf.mxu0
      %312 = vmatprep.mubr.f32.mxu0 0.0
      %313 = vmatmul.mubr.f32.gmra.mxu0 %v213
      %v314 = vpop.f32.mrf.mxu0
      %v315 = vadd.f32 %v191, %v314
      %v316 = vpop.f32.mrf.mxu0
      %317 = vmatprep.mubr.f32.mxu0 0.0
      %318 = vmatmul.mubr.f32.gmra.mxu0 %v216
      %v319 = vpop.f32.mrf.mxu0
      %v320 = vadd.f32 %v191, %v319
      %v321 = vpop.f32.mrf.mxu0
      %322 = vdwg.mxu0
      %323 = vst [vmem:[%s172] sm:$0xff] %v285
      %324 = vst [vmem:[%s172 + $0x8] sm:$0xff] %v290
      %325 = vst [vmem:[%s172 + $0x10] sm:$0xff] %v295
      %326 = vst [vmem:[%s172 + $0x18] sm:$0xff] %v300
      %327 = vst [vmem:[%s172 + $0x20] sm:$0xff] %v305
      %328 = vst [vmem:[%s172 + $0x28] sm:$0xff] %v310
      %329 = vst [vmem:[%s172 + $0x30] sm:$0xff] %v315
      %330 = vst [vmem:[%s172 + $0x38] sm:$0xff] %v320
      %s331 = smul.u32 8, %s14
      %p332 = scmp.lt.s32.totalorder %s331, 15
      %s333 = scalar_select %p332, %s331, 15
      %s334 = smul.addr %s333, 8
      %s335 = scalar_lea.vmem %s3, %s334
      // Predicated region
      $region33: #{ed_forward.21} parent=31 // pred_check
        %p336 = pneg %p100
      $region34: #{ed_forward.21} parent=31 // pred_check_branch
        %338 = sbr.rel (%p336) target = $region36
      $region35: #{ed_forward.21} parent=31 // pred_region
        %s339 = smul.u32 8, %s14
      $region36: #{ed_forward.21} parent=31 // pred_fallthru
        _
    $region32: #{ed_forward.21} parent=5 // pred_fallthru
      _
    %p340 = scmp.le.s32.totalorder 2, %s9
    // Predicated region
    $region37: #{ed_forward.21} parent=5 // pred_check
      %p341 = pneg %p340
    $region38: #{ed_forward.21} parent=5 // pred_check_branch
      %343 = sbr.rel (%p341) target = $region40
    $region39: #{ed_forward.21} parent=5 // pred_region
      %s344 = ssub.s32 %s9, 2
      // Predicated region
      $region41: #{ed_forward.21} parent=39 // pred_check
        %p345 = pneg %p106
      $region42: #{ed_forward.21} parent=39 // pred_check_branch
        %347 = sbr.rel (%p345) target = $region44
      $region43: #{ed_forward.21} parent=39 // pred_region
        %s348 = smul.u32 8, %s15
        %p349 = scmp.lt.s32.totalorder %s348, 15
        %s350 = scalar_select %p349, %s348, 15
        %s351 = smul.addr %s350, 8
        %s352 = scalar_lea.vmem %s3, %s351
      $region44: #{ed_forward.21} parent=39 // pred_fallthru
        _
    $region40: #{ed_forward.21} parent=5 // pred_fallthru
      _
  $region6: #{ed_forward.21} parent=0 // loop_footer
    %s13 = sadd.s32 1, %s9
  $region7: #{ed_forward.21} parent=0 // loop_footer_branch
    %8 = sbr.rel target = $region3
  $region8: #{ed_forward.21} parent=0 // loop_exit
    _

// kernel: ed_forward.19
$region0: #{ed_forward.19}
  #allocation0 [shape = 'u32[]', space=smem, size = 0x4, offset = 0x4, fixed_abs, tag = 'smem constant byte address 0x4 - core index']
  #allocation1 [shape = 'u32[144,128]{1,0:T(1,128)}', space=vmem, size = 0x12000, scoped, tag = 'internal scratch']
  %s0 = inlined_call_operand.vmem [shape: f32[2,64,4], index: 0, kind: input, shape index: {}]
  %s1 = inlined_call_operand.vmem [shape: f32[4,32], index: 1, kind: input, shape index: {}]
  %s2 = inlined_call_operand.vmem [shape: f32[1,32], index: 2, kind: input, shape index: {}]
  %s3 = inlined_call_operand.vmem [shape: f32[1,64,32], index: 3, kind: input, shape index: {}]
  %s4 = inlined_call_operand.vmem [shape: f32[2,64,32], index: 4, kind: output, shape index: {}]
  %s5 = sld [smem:[#allocation0]]
  $region49: #{ed_forward.19} parent=0
    _
  %s7 = ssub.s32 1, %s5
  %s8 = scalar_select 0, %s7, %s5
  loop: start=0, step=1, limit=4
  $region2: #{ed_forward.19} parent=0 // loop_pre_header
    _
  $region3: #{ed_forward.19} parent=0 // loop_header
    %s10 = sphi 0, %s14
    %p11 = scmp.ge.s32.totalorder %s10, 4
    %s20 = sphi 0, %s22
    %s23 = sphi 0, %s20
    %s24 = sphi 0, %s23
    %s40 = sphi 0, %s24
    %s44 = sphi 0, %s44
    %s46 = sphi 0, %s44
    %s47 = sphi 0, %s46
    %s61 = sphi 0, %s47
    %s65 = sphi 0, %s65
    %s67 = sphi 0, %s65
    %s68 = sphi 0, %s67
    %s82 = sphi 0, %s68
    %s86 = sphi 0, %s86
    %s88 = sphi 0, %s86
    %s89 = sphi 0, %s88
    %s103 = sphi 0, %s89
    %s109 = sphi 0, %s111
    %s112 = sphi 0, %s109
    %s113 = sphi 0, %s112
    %s129 = sphi 0, %s113
  $region4: #{ed_forward.19} parent=0 // loop_header_branch
    %13 = sbr.rel (%p11) target = $region8
  $region5: #{ed_forward.19} parent=0 // loop_body
    %s15 = ssub.s32 %s10, 1
    %s16 = ssub.s32 %s10, 2
    %s17 = sadd.s32 %s10, 1
    %s18 = ssub.s32 %s10, %s17
    %p19 = scmp.eq.s32.totalorder %s18, 0
    %s21 = sadd.s32 %s20, 1
    %s22 = scalar_select %p19, %s20, %s21
    %p25 = pneg %p19
    %p26 = scmp.eq.s32.totalorder %s10, 1
    %p27 = por %p25, %p26
    %p28 = scmp.ne.s32.totalorder %s20, %s23
    %p29 = scmp.eq.s32.totalorder %s10, 0
    %p30 = por %p28, %p29
    %p31 = scmp.ne.s32.totalorder %s20, %s23
    %p32 = scmp.eq.s32.totalorder %s15, 1
    %p33 = por %p31, %p32
    %p34 = scmp.ne.s32.totalorder %s23, %s24
    %p35 = scmp.eq.s32.totalorder %s15, 0
    %p36 = por %p34, %p35
    %p37 = scmp.ne.s32.totalorder %s23, %s24
    %p38 = scmp.eq.s32.totalorder %s16, 1
    %p39 = por %p37, %p38
    %p41 = scmp.ne.s32.totalorder %s24, %s40
    %p42 = scmp.eq.s32.totalorder %s16, 0
    %p43 = por %p41, %p42
    %s45 = sadd.s32 %s44, 1
    %p48 = scmp.eq.s32.totalorder %s10, 1
    %p49 = scmp.ne.s32.totalorder %s44, %s46
    %p50 = scmp.eq.s32.totalorder %s10, 0
    %p51 = por %p49, %p50
    %p52 = scmp.ne.s32.totalorder %s44, %s46
    %p53 = scmp.eq.s32.totalorder %s15, 1
    %p54 = por %p52, %p53
    %p55 = scmp.ne.s32.totalorder %s46, %s47
    %p56 = scmp.eq.s32.totalorder %s15, 0
    %p57 = por %p55, %p56
    %p58 = scmp.ne.s32.totalorder %s46, %s47
    %p59 = scmp.eq.s32.totalorder %s16, 1
    %p60 = por %p58, %p59
    %p62 = scmp.ne.s32.totalorder %s47, %s61
    %p63 = scmp.eq.s32.totalorder %s16, 0
    %p64 = por %p62, %p63
    %s66 = sadd.s32 %s65, 1
    %p69 = scmp.eq.s32.totalorder %s10, 1
    %p70 = scmp.ne.s32.totalorder %s65, %s67
    %p71 = scmp.eq.s32.totalorder %s10, 0
    %p72 = por %p70, %p71
    %p73 = scmp.ne.s32.totalorder %s65, %s67
    %p74 = scmp.eq.s32.totalorder %s15, 1
    %p75 = por %p73, %p74
    %p76 = scmp.ne.s32.totalorder %s67, %s68
    %p77 = scmp.eq.s32.totalorder %s15, 0
    %p78 = por %p76, %p77
    %p79 = scmp.ne.s32.totalorder %s67, %s68
    %p80 = scmp.eq.s32.totalorder %s16, 1
    %p81 = por %p79, %p80
    %p83 = scmp.ne.s32.totalorder %s68, %s82
    %p84 = scmp.eq.s32.totalorder %s16, 0
    %p85 = por %p83, %p84
    %s87 = sadd.s32 %s86, 1
    %p90 = scmp.eq.s32.totalorder %s10, 1
    %p91 = scmp.ne.s32.totalorder %s86, %s88
    %p92 = scmp.eq.s32.totalorder %s10, 0
    %p93 = por %p91, %p92
    %p94 = scmp.ne.s32.totalorder %s86, %s88
    %p95 = scmp.eq.s32.totalorder %s15, 1
    %p96 = por %p94, %p95
    %p97 = scmp.ne.s32.totalorder %s88, %s89
    %p98 = scmp.eq.s32.totalorder %s15, 0
    %p99 = por %p97, %p98
    %p100 = scmp.ne.s32.totalorder %s88, %s89
    %p101 = scmp.eq.s32.totalorder %s16, 1
    %p102 = por %p100, %p101
    %p104 = scmp.ne.s32.totalorder %s89, %s103
    %p105 = scmp.eq.s32.totalorder %s16, 0
    %p106 = por %p104, %p105
    %s107 = ssub.s32 %s10, %s17
    %p108 = scmp.eq.s32.totalorder %s107, 0
    %s110 = sadd.s32 %s109, 1
    %s111 = scalar_select %p108, %s109, %s110
    %p114 = pneg %p108
    %p115 = scmp.eq.s32.totalorder %s10, 1
    %p116 = por %p114, %p115
    %p117 = scmp.ne.s32.totalorder %s109, %s112
    %p118 = scmp.eq.s32.totalorder %s10, 0
    %p119 = por %p117, %p118
    %p120 = scmp.ne.s32.totalorder %s109, %s112
    %p121 = scmp.eq.s32.totalorder %s15, 1
    %p122 = por %p120, %p121
    %p123 = scmp.ne.s32.totalorder %s112, %s113
    %p124 = scmp.eq.s32.totalorder %s15, 0
    %p125 = por %p123, %p124
    %p126 = scmp.ne.s32.totalorder %s112, %s113
    %p127 = scmp.eq.s32.totalorder %s16, 1
    %p128 = por %p126, %p127
    %p130 = scmp.ne.s32.totalorder %s113, %s129
    %p131 = scmp.eq.s32.totalorder %s16, 0
    %p132 = por %p130, %p131
    %p133 = scmp.le.s32.totalorder 1, %s10
    %p134 = scmp.lt.s32.totalorder %s10, 3
    %p135 = pnand %p133, %p134
    %p136 = pneg %p135
    // Predicated region
    $region9: #{ed_forward.19} parent=5 // pred_check
      _
    $region10: #{ed_forward.19} parent=5 // pred_check_branch
      %138 = sbr.rel (%p135) target = $region12
    $region11: #{ed_forward.19} parent=5 // pred_region
      %s139 = ssub.s32 %s10, 1
      // Predicated region
      $region13: #{ed_forward.19} parent=11 // pred_check
        %p140 = pneg %p57
      $region14: #{ed_forward.19} parent=11 // pred_check_branch
        %142 = sbr.rel (%p140) target = $region16
      $region15: #{ed_forward.19} parent=11 // pred_region
        _
      $region16: #{ed_forward.19} parent=11 // pred_fallthru
        _
      // Predicated region
      $region17: #{ed_forward.19} parent=11 // pred_check
        %p143 = pneg %p78
      $region18: #{ed_forward.19} parent=11 // pred_check_branch
        %145 = sbr.rel (%p143) target = $region20
      $region19: #{ed_forward.19} parent=11 // pred_region
        _
      $region20: #{ed_forward.19} parent=11 // pred_fallthru
        _
      // Predicated region
      $region21: #{ed_forward.19} parent=11 // pred_check
        %p146 = pneg %p99
      $region22: #{ed_forward.19} parent=11 // pred_check_branch
        %148 = sbr.rel (%p146) target = $region24
      $region23: #{ed_forward.19} parent=11 // pred_region
        _
      $region24: #{ed_forward.19} parent=11 // pred_fallthru
        _
    $region12: #{ed_forward.19} parent=5 // pred_fallthru
      _
    %p149 = scmp.lt.s32.totalorder %s10, 2
    // Predicated region
    $region25: #{ed_forward.19} parent=5 // pred_check
      %p150 = pneg %p149
    $region26: #{ed_forward.19} parent=5 // pred_check_branch
      %152 = sbr.rel (%p150) target = $region28
    $region27: #{ed_forward.19} parent=5 // pred_region
      // Predicated region
      $region29: #{ed_forward.19} parent=27 // pred_check
        %p153 = pneg %p30
      $region30: #{ed_forward.19} parent=27 // pred_check_branch
        %155 = sbr.rel (%p153) target = $region32
      $region31: #{ed_forward.19} parent=27 // pred_region
        %p156 = scmp.lt.s32.totalorder %s10, 1
        %s157 = scalar_select %p156, %s10, 1
        %s158 = smul.addr %s157, 8
        %s159 = smul.addr %s158, 8
        %s160 = scalar_lea.vmem %s0, %s159
      $region32: #{ed_forward.19} parent=27 // pred_fallthru
        _
    $region28: #{ed_forward.19} parent=5 // pred_fallthru
      _
    %p161 = scmp.le.s32.totalorder 1, %s10
    %p162 = scmp.lt.s32.totalorder %s10, 3
    %p163 = pnand %p161, %p162
    %p164 = pneg %p163
    // Predicated region
    $region33: #{ed_forward.19} parent=5 // pred_check
      _
    $region34: #{ed_forward.19} parent=5 // pred_check_branch
      %166 = sbr.rel (%p163) target = $region36
    $region35: #{ed_forward.19} parent=5 // pred_region
      %s167 = ssub.s32 %s10, 1
      %p168 = scmp.lt.s32.totalorder %s15, 1
      %s169 = scalar_select %p168, %s15, 1
      %s170 = smul.addr %s169, 8
      %s171 = smul.addr %s170, 8
      %s172 = scalar_lea.vmem %s0, %s171
      %p173 = pneg %p36
      %p174 = pneg %p33
      %p175 = pneg %p57
      %p176 = pneg %p54
      %p177 = pneg %p78
      %p178 = pneg %p75
      %p179 = pneg %p99
      %p180 = pneg %p96
      %p181 = pneg %p125
      %p182 = pneg %p122
      %p183 = scmp.lt.s32.totalorder %s15, 1
      %s184 = scalar_select %p183, %s15, 1
      %s185 = smul.addr %s184, 8
      %s186 = smul.addr %s185, 8
      %s187 = scalar_lea.vmem %s4, %s186
      %p188 = scmp.lt.s32.totalorder %s15, 1
      %s189 = scalar_select %p188, %s15, 1
      %s190 = smul.addr %s189, 8
      %s191 = smul.addr %s190, 8
      %s192 = scalar_lea.vmem %s0, %s191
      %p193 = scmp.lt.s32.totalorder %s15, 1
      %s194 = scalar_select %p193, %s15, 1
      %s195 = smul.addr %s194, 8
      %s196 = smul.addr %s195, 8
      %s197 = scalar_lea.vmem %s4, %s196
      %v198 = vld [vmem:[%s192] sm:$0xff]
      %v199 = vld [vmem:[%s192 + $0x8] sm:$0xff]
      %v200 = vld [vmem:[%s192 + $0x10] sm:$0xff]
      %v201 = vld [vmem:[%s192 + $0x18] sm:$0xff]
      %v202 = vld [vmem:[%s192 + $0x20] sm:$0xff]
      %v203 = vld [vmem:[%s192 + $0x28] sm:$0xff]
      %v204 = vld [vmem:[%s192 + $0x30] sm:$0xff]
      %v205 = vld [vmem:[%s192 + $0x38] sm:$0xff]
      %v206 = vld [vmem:[%s1] sm:$0xf]
      %v207 = vld [vmem:[%s2] sm:$0x1]
      %v209 = vlaneseq
      %v210 = vshrl.u32 %v209, 7
      %v211 = vsub.s32 0, %v210
      %v212 = vrot.slane %v207, %v211
      %vm214 = vcmask 31744
      %v216 = vsel %vm214, %v198, 0
      %v219 = vsel %vm214, %v199, 0
      %v222 = vsel %vm214, %v200, 0
      %v225 = vsel %vm214, %v201, 0
      %v228 = vsel %vm214, %v202, 0
      %v231 = vsel %vm214, %v203, 0
      %v234 = vsel %vm214, %v204, 0
      %v237 = vsel %vm214, %v205, 0
      %vm239 = vcmask 1043456
      %v241 = vsel %vm239, %v206, 0
      %243 = vmatprep.subr.mxu0 0.0
      %244 = vmatpush1.msra.mxu0 0.0
      %245 = vmatprep.subr.mxu0 0.0
      %246 = vmatpush1.msra.mxu0 0.0
      %247 = vmatprep.subr.mxu0 0.0
      %248 = vmatpush1.msra.mxu0 0.0
      %249 = vmatprep.subr.mxu0 0.0
      %250 = vmatpush1.msra.mxu0 0.0
      %251 = vmatprep.subr.mxu0 0.0
      %252 = vmatpush1.msra.mxu0 0.0
      %253 = vmatprep.subr.mxu0 0.0
      %254 = vmatpush1.msra.mxu0 0.0
      %255 = vmatprep.subr.mxu0 0.0
      %256 = vmatpush1.msra.mxu0 0.0
      %257 = vmatprep.subr.mxu0 0.0
      %258 = vmatpush1.msra.mxu0 0.0
      %259 = vmatprep.subr.mxu0 0.0
      %260 = vmatpush1.msra.mxu0 0.0
      %261 = vmatprep.subr.mxu0 0.0
      %262 = vmatpush1.msra.mxu0 0.0
      %263 = vmatprep.subr.mxu0 0.0
      %264 = vmatpush1.msra.mxu0 0.0
      %265 = vmatprep.subr.mxu0 0.0
      %266 = vmatpush1.msra.mxu0 0.0
      %267 = vmatprep.subr.mxu0 0.0
      %268 = vmatpush1.msra.mxu0 0.0
      %269 = vmatprep.subr.mxu0 0.0
      %270 = vmatpush1.msra.mxu0 0.0
      %271 = vmatprep.subr.mxu0 0.0
      %272 = vmatpush1.msra.mxu0 0.0
      %273 = vmatprep.subr.mxu0 0.0
      %274 = vmatpush1.msra.mxu0 %v241
      %275 = vmatprep.subr.mxu0 0.0
      %276 = vmatpush2.msra.mxu0 0.0
      %277 = vmatprep.subr.mxu0 0.0
      %278 = vmatpush2.msra.mxu0 0.0
      %279 = vmatprep.subr.mxu0 0.0
      %280 = vmatpush2.msra.mxu0 0.0
      %281 = vmatprep.subr.mxu0 0.0
      %282 = vmatpush2.msra.mxu0 0.0
      %283 = vmatprep.subr.mxu0 0.0
      %284 = vmatpush2.msra.mxu0 0.0
      %285 = vmatprep.subr.mxu0 0.0
      %286 = vmatpush2.msra.mxu0 0.0
      %287 = vmatprep.subr.mxu0 0.0
      %288 = vmatpush2.msra.mxu0 0.0
      %289 = vmatprep.subr.mxu0 0.0
      %290 = vmatpush2.msra.mxu0 0.0
      %291 = vmatprep.subr.mxu0 0.0
      %292 = vmatpush2.msra.mxu0 0.0
      %293 = vmatprep.subr.mxu0 0.0
      %294 = vmatpush2.msra.mxu0 0.0
      %295 = vmatprep.subr.mxu0 0.0
      %296 = vmatpush2.msra.mxu0 0.0
      %297 = vmatprep.subr.mxu0 0.0
      %298 = vmatpush2.msra.mxu0 0.0
      %299 = vmatprep.subr.mxu0 0.0
      %300 = vmatpush2.msra.mxu0 0.0
      %301 = vmatprep.subr.mxu0 0.0
      %302 = vmatpush2.msra.mxu0 0.0
      %303 = vmatprep.subr.mxu0 0.0
      %304 = vmatpush2.msra.mxu0 0.0
      %305 = vmatprep.subr.mxu0 0.0
      %306 = vmatpush2.msra.mxu0 0.0
      %307 = vmatprep.mubr.f32.mxu0 0.0
      %308 = vmatmul.mubr.f32.gmra.mxu0 %v216
      %v309 = vpop.f32.mrf.mxu0
      %v310 = vadd.f32 %v212, %v309
      %v311 = vpop.f32.mrf.mxu0
      %312 = vmatprep.mubr.f32.mxu0 0.0
      %313 = vmatmul.mubr.f32.gmra.mxu0 %v219
      %v314 = vpop.f32.mrf.mxu0
      %v315 = vadd.f32 %v212, %v314
      %v316 = vpop.f32.mrf.mxu0
      %317 = vmatprep.mubr.f32.mxu0 0.0
      %318 = vmatmul.mubr.f32.gmra.mxu0 %v222
      %v319 = vpop.f32.mrf.mxu0
      %v320 = vadd.f32 %v212, %v319
      %v321 = vpop.f32.mrf.mxu0
      %322 = vmatprep.mubr.f32.mxu0 0.0
      %323 = vmatmul.mubr.f32.gmra.mxu0 %v225
      %v324 = vpop.f32.mrf.mxu0
      %v325 = vadd.f32 %v212, %v324
      %v326 = vpop.f32.mrf.mxu0
      %327 = vmatprep.mubr.f32.mxu0 0.0
      %328 = vmatmul.mubr.f32.gmra.mxu0 %v228
      %v329 = vpop.f32.mrf.mxu0
      %v330 = vadd.f32 %v212, %v329
      %v331 = vpop.f32.mrf.mxu0
      %332 = vmatprep.mubr.f32.mxu0 0.0
      %333 = vmatmul.mubr.f32.gmra.mxu0 %v231
      %v334 = vpop.f32.mrf.mxu0
      %v335 = vadd.f32 %v212, %v334
      %v336 = vpop.f32.mrf.mxu0
      %337 = vmatprep.mubr.f32.mxu0 0.0
      %338 = vmatmul.mubr.f32.gmra.mxu0 %v234
      %v339 = vpop.f32.mrf.mxu0
      %v340 = vadd.f32 %v212, %v339
      %v341 = vpop.f32.mrf.mxu0
      %342 = vmatprep.mubr.f32.mxu0 0.0
      %343 = vmatmul.mubr.f32.gmra.mxu0 %v237
      %v344 = vpop.f32.mrf.mxu0
      %v345 = vadd.f32 %v212, %v344
      %v346 = vpop.f32.mrf.mxu0
      %347 = vdwg.mxu0
      %v348 = vld [vmem:[%s3] sm:$0xff]
      %v349 = vld [vmem:[%s3 + $0x8] sm:$0xff]
      %v350 = vld [vmem:[%s3 + $0x10] sm:$0xff]
      %v351 = vld [vmem:[%s3 + $0x18] sm:$0xff]
      %v352 = vld [vmem:[%s3 + $0x20] sm:$0xff]
      %v353 = vld [vmem:[%s3 + $0x28] sm:$0xff]
      %v354 = vld [vmem:[%s3 + $0x30] sm:$0xff]
      %v355 = vld [vmem:[%s3 + $0x38] sm:$0xff]
      %v356 = vadd.f32 %v310, %v348
      %v357 = vadd.f32 %v315, %v349
      %v358 = vadd.f32 %v320, %v350
      %v359 = vadd.f32 %v325, %v351
      %v360 = vadd.f32 %v330, %v352
      %v361 = vadd.f32 %v335, %v353
      %v362 = vadd.f32 %v340, %v354
      %v363 = vadd.f32 %v345, %v355
      %vm364 = vcmask 261120
      %365 = vst.msk [vmem:[%s197] sm:$0xff] %vm364, %v356
      %366 = vst.msk [vmem:[%s197 + $0x8] sm:$0xff] %vm364, %v357
      %367 = vst.msk [vmem:[%s197 + $0x10] sm:$0xff] %vm364, %v358
      %368 = vst.msk [vmem:[%s197 + $0x18] sm:$0xff] %vm364, %v359
      %369 = vst.msk [vmem:[%s197 + $0x20] sm:$0xff] %vm364, %v360
      %370 = vst.msk [vmem:[%s197 + $0x28] sm:$0xff] %vm364, %v361
      %371 = vst.msk [vmem:[%s197 + $0x30] sm:$0xff] %vm364, %v362
      %372 = vst.msk [vmem:[%s197 + $0x38] sm:$0xff] %vm364, %v363
      %p373 = scmp.lt.s32.totalorder %s15, 1
      %s374 = scalar_select %p373, %s15, 1
      %s375 = smul.addr %s374, 8
      %s376 = smul.addr %s375, 8
      %s377 = scalar_lea.vmem %s4, %s376
      // Predicated region
      $region37: #{ed_forward.19} parent=35 // pred_check
        %p378 = pneg %p122
      $region38: #{ed_forward.19} parent=35 // pred_check_branch
        %380 = sbr.rel (%p378) target = $region40
      $region39: #{ed_forward.19} parent=35 // pred_region
        _
      $region40: #{ed_forward.19} parent=35 // pred_fallthru
        _
    $region36: #{ed_forward.19} parent=5 // pred_fallthru
      _
    %p381 = scmp.le.s32.totalorder 2, %s10
    // Predicated region
    $region41: #{ed_forward.19} parent=5 // pred_check
      %p382 = pneg %p381
    $region42: #{ed_forward.19} parent=5 // pred_check_branch
      %384 = sbr.rel (%p382) target = $region44
    $region43: #{ed_forward.19} parent=5 // pred_region
      %s385 = ssub.s32 %s10, 2
      // Predicated region
      $region45: #{ed_forward.19} parent=43 // pred_check
        %p386 = pneg %p128
      $region46: #{ed_forward.19} parent=43 // pred_check_branch
        %388 = sbr.rel (%p386) target = $region48
      $region47: #{ed_forward.19} parent=43 // pred_region
        %p389 = scmp.lt.s32.totalorder %s16, 1
        %s390 = scalar_select %p389, %s16, 1
        %s391 = smul.addr %s390, 8
        %s392 = smul.addr %s391, 8
        %s393 = scalar_lea.vmem %s4, %s392
      $region48: #{ed_forward.19} parent=43 // pred_fallthru
        _
    $region44: #{ed_forward.19} parent=5 // pred_fallthru
      _
  $region6: #{ed_forward.19} parent=0 // loop_footer
    %s14 = sadd.s32 1, %s10
  $region7: #{ed_forward.19} parent=0 // loop_footer_branch
    %9 = sbr.rel target = $region3
  $region8: #{ed_forward.19} parent=0 // loop_exit
    _

// kernel: ed_forward.22
$region0: #{ed_forward.22}
  #allocation0 [shape = 'u32[]', space=smem, size = 0x4, offset = 0x4, fixed_abs, tag = 'smem constant byte address 0x4 - core index']
  #allocation1 [shape = 'u32[144,128]{1,0:T(1,128)}', space=vmem, size = 0x12000, scoped, tag = 'internal scratch']
  %s0 = inlined_call_operand.vmem [shape: f32[64,32], index: 0, kind: input, shape index: {}]
  %s1 = inlined_call_operand.vmem [shape: f32[32,64], index: 1, kind: input, shape index: {}]
  %s2 = inlined_call_operand.vmem [shape: f32[1,64], index: 2, kind: input, shape index: {}]
  %s3 = inlined_call_operand.vmem [shape: f32[64,64], index: 3, kind: output, shape index: {}]
  %s4 = sld [smem:[#allocation0]]
  $region45: #{ed_forward.22} parent=0
    _
  %s6 = ssub.s32 1, %s4
  %s7 = scalar_select 0, %s6, %s4
  loop: start=0, step=1, limit=4
  $region2: #{ed_forward.22} parent=0 // loop_pre_header
    _
  $region3: #{ed_forward.22} parent=0 // loop_header
    %s9 = sphi 0, %s13
    %p10 = scmp.ge.s32.totalorder %s9, 4
    %s19 = sphi 0, %s21
    %s22 = sphi 0, %s19
    %s23 = sphi 0, %s22
    %s39 = sphi 0, %s23
    %s43 = sphi 0, %s43
    %s45 = sphi 0, %s43
    %s46 = sphi 0, %s45
    %s60 = sphi 0, %s46
    %s64 = sphi 0, %s64
    %s66 = sphi 0, %s64
    %s67 = sphi 0, %s66
    %s81 = sphi 0, %s67
    %s87 = sphi 0, %s89
    %s90 = sphi 0, %s87
    %s91 = sphi 0, %s90
    %s107 = sphi 0, %s91
  $region4: #{ed_forward.22} parent=0 // loop_header_branch
    %12 = sbr.rel (%p10) target = $region8
  $region5: #{ed_forward.22} parent=0 // loop_body
    %s14 = ssub.s32 %s9, 1
    %s15 = ssub.s32 %s9, 2
    %s16 = sadd.s32 %s9, 1
    %s17 = ssub.s32 %s9, %s16
    %p18 = scmp.eq.s32.totalorder %s17, 0
    %s20 = sadd.s32 %s19, 1
    %s21 = scalar_select %p18, %s19, %s20
    %p24 = pneg %p18
    %p25 = scmp.eq.s32.totalorder %s9, 1
    %p26 = por %p24, %p25
    %p27 = scmp.ne.s32.totalorder %s19, %s22
    %p28 = scmp.eq.s32.totalorder %s9, 0
    %p29 = por %p27, %p28
    %p30 = scmp.ne.s32.totalorder %s19, %s22
    %p31 = scmp.eq.s32.totalorder %s14, 1
    %p32 = por %p30, %p31
    %p33 = scmp.ne.s32.totalorder %s22, %s23
    %p34 = scmp.eq.s32.totalorder %s14, 0
    %p35 = por %p33, %p34
    %p36 = scmp.ne.s32.totalorder %s22, %s23
    %p37 = scmp.eq.s32.totalorder %s15, 1
    %p38 = por %p36, %p37
    %p40 = scmp.ne.s32.totalorder %s23, %s39
    %p41 = scmp.eq.s32.totalorder %s15, 0
    %p42 = por %p40, %p41
    %s44 = sadd.s32 %s43, 1
    %p47 = scmp.eq.s32.totalorder %s9, 1
    %p48 = scmp.ne.s32.totalorder %s43, %s45
    %p49 = scmp.eq.s32.totalorder %s9, 0
    %p50 = por %p48, %p49
    %p51 = scmp.ne.s32.totalorder %s43, %s45
    %p52 = scmp.eq.s32.totalorder %s14, 1
    %p53 = por %p51, %p52
    %p54 = scmp.ne.s32.totalorder %s45, %s46
    %p55 = scmp.eq.s32.totalorder %s14, 0
    %p56 = por %p54, %p55
    %p57 = scmp.ne.s32.totalorder %s45, %s46
    %p58 = scmp.eq.s32.totalorder %s15, 1
    %p59 = por %p57, %p58
    %p61 = scmp.ne.s32.totalorder %s46, %s60
    %p62 = scmp.eq.s32.totalorder %s15, 0
    %p63 = por %p61, %p62
    %s65 = sadd.s32 %s64, 1
    %p68 = scmp.eq.s32.totalorder %s9, 1
    %p69 = scmp.ne.s32.totalorder %s64, %s66
    %p70 = scmp.eq.s32.totalorder %s9, 0
    %p71 = por %p69, %p70
    %p72 = scmp.ne.s32.totalorder %s64, %s66
    %p73 = scmp.eq.s32.totalorder %s14, 1
    %p74 = por %p72, %p73
    %p75 = scmp.ne.s32.totalorder %s66, %s67
    %p76 = scmp.eq.s32.totalorder %s14, 0
    %p77 = por %p75, %p76
    %p78 = scmp.ne.s32.totalorder %s66, %s67
    %p79 = scmp.eq.s32.totalorder %s15, 1
    %p80 = por %p78, %p79
    %p82 = scmp.ne.s32.totalorder %s67, %s81
    %p83 = scmp.eq.s32.totalorder %s15, 0
    %p84 = por %p82, %p83
    %s85 = ssub.s32 %s9, %s16
    %p86 = scmp.eq.s32.totalorder %s85, 0
    %s88 = sadd.s32 %s87, 1
    %s89 = scalar_select %p86, %s87, %s88
    %p92 = pneg %p86
    %p93 = scmp.eq.s32.totalorder %s9, 1
    %p94 = por %p92, %p93
    %p95 = scmp.ne.s32.totalorder %s87, %s90
    %p96 = scmp.eq.s32.totalorder %s9, 0
    %p97 = por %p95, %p96
    %p98 = scmp.ne.s32.totalorder %s87, %s90
    %p99 = scmp.eq.s32.totalorder %s14, 1
    %p100 = por %p98, %p99
    %p101 = scmp.ne.s32.totalorder %s90, %s91
    %p102 = scmp.eq.s32.totalorder %s14, 0
    %p103 = por %p101, %p102
    %p104 = scmp.ne.s32.totalorder %s90, %s91
    %p105 = scmp.eq.s32.totalorder %s15, 1
    %p106 = por %p104, %p105
    %p108 = scmp.ne.s32.totalorder %s91, %s107
    %p109 = scmp.eq.s32.totalorder %s15, 0
    %p110 = por %p108, %p109
    %p111 = scmp.le.s32.totalorder 1, %s9
    %p112 = scmp.lt.s32.totalorder %s9, 3
    %p113 = pnand %p111, %p112
    %p114 = pneg %p113
    // Predicated region
    $region9: #{ed_forward.22} parent=5 // pred_check
      _
    $region10: #{ed_forward.22} parent=5 // pred_check_branch
      %116 = sbr.rel (%p113) target = $region12
    $region11: #{ed_forward.22} parent=5 // pred_region
      %s117 = ssub.s32 %s9, 1
      // Predicated region
      $region13: #{ed_forward.22} parent=11 // pred_check
        %p118 = pneg %p56
      $region14: #{ed_forward.22} parent=11 // pred_check_branch
        %120 = sbr.rel (%p118) target = $region16
      $region15: #{ed_forward.22} parent=11 // pred_region
        _
      $region16: #{ed_forward.22} parent=11 // pred_fallthru
        _
      // Predicated region
      $region17: #{ed_forward.22} parent=11 // pred_check
        %p121 = pneg %p77
      $region18: #{ed_forward.22} parent=11 // pred_check_branch
        %123 = sbr.rel (%p121) target = $region20
      $region19: #{ed_forward.22} parent=11 // pred_region
        _
      $region20: #{ed_forward.22} parent=11 // pred_fallthru
        _
    $region12: #{ed_forward.22} parent=5 // pred_fallthru
      _
    %p124 = scmp.lt.s32.totalorder %s9, 2
    // Predicated region
    $region21: #{ed_forward.22} parent=5 // pred_check
      %p125 = pneg %p124
    $region22: #{ed_forward.22} parent=5 // pred_check_branch
      %127 = sbr.rel (%p125) target = $region24
    $region23: #{ed_forward.22} parent=5 // pred_region
      // Predicated region
      $region25: #{ed_forward.22} parent=23 // pred_check
        %p128 = pneg %p29
      $region26: #{ed_forward.22} parent=23 // pred_check_branch
        %130 = sbr.rel (%p128) target = $region28
      $region27: #{ed_forward.22} parent=23 // pred_region
        %s131 = smul.u32 4, %s9
        %p132 = scmp.lt.s32.totalorder %s131, 7
        %s133 = scalar_select %p132, %s131, 7
        %s134 = smul.addr %s133, 8
        %s135 = scalar_lea.vmem %s0, %s134
        %s136 = smul.u32 4, %s9
      $region28: #{ed_forward.22} parent=23 // pred_fallthru
        _
    $region24: #{ed_forward.22} parent=5 // pred_fallthru
      _
    %p137 = scmp.le.s32.totalorder 1, %s9
    %p138 = scmp.lt.s32.totalorder %s9, 3
    %p139 = pnand %p137, %p138
    %p140 = pneg %p139
    // Predicated region
    $region29: #{ed_forward.22} parent=5 // pred_check
      _
    $region30: #{ed_forward.22} parent=5 // pred_check_branch
      %142 = sbr.rel (%p139) target = $region32
    $region31: #{ed_forward.22} parent=5 // pred_region
      %s143 = ssub.s32 %s9, 1
      %s144 = smul.u32 4, %s14
      %p145 = scmp.lt.s32.totalorder %s144, 7
      %s146 = scalar_select %p145, %s144, 7
      %s147 = smul.addr %s146, 8
      %s148 = scalar_lea.vmem %s0, %s147
      %p149 = pneg %p35
      %p150 = pneg %p32
      %p151 = pneg %p56
      %p152 = pneg %p53
      %p153 = pneg %p77
      %p154 = pneg %p74
      %p155 = pneg %p103
      %p156 = pneg %p100
      %s157 = smul.u32 4, %s14
      %p158 = scmp.lt.s32.totalorder %s157, 7
      %s159 = scalar_select %p158, %s157, 7
      %s160 = smul.addr %s159, 8
      %s161 = scalar_lea.vmem %s3, %s160
      %s162 = smul.u32 4, %s14
      %p163 = scmp.lt.s32.totalorder %s162, 7
      %s164 = scalar_select %p163, %s162, 7
      %s165 = smul.addr %s164, 8
      %s166 = scalar_lea.vmem %s0, %s165
      %s167 = smul.u32 4, %s14
      %s168 = smul.u32 4, %s14
      %p169 = scmp.lt.s32.totalorder %s168, 7
      %s170 = scalar_select %p169, %s168, 7
      %s171 = smul.addr %s170, 8
      %s172 = scalar_lea.vmem %s3, %s171
      %s173 = smul.u32 4, %s14
      %v174 = vld [vmem:[%s166] sm:$0xff]
      %v175 = vld [vmem:[%s166 + $0x8] sm:$0xff]
      %v176 = vld [vmem:[%s166 + $0x10] sm:$0xff]
      %v177 = vld [vmem:[%s166 + $0x18] sm:$0xff]
      %v178 = vld [vmem:[%s1] sm:$0xff]
      %v179 = vld [vmem:[%s1 + $0x8] sm:$0xff]
      %v180 = vld [vmem:[%s1 + $0x10] sm:$0xff]
      %v181 = vld [vmem:[%s1 + $0x18] sm:$0xff]
      %v182 = vld [vmem:[%s2] sm:$0x1]
      %v184 = vlaneseq
      %v185 = vshrl.u32 %v184, 7
      %v186 = vsub.s32 0, %v185
      %v187 = vrot.slane %v182, %v186
      %vm189 = vcmask 261120
      %v191 = vsel %vm189, %v174, 0
      %v194 = vsel %vm189, %v175, 0
      %v197 = vsel %vm189, %v176, 0
      %v200 = vsel %vm189, %v177, 0
      %202 = vmatprep.subr.mxu0 0.0
      %203 = vmatpush1.msra.mxu0 0.0
      %204 = vmatprep.subr.mxu0 0.0
      %205 = vmatpush1.msra.mxu0 0.0
      %206 = vmatprep.subr.mxu0 0.0
      %207 = vmatpush1.msra.mxu0 0.0
      %208 = vmatprep.subr.mxu0 0.0
      %209 = vmatpush1.msra.mxu0 0.0
      %210 = vmatprep.subr.mxu0 0.0
      %211 = vmatpush1.msra.mxu0 0.0
      %212 = vmatprep.subr.mxu0 0.0
      %213 = vmatpush1.msra.mxu0 0.0
      %214 = vmatprep.subr.mxu0 0.0
      %215 = vmatpush1.msra.mxu0 0.0
      %216 = vmatprep.subr.mxu0 0.0
      %217 = vmatpush1.msra.mxu0 0.0
      %218 = vmatprep.subr.mxu0 0.0
      %219 = vmatpush1.msra.mxu0 0.0
      %220 = vmatprep.subr.mxu0 0.0
      %221 = vmatpush1.msra.mxu0 0.0
      %222 = vmatprep.subr.mxu0 0.0
      %223 = vmatpush1.msra.mxu0 0.0
      %224 = vmatprep.subr.mxu0 0.0
      %225 = vmatpush1.msra.mxu0 0.0
      %226 = vmatprep.subr.mxu0 0.0
      %227 = vmatpush1.msra.mxu0 %v181
      %228 = vmatprep.subr.mxu0 0.0
      %229 = vmatpush1.msra.mxu0 %v180
      %230 = vmatprep.subr.mxu0 0.0
      %231 = vmatpush1.msra.mxu0 %v179
      %232 = vmatprep.subr.mxu0 0.0
      %233 = vmatpush1.msra.mxu0 %v178
      %234 = vmatprep.subr.mxu0 0.0
      %235 = vmatpush2.msra.mxu0 0.0
      %236 = vmatprep.subr.mxu0 0.0
      %237 = vmatpush2.msra.mxu0 0.0
      %238 = vmatprep.subr.mxu0 0.0
      %239 = vmatpush2.msra.mxu0 0.0
      %240 = vmatprep.subr.mxu0 0.0
      %241 = vmatpush2.msra.mxu0 0.0
      %242 = vmatprep.subr.mxu0 0.0
      %243 = vmatpush2.msra.mxu0 0.0
      %244 = vmatprep.subr.mxu0 0.0
      %245 = vmatpush2.msra.mxu0 0.0
      %246 = vmatprep.subr.mxu0 0.0
      %247 = vmatpush2.msra.mxu0 0.0
      %248 = vmatprep.subr.mxu0 0.0
      %249 = vmatpush2.msra.mxu0 0.0
      %250 = vmatprep.subr.mxu0 0.0
      %251 = vmatpush2.msra.mxu0 0.0
      %252 = vmatprep.subr.mxu0 0.0
      %253 = vmatpush2.msra.mxu0 0.0
      %254 = vmatprep.subr.mxu0 0.0
      %255 = vmatpush2.msra.mxu0 0.0
      %256 = vmatprep.subr.mxu0 0.0
      %257 = vmatpush2.msra.mxu0 0.0
      %258 = vmatprep.subr.mxu0 0.0
      %259 = vmatpush2.msra.mxu0 0.0
      %260 = vmatprep.subr.mxu0 0.0
      %261 = vmatpush2.msra.mxu0 0.0
      %262 = vmatprep.subr.mxu0 0.0
      %263 = vmatpush2.msra.mxu0 0.0
      %264 = vmatprep.subr.mxu0 0.0
      %265 = vmatpush2.msra.mxu0 0.0
      %266 = vmatprep.mubr.f32.mxu0 0.0
      %267 = vmatmul.mubr.f32.gmra.mxu0 %v191
      %v268 = vpop.f32.mrf.mxu0
      %v269 = vadd.f32 %v187, %v268
      %v270 = vpop.f32.mrf.mxu0
      %271 = vmatprep.mubr.f32.mxu0 0.0
      %272 = vmatmul.mubr.f32.gmra.mxu0 %v194
      %v273 = vpop.f32.mrf.mxu0
      %v274 = vadd.f32 %v187, %v273
      %v275 = vpop.f32.mrf.mxu0
      %276 = vmatprep.mubr.f32.mxu0 0.0
      %277 = vmatmul.mubr.f32.gmra.mxu0 %v197
      %v278 = vpop.f32.mrf.mxu0
      %v279 = vadd.f32 %v187, %v278
      %v280 = vpop.f32.mrf.mxu0
      %281 = vmatprep.mubr.f32.mxu0 0.0
      %282 = vmatmul.mubr.f32.gmra.mxu0 %v200
      %v283 = vpop.f32.mrf.mxu0
      %v284 = vadd.f32 %v187, %v283
      %v285 = vpop.f32.mrf.mxu0
      %286 = vdwg.mxu0
      %vm287 = vcmask 523264
      %288 = vst.msk [vmem:[%s172] sm:$0xff] %vm287, %v269
      %289 = vst.msk [vmem:[%s172 + $0x8] sm:$0xff] %vm287, %v274
      %290 = vst.msk [vmem:[%s172 + $0x10] sm:$0xff] %vm287, %v279
      %291 = vst.msk [vmem:[%s172 + $0x18] sm:$0xff] %vm287, %v284
      %s292 = smul.u32 4, %s14
      %p293 = scmp.lt.s32.totalorder %s292, 7
      %s294 = scalar_select %p293, %s292, 7
      %s295 = smul.addr %s294, 8
      %s296 = scalar_lea.vmem %s3, %s295
      // Predicated region
      $region33: #{ed_forward.22} parent=31 // pred_check
        %p297 = pneg %p100
      $region34: #{ed_forward.22} parent=31 // pred_check_branch
        %299 = sbr.rel (%p297) target = $region36
      $region35: #{ed_forward.22} parent=31 // pred_region
        %s300 = smul.u32 4, %s14
      $region36: #{ed_forward.22} parent=31 // pred_fallthru
        _
    $region32: #{ed_forward.22} parent=5 // pred_fallthru
      _
    %p301 = scmp.le.s32.totalorder 2, %s9
    // Predicated region
    $region37: #{ed_forward.22} parent=5 // pred_check
      %p302 = pneg %p301
    $region38: #{ed_forward.22} parent=5 // pred_check_branch
      %304 = sbr.rel (%p302) target = $region40
    $region39: #{ed_forward.22} parent=5 // pred_region
      %s305 = ssub.s32 %s9, 2
      // Predicated region
      $region41: #{ed_forward.22} parent=39 // pred_check
        %p306 = pneg %p106
      $region42: #{ed_forward.22} parent=39 // pred_check_branch
        %308 = sbr.rel (%p306) target = $region44
      $region43: #{ed_forward.22} parent=39 // pred_region
        %s309 = smul.u32 4, %s15
        %p310 = scmp.lt.s32.totalorder %s309, 7
        %s311 = scalar_select %p310, %s309, 7
        %s312 = smul.addr %s311, 8
        %s313 = scalar_lea.vmem %s3, %s312
      $region44: #{ed_forward.22} parent=39 // pred_fallthru
        _
    $region40: #{ed_forward.22} parent=5 // pred_fallthru
      _
  $region6: #{ed_forward.22} parent=0 // loop_footer
    %s13 = sadd.s32 1, %s9
  $region7: #{ed_forward.22} parent=0 // loop_footer_branch
    %8 = sbr.rel target = $region3
  $region8: #{ed_forward.22} parent=0 // loop_exit
    _

// kernel: ed_forward.20
$region0: #{ed_forward.20}
  #allocation0 [shape = 'u32[]', space=smem, size = 0x4, offset = 0x4, fixed_abs, tag = 'smem constant byte address 0x4 - core index']
  #allocation1 [shape = 'u32[144,128]{1,0:T(1,128)}', space=vmem, size = 0x12000, scoped, tag = 'internal scratch']
  %s0 = inlined_call_operand.vmem [shape: f32[1,64,4], index: 0, kind: input, shape index: {}]
  %s1 = inlined_call_operand.vmem [shape: f32[4,32], index: 1, kind: input, shape index: {}]
  %s2 = inlined_call_operand.vmem [shape: f32[1,32], index: 2, kind: input, shape index: {}]
  %s3 = inlined_call_operand.vmem [shape: f32[1,64,32], index: 3, kind: input, shape index: {}]
  %s4 = inlined_call_operand.vmem [shape: f32[1,64,32], index: 4, kind: output, shape index: {}]
  %s5 = sld [smem:[#allocation0]]
  $region26: #{ed_forward.20} parent=0
    _
  %s7 = ssub.s32 1, %s5
  %s8 = scalar_select 0, %s7, %s5
  // Predicated region
  $region2: #{ed_forward.20} parent=0 // pred_check
    _
  $region3: #{ed_forward.20} parent=0 // pred_check_branch
    %10 = sbr.rel (0) target = $region5
  $region4: #{ed_forward.20} parent=0 // pred_region
    _
  $region5: #{ed_forward.20} parent=0 // pred_fallthru
    _
  // Predicated region
  $region6: #{ed_forward.20} parent=0 // pred_check
    _
  $region7: #{ed_forward.20} parent=0 // pred_check_branch
    %12 = sbr.rel (0) target = $region9
  $region8: #{ed_forward.20} parent=0 // pred_region
    _
  $region9: #{ed_forward.20} parent=0 // pred_fallthru
    _
  // Predicated region
  $region10: #{ed_forward.20} parent=0 // pred_check
    _
  $region11: #{ed_forward.20} parent=0 // pred_check_branch
    %14 = sbr.rel (0) target = $region13
  $region12: #{ed_forward.20} parent=0 // pred_region
    _
  $region13: #{ed_forward.20} parent=0 // pred_fallthru
    _
  // Predicated region
  $region14: #{ed_forward.20} parent=0 // pred_check
    _
  $region15: #{ed_forward.20} parent=0 // pred_check_branch
    %16 = sbr.rel (0) target = $region17
  $region16: #{ed_forward.20} parent=0 // pred_region
    _
  $region17: #{ed_forward.20} parent=0 // pred_fallthru
    _
  %v17 = vld [vmem:[%s0] sm:$0xff]
  %v18 = vld [vmem:[%s0 + $0x8] sm:$0xff]
  %v19 = vld [vmem:[%s0 + $0x10] sm:$0xff]
  %v20 = vld [vmem:[%s0 + $0x18] sm:$0xff]
  %v21 = vld [vmem:[%s0 + $0x20] sm:$0xff]
  %v22 = vld [vmem:[%s0 + $0x28] sm:$0xff]
  %v23 = vld [vmem:[%s0 + $0x30] sm:$0xff]
  %v24 = vld [vmem:[%s0 + $0x38] sm:$0xff]
  %v25 = vld [vmem:[%s1] sm:$0xf]
  %v26 = vld [vmem:[%s2] sm:$0x1]
  %v28 = vlaneseq
  %v29 = vshrl.u32 %v28, 7
  %v30 = vsub.s32 0, %v29
  %v31 = vrot.slane %v26, %v30
  %vm33 = vcmask 31744
  %v35 = vsel %vm33, %v17, 0
  %v38 = vsel %vm33, %v18, 0
  %v41 = vsel %vm33, %v19, 0
  %v44 = vsel %vm33, %v20, 0
  %v47 = vsel %vm33, %v21, 0
  %v50 = vsel %vm33, %v22, 0
  %v53 = vsel %vm33, %v23, 0
  %v56 = vsel %vm33, %v24, 0
  %vm58 = vcmask 1043456
  %v60 = vsel %vm58, %v25, 0
  %62 = vmatprep.subr.mxu0 0.0
  %63 = vmatpush1.msra.mxu0 0.0
  %64 = vmatprep.subr.mxu0 0.0
  %65 = vmatpush1.msra.mxu0 0.0
  %66 = vmatprep.subr.mxu0 0.0
  %67 = vmatpush1.msra.mxu0 0.0
  %68 = vmatprep.subr.mxu0 0.0
  %69 = vmatpush1.msra.mxu0 0.0
  %70 = vmatprep.subr.mxu0 0.0
  %71 = vmatpush1.msra.mxu0 0.0
  %72 = vmatprep.subr.mxu0 0.0
  %73 = vmatpush1.msra.mxu0 0.0
  %74 = vmatprep.subr.mxu0 0.0
  %75 = vmatpush1.msra.mxu0 0.0
  %76 = vmatprep.subr.mxu0 0.0
  %77 = vmatpush1.msra.mxu0 0.0
  %78 = vmatprep.subr.mxu0 0.0
  %79 = vmatpush1.msra.mxu0 0.0
  %80 = vmatprep.subr.mxu0 0.0
  %81 = vmatpush1.msra.mxu0 0.0
  %82 = vmatprep.subr.mxu0 0.0
  %83 = vmatpush1.msra.mxu0 0.0
  %84 = vmatprep.subr.mxu0 0.0
  %85 = vmatpush1.msra.mxu0 0.0
  %86 = vmatprep.subr.mxu0 0.0
  %87 = vmatpush1.msra.mxu0 0.0
  %88 = vmatprep.subr.mxu0 0.0
  %89 = vmatpush1.msra.mxu0 0.0
  %90 = vmatprep.subr.mxu0 0.0
  %91 = vmatpush1.msra.mxu0 0.0
  %92 = vmatprep.subr.mxu0 0.0
  %93 = vmatpush1.msra.mxu0 %v60
  %94 = vmatprep.subr.mxu0 0.0
  %95 = vmatpush2.msra.mxu0 0.0
  %96 = vmatprep.subr.mxu0 0.0
  %97 = vmatpush2.msra.mxu0 0.0
  %98 = vmatprep.subr.mxu0 0.0
  %99 = vmatpush2.msra.mxu0 0.0
  %100 = vmatprep.subr.mxu0 0.0
  %101 = vmatpush2.msra.mxu0 0.0
  %102 = vmatprep.subr.mxu0 0.0
  %103 = vmatpush2.msra.mxu0 0.0
  %104 = vmatprep.subr.mxu0 0.0
  %105 = vmatpush2.msra.mxu0 0.0
  %106 = vmatprep.subr.mxu0 0.0
  %107 = vmatpush2.msra.mxu0 0.0
  %108 = vmatprep.subr.mxu0 0.0
  %109 = vmatpush2.msra.mxu0 0.0
  %110 = vmatprep.subr.mxu0 0.0
  %111 = vmatpush2.msra.mxu0 0.0
  %112 = vmatprep.subr.mxu0 0.0
  %113 = vmatpush2.msra.mxu0 0.0
  %114 = vmatprep.subr.mxu0 0.0
  %115 = vmatpush2.msra.mxu0 0.0
  %116 = vmatprep.subr.mxu0 0.0
  %117 = vmatpush2.msra.mxu0 0.0
  %118 = vmatprep.subr.mxu0 0.0
  %119 = vmatpush2.msra.mxu0 0.0
  %120 = vmatprep.subr.mxu0 0.0
  %121 = vmatpush2.msra.mxu0 0.0
  %122 = vmatprep.subr.mxu0 0.0
  %123 = vmatpush2.msra.mxu0 0.0
  %124 = vmatprep.subr.mxu0 0.0
  %125 = vmatpush2.msra.mxu0 0.0
  %126 = vmatprep.mubr.f32.mxu0 0.0
  %127 = vmatmul.mubr.f32.gmra.mxu0 %v35
  %v128 = vpop.f32.mrf.mxu0
  %v129 = vadd.f32 %v31, %v128
  %v130 = vpop.f32.mrf.mxu0
  %131 = vmatprep.mubr.f32.mxu0 0.0
  %132 = vmatmul.mubr.f32.gmra.mxu0 %v38
  %v133 = vpop.f32.mrf.mxu0
  %v134 = vadd.f32 %v31, %v133
  %v135 = vpop.f32.mrf.mxu0
  %136 = vmatprep.mubr.f32.mxu0 0.0
  %137 = vmatmul.mubr.f32.gmra.mxu0 %v41
  %v138 = vpop.f32.mrf.mxu0
  %v139 = vadd.f32 %v31, %v138
  %v140 = vpop.f32.mrf.mxu0
  %141 = vmatprep.mubr.f32.mxu0 0.0
  %142 = vmatmul.mubr.f32.gmra.mxu0 %v44
  %v143 = vpop.f32.mrf.mxu0
  %v144 = vadd.f32 %v31, %v143
  %v145 = vpop.f32.mrf.mxu0
  %146 = vmatprep.mubr.f32.mxu0 0.0
  %147 = vmatmul.mubr.f32.gmra.mxu0 %v47
  %v148 = vpop.f32.mrf.mxu0
  %v149 = vadd.f32 %v31, %v148
  %v150 = vpop.f32.mrf.mxu0
  %151 = vmatprep.mubr.f32.mxu0 0.0
  %152 = vmatmul.mubr.f32.gmra.mxu0 %v50
  %v153 = vpop.f32.mrf.mxu0
  %v154 = vadd.f32 %v31, %v153
  %v155 = vpop.f32.mrf.mxu0
  %156 = vmatprep.mubr.f32.mxu0 0.0
  %157 = vmatmul.mubr.f32.gmra.mxu0 %v53
  %v158 = vpop.f32.mrf.mxu0
  %v159 = vadd.f32 %v31, %v158
  %v160 = vpop.f32.mrf.mxu0
  %161 = vmatprep.mubr.f32.mxu0 0.0
  %162 = vmatmul.mubr.f32.gmra.mxu0 %v56
  %v163 = vpop.f32.mrf.mxu0
  %v164 = vadd.f32 %v31, %v163
  %v165 = vpop.f32.mrf.mxu0
  %166 = vdwg.mxu0
  %v167 = vld [vmem:[%s3] sm:$0xff]
  %v168 = vld [vmem:[%s3 + $0x8] sm:$0xff]
  %v169 = vld [vmem:[%s3 + $0x10] sm:$0xff]
  %v170 = vld [vmem:[%s3 + $0x18] sm:$0xff]
  %v171 = vld [vmem:[%s3 + $0x20] sm:$0xff]
  %v172 = vld [vmem:[%s3 + $0x28] sm:$0xff]
  %v173 = vld [vmem:[%s3 + $0x30] sm:$0xff]
  %v174 = vld [vmem:[%s3 + $0x38] sm:$0xff]
  %v175 = vadd.f32 %v129, %v167
  %v176 = vadd.f32 %v134, %v168
  %v177 = vadd.f32 %v139, %v169
  %v178 = vadd.f32 %v144, %v170
  %v179 = vadd.f32 %v149, %v171
  %v180 = vadd.f32 %v154, %v172
  %v181 = vadd.f32 %v159, %v173
  %v182 = vadd.f32 %v164, %v174
  %vm183 = vcmask 261120
  %184 = vst.msk [vmem:[%s4] sm:$0xff] %vm183, %v175
  %185 = vst.msk [vmem:[%s4 + $0x8] sm:$0xff] %vm183, %v176
  %186 = vst.msk [vmem:[%s4 + $0x10] sm:$0xff] %vm183, %v177
  %187 = vst.msk [vmem:[%s4 + $0x18] sm:$0xff] %vm183, %v178
  %188 = vst.msk [vmem:[%s4 + $0x20] sm:$0xff] %vm183, %v179
  %189 = vst.msk [vmem:[%s4 + $0x28] sm:$0xff] %vm183, %v180
  %190 = vst.msk [vmem:[%s4 + $0x30] sm:$0xff] %vm183, %v181
  %191 = vst.msk [vmem:[%s4 + $0x38] sm:$0xff] %vm183, %v182
  // Predicated region
  $region18: #{ed_forward.20} parent=0 // pred_check
    _
  $region19: #{ed_forward.20} parent=0 // pred_check_branch
    %193 = sbr.rel (0) target = $region21
  $region20: #{ed_forward.20} parent=0 // pred_region
    _
  $region21: #{ed_forward.20} parent=0 // pred_fallthru
    _
  // Predicated region
  $region22: #{ed_forward.20} parent=0 // pred_check
    _
  $region23: #{ed_forward.20} parent=0 // pred_check_branch
    %195 = sbr.rel (0) target = $region25
  $region24: #{ed_forward.20} parent=0 // pred_region
    _
  $region25: #{ed_forward.20} parent=0 // pred_fallthru
    _

// kernel: ed_forward.23
$region0: #{ed_forward.23}
  #allocation0 [shape = 'u32[]', space=smem, size = 0x4, offset = 0x4, fixed_abs, tag = 'smem constant byte address 0x4 - core index']
  #allocation1 [shape = 'u32[144,128]{1,0:T(1,128)}', space=vmem, size = 0x12000, scoped, tag = 'internal scratch']
  %s0 = inlined_call_operand.vmem [shape: f32[2,4,64,8], index: 0, kind: input, shape index: {}]
  %s1 = inlined_call_operand.vmem [shape: f32[2,4,64,8], index: 1, kind: input, shape index: {}]
  %s2 = inlined_call_operand.vmem [shape: f32[2,4,64,8], index: 2, kind: input, shape index: {}]
  %s3 = inlined_call_operand.vmem [shape: f32[2,4,64,8], index: 3, kind: output, shape index: {0}]
  %s4 = inlined_call_operand.hbm [shape: f32[2,4,64,64], index: 4, kind: output, shape index: {1}]
  %5 = xla_tuple %s3, %s4
  %s6 = sld [smem:[#allocation0]]
  $region53: #{ed_forward.23} parent=0
    _
  %s8 = ssub.s32 1, %s6
  %s9 = scalar_select 0, %s8, %s6
  $region1: #{ed_forward.23} parent=0
    #allocation2 [shape = 'u8[262144]{0}', space=vmem, size = 0x40000, scoped, tag = 'output window, operand 1']
    #allocation3 [shape = 's32[2]{0}', space=sflag, size = 0x8, scoped, tag = 'scoped memory for ed_forward.23']
    %10 = vsyncpa [#allocation3], 0
    %s11 = scalar_lea.sflag [#allocation3], 1
    %12 = vsyncpa %s11, 0
    loop: start=0, step=1, limit=4
    $region2: #{ed_forward.23} parent=1 // loop_pre_header
      _
    $region3: #{ed_forward.23} parent=1 // loop_header
      %s14 = sphi 0, %s18
      %p15 = scmp.ge.s32.totalorder %s14, 4
      %s24 = sphi 0, %s26
      %s27 = sphi 0, %s24
      %s28 = sphi 0, %s27
      %s44 = sphi 0, %s28
      %s50 = sphi 0, %s52
      %s53 = sphi 0, %s50
      %s54 = sphi 0, %s53
      %s70 = sphi 0, %s54
      %s76 = sphi 0, %s78
      %s79 = sphi 0, %s76
      %s80 = sphi 0, %s79
      %s96 = sphi 0, %s80
      %s102 = sphi 0, %s104
      %s105 = sphi 0, %s102
      %s106 = sphi 0, %s105
      %s122 = sphi 0, %s106
      %s128 = sphi 0, %s130
      %s131 = sphi 0, %s128
      %s132 = sphi 0, %s131
      %s148 = sphi 0, %s132
    $region4: #{ed_forward.23} parent=1 // loop_header_branch
      %17 = sbr.rel (%p15) target = $region8
    $region5: #{ed_forward.23} parent=1 // loop_body
      %s19 = ssub.s32 %s14, 1
      %s20 = ssub.s32 %s14, 2
      %s21 = sadd.s32 %s14, 1
      %s22 = ssub.s32 %s14, %s21
      %p23 = scmp.eq.s32.totalorder %s22, 0
      %s25 = sadd.s32 %s24, 1
      %s26 = scalar_select %p23, %s24, %s25
      %p29 = pneg %p23
      %p30 = scmp.eq.s32.totalorder %s14, 1
      %p31 = por %p29, %p30
      %p32 = scmp.ne.s32.totalorder %s24, %s27
      %p33 = scmp.eq.s32.totalorder %s14, 0
      %p34 = por %p32, %p33
      %p35 = scmp.ne.s32.totalorder %s24, %s27
      %p36 = scmp.eq.s32.totalorder %s19, 1
      %p37 = por %p35, %p36
      %p38 = scmp.ne.s32.totalorder %s27, %s28
      %p39 = scmp.eq.s32.totalorder %s19, 0
      %p40 = por %p38, %p39
      %p41 = scmp.ne.s32.totalorder %s27, %s28
      %p42 = scmp.eq.s32.totalorder %s20, 1
      %p43 = por %p41, %p42
      %p45 = scmp.ne.s32.totalorder %s28, %s44
      %p46 = scmp.eq.s32.totalorder %s20, 0
      %p47 = por %p45, %p46
      %s48 = ssub.s32 %s14, %s21
      %p49 = scmp.eq.s32.totalorder %s48, 0
      %s51 = sadd.s32 %s50, 1
      %s52 = scalar_select %p49, %s50, %s51
      %p55 = pneg %p49
      %p56 = scmp.eq.s32.totalorder %s14, 1
      %p57 = por %p55, %p56
      %p58 = scmp.ne.s32.totalorder %s50, %s53
      %p59 = scmp.eq.s32.totalorder %s14, 0
      %p60 = por %p58, %p59
      %p61 = scmp.ne.s32.totalorder %s50, %s53
      %p62 = scmp.eq.s32.totalorder %s19, 1
      %p63 = por %p61, %p62
      %p64 = scmp.ne.s32.totalorder %s53, %s54
      %p65 = scmp.eq.s32.totalorder %s19, 0
      %p66 = por %p64, %p65
      %p67 = scmp.ne.s32.totalorder %s53, %s54
      %p68 = scmp.eq.s32.totalorder %s20, 1
      %p69 = por %p67, %p68
      %p71 = scmp.ne.s32.totalorder %s54, %s70
      %p72 = scmp.eq.s32.totalorder %s20, 0
      %p73 = por %p71, %p72
      %s74 = ssub.s32 %s14, %s21
      %p75 = scmp.eq.s32.totalorder %s74, 0
      %s77 = sadd.s32 %s76, 1
      %s78 = scalar_select %p75, %s76, %s77
      %p81 = pneg %p75
      %p82 = scmp.eq.s32.totalorder %s14, 1
      %p83 = por %p81, %p82
      %p84 = scmp.ne.s32.totalorder %s76, %s79
      %p85 = scmp.eq.s32.totalorder %s14, 0
      %p86 = por %p84, %p85
      %p87 = scmp.ne.s32.totalorder %s76, %s79
      %p88 = scmp.eq.s32.totalorder %s19, 1
      %p89 = por %p87, %p88
      %p90 = scmp.ne.s32.totalorder %s79, %s80
      %p91 = scmp.eq.s32.totalorder %s19, 0
      %p92 = por %p90, %p91
      %p93 = scmp.ne.s32.totalorder %s79, %s80
      %p94 = scmp.eq.s32.totalorder %s20, 1
      %p95 = por %p93, %p94
      %p97 = scmp.ne.s32.totalorder %s80, %s96
      %p98 = scmp.eq.s32.totalorder %s20, 0
      %p99 = por %p97, %p98
      %s100 = ssub.s32 %s14, %s21
      %p101 = scmp.eq.s32.totalorder %s100, 0
      %s103 = sadd.s32 %s102, 1
      %s104 = scalar_select %p101, %s102, %s103
      %p107 = pneg %p101
      %p108 = scmp.eq.s32.totalorder %s14, 1
      %p109 = por %p107, %p108
      %p110 = scmp.ne.s32.totalorder %s102, %s105
      %p111 = scmp.eq.s32.totalorder %s14, 0
      %p112 = por %p110, %p111
      %p113 = scmp.ne.s32.totalorder %s102, %s105
      %p114 = scmp.eq.s32.totalorder %s19, 1
      %p115 = por %p113, %p114
      %p116 = scmp.ne.s32.totalorder %s105, %s106
      %p117 = scmp.eq.s32.totalorder %s19, 0
      %p118 = por %p116, %p117
      %p119 = scmp.ne.s32.totalorder %s105, %s106
      %p120 = scmp.eq.s32.totalorder %s20, 1
      %p121 = por %p119, %p120
      %p123 = scmp.ne.s32.totalorder %s106, %s122
      %p124 = scmp.eq.s32.totalorder %s20, 0
      %p125 = por %p123, %p124
      %s126 = ssub.s32 %s14, %s21
      %p127 = scmp.eq.s32.totalorder %s126, 0
      %s129 = sadd.s32 %s128, 1
      %s130 = scalar_select %p127, %s128, %s129
      %p133 = pneg %p127
      %p134 = scmp.eq.s32.totalorder %s14, 1
      %p135 = por %p133, %p134
      %p136 = scmp.ne.s32.totalorder %s128, %s131
      %p137 = scmp.eq.s32.totalorder %s14, 0
      %p138 = por %p136, %p137
      %p139 = scmp.ne.s32.totalorder %s128, %s131
      %p140 = scmp.eq.s32.totalorder %s19, 1
      %p141 = por %p139, %p140
      %p142 = scmp.ne.s32.totalorder %s131, %s132
      %p143 = scmp.eq.s32.totalorder %s19, 0
      %p144 = por %p142, %p143
      %p145 = scmp.ne.s32.totalorder %s131, %s132
      %p146 = scmp.eq.s32.totalorder %s20, 1
      %p147 = por %p145, %p146
      %p149 = scmp.ne.s32.totalorder %s132, %s148
      %p150 = scmp.eq.s32.totalorder %s20, 0
      %p151 = por %p149, %p150
      %p152 = scmp.le.s32.totalorder 1, %s14
      %p153 = scmp.lt.s32.totalorder %s14, 3
      %p154 = pnand %p152, %p153
      %p155 = pneg %p154
      // Predicated region
      $region9: #{ed_forward.23} parent=5 // pred_check
        _
      $region10: #{ed_forward.23} parent=5 // pred_check_branch
        %157 = sbr.rel (%p154) target = $region12
      $region11: #{ed_forward.23} parent=5 // pred_region
        %s158 = ssub.s32 %s14, 1
      $region12: #{ed_forward.23} parent=5 // pred_fallthru
        _
      %p159 = scmp.lt.s32.totalorder %s14, 2
      // Predicated region
      $region13: #{ed_forward.23} parent=5 // pred_check
        %p160 = pneg %p159
      $region14: #{ed_forward.23} parent=5 // pred_check_branch
        %162 = sbr.rel (%p160) target = $region16
      $region15: #{ed_forward.23} parent=5 // pred_region
        // Predicated region
        $region17: #{ed_forward.23} parent=15 // pred_check
          %p163 = pneg %p34
        $region18: #{ed_forward.23} parent=15 // pred_check_branch
          %165 = sbr.rel (%p163) target = $region20
        $region19: #{ed_forward.23} parent=15 // pred_region
          %p166 = scmp.lt.s32.totalorder %s14, 1
          %s167 = scalar_select %p166, %s14, 1
          %s168 = smul.addr %s167, 32
          %s169 = smul.addr %s168, 8
          %s170 = scalar_lea.vmem %s0, %s169
        $region20: #{ed_forward.23} parent=15 // pred_fallthru
          _
        // Predicated region
        $region21: #{ed_forward.23} parent=15 // pred_check
          %p171 = pneg %p60
        $region22: #{ed_forward.23} parent=15 // pred_check_branch
          %173 = sbr.rel (%p171) target = $region24
        $region23: #{ed_forward.23} parent=15 // pred_region
          %p174 = scmp.lt.s32.totalorder %s14, 1
          %s175 = scalar_select %p174, %s14, 1
          %s176 = smul.addr %s175, 32
          %s177 = smul.addr %s176, 8
          %s178 = scalar_lea.vmem %s1, %s177
        $region24: #{ed_forward.23} parent=15 // pred_fallthru
          _
        // Predicated region
        $region25: #{ed_forward.23} parent=15 // pred_check
          %p179 = pneg %p86
        $region26: #{ed_forward.23} parent=15 // pred_check_branch
          %181 = sbr.rel (%p179) target = $region28
        $region27: #{ed_forward.23} parent=15 // pred_region
          %p182 = scmp.lt.s32.totalorder %s14, 1
          %s183 = scalar_select %p182, %s14, 1
          %s184 = smul.addr %s183, 32
          %s185 = smul.addr %s184, 8
          %s186 = scalar_lea.vmem %s2, %s185
        $region28: #{ed_forward.23} parent=15 // pred_fallthru
          _
      $region16: #{ed_forward.23} parent=5 // pred_fallthru
        _
      %p187 = scmp.le.s32.totalorder 1, %s14
      %p188 = scmp.lt.s32.totalorder %s14, 3
      %p189 = pnand %p187, %p188
      %p190 = pneg %p189
      // Predicated region
      $region29: #{ed_forward.23} parent=5 // pred_check
        _
      $region30: #{ed_forward.23} parent=5 // pred_check_branch
        %192 = sbr.rel (%p189) target = $region32
      $region31: #{ed_forward.23} parent=5 // pred_region
        %s193 = ssub.s32 %s14, 1
        %p194 = scmp.lt.s32.totalorder %s19, 1
        %s195 = scalar_select %p194, %s19, 1
        %s196 = smul.addr %s195, 32
        %s197 = smul.addr %s196, 8
        %s198 = scalar_lea.vmem %s0, %s197
        %p199 = pneg %p40
        %p200 = pneg %p37
        %p201 = scmp.lt.s32.totalorder %s19, 1
        %s202 = scalar_select %p201, %s19, 1
        %s203 = smul.addr %s202, 32
        %s204 = smul.addr %s203, 8
        %s205 = scalar_lea.vmem %s1, %s204
        %p206 = pneg %p66
        %p207 = pneg %p63
        %p208 = scmp.lt.s32.totalorder %s19, 1
        %s209 = scalar_select %p208, %s19, 1
        %s210 = smul.addr %s209, 32
        %s211 = smul.addr %s210, 8
        %s212 = scalar_lea.vmem %s2, %s211
        %p213 = pneg %p92
        %p214 = pneg %p89
        %p215 = pneg %p118
        %p216 = pneg %p115
        %p217 = scmp.lt.s32.totalorder %s19, 1
        %s218 = scalar_select %p217, %s19, 1
        %s219 = smul.addr %s218, 32
        %s220 = smul.addr %s219, 8
        %s221 = scalar_lea.vmem %s3, %s220
        %p222 = pneg %p144
        %p223 = pneg %p141
        %s224 = sand.u32 %s131, 1
        %s225 = scalar_lea.sflag [#allocation3], %s224
        %s226 = sand.u32 %s131, 1
        %s227 = smul.addr %s226, 256
        %s228 = scalar_lea.vmem [#allocation2], %s227
        %p229 = scmp.lt.s32.totalorder %s19, 1
        %s230 = scalar_select %p229, %s19, 1
        %s231 = smul.addr %s230, 32
        %s232 = smul.addr %s231, 8
        %s233 = scalar_lea.vmem %s0, %s232
        %p234 = scmp.lt.s32.totalorder %s19, 1
        %s235 = scalar_select %p234, %s19, 1
        %s236 = smul.addr %s235, 32
        %s237 = smul.addr %s236, 8
        %s238 = scalar_lea.vmem %s1, %s237
        %p239 = scmp.lt.s32.totalorder %s19, 1
        %s240 = scalar_select %p239, %s19, 1
        %s241 = smul.addr %s240, 32
        %s242 = smul.addr %s241, 8
        %s243 = scalar_lea.vmem %s2, %s242
        %p244 = scmp.lt.s32.totalorder %s19, 1
        %s245 = scalar_select %p244, %s19, 1
        %s246 = smul.addr %s245, 32
        %s247 = smul.addr %s246, 8
        %s248 = scalar_lea.vmem %s3, %s247
        %v249 = vld [vmem:[%s233] sm:$0xff]
        %v250 = vld [vmem:[%s233 + $0x8] sm:$0xff]
        %v251 = vld [vmem:[%s233 + $0x10] sm:$0xff]
        %v252 = vld [vmem:[%s233 + $0x18] sm:$0xff]
        %v253 = vld [vmem:[%s233 + $0x20] sm:$0xff]
        %v254 = vld [vmem:[%s233 + $0x28] sm:$0xff]
        %v255 = vld [vmem:[%s233 + $0x30] sm:$0xff]
        %v256 = vld [vmem:[%s233 + $0x38] sm:$0xff]
        %v257 = vld [vmem:[%s233 + $0x40] sm:$0xff]
        %v258 = vld [vmem:[%s233 + $0x48] sm:$0xff]
        %v259 = vld [vmem:[%s233 + $0x50] sm:$0xff]
        %v260 = vld [vmem:[%s233 + $0x58] sm:$0xff]
        %v261 = vld [vmem:[%s233 + $0x60] sm:$0xff]
        %v262 = vld [vmem:[%s233 + $0x68] sm:$0xff]
        %v263 = vld [vmem:[%s233 + $0x70] sm:$0xff]
        %v264 = vld [vmem:[%s233 + $0x78] sm:$0xff]
        %v265 = vld [vmem:[%s233 + $0x80] sm:$0xff]
        %v266 = vld [vmem:[%s233 + $0x88] sm:$0xff]
        %v267 = vld [vmem:[%s233 + $0x90] sm:$0xff]
        %v268 = vld [vmem:[%s233 + $0x98] sm:$0xff]
        %v269 = vld [vmem:[%s233 + $0xa0] sm:$0xff]
        %v270 = vld [vmem:[%s233 + $0xa8] sm:$0xff]
        %v271 = vld [vmem:[%s233 + $0xb0] sm:$0xff]
        %v272 = vld [vmem:[%s233 + $0xb8] sm:$0xff]
        %v273 = vld [vmem:[%s233 + $0xc0] sm:$0xff]
        %v274 = vld [vmem:[%s233 + $0xc8] sm:$0xff]
        %v275 = vld [vmem:[%s233 + $0xd0] sm:$0xff]
        %v276 = vld [vmem:[%s233 + $0xd8] sm:$0xff]
        %v277 = vld [vmem:[%s233 + $0xe0] sm:$0xff]
        %v278 = vld [vmem:[%s233 + $0xe8] sm:$0xff]
        %v279 = vld [vmem:[%s233 + $0xf0] sm:$0xff]
        %v280 = vld [vmem:[%s233 + $0xf8] sm:$0xff]
        %v281 = vld [vmem:[%s238] sm:$0xff]
        %v282 = vld [vmem:[%s238 + $0x8] sm:$0xff]
        %v283 = vld [vmem:[%s238 + $0x10] sm:$0xff]
        %v284 = vld [vmem:[%s238 + $0x18] sm:$0xff]
        %v285 = vld [vmem:[%s238 + $0x20] sm:$0xff]
        %v286 = vld [vmem:[%s238 + $0x28] sm:$0xff]
        %v287 = vld [vmem:[%s238 + $0x30] sm:$0xff]
        %v288 = vld [vmem:[%s238 + $0x38] sm:$0xff]
        %v289 = vld [vmem:[%s238 + $0x40] sm:$0xff]
        %v290 = vld [vmem:[%s238 + $0x48] sm:$0xff]
        %v291 = vld [vmem:[%s238 + $0x50] sm:$0xff]
        %v292 = vld [vmem:[%s238 + $0x58] sm:$0xff]
        %v293 = vld [vmem:[%s238 + $0x60] sm:$0xff]
        %v294 = vld [vmem:[%s238 + $0x68] sm:$0xff]
        %v295 = vld [vmem:[%s238 + $0x70] sm:$0xff]
        %v296 = vld [vmem:[%s238 + $0x78] sm:$0xff]
        %v297 = vld [vmem:[%s238 + $0x80] sm:$0xff]
        %v298 = vld [vmem:[%s238 + $0x88] sm:$0xff]
        %v299 = vld [vmem:[%s238 + $0x90] sm:$0xff]
        %v300 = vld [vmem:[%s238 + $0x98] sm:$0xff]
        %v301 = vld [vmem:[%s238 + $0xa0] sm:$0xff]
        %v302 = vld [vmem:[%s238 + $0xa8] sm:$0xff]
        %v303 = vld [vmem:[%s238 + $0xb0] sm:$0xff]
        %v304 = vld [vmem:[%s238 + $0xb8] sm:$0xff]
        %v305 = vld [vmem:[%s238 + $0xc0] sm:$0xff]
        %v306 = vld [vmem:[%s238 + $0xc8] sm:$0xff]
        %v307 = vld [vmem:[%s238 + $0xd0] sm:$0xff]
        %v308 = vld [vmem:[%s238 + $0xd8] sm:$0xff]
        %v309 = vld [vmem:[%s238 + $0xe0] sm:$0xff]
        %v310 = vld [vmem:[%s238 + $0xe8] sm:$0xff]
        %v311 = vld [vmem:[%s238 + $0xf0] sm:$0xff]
        %v312 = vld [vmem:[%s238 + $0xf8] sm:$0xff]
        %v313 = vld [vmem:[%s243] sm:$0xff]
        %v314 = vld [vmem:[%s243 + $0x8] sm:$0xff]
        %v315 = vld [vmem:[%s243 + $0x10] sm:$0xff]
        %v316 = vld [vmem:[%s243 + $0x18] sm:$0xff]
        %v317 = vld [vmem:[%s243 + $0x20] sm:$0xff]
        %v318 = vld [vmem:[%s243 + $0x28] sm:$0xff]
        %v319 = vld [vmem:[%s243 + $0x30] sm:$0xff]
        %v320 = vld [vmem:[%s243 + $0x38] sm:$0xff]
        %v321 = vld [vmem:[%s243 + $0x40] sm:$0xff]
        %v322 = vld [vmem:[%s243 + $0x48] sm:$0xff]
        %v323 = vld [vmem:[%s243 + $0x50] sm:$0xff]
        %v324 = vld [vmem:[%s243 + $0x58] sm:$0xff]
        %v325 = vld [vmem:[%s243 + $0x60] sm:$0xff]
        %v326 = vld [vmem:[%s243 + $0x68] sm:$0xff]
        %v327 = vld [vmem:[%s243 + $0x70] sm:$0xff]
        %v328 = vld [vmem:[%s243 + $0x78] sm:$0xff]
        %v329 = vld [vmem:[%s243 + $0x80] sm:$0xff]
        %v330 = vld [vmem:[%s243 + $0x88] sm:$0xff]
        %v331 = vld [vmem:[%s243 + $0x90] sm:$0xff]
        %v332 = vld [vmem:[%s243 + $0x98] sm:$0xff]
        %v333 = vld [vmem:[%s243 + $0xa0] sm:$0xff]
        %v334 = vld [vmem:[%s243 + $0xa8] sm:$0xff]
        %v335 = vld [vmem:[%s243 + $0xb0] sm:$0xff]
        %v336 = vld [vmem:[%s243 + $0xb8] sm:$0xff]
        %v337 = vld [vmem:[%s243 + $0xc0] sm:$0xff]
        %v338 = vld [vmem:[%s243 + $0xc8] sm:$0xff]
        %v339 = vld [vmem:[%s243 + $0xd0] sm:$0xff]
        %v340 = vld [vmem:[%s243 + $0xd8] sm:$0xff]
        %v341 = vld [vmem:[%s243 + $0xe0] sm:$0xff]
        %v342 = vld [vmem:[%s243 + $0xe8] sm:$0xff]
        %v343 = vld [vmem:[%s243 + $0xf0] sm:$0xff]
        %v344 = vld [vmem:[%s243 + $0xf8] sm:$0xff]
        %vm345 = vcmask 64512
        %v347 = vsel %vm345, %v249, 0
        %v350 = vsel %vm345, %v250, 0
        %v353 = vsel %vm345, %v251, 0
        %v356 = vsel %vm345, %v252, 0
        %v359 = vsel %vm345, %v253, 0
        %v362 = vsel %vm345, %v254, 0
        %v365 = vsel %vm345, %v255, 0
        %v368 = vsel %vm345, %v256, 0
        %v371 = vsel %vm345, %v281, 0
        %v374 = vsel %vm345, %v282, 0
        %v377 = vsel %vm345, %v283, 0
        %v380 = vsel %vm345, %v284, 0
        %v383 = vsel %vm345, %v285, 0
        %v386 = vsel %vm345, %v286, 0
        %v389 = vsel %vm345, %v287, 0
        %v392 = vsel %vm345, %v288, 0
        %394 = vmatprep.subr.mxu0 0.0
        %395 = vmatpush1.xpose.msra.mxu0 0.0
        %396 = vmatprep.subr.mxu0 0.0
        %397 = vmatpush1.xpose.msra.mxu0 0.0
        %398 = vmatprep.subr.mxu0 0.0
        %399 = vmatpush1.xpose.msra.mxu0 0.0
        %400 = vmatprep.subr.mxu0 0.0
        %401 = vmatpush1.xpose.msra.mxu0 0.0
        %402 = vmatprep.subr.mxu0 0.0
        %403 = vmatpush1.xpose.msra.mxu0 0.0
        %404 = vmatprep.subr.mxu0 0.0
        %405 = vmatpush1.xpose.msra.mxu0 0.0
        %406 = vmatprep.subr.mxu0 0.0
        %407 = vmatpush1.xpose.msra.mxu0 0.0
        %408 = vmatprep.subr.mxu0 0.0
        %409 = vmatpush1.xpose.msra.mxu0 0.0
        %410 = vmatprep.subr.mxu0 0.0
        %411 = vmatpush1.xpose.msra.mxu0 %v392
        %412 = vmatprep.subr.mxu0 0.0
        %413 = vmatpush1.xpose.msra.mxu0 %v389
        %414 = vmatprep.subr.mxu0 0.0
        %415 = vmatpush1.xpose.msra.mxu0 %v386
        %416 = vmatprep.subr.mxu0 0.0
        %417 = vmatpush1.xpose.msra.mxu0 %v383
        %418 = vmatprep.subr.mxu0 0.0
        %419 = vmatpush1.xpose.msra.mxu0 %v380
        %420 = vmatprep.subr.mxu0 0.0
        %421 = vmatpush1.xpose.msra.mxu0 %v377
        %422 = vmatprep.subr.mxu0 0.0
        %423 = vmatpush1.xpose.msra.mxu0 %v374
        %424 = vmatprep.subr.mxu0 0.0
        %425 = vmatpush1.xpose.msra.mxu0 %v371
        %426 = vmatprep.subr.mxu0 0.0
        %427 = vmatpush2.xpose.msra.mxu0 0.0
        %428 = vmatprep.subr.mxu0 0.0
        %429 = vmatpush2.xpose.msra.mxu0 0.0
        %430 = vmatprep.subr.mxu0 0.0
        %431 = vmatpush2.xpose.msra.mxu0 0.0
        %432 = vmatprep.subr.mxu0 0.0
        %433 = vmatpush2.xpose.msra.mxu0 0.0
        %434 = vmatprep.subr.mxu0 0.0
        %435 = vmatpush2.xpose.msra.mxu0 0.0
        %436 = vmatprep.subr.mxu0 0.0
        %437 = vmatpush2.xpose.msra.mxu0 0.0
        %438 = vmatprep.subr.mxu0 0.0
        %439 = vmatpush2.xpose.msra.mxu0 0.0
        %440 = vmatprep.subr.mxu0 0.0
        %441 = vmatpush2.xpose.msra.mxu0 0.0
        %442 = vmatprep.subr.mxu0 0.0
        %443 = vmatpush2.xpose.msra.mxu0 0.0
        %444 = vmatprep.subr.mxu0 0.0
        %445 = vmatpush2.xpose.msra.mxu0 0.0
        %446 = vmatprep.subr.mxu0 0.0
        %447 = vmatpush2.xpose.msra.mxu0 0.0
        %448 = vmatprep.subr.mxu0 0.0
        %449 = vmatpush2.xpose.msra.mxu0 0.0
        %450 = vmatprep.subr.mxu0 0.0
        %451 = vmatpush2.xpose.msra.mxu0 0.0
        %452 = vmatprep.subr.mxu0 0.0
        %453 = vmatpush2.xpose.msra.mxu0 0.0
        %454 = vmatprep.subr.mxu0 0.0
        %455 = vmatpush2.xpose.msra.mxu0 0.0
        %456 = vmatprep.subr.mxu0 0.0
        %457 = vmatpush2.xpose.msra.mxu0 0.0
        %458 = vmatprep.mubr.f32.mxu0 0.0
        %459 = vmatmul.mubr.f32.gmra.mxu0 %v347
        %v460 = vpop.f32.mrf.mxu0
        %v461 = vadd.f32 0.0, %v460
        %v462 = vpop.f32.mrf.mxu0
        %463 = vmatprep.mubr.f32.mxu0 0.0
        %464 = vmatmul.mubr.f32.gmra.mxu0 %v350
        %v465 = vpop.f32.mrf.mxu0
        %v466 = vadd.f32 0.0, %v465
        %v467 = vpop.f32.mrf.mxu0
        %468 = vmatprep.mubr.f32.mxu0 0.0
        %469 = vmatmul.mubr.f32.gmra.mxu0 %v353
        %v470 = vpop.f32.mrf.mxu0
        %v471 = vadd.f32 0.0, %v470
        %v472 = vpop.f32.mrf.mxu0
        %473 = vmatprep.mubr.f32.mxu0 0.0
        %474 = vmatmul.mubr.f32.gmra.mxu0 %v356
        %v475 = vpop.f32.mrf.mxu0
        %v476 = vadd.f32 0.0, %v475
        %v477 = vpop.f32.mrf.mxu0
        %478 = vmatprep.mubr.f32.mxu0 0.0
        %479 = vmatmul.mubr.f32.gmra.mxu0 %v359
        %v480 = vpop.f32.mrf.mxu0
        %v481 = vadd.f32 0.0, %v480
        %v482 = vpop.f32.mrf.mxu0
        %483 = vmatprep.mubr.f32.mxu0 0.0
        %484 = vmatmul.mubr.f32.gmra.mxu0 %v362
        %v485 = vpop.f32.mrf.mxu0
        %v486 = vadd.f32 0.0, %v485
        %v487 = vpop.f32.mrf.mxu0
        %488 = vmatprep.mubr.f32.mxu0 0.0
        %489 = vmatmul.mubr.f32.gmra.mxu0 %v365
        %v490 = vpop.f32.mrf.mxu0
        %v491 = vadd.f32 0.0, %v490
        %v492 = vpop.f32.mrf.mxu0
        %493 = vmatprep.mubr.f32.mxu0 0.0
        %494 = vmatmul.mubr.f32.gmra.mxu0 %v368
        %v495 = vpop.f32.mrf.mxu0
        %v496 = vadd.f32 0.0, %v495
        %v497 = vpop.f32.mrf.mxu0
        %498 = vdwg.mxu0
        %v500 = vsel %vm345, %v257, 0
        %v503 = vsel %vm345, %v258, 0
        %v506 = vsel %vm345, %v259, 0
        %v509 = vsel %vm345, %v260, 0
        %v512 = vsel %vm345, %v261, 0
        %v515 = vsel %vm345, %v262, 0
        %v518 = vsel %vm345, %v263, 0
        %v521 = vsel %vm345, %v264, 0
        %v524 = vsel %vm345, %v289, 0
        %v527 = vsel %vm345, %v290, 0
        %v530 = vsel %vm345, %v291, 0
        %v533 = vsel %vm345, %v292, 0
        %v536 = vsel %vm345, %v293, 0
        %v539 = vsel %vm345, %v294, 0
        %v542 = vsel %vm345, %v295, 0
        %v545 = vsel %vm345, %v296, 0
        %547 = vmatprep.subr.mxu0 0.0
        %548 = vmatpush1.xpose.msra.mxu0 0.0
        %549 = vmatprep.subr.mxu0 0.0
        %550 = vmatpush1.xpose.msra.mxu0 0.0
        %551 = vmatprep.subr.mxu0 0.0
        %552 = vmatpush1.xpose.msra.mxu0 0.0
        %553 = vmatprep.subr.mxu0 0.0
        %554 = vmatpush1.xpose.msra.mxu0 0.0
        %555 = vmatprep.subr.mxu0 0.0
        %556 = vmatpush1.xpose.msra.mxu0 0.0
        %557 = vmatprep.subr.mxu0 0.0
        %558 = vmatpush1.xpose.msra.mxu0 0.0
        %559 = vmatprep.subr.mxu0 0.0
        %560 = vmatpush1.xpose.msra.mxu0 0.0
        %561 = vmatprep.subr.mxu0 0.0
        %562 = vmatpush1.xpose.msra.mxu0 0.0
        %563 = vmatprep.subr.mxu0 0.0
        %564 = vmatpush1.xpose.msra.mxu0 %v545
        %565 = vmatprep.subr.mxu0 0.0
        %566 = vmatpush1.xpose.msra.mxu0 %v542
        %567 = vmatprep.subr.mxu0 0.0
        %568 = vmatpush1.xpose.msra.mxu0 %v539
        %569 = vmatprep.subr.mxu0 0.0
        %570 = vmatpush1.xpose.msra.mxu0 %v536
        %571 = vmatprep.subr.mxu0 0.0
        %572 = vmatpush1.xpose.msra.mxu0 %v533
        %573 = vmatprep.subr.mxu0 0.0
        %574 = vmatpush1.xpose.msra.mxu0 %v530
        %575 = vmatprep.subr.mxu0 0.0
        %576 = vmatpush1.xpose.msra.mxu0 %v527
        %577 = vmatprep.subr.mxu0 0.0
        %578 = vmatpush1.xpose.msra.mxu0 %v524
        %579 = vmatprep.subr.mxu0 0.0
        %580 = vmatpush2.xpose.msra.mxu0 0.0
        %581 = vmatprep.subr.mxu0 0.0
        %582 = vmatpush2.xpose.msra.mxu0 0.0
        %583 = vmatprep.subr.mxu0 0.0
        %584 = vmatpush2.xpose.msra.mxu0 0.0
        %585 = vmatprep.subr.mxu0 0.0
        %586 = vmatpush2.xpose.msra.mxu0 0.0
        %587 = vmatprep.subr.mxu0 0.0
        %588 = vmatpush2.xpose.msra.mxu0 0.0
        %589 = vmatprep.subr.mxu0 0.0
        %590 = vmatpush2.xpose.msra.mxu0 0.0
        %591 = vmatprep.subr.mxu0 0.0
        %592 = vmatpush2.xpose.msra.mxu0 0.0
        %593 = vmatprep.subr.mxu0 0.0
        %594 = vmatpush2.xpose.msra.mxu0 0.0
        %595 = vmatprep.subr.mxu0 0.0
        %596 = vmatpush2.xpose.msra.mxu0 0.0
        %597 = vmatprep.subr.mxu0 0.0
        %598 = vmatpush2.xpose.msra.mxu0 0.0
        %599 = vmatprep.subr.mxu0 0.0
        %600 = vmatpush2.xpose.msra.mxu0 0.0
        %601 = vmatprep.subr.mxu0 0.0
        %602 = vmatpush2.xpose.msra.mxu0 0.0
        %603 = vmatprep.subr.mxu0 0.0
        %604 = vmatpush2.xpose.msra.mxu0 0.0
        %605 = vmatprep.subr.mxu0 0.0
        %606 = vmatpush2.xpose.msra.mxu0 0.0
        %607 = vmatprep.subr.mxu0 0.0
        %608 = vmatpush2.xpose.msra.mxu0 0.0
        %609 = vmatprep.subr.mxu0 0.0
        %610 = vmatpush2.xpose.msra.mxu0 0.0
        %611 = vmatprep.mubr.f32.mxu0 0.0
        %612 = vmatmul.mubr.f32.gmra.mxu0 %v500
        %v613 = vpop.f32.mrf.mxu0
        %v614 = vadd.f32 0.0, %v613
        %v615 = vpop.f32.mrf.mxu0
        %616 = vmatprep.mubr.f32.mxu0 0.0
        %617 = vmatmul.mubr.f32.gmra.mxu0 %v503
        %v618 = vpop.f32.mrf.mxu0
        %v619 = vadd.f32 0.0, %v618
        %v620 = vpop.f32.mrf.mxu0
        %621 = vmatprep.mubr.f32.mxu0 0.0
        %622 = vmatmul.mubr.f32.gmra.mxu0 %v506
        %v623 = vpop.f32.mrf.mxu0
        %v624 = vadd.f32 0.0, %v623
        %v625 = vpop.f32.mrf.mxu0
        %626 = vmatprep.mubr.f32.mxu0 0.0
        %627 = vmatmul.mubr.f32.gmra.mxu0 %v509
        %v628 = vpop.f32.mrf.mxu0
        %v629 = vadd.f32 0.0, %v628
        %v630 = vpop.f32.mrf.mxu0
        %631 = vmatprep.mubr.f32.mxu0 0.0
        %632 = vmatmul.mubr.f32.gmra.mxu0 %v512
        %v633 = vpop.f32.mrf.mxu0
        %v634 = vadd.f32 0.0, %v633
        %v635 = vpop.f32.mrf.mxu0
        %636 = vmatprep.mubr.f32.mxu0 0.0
        %637 = vmatmul.mubr.f32.gmra.mxu0 %v515
        %v638 = vpop.f32.mrf.mxu0
        %v639 = vadd.f32 0.0, %v638
        %v640 = vpop.f32.mrf.mxu0
        %641 = vmatprep.mubr.f32.mxu0 0.0
        %642 = vmatmul.mubr.f32.gmra.mxu0 %v518
        %v643 = vpop.f32.mrf.mxu0
        %v644 = vadd.f32 0.0, %v643
        %v645 = vpop.f32.mrf.mxu0
        %646 = vmatprep.mubr.f32.mxu0 0.0
        %647 = vmatmul.mubr.f32.gmra.mxu0 %v521
        %v648 = vpop.f32.mrf.mxu0
        %v649 = vadd.f32 0.0, %v648
        %v650 = vpop.f32.mrf.mxu0
        %651 = vdwg.mxu0
        %v653 = vsel %vm345, %v265, 0
        %v656 = vsel %vm345, %v266, 0
        %v659 = vsel %vm345, %v267, 0
        %v662 = vsel %vm345, %v268, 0
        %v665 = vsel %vm345, %v269, 0
        %v668 = vsel %vm345, %v270, 0
        %v671 = vsel %vm345, %v271, 0
        %v674 = vsel %vm345, %v272, 0
        %v677 = vsel %vm345, %v297, 0
        %v680 = vsel %vm345, %v298, 0
        %v683 = vsel %vm345, %v299, 0
        %v686 = vsel %vm345, %v300, 0
        %v689 = vsel %vm345, %v301, 0
        %v692 = vsel %vm345, %v302, 0
        %v695 = vsel %vm345, %v303, 0
        %v698 = vsel %vm345, %v304, 0
        %700 = vmatprep.subr.mxu0 0.0
        %701 = vmatpush1.xpose.msra.mxu0 0.0
        %702 = vmatprep.subr.mxu0 0.0
        %703 = vmatpush1.xpose.msra.mxu0 0.0
        %704 = vmatprep.subr.mxu0 0.0
        %705 = vmatpush1.xpose.msra.mxu0 0.0
        %706 = vmatprep.subr.mxu0 0.0
        %707 = vmatpush1.xpose.msra.mxu0 0.0
        %708 = vmatprep.subr.mxu0 0.0
        %709 = vmatpush1.xpose.msra.mxu0 0.0
        %710 = vmatprep.subr.mxu0 0.0
        %711 = vmatpush1.xpose.msra.mxu0 0.0
        %712 = vmatprep.subr.mxu0 0.0
        %713 = vmatpush1.xpose.msra.mxu0 0.0
        %714 = vmatprep.subr.mxu0 0.0
        %715 = vmatpush1.xpose.msra.mxu0 0.0
        %716 = vmatprep.subr.mxu0 0.0
        %717 = vmatpush1.xpose.msra.mxu0 %v698
        %718 = vmatprep.subr.mxu0 0.0
        %719 = vmatpush1.xpose.msra.mxu0 %v695
        %720 = vmatprep.subr.mxu0 0.0
        %721 = vmatpush1.xpose.msra.mxu0 %v692
        %722 = vmatprep.subr.mxu0 0.0
        %723 = vmatpush1.xpose.msra.mxu0 %v689
        %724 = vmatprep.subr.mxu0 0.0
        %725 = vmatpush1.xpose.msra.mxu0 %v686
        %726 = vmatprep.subr.mxu0 0.0
        %727 = vmatpush1.xpose.msra.mxu0 %v683
        %728 = vmatprep.subr.mxu0 0.0
        %729 = vmatpush1.xpose.msra.mxu0 %v680
        %730 = vmatprep.subr.mxu0 0.0
        %731 = vmatpush1.xpose.msra.mxu0 %v677
        %732 = vmatprep.subr.mxu0 0.0
        %733 = vmatpush2.xpose.msra.mxu0 0.0
        %734 = vmatprep.subr.mxu0 0.0
        %735 = vmatpush2.xpose.msra.mxu0 0.0
        %736 = vmatprep.subr.mxu0 0.0
        %737 = vmatpush2.xpose.msra.mxu0 0.0
        %738 = vmatprep.subr.mxu0 0.0
        %739 = vmatpush2.xpose.msra.mxu0 0.0
        %740 = vmatprep.subr.mxu0 0.0
        %741 = vmatpush2.xpose.msra.mxu0 0.0
        %742 = vmatprep.subr.mxu0 0.0
        %743 = vmatpush2.xpose.msra.mxu0 0.0
        %744 = vmatprep.subr.mxu0 0.0
        %745 = vmatpush2.xpose.msra.mxu0 0.0
        %746 = vmatprep.subr.mxu0 0.0
        %747 = vmatpush2.xpose.msra.mxu0 0.0
        %748 = vmatprep.subr.mxu0 0.0
        %749 = vmatpush2.xpose.msra.mxu0 0.0
        %750 = vmatprep.subr.mxu0 0.0
        %751 = vmatpush2.xpose.msra.mxu0 0.0
        %752 = vmatprep.subr.mxu0 0.0
        %753 = vmatpush2.xpose.msra.mxu0 0.0
        %754 = vmatprep.subr.mxu0 0.0
        %755 = vmatpush2.xpose.msra.mxu0 0.0
        %756 = vmatprep.subr.mxu0 0.0
        %757 = vmatpush2.xpose.msra.mxu0 0.0
        %758 = vmatprep.subr.mxu0 0.0
        %759 = vmatpush2.xpose.msra.mxu0 0.0
        %760 = vmatprep.subr.mxu0 0.0
        %761 = vmatpush2.xpose.msra.mxu0 0.0
        %762 = vmatprep.subr.mxu0 0.0
        %763 = vmatpush2.xpose.msra.mxu0 0.0
        %764 = vmatprep.mubr.f32.mxu0 0.0
        %765 = vmatmul.mubr.f32.gmra.mxu0 %v653
        %v766 = vpop.f32.mrf.mxu0
        %v767 = vadd.f32 0.0, %v766
        %v768 = vpop.f32.mrf.mxu0
        %769 = vmatprep.mubr.f32.mxu0 0.0
        %770 = vmatmul.mubr.f32.gmra.mxu0 %v656
        %v771 = vpop.f32.mrf.mxu0
        %v772 = vadd.f32 0.0, %v771
        %v773 = vpop.f32.mrf.mxu0
        %774 = vmatprep.mubr.f32.mxu0 0.0
        %775 = vmatmul.mubr.f32.gmra.mxu0 %v659
        %v776 = vpop.f32.mrf.mxu0
        %v777 = vadd.f32 0.0, %v776
        %v778 = vpop.f32.mrf.mxu0
        %779 = vmatprep.mubr.f32.mxu0 0.0
        %780 = vmatmul.mubr.f32.gmra.mxu0 %v662
        %v781 = vpop.f32.mrf.mxu0
        %v782 = vadd.f32 0.0, %v781
        %v783 = vpop.f32.mrf.mxu0
        %784 = vmatprep.mubr.f32.mxu0 0.0
        %785 = vmatmul.mubr.f32.gmra.mxu0 %v665
        %v786 = vpop.f32.mrf.mxu0
        %v787 = vadd.f32 0.0, %v786
        %v788 = vpop.f32.mrf.mxu0
        %789 = vmatprep.mubr.f32.mxu0 0.0
        %790 = vmatmul.mubr.f32.gmra.mxu0 %v668
        %v791 = vpop.f32.mrf.mxu0
        %v792 = vadd.f32 0.0, %v791
        %v793 = vpop.f32.mrf.mxu0
        %794 = vmatprep.mubr.f32.mxu0 0.0
        %795 = vmatmul.mubr.f32.gmra.mxu0 %v671
        %v796 = vpop.f32.mrf.mxu0
        %v797 = vadd.f32 0.0, %v796
        %v798 = vpop.f32.mrf.mxu0
        %799 = vmatprep.mubr.f32.mxu0 0.0
        %800 = vmatmul.mubr.f32.gmra.mxu0 %v674
        %v801 = vpop.f32.mrf.mxu0
        %v802 = vadd.f32 0.0, %v801
        %v803 = vpop.f32.mrf.mxu0
        %804 = vdwg.mxu0
        %v806 = vsel %vm345, %v273, 0
        %v809 = vsel %vm345, %v274, 0
        %v812 = vsel %vm345, %v275, 0
        %v815 = vsel %vm345, %v276, 0
        %v818 = vsel %vm345, %v277, 0
        %v821 = vsel %vm345, %v278, 0
        %v824 = vsel %vm345, %v279, 0
        %v827 = vsel %vm345, %v280, 0
        %v830 = vsel %vm345, %v305, 0
        %v833 = vsel %vm345, %v306, 0
        %v836 = vsel %vm345, %v307, 0
        %v839 = vsel %vm345, %v308, 0
        %v842 = vsel %vm345, %v309, 0
        %v845 = vsel %vm345, %v310, 0
        %v848 = vsel %vm345, %v311, 0
        %v851 = vsel %vm345, %v312, 0
        %853 = vmatprep.subr.mxu0 0.0
        %854 = vmatpush1.xpose.msra.mxu0 0.0
        %855 = vmatprep.subr.mxu0 0.0
        %856 = vmatpush1.xpose.msra.mxu0 0.0
        %857 = vmatprep.subr.mxu0 0.0
        %858 = vmatpush1.xpose.msra.mxu0 0.0
        %859 = vmatprep.subr.mxu0 0.0
        %860 = vmatpush1.xpose.msra.mxu0 0.0
        %861 = vmatprep.subr.mxu0 0.0
        %862 = vmatpush1.xpose.msra.mxu0 0.0
        %863 = vmatprep.subr.mxu0 0.0
        %864 = vmatpush1.xpose.msra.mxu0 0.0
        %865 = vmatprep.subr.mxu0 0.0
        %866 = vmatpush1.xpose.msra.mxu0 0.0
        %867 = vmatprep.subr.mxu0 0.0
        %868 = vmatpush1.xpose.msra.mxu0 0.0
        %869 = vmatprep.subr.mxu0 0.0
        %870 = vmatpush1.xpose.msra.mxu0 %v851
        %871 = vmatprep.subr.mxu0 0.0
        %872 = vmatpush1.xpose.msra.mxu0 %v848
        %873 = vmatprep.subr.mxu0 0.0
        %874 = vmatpush1.xpose.msra.mxu0 %v845
        %875 = vmatprep.subr.mxu0 0.0
        %876 = vmatpush1.xpose.msra.mxu0 %v842
        %877 = vmatprep.subr.mxu0 0.0
        %878 = vmatpush1.xpose.msra.mxu0 %v839
        %879 = vmatprep.subr.mxu0 0.0
        %880 = vmatpush1.xpose.msra.mxu0 %v836
        %881 = vmatprep.subr.mxu0 0.0
        %882 = vmatpush1.xpose.msra.mxu0 %v833
        %883 = vmatprep.subr.mxu0 0.0
        %884 = vmatpush1.xpose.msra.mxu0 %v830
        %885 = vmatprep.subr.mxu0 0.0
        %886 = vmatpush2.xpose.msra.mxu0 0.0
        %887 = vmatprep.subr.mxu0 0.0
        %888 = vmatpush2.xpose.msra.mxu0 0.0
        %889 = vmatprep.subr.mxu0 0.0
        %890 = vmatpush2.xpose.msra.mxu0 0.0
        %891 = vmatprep.subr.mxu0 0.0
        %892 = vmatpush2.xpose.msra.mxu0 0.0
        %893 = vmatprep.subr.mxu0 0.0
        %894 = vmatpush2.xpose.msra.mxu0 0.0
        %895 = vmatprep.subr.mxu0 0.0
        %896 = vmatpush2.xpose.msra.mxu0 0.0
        %897 = vmatprep.subr.mxu0 0.0
        %898 = vmatpush2.xpose.msra.mxu0 0.0
        %899 = vmatprep.subr.mxu0 0.0
        %900 = vmatpush2.xpose.msra.mxu0 0.0
        %901 = vmatprep.subr.mxu0 0.0
        %902 = vmatpush2.xpose.msra.mxu0 0.0
        %903 = vmatprep.subr.mxu0 0.0
        %904 = vmatpush2.xpose.msra.mxu0 0.0
        %905 = vmatprep.subr.mxu0 0.0
        %906 = vmatpush2.xpose.msra.mxu0 0.0
        %907 = vmatprep.subr.mxu0 0.0
        %908 = vmatpush2.xpose.msra.mxu0 0.0
        %909 = vmatprep.subr.mxu0 0.0
        %910 = vmatpush2.xpose.msra.mxu0 0.0
        %911 = vmatprep.subr.mxu0 0.0
        %912 = vmatpush2.xpose.msra.mxu0 0.0
        %913 = vmatprep.subr.mxu0 0.0
        %914 = vmatpush2.xpose.msra.mxu0 0.0
        %915 = vmatprep.subr.mxu0 0.0
        %916 = vmatpush2.xpose.msra.mxu0 0.0
        %917 = vmatprep.mubr.f32.mxu0 0.0
        %918 = vmatmul.mubr.f32.gmra.mxu0 %v806
        %v919 = vpop.f32.mrf.mxu0
        %v920 = vadd.f32 0.0, %v919
        %v921 = vpop.f32.mrf.mxu0
        %922 = vmatprep.mubr.f32.mxu0 0.0
        %923 = vmatmul.mubr.f32.gmra.mxu0 %v809
        %v924 = vpop.f32.mrf.mxu0
        %v925 = vadd.f32 0.0, %v924
        %v926 = vpop.f32.mrf.mxu0
        %927 = vmatprep.mubr.f32.mxu0 0.0
        %928 = vmatmul.mubr.f32.gmra.mxu0 %v812
        %v929 = vpop.f32.mrf.mxu0
        %v930 = vadd.f32 0.0, %v929
        %v931 = vpop.f32.mrf.mxu0
        %932 = vmatprep.mubr.f32.mxu0 0.0
        %933 = vmatmul.mubr.f32.gmra.mxu0 %v815
        %v934 = vpop.f32.mrf.mxu0
        %v935 = vadd.f32 0.0, %v934
        %v936 = vpop.f32.mrf.mxu0
        %937 = vmatprep.mubr.f32.mxu0 0.0
        %938 = vmatmul.mubr.f32.gmra.mxu0 %v818
        %v939 = vpop.f32.mrf.mxu0
        %v940 = vadd.f32 0.0, %v939
        %v941 = vpop.f32.mrf.mxu0
        %942 = vmatprep.mubr.f32.mxu0 0.0
        %943 = vmatmul.mubr.f32.gmra.mxu0 %v821
        %v944 = vpop.f32.mrf.mxu0
        %v945 = vadd.f32 0.0, %v944
        %v946 = vpop.f32.mrf.mxu0
        %947 = vmatprep.mubr.f32.mxu0 0.0
        %948 = vmatmul.mubr.f32.gmra.mxu0 %v824
        %v949 = vpop.f32.mrf.mxu0
        %v950 = vadd.f32 0.0, %v949
        %v951 = vpop.f32.mrf.mxu0
        %952 = vmatprep.mubr.f32.mxu0 0.0
        %953 = vmatmul.mubr.f32.gmra.mxu0 %v827
        %v954 = vpop.f32.mrf.mxu0
        %v955 = vadd.f32 0.0, %v954
        %v956 = vpop.f32.mrf.mxu0
        %957 = vdwg.mxu0
        %v958 = vmul.f32 %v461, 0.35355338
        %v959 = vmul.f32 %v466, 0.35355338
        %v960 = vmul.f32 %v471, 0.35355338
        %v961 = vmul.f32 %v476, 0.35355338
        %v962 = vmul.f32 %v481, 0.35355338
        %v963 = vmul.f32 %v486, 0.35355338
        %v964 = vmul.f32 %v491, 0.35355338
        %v965 = vmul.f32 %v496, 0.35355338
        %v966 = vmul.f32 %v614, 0.35355338
        %v967 = vmul.f32 %v619, 0.35355338
        %v968 = vmul.f32 %v624, 0.35355338
        %v969 = vmul.f32 %v629, 0.35355338
        %v970 = vmul.f32 %v634, 0.35355338
        %v971 = vmul.f32 %v639, 0.35355338
        %v972 = vmul.f32 %v644, 0.35355338
        %v973 = vmul.f32 %v649, 0.35355338
        %v974 = vmul.f32 %v767, 0.35355338
        %v975 = vmul.f32 %v772, 0.35355338
        %v976 = vmul.f32 %v777, 0.35355338
        %v977 = vmul.f32 %v782, 0.35355338
        %v978 = vmul.f32 %v787, 0.35355338
        %v979 = vmul.f32 %v792, 0.35355338
        %v980 = vmul.f32 %v797, 0.35355338
        %v981 = vmul.f32 %v802, 0.35355338
        %v982 = vmul.f32 %v920, 0.35355338
        %v983 = vmul.f32 %v925, 0.35355338
        %v984 = vmul.f32 %v930, 0.35355338
        %v985 = vmul.f32 %v935, 0.35355338
        %v986 = vmul.f32 %v940, 0.35355338
        %v987 = vmul.f32 %v945, 0.35355338
        %v988 = vmul.f32 %v950, 0.35355338
        %v989 = vmul.f32 %v955, 0.35355338
        %vm990 = vcmask 523264
        %v991 = vsel %vm990, %v958, -inf
        %992 = vmax.xlane.f32.xlu0 %v991
        %v993 = vpop.xlane.xlu0 %992
        %v994 = vsel %vm990, %v959, -inf
        %995 = vmax.xlane.f32.xlu0 %v994
        %v996 = vpop.xlane.xlu0 %995
        %v997 = vsel %vm990, %v960, -inf
        %998 = vmax.xlane.f32.xlu0 %v997
        %v999 = vpop.xlane.xlu0 %998
        %v1000 = vsel %vm990, %v961, -inf
        %1001 = vmax.xlane.f32.xlu0 %v1000
        %v1002 = vpop.xlane.xlu0 %1001
        %v1003 = vsel %vm990, %v962, -inf
        %1004 = vmax.xlane.f32.xlu0 %v1003
        %v1005 = vpop.xlane.xlu0 %1004
        %v1006 = vsel %vm990, %v963, -inf
        %1007 = vmax.xlane.f32.xlu0 %v1006
        %v1008 = vpop.xlane.xlu0 %1007
        %v1009 = vsel %vm990, %v964, -inf
        %1010 = vmax.xlane.f32.xlu0 %v1009
        %v1011 = vpop.xlane.xlu0 %1010
        %v1012 = vsel %vm990, %v965, -inf
        %1013 = vmax.xlane.f32.xlu0 %v1012
        %v1014 = vpop.xlane.xlu0 %1013
        %v1015 = vsel %vm990, %v966, -inf
        %1016 = vmax.xlane.f32.xlu0 %v1015
        %v1017 = vpop.xlane.xlu0 %1016
        %v1018 = vsel %vm990, %v967, -inf
        %1019 = vmax.xlane.f32.xlu0 %v1018
        %v1020 = vpop.xlane.xlu0 %1019
        %v1021 = vsel %vm990, %v968, -inf
        %1022 = vmax.xlane.f32.xlu0 %v1021
        %v1023 = vpop.xlane.xlu0 %1022
        %v1024 = vsel %vm990, %v969, -inf
        %1025 = vmax.xlane.f32.xlu0 %v1024
        %v1026 = vpop.xlane.xlu0 %1025
        %v1027 = vsel %vm990, %v970, -inf
        %1028 = vmax.xlane.f32.xlu0 %v1027
        %v1029 = vpop.xlane.xlu0 %1028
        %v1030 = vsel %vm990, %v971, -inf
        %1031 = vmax.xlane.f32.xlu0 %v1030
        %v1032 = vpop.xlane.xlu0 %1031
        %v1033 = vsel %vm990, %v972, -inf
        %1034 = vmax.xlane.f32.xlu0 %v1033
        %v1035 = vpop.xlane.xlu0 %1034
        %v1036 = vsel %vm990, %v973, -inf
        %1037 = vmax.xlane.f32.xlu0 %v1036
        %v1038 = vpop.xlane.xlu0 %1037
        %v1039 = vsel %vm990, %v974, -inf
        %1040 = vmax.xlane.f32.xlu0 %v1039
        %v1041 = vpop.xlane.xlu0 %1040
        %v1042 = vsel %vm990, %v975, -inf
        %1043 = vmax.xlane.f32.xlu0 %v1042
        %v1044 = vpop.xlane.xlu0 %1043
        %v1045 = vsel %vm990, %v976, -inf
        %1046 = vmax.xlane.f32.xlu0 %v1045
        %v1047 = vpop.xlane.xlu0 %1046
        %v1048 = vsel %vm990, %v977, -inf
        %1049 = vmax.xlane.f32.xlu0 %v1048
        %v1050 = vpop.xlane.xlu0 %1049
        %v1051 = vsel %vm990, %v978, -inf
        %1052 = vmax.xlane.f32.xlu0 %v1051
        %v1053 = vpop.xlane.xlu0 %1052
        %v1054 = vsel %vm990, %v979, -inf
        %1055 = vmax.xlane.f32.xlu0 %v1054
        %v1056 = vpop.xlane.xlu0 %1055
        %v1057 = vsel %vm990, %v980, -inf
        %1058 = vmax.xlane.f32.xlu0 %v1057
        %v1059 = vpop.xlane.xlu0 %1058
        %v1060 = vsel %vm990, %v981, -inf
        %1061 = vmax.xlane.f32.xlu0 %v1060
        %v1062 = vpop.xlane.xlu0 %1061
        %v1063 = vsel %vm990, %v982, -inf
        %1064 = vmax.xlane.f32.xlu0 %v1063
        %v1065 = vpop.xlane.xlu0 %1064
        %v1066 = vsel %vm990, %v983, -inf
        %1067 = vmax.xlane.f32.xlu0 %v1066
        %v1068 = vpop.xlane.xlu0 %1067
        %v1069 = vsel %vm990, %v984, -inf
        %1070 = vmax.xlane.f32.xlu0 %v1069
        %v1071 = vpop.xlane.xlu0 %1070
        %v1072 = vsel %vm990, %v985, -inf
        %1073 = vmax.xlane.f32.xlu0 %v1072
        %v1074 = vpop.xlane.xlu0 %1073
        %v1075 = vsel %vm990, %v986, -inf
        %1076 = vmax.xlane.f32.xlu0 %v1075
        %v1077 = vpop.xlane.xlu0 %1076
        %v1078 = vsel %vm990, %v987, -inf
        %1079 = vmax.xlane.f32.xlu0 %v1078
        %v1080 = vpop.xlane.xlu0 %1079
        %v1081 = vsel %vm990, %v988, -inf
        %1082 = vmax.xlane.f32.xlu0 %v1081
        %v1083 = vpop.xlane.xlu0 %1082
        %v1084 = vsel %vm990, %v989, -inf
        %1085 = vmax.xlane.f32.xlu0 %v1084
        %v1086 = vpop.xlane.xlu0 %1085
        %v1087 = vsub.f32 %v958, %v993
        %v1088 = vsub.f32 %v959, %v996
        %v1089 = vsub.f32 %v960, %v999
        %v1090 = vsub.f32 %v961, %v1002
        %v1091 = vsub.f32 %v962, %v1005
        %v1092 = vsub.f32 %v963, %v1008
        %v1093 = vsub.f32 %v964, %v1011
        %v1094 = vsub.f32 %v965, %v1014
        %v1095 = vsub.f32 %v966, %v1017
        %v1096 = vsub.f32 %v967, %v1020
        %v1097 = vsub.f32 %v968, %v1023
        %v1098 = vsub.f32 %v969, %v1026
        %v1099 = vsub.f32 %v970, %v1029
        %v1100 = vsub.f32 %v971, %v1032
        %v1101 = vsub.f32 %v972, %v1035
        %v1102 = vsub.f32 %v973, %v1038
        %v1103 = vsub.f32 %v974, %v1041
        %v1104 = vsub.f32 %v975, %v1044
        %v1105 = vsub.f32 %v976, %v1047
        %v1106 = vsub.f32 %v977, %v1050
        %v1107 = vsub.f32 %v978, %v1053
        %v1108 = vsub.f32 %v979, %v1056
        %v1109 = vsub.f32 %v980, %v1059
        %v1110 = vsub.f32 %v981, %v1062
        %v1111 = vsub.f32 %v982, %v1065
        %v1112 = vsub.f32 %v983, %v1068
        %v1113 = vsub.f32 %v984, %v1071
        %v1114 = vsub.f32 %v985, %v1074
        %v1115 = vsub.f32 %v986, %v1077
        %v1116 = vsub.f32 %v987, %v1080
        %v1117 = vsub.f32 %v988, %v1083
        %v1118 = vsub.f32 %v989, %v1086
        %v1119 = vmul.f32 %v1087, 1.442695
        %v1120 = vpow.pop %v1119
        %v1121 = vmul.f32 %v1088, 1.442695
        %v1122 = vpow.pop %v1121
        %v1123 = vmul.f32 %v1089, 1.442695
        %v1124 = vpow.pop %v1123
        %v1125 = vmul.f32 %v1090, 1.442695
        %v1126 = vpow.pop %v1125
        %v1127 = vmul.f32 %v1091, 1.442695
        %v1128 = vpow.pop %v1127
        %v1129 = vmul.f32 %v1092, 1.442695
        %v1130 = vpow.pop %v1129
        %v1131 = vmul.f32 %v1093, 1.442695
        %v1132 = vpow.pop %v1131
        %v1133 = vmul.f32 %v1094, 1.442695
        %v1134 = vpow.pop %v1133
        %v1135 = vmul.f32 %v1095, 1.442695
        %v1136 = vpow.pop %v1135
        %v1137 = vmul.f32 %v1096, 1.442695
        %v1138 = vpow.pop %v1137
        %v1139 = vmul.f32 %v1097, 1.442695
        %v1140 = vpow.pop %v1139
        %v1141 = vmul.f32 %v1098, 1.442695
        %v1142 = vpow.pop %v1141
        %v1143 = vmul.f32 %v1099, 1.442695
        %v1144 = vpow.pop %v1143
        %v1145 = vmul.f32 %v1100, 1.442695
        %v1146 = vpow.pop %v1145
        %v1147 = vmul.f32 %v1101, 1.442695
        %v1148 = vpow.pop %v1147
        %v1149 = vmul.f32 %v1102, 1.442695
        %v1150 = vpow.pop %v1149
        %v1151 = vmul.f32 %v1103, 1.442695
        %v1152 = vpow.pop %v1151
        %v1153 = vmul.f32 %v1104, 1.442695
        %v1154 = vpow.pop %v1153
        %v1155 = vmul.f32 %v1105, 1.442695
        %v1156 = vpow.pop %v1155
        %v1157 = vmul.f32 %v1106, 1.442695
        %v1158 = vpow.pop %v1157
        %v1159 = vmul.f32 %v1107, 1.442695
        %v1160 = vpow.pop %v1159
        %v1161 = vmul.f32 %v1108, 1.442695
        %v1162 = vpow.pop %v1161
        %v1163 = vmul.f32 %v1109, 1.442695
        %v1164 = vpow.pop %v1163
        %v1165 = vmul.f32 %v1110, 1.442695
        %v1166 = vpow.pop %v1165
        %v1167 = vmul.f32 %v1111, 1.442695
        %v1168 = vpow.pop %v1167
        %v1169 = vmul.f32 %v1112, 1.442695
        %v1170 = vpow.pop %v1169
        %v1171 = vmul.f32 %v1113, 1.442695
        %v1172 = vpow.pop %v1171
        %v1173 = vmul.f32 %v1114, 1.442695
        %v1174 = vpow.pop %v1173
        %v1175 = vmul.f32 %v1115, 1.442695
        %v1176 = vpow.pop %v1175
        %v1177 = vmul.f32 %v1116, 1.442695
        %v1178 = vpow.pop %v1177
        %v1179 = vmul.f32 %v1117, 1.442695
        %v1180 = vpow.pop %v1179
        %v1181 = vmul.f32 %v1118, 1.442695
        %v1182 = vpow.pop %v1181
        %v1183 = vsel %vm990, %v1120, 0.0
        %1184 = vadd.xlane.f32.xlu0 %v1183
        %v1185 = vpop.xlane.xlu0 %1184
        %v1186 = vsel %vm990, %v1122, 0.0
        %1187 = vadd.xlane.f32.xlu0 %v1186
        %v1188 = vpop.xlane.xlu0 %1187
        %v1189 = vsel %vm990, %v1124, 0.0
        %1190 = vadd.xlane.f32.xlu0 %v1189
        %v1191 = vpop.xlane.xlu0 %1190
        %v1192 = vsel %vm990, %v1126, 0.0
        %1193 = vadd.xlane.f32.xlu0 %v1192
        %v1194 = vpop.xlane.xlu0 %1193
        %v1195 = vsel %vm990, %v1128, 0.0
        %1196 = vadd.xlane.f32.xlu0 %v1195
        %v1197 = vpop.xlane.xlu0 %1196
        %v1198 = vsel %vm990, %v1130, 0.0
        %1199 = vadd.xlane.f32.xlu0 %v1198
        %v1200 = vpop.xlane.xlu0 %1199
        %v1201 = vsel %vm990, %v1132, 0.0
        %1202 = vadd.xlane.f32.xlu0 %v1201
        %v1203 = vpop.xlane.xlu0 %1202
        %v1204 = vsel %vm990, %v1134, 0.0
        %1205 = vadd.xlane.f32.xlu0 %v1204
        %v1206 = vpop.xlane.xlu0 %1205
        %v1207 = vsel %vm990, %v1136, 0.0
        %1208 = vadd.xlane.f32.xlu0 %v1207
        %v1209 = vpop.xlane.xlu0 %1208
        %v1210 = vsel %vm990, %v1138, 0.0
        %1211 = vadd.xlane.f32.xlu0 %v1210
        %v1212 = vpop.xlane.xlu0 %1211
        %v1213 = vsel %vm990, %v1140, 0.0
        %1214 = vadd.xlane.f32.xlu0 %v1213
        %v1215 = vpop.xlane.xlu0 %1214
        %v1216 = vsel %vm990, %v1142, 0.0
        %1217 = vadd.xlane.f32.xlu0 %v1216
        %v1218 = vpop.xlane.xlu0 %1217
        %v1219 = vsel %vm990, %v1144, 0.0
        %1220 = vadd.xlane.f32.xlu0 %v1219
        %v1221 = vpop.xlane.xlu0 %1220
        %v1222 = vsel %vm990, %v1146, 0.0
        %1223 = vadd.xlane.f32.xlu0 %v1222
        %v1224 = vpop.xlane.xlu0 %1223
        %v1225 = vsel %vm990, %v1148, 0.0
        %1226 = vadd.xlane.f32.xlu0 %v1225
        %v1227 = vpop.xlane.xlu0 %1226
        %v1228 = vsel %vm990, %v1150, 0.0
        %1229 = vadd.xlane.f32.xlu0 %v1228
        %v1230 = vpop.xlane.xlu0 %1229
        %v1231 = vsel %vm990, %v1152, 0.0
        %1232 = vadd.xlane.f32.xlu0 %v1231
        %v1233 = vpop.xlane.xlu0 %1232
        %v1234 = vsel %vm990, %v1154, 0.0
        %1235 = vadd.xlane.f32.xlu0 %v1234
        %v1236 = vpop.xlane.xlu0 %1235
        %v1237 = vsel %vm990, %v1156, 0.0
        %1238 = vadd.xlane.f32.xlu0 %v1237
        %v1239 = vpop.xlane.xlu0 %1238
        %v1240 = vsel %vm990, %v1158, 0.0
        %1241 = vadd.xlane.f32.xlu0 %v1240
        %v1242 = vpop.xlane.xlu0 %1241
        %v1243 = vsel %vm990, %v1160, 0.0
        %1244 = vadd.xlane.f32.xlu0 %v1243
        %v1245 = vpop.xlane.xlu0 %1244
        %v1246 = vsel %vm990, %v1162, 0.0
        %1247 = vadd.xlane.f32.xlu0 %v1246
        %v1248 = vpop.xlane.xlu0 %1247
        %v1249 = vsel %vm990, %v1164, 0.0
        %1250 = vadd.xlane.f32.xlu0 %v1249
        %v1251 = vpop.xlane.xlu0 %1250
        %v1252 = vsel %vm990, %v1166, 0.0
        %1253 = vadd.xlane.f32.xlu0 %v1252
        %v1254 = vpop.xlane.xlu0 %1253
        %v1255 = vsel %vm990, %v1168, 0.0
        %1256 = vadd.xlane.f32.xlu0 %v1255
        %v1257 = vpop.xlane.xlu0 %1256
        %v1258 = vsel %vm990, %v1170, 0.0
        %1259 = vadd.xlane.f32.xlu0 %v1258
        %v1260 = vpop.xlane.xlu0 %1259
        %v1261 = vsel %vm990, %v1172, 0.0
        %1262 = vadd.xlane.f32.xlu0 %v1261
        %v1263 = vpop.xlane.xlu0 %1262
        %v1264 = vsel %vm990, %v1174, 0.0
        %1265 = vadd.xlane.f32.xlu0 %v1264
        %v1266 = vpop.xlane.xlu0 %1265
        %v1267 = vsel %vm990, %v1176, 0.0
        %1268 = vadd.xlane.f32.xlu0 %v1267
        %v1269 = vpop.xlane.xlu0 %1268
        %v1270 = vsel %vm990, %v1178, 0.0
        %1271 = vadd.xlane.f32.xlu0 %v1270
        %v1272 = vpop.xlane.xlu0 %1271
        %v1273 = vsel %vm990, %v1180, 0.0
        %1274 = vadd.xlane.f32.xlu0 %v1273
        %v1275 = vpop.xlane.xlu0 %1274
        %v1276 = vsel %vm990, %v1182, 0.0
        %1277 = vadd.xlane.f32.xlu0 %v1276
        %v1278 = vpop.xlane.xlu0 %1277
        %v1279 = vrcp.pop %v1185
        %v1280 = vrcp.pop %v1188
        %v1281 = vrcp.pop %v1191
        %v1282 = vrcp.pop %v1194
        %v1283 = vrcp.pop %v1197
        %v1284 = vrcp.pop %v1200
        %v1285 = vrcp.pop %v1203
        %v1286 = vrcp.pop %v1206
        %v1287 = vrcp.pop %v1209
        %v1288 = vrcp.pop %v1212
        %v1289 = vrcp.pop %v1215
        %v1290 = vrcp.pop %v1218
        %v1291 = vrcp.pop %v1221
        %v1292 = vrcp.pop %v1224
        %v1293 = vrcp.pop %v1227
        %v1294 = vrcp.pop %v1230
        %v1295 = vrcp.pop %v1233
        %v1296 = vrcp.pop %v1236
        %v1297 = vrcp.pop %v1239
        %v1298 = vrcp.pop %v1242
        %v1299 = vrcp.pop %v1245
        %v1300 = vrcp.pop %v1248
        %v1301 = vrcp.pop %v1251
        %v1302 = vrcp.pop %v1254
        %v1303 = vrcp.pop %v1257
        %v1304 = vrcp.pop %v1260
        %v1305 = vrcp.pop %v1263
        %v1306 = vrcp.pop %v1266
        %v1307 = vrcp.pop %v1269
        %v1308 = vrcp.pop %v1272
        %v1309 = vrcp.pop %v1275
        %v1310 = vrcp.pop %v1278
        %v1311 = vmul.f32 %v1120, %v1279
        %v1312 = vmul.f32 %v1122, %v1280
        %v1313 = vmul.f32 %v1124, %v1281
        %v1314 = vmul.f32 %v1126, %v1282
        %v1315 = vmul.f32 %v1128, %v1283
        %v1316 = vmul.f32 %v1130, %v1284
        %v1317 = vmul.f32 %v1132, %v1285
        %v1318 = vmul.f32 %v1134, %v1286
        %v1319 = vmul.f32 %v1136, %v1287
        %v1320 = vmul.f32 %v1138, %v1288
        %v1321 = vmul.f32 %v1140, %v1289
        %v1322 = vmul.f32 %v1142, %v1290
        %v1323 = vmul.f32 %v1144, %v1291
        %v1324 = vmul.f32 %v1146, %v1292
        %v1325 = vmul.f32 %v1148, %v1293
        %v1326 = vmul.f32 %v1150, %v1294
        %v1327 = vmul.f32 %v1152, %v1295
        %v1328 = vmul.f32 %v1154, %v1296
        %v1329 = vmul.f32 %v1156, %v1297
        %v1330 = vmul.f32 %v1158, %v1298
        %v1331 = vmul.f32 %v1160, %v1299
        %v1332 = vmul.f32 %v1162, %v1300
        %v1333 = vmul.f32 %v1164, %v1301
        %v1334 = vmul.f32 %v1166, %v1302
        %v1335 = vmul.f32 %v1168, %v1303
        %v1336 = vmul.f32 %v1170, %v1304
        %v1337 = vmul.f32 %v1172, %v1305
        %v1338 = vmul.f32 %v1174, %v1306
        %v1339 = vmul.f32 %v1176, %v1307
        %v1340 = vmul.f32 %v1178, %v1308
        %v1341 = vmul.f32 %v1180, %v1309
        %v1342 = vmul.f32 %v1182, %v1310
        %v1344 = vsel %vm990, %v1311, 0
        %v1347 = vsel %vm990, %v1312, 0
        %v1350 = vsel %vm990, %v1313, 0
        %v1353 = vsel %vm990, %v1314, 0
        %v1356 = vsel %vm990, %v1315, 0
        %v1359 = vsel %vm990, %v1316, 0
        %v1362 = vsel %vm990, %v1317, 0
        %v1365 = vsel %vm990, %v1318, 0
        %1367 = vmatprep.subr.mxu0 0.0
        %1368 = vmatpush1.msra.mxu0 0.0
        %1369 = vmatprep.subr.mxu0 0.0
        %1370 = vmatpush1.msra.mxu0 0.0
        %1371 = vmatprep.subr.mxu0 0.0
        %1372 = vmatpush1.msra.mxu0 0.0
        %1373 = vmatprep.subr.mxu0 0.0
        %1374 = vmatpush1.msra.mxu0 0.0
        %1375 = vmatprep.subr.mxu0 0.0
        %1376 = vmatpush1.msra.mxu0 0.0
        %1377 = vmatprep.subr.mxu0 0.0
        %1378 = vmatpush1.msra.mxu0 0.0
        %1379 = vmatprep.subr.mxu0 0.0
        %1380 = vmatpush1.msra.mxu0 0.0
        %1381 = vmatprep.subr.mxu0 0.0
        %1382 = vmatpush1.msra.mxu0 0.0
        %1383 = vmatprep.subr.mxu0 0.0
        %1384 = vmatpush1.msra.mxu0 %v320
        %1385 = vmatprep.subr.mxu0 0.0
        %1386 = vmatpush1.msra.mxu0 %v319
        %1387 = vmatprep.subr.mxu0 0.0
        %1388 = vmatpush1.msra.mxu0 %v318
        %1389 = vmatprep.subr.mxu0 0.0
        %1390 = vmatpush1.msra.mxu0 %v317
        %1391 = vmatprep.subr.mxu0 0.0
        %1392 = vmatpush1.msra.mxu0 %v316
        %1393 = vmatprep.subr.mxu0 0.0
        %1394 = vmatpush1.msra.mxu0 %v315
        %1395 = vmatprep.subr.mxu0 0.0
        %1396 = vmatpush1.msra.mxu0 %v314
        %1397 = vmatprep.subr.mxu0 0.0
        %1398 = vmatpush1.msra.mxu0 %v313
        %1399 = vmatprep.subr.mxu0 0.0
        %1400 = vmatpush2.msra.mxu0 0.0
        %1401 = vmatprep.subr.mxu0 0.0
        %1402 = vmatpush2.msra.mxu0 0.0
        %1403 = vmatprep.subr.mxu0 0.0
        %1404 = vmatpush2.msra.mxu0 0.0
        %1405 = vmatprep.subr.mxu0 0.0
        %1406 = vmatpush2.msra.mxu0 0.0
        %1407 = vmatprep.subr.mxu0 0.0
        %1408 = vmatpush2.msra.mxu0 0.0
        %1409 = vmatprep.subr.mxu0 0.0
        %1410 = vmatpush2.msra.mxu0 0.0
        %1411 = vmatprep.subr.mxu0 0.0
        %1412 = vmatpush2.msra.mxu0 0.0
        %1413 = vmatprep.subr.mxu0 0.0
        %1414 = vmatpush2.msra.mxu0 0.0
        %1415 = vmatprep.subr.mxu0 0.0
        %1416 = vmatpush2.msra.mxu0 0.0
        %1417 = vmatprep.subr.mxu0 0.0
        %1418 = vmatpush2.msra.mxu0 0.0
        %1419 = vmatprep.subr.mxu0 0.0
        %1420 = vmatpush2.msra.mxu0 0.0
        %1421 = vmatprep.subr.mxu0 0.0
        %1422 = vmatpush2.msra.mxu0 0.0
        %1423 = vmatprep.subr.mxu0 0.0
        %1424 = vmatpush2.msra.mxu0 0.0
        %1425 = vmatprep.subr.mxu0 0.0
        %1426 = vmatpush2.msra.mxu0 0.0
        %1427 = vmatprep.subr.mxu0 0.0
        %1428 = vmatpush2.msra.mxu0 0.0
        %1429 = vmatprep.subr.mxu0 0.0
        %1430 = vmatpush2.msra.mxu0 0.0
        %1431 = vmatprep.mubr.f32.mxu0 0.0
        %1432 = vmatmul.mubr.f32.gmra.mxu0 %v1344
        %v1433 = vpop.f32.mrf.mxu0
        %v1434 = vadd.f32 0.0, %v1433
        %v1435 = vpop.f32.mrf.mxu0
        %1436 = vmatprep.mubr.f32.mxu0 0.0
        %1437 = vmatmul.mubr.f32.gmra.mxu0 %v1347
        %v1438 = vpop.f32.mrf.mxu0
        %v1439 = vadd.f32 0.0, %v1438
        %v1440 = vpop.f32.mrf.mxu0
        %1441 = vmatprep.mubr.f32.mxu0 0.0
        %1442 = vmatmul.mubr.f32.gmra.mxu0 %v1350
        %v1443 = vpop.f32.mrf.mxu0
        %v1444 = vadd.f32 0.0, %v1443
        %v1445 = vpop.f32.mrf.mxu0
        %1446 = vmatprep.mubr.f32.mxu0 0.0
        %1447 = vmatmul.mubr.f32.gmra.mxu0 %v1353
        %v1448 = vpop.f32.mrf.mxu0
        %v1449 = vadd.f32 0.0, %v1448
        %v1450 = vpop.f32.mrf.mxu0
        %1451 = vmatprep.mubr.f32.mxu0 0.0
        %1452 = vmatmul.mubr.f32.gmra.mxu0 %v1356
        %v1453 = vpop.f32.mrf.mxu0
        %v1454 = vadd.f32 0.0, %v1453
        %v1455 = vpop.f32.mrf.mxu0
        %1456 = vmatprep.mubr.f32.mxu0 0.0
        %1457 = vmatmul.mubr.f32.gmra.mxu0 %v1359
        %v1458 = vpop.f32.mrf.mxu0
        %v1459 = vadd.f32 0.0, %v1458
        %v1460 = vpop.f32.mrf.mxu0
        %1461 = vmatprep.mubr.f32.mxu0 0.0
        %1462 = vmatmul.mubr.f32.gmra.mxu0 %v1362
        %v1463 = vpop.f32.mrf.mxu0
        %v1464 = vadd.f32 0.0, %v1463
        %v1465 = vpop.f32.mrf.mxu0
        %1466 = vmatprep.mubr.f32.mxu0 0.0
        %1467 = vmatmul.mubr.f32.gmra.mxu0 %v1365
        %v1468 = vpop.f32.mrf.mxu0
        %v1469 = vadd.f32 0.0, %v1468
        %v1470 = vpop.f32.mrf.mxu0
        %1471 = vdwg.mxu0
        %v1473 = vsel %vm990, %v1319, 0
        %v1476 = vsel %vm990, %v1320, 0
        %v1479 = vsel %vm990, %v1321, 0
        %v1482 = vsel %vm990, %v1322, 0
        %v1485 = vsel %vm990, %v1323, 0
        %v1488 = vsel %vm990, %v1324, 0
        %v1491 = vsel %vm990, %v1325, 0
        %v1494 = vsel %vm990, %v1326, 0
        %1496 = vmatprep.subr.mxu0 0.0
        %1497 = vmatpush1.msra.mxu0 0.0
        %1498 = vmatprep.subr.mxu0 0.0
        %1499 = vmatpush1.msra.mxu0 0.0
        %1500 = vmatprep.subr.mxu0 0.0
        %1501 = vmatpush1.msra.mxu0 0.0
        %1502 = vmatprep.subr.mxu0 0.0
        %1503 = vmatpush1.msra.mxu0 0.0
        %1504 = vmatprep.subr.mxu0 0.0
        %1505 = vmatpush1.msra.mxu0 0.0
        %1506 = vmatprep.subr.mxu0 0.0
        %1507 = vmatpush1.msra.mxu0 0.0
        %1508 = vmatprep.subr.mxu0 0.0
        %1509 = vmatpush1.msra.mxu0 0.0
        %1510 = vmatprep.subr.mxu0 0.0
        %1511 = vmatpush1.msra.mxu0 0.0
        %1512 = vmatprep.subr.mxu0 0.0
        %1513 = vmatpush1.msra.mxu0 %v328
        %1514 = vmatprep.subr.mxu0 0.0
        %1515 = vmatpush1.msra.mxu0 %v327
        %1516 = vmatprep.subr.mxu0 0.0
        %1517 = vmatpush1.msra.mxu0 %v326
        %1518 = vmatprep.subr.mxu0 0.0
        %1519 = vmatpush1.msra.mxu0 %v325
        %1520 = vmatprep.subr.mxu0 0.0
        %1521 = vmatpush1.msra.mxu0 %v324
        %1522 = vmatprep.subr.mxu0 0.0
        %1523 = vmatpush1.msra.mxu0 %v323
        %1524 = vmatprep.subr.mxu0 0.0
        %1525 = vmatpush1.msra.mxu0 %v322
        %1526 = vmatprep.subr.mxu0 0.0
        %1527 = vmatpush1.msra.mxu0 %v321
        %1528 = vmatprep.subr.mxu0 0.0
        %1529 = vmatpush2.msra.mxu0 0.0
        %1530 = vmatprep.subr.mxu0 0.0
        %1531 = vmatpush2.msra.mxu0 0.0
        %1532 = vmatprep.subr.mxu0 0.0
        %1533 = vmatpush2.msra.mxu0 0.0
        %1534 = vmatprep.subr.mxu0 0.0
        %1535 = vmatpush2.msra.mxu0 0.0
        %1536 = vmatprep.subr.mxu0 0.0
        %1537 = vmatpush2.msra.mxu0 0.0
        %1538 = vmatprep.subr.mxu0 0.0
        %1539 = vmatpush2.msra.mxu0 0.0
        %1540 = vmatprep.subr.mxu0 0.0
        %1541 = vmatpush2.msra.mxu0 0.0
        %1542 = vmatprep.subr.mxu0 0.0
        %1543 = vmatpush2.msra.mxu0 0.0
        %1544 = vmatprep.subr.mxu0 0.0
        %1545 = vmatpush2.msra.mxu0 0.0
        %1546 = vmatprep.subr.mxu0 0.0
        %1547 = vmatpush2.msra.mxu0 0.0
        %1548 = vmatprep.subr.mxu0 0.0
        %1549 = vmatpush2.msra.mxu0 0.0
        %1550 = vmatprep.subr.mxu0 0.0
        %1551 = vmatpush2.msra.mxu0 0.0
        %1552 = vmatprep.subr.mxu0 0.0
        %1553 = vmatpush2.msra.mxu0 0.0
        %1554 = vmatprep.subr.mxu0 0.0
        %1555 = vmatpush2.msra.mxu0 0.0
        %1556 = vmatprep.subr.mxu0 0.0
        %1557 = vmatpush2.msra.mxu0 0.0
        %1558 = vmatprep.subr.mxu0 0.0
        %1559 = vmatpush2.msra.mxu0 0.0
        %1560 = vmatprep.mubr.f32.mxu0 0.0
        %1561 = vmatmul.mubr.f32.gmra.mxu0 %v1473
        %v1562 = vpop.f32.mrf.mxu0
        %v1563 = vadd.f32 0.0, %v1562
        %v1564 = vpop.f32.mrf.mxu0
        %1565 = vmatprep.mubr.f32.mxu0 0.0
        %1566 = vmatmul.mubr.f32.gmra.mxu0 %v1476
        %v1567 = vpop.f32.mrf.mxu0
        %v1568 = vadd.f32 0.0, %v1567
        %v1569 = vpop.f32.mrf.mxu0
        %1570 = vmatprep.mubr.f32.mxu0 0.0
        %1571 = vmatmul.mubr.f32.gmra.mxu0 %v1479
        %v1572 = vpop.f32.mrf.mxu0
        %v1573 = vadd.f32 0.0, %v1572
        %v1574 = vpop.f32.mrf.mxu0
        %1575 = vmatprep.mubr.f32.mxu0 0.0
        %1576 = vmatmul.mubr.f32.gmra.mxu0 %v1482
        %v1577 = vpop.f32.mrf.mxu0
        %v1578 = vadd.f32 0.0, %v1577
        %v1579 = vpop.f32.mrf.mxu0
        %1580 = vmatprep.mubr.f32.mxu0 0.0
        %1581 = vmatmul.mubr.f32.gmra.mxu0 %v1485
        %v1582 = vpop.f32.mrf.mxu0
        %v1583 = vadd.f32 0.0, %v1582
        %v1584 = vpop.f32.mrf.mxu0
        %1585 = vmatprep.mubr.f32.mxu0 0.0
        %1586 = vmatmul.mubr.f32.gmra.mxu0 %v1488
        %v1587 = vpop.f32.mrf.mxu0
        %v1588 = vadd.f32 0.0, %v1587
        %v1589 = vpop.f32.mrf.mxu0
        %1590 = vmatprep.mubr.f32.mxu0 0.0
        %1591 = vmatmul.mubr.f32.gmra.mxu0 %v1491
        %v1592 = vpop.f32.mrf.mxu0
        %v1593 = vadd.f32 0.0, %v1592
        %v1594 = vpop.f32.mrf.mxu0
        %1595 = vmatprep.mubr.f32.mxu0 0.0
        %1596 = vmatmul.mubr.f32.gmra.mxu0 %v1494
        %v1597 = vpop.f32.mrf.mxu0
        %v1598 = vadd.f32 0.0, %v1597
        %v1599 = vpop.f32.mrf.mxu0
        %1600 = vdwg.mxu0
        %v1602 = vsel %vm990, %v1327, 0
        %v1605 = vsel %vm990, %v1328, 0
        %v1608 = vsel %vm990, %v1329, 0
        %v1611 = vsel %vm990, %v1330, 0
        %v1614 = vsel %vm990, %v1331, 0
        %v1617 = vsel %vm990, %v1332, 0
        %v1620 = vsel %vm990, %v1333, 0
        %v1623 = vsel %vm990, %v1334, 0
        %1625 = vmatprep.subr.mxu0 0.0
        %1626 = vmatpush1.msra.mxu0 0.0
        %1627 = vmatprep.subr.mxu0 0.0
        %1628 = vmatpush1.msra.mxu0 0.0
        %1629 = vmatprep.subr.mxu0 0.0
        %1630 = vmatpush1.msra.mxu0 0.0
        %1631 = vmatprep.subr.mxu0 0.0
        %1632 = vmatpush1.msra.mxu0 0.0
        %1633 = vmatprep.subr.mxu0 0.0
        %1634 = vmatpush1.msra.mxu0 0.0
        %1635 = vmatprep.subr.mxu0 0.0
        %1636 = vmatpush1.msra.mxu0 0.0
        %1637 = vmatprep.subr.mxu0 0.0
        %1638 = vmatpush1.msra.mxu0 0.0
        %1639 = vmatprep.subr.mxu0 0.0
        %1640 = vmatpush1.msra.mxu0 0.0
        %1641 = vmatprep.subr.mxu0 0.0
        %1642 = vmatpush1.msra.mxu0 %v336
        %1643 = vmatprep.subr.mxu0 0.0
        %1644 = vmatpush1.msra.mxu0 %v335
        %1645 = vmatprep.subr.mxu0 0.0
        %1646 = vmatpush1.msra.mxu0 %v334
        %1647 = vmatprep.subr.mxu0 0.0
        %1648 = vmatpush1.msra.mxu0 %v333
        %1649 = vmatprep.subr.mxu0 0.0
        %1650 = vmatpush1.msra.mxu0 %v332
        %1651 = vmatprep.subr.mxu0 0.0
        %1652 = vmatpush1.msra.mxu0 %v331
        %1653 = vmatprep.subr.mxu0 0.0
        %1654 = vmatpush1.msra.mxu0 %v330
        %1655 = vmatprep.subr.mxu0 0.0
        %1656 = vmatpush1.msra.mxu0 %v329
        %1657 = vmatprep.subr.mxu0 0.0
        %1658 = vmatpush2.msra.mxu0 0.0
        %1659 = vmatprep.subr.mxu0 0.0
        %1660 = vmatpush2.msra.mxu0 0.0
        %1661 = vmatprep.subr.mxu0 0.0
        %1662 = vmatpush2.msra.mxu0 0.0
        %1663 = vmatprep.subr.mxu0 0.0
        %1664 = vmatpush2.msra.mxu0 0.0
        %1665 = vmatprep.subr.mxu0 0.0
        %1666 = vmatpush2.msra.mxu0 0.0
        %1667 = vmatprep.subr.mxu0 0.0
        %1668 = vmatpush2.msra.mxu0 0.0
        %1669 = vmatprep.subr.mxu0 0.0
        %1670 = vmatpush2.msra.mxu0 0.0
        %1671 = vmatprep.subr.mxu0 0.0
        %1672 = vmatpush2.msra.mxu0 0.0
        %1673 = vmatprep.subr.mxu0 0.0
        %1674 = vmatpush2.msra.mxu0 0.0
        %1675 = vmatprep.subr.mxu0 0.0
        %1676 = vmatpush2.msra.mxu0 0.0
        %1677 = vmatprep.subr.mxu0 0.0
        %1678 = vmatpush2.msra.mxu0 0.0
        %1679 = vmatprep.subr.mxu0 0.0
        %1680 = vmatpush2.msra.mxu0 0.0
        %1681 = vmatprep.subr.mxu0 0.0
        %1682 = vmatpush2.msra.mxu0 0.0
        %1683 = vmatprep.subr.mxu0 0.0
        %1684 = vmatpush2.msra.mxu0 0.0
        %1685 = vmatprep.subr.mxu0 0.0
        %1686 = vmatpush2.msra.mxu0 0.0
        %1687 = vmatprep.subr.mxu0 0.0
        %1688 = vmatpush2.msra.mxu0 0.0
        %1689 = vmatprep.mubr.f32.mxu0 0.0
        %1690 = vmatmul.mubr.f32.gmra.mxu0 %v1602
        %v1691 = vpop.f32.mrf.mxu0
        %v1692 = vadd.f32 0.0, %v1691
        %v1693 = vpop.f32.mrf.mxu0
        %1694 = vmatprep.mubr.f32.mxu0 0.0
        %1695 = vmatmul.mubr.f32.gmra.mxu0 %v1605
        %v1696 = vpop.f32.mrf.mxu0
        %v1697 = vadd.f32 0.0, %v1696
        %v1698 = vpop.f32.mrf.mxu0
        %1699 = vmatprep.mubr.f32.mxu0 0.0
        %1700 = vmatmul.mubr.f32.gmra.mxu0 %v1608
        %v1701 = vpop.f32.mrf.mxu0
        %v1702 = vadd.f32 0.0, %v1701
        %v1703 = vpop.f32.mrf.mxu0
        %1704 = vmatprep.mubr.f32.mxu0 0.0
        %1705 = vmatmul.mubr.f32.gmra.mxu0 %v1611
        %v1706 = vpop.f32.mrf.mxu0
        %v1707 = vadd.f32 0.0, %v1706
        %v1708 = vpop.f32.mrf.mxu0
        %1709 = vmatprep.mubr.f32.mxu0 0.0
        %1710 = vmatmul.mubr.f32.gmra.mxu0 %v1614
        %v1711 = vpop.f32.mrf.mxu0
        %v1712 = vadd.f32 0.0, %v1711
        %v1713 = vpop.f32.mrf.mxu0
        %1714 = vmatprep.mubr.f32.mxu0 0.0
        %1715 = vmatmul.mubr.f32.gmra.mxu0 %v1617
        %v1716 = vpop.f32.mrf.mxu0
        %v1717 = vadd.f32 0.0, %v1716
        %v1718 = vpop.f32.mrf.mxu0
        %1719 = vmatprep.mubr.f32.mxu0 0.0
        %1720 = vmatmul.mubr.f32.gmra.mxu0 %v1620
        %v1721 = vpop.f32.mrf.mxu0
        %v1722 = vadd.f32 0.0, %v1721
        %v1723 = vpop.f32.mrf.mxu0
        %1724 = vmatprep.mubr.f32.mxu0 0.0
        %1725 = vmatmul.mubr.f32.gmra.mxu0 %v1623
        %v1726 = vpop.f32.mrf.mxu0
        %v1727 = vadd.f32 0.0, %v1726
        %v1728 = vpop.f32.mrf.mxu0
        %1729 = vdwg.mxu0
        %v1731 = vsel %vm990, %v1335, 0
        %v1734 = vsel %vm990, %v1336, 0
        %v1737 = vsel %vm990, %v1337, 0
        %v1740 = vsel %vm990, %v1338, 0
        %v1743 = vsel %vm990, %v1339, 0
        %v1746 = vsel %vm990, %v1340, 0
        %v1749 = vsel %vm990, %v1341, 0
        %v1752 = vsel %vm990, %v1342, 0
        %1754 = vmatprep.subr.mxu0 0.0
        %1755 = vmatpush1.msra.mxu0 0.0
        %1756 = vmatprep.subr.mxu0 0.0
        %1757 = vmatpush1.msra.mxu0 0.0
        %1758 = vmatprep.subr.mxu0 0.0
        %1759 = vmatpush1.msra.mxu0 0.0
        %1760 = vmatprep.subr.mxu0 0.0
        %1761 = vmatpush1.msra.mxu0 0.0
        %1762 = vmatprep.subr.mxu0 0.0
        %1763 = vmatpush1.msra.mxu0 0.0
        %1764 = vmatprep.subr.mxu0 0.0
        %1765 = vmatpush1.msra.mxu0 0.0
        %1766 = vmatprep.subr.mxu0 0.0
        %1767 = vmatpush1.msra.mxu0 0.0
        %1768 = vmatprep.subr.mxu0 0.0
        %1769 = vmatpush1.msra.mxu0 0.0
        %1770 = vmatprep.subr.mxu0 0.0
        %1771 = vmatpush1.msra.mxu0 %v344
        %1772 = vmatprep.subr.mxu0 0.0
        %1773 = vmatpush1.msra.mxu0 %v343
        %1774 = vmatprep.subr.mxu0 0.0
        %1775 = vmatpush1.msra.mxu0 %v342
        %1776 = vmatprep.subr.mxu0 0.0
        %1777 = vmatpush1.msra.mxu0 %v341
        %1778 = vmatprep.subr.mxu0 0.0
        %1779 = vmatpush1.msra.mxu0 %v340
        %1780 = vmatprep.subr.mxu0 0.0
        %1781 = vmatpush1.msra.mxu0 %v339
        %1782 = vmatprep.subr.mxu0 0.0
        %1783 = vmatpush1.msra.mxu0 %v338
        %1784 = vmatprep.subr.mxu0 0.0
        %1785 = vmatpush1.msra.mxu0 %v337
        %1786 = vmatprep.subr.mxu0 0.0
        %1787 = vmatpush2.msra.mxu0 0.0
        %1788 = vmatprep.subr.mxu0 0.0
        %1789 = vmatpush2.msra.mxu0 0.0
        %1790 = vmatprep.subr.mxu0 0.0
        %1791 = vmatpush2.msra.mxu0 0.0
        %1792 = vmatprep.subr.mxu0 0.0
        %1793 = vmatpush2.msra.mxu0 0.0
        %1794 = vmatprep.subr.mxu0 0.0
        %1795 = vmatpush2.msra.mxu0 0.0
        %1796 = vmatprep.subr.mxu0 0.0
        %1797 = vmatpush2.msra.mxu0 0.0
        %1798 = vmatprep.subr.mxu0 0.0
        %1799 = vmatpush2.msra.mxu0 0.0
        %1800 = vmatprep.subr.mxu0 0.0
        %1801 = vmatpush2.msra.mxu0 0.0
        %1802 = vmatprep.subr.mxu0 0.0
        %1803 = vmatpush2.msra.mxu0 0.0
        %1804 = vmatprep.subr.mxu0 0.0
        %1805 = vmatpush2.msra.mxu0 0.0
        %1806 = vmatprep.subr.mxu0 0.0
        %1807 = vmatpush2.msra.mxu0 0.0
        %1808 = vmatprep.subr.mxu0 0.0
        %1809 = vmatpush2.msra.mxu0 0.0
        %1810 = vmatprep.subr.mxu0 0.0
        %1811 = vmatpush2.msra.mxu0 0.0
        %1812 = vmatprep.subr.mxu0 0.0
        %1813 = vmatpush2.msra.mxu0 0.0
        %1814 = vmatprep.subr.mxu0 0.0
        %1815 = vmatpush2.msra.mxu0 0.0
        %1816 = vmatprep.subr.mxu0 0.0
        %1817 = vmatpush2.msra.mxu0 0.0
        %1818 = vmatprep.mubr.f32.mxu0 0.0
        %1819 = vmatmul.mubr.f32.gmra.mxu0 %v1731
        %v1820 = vpop.f32.mrf.mxu0
        %v1821 = vadd.f32 0.0, %v1820
        %v1822 = vpop.f32.mrf.mxu0
        %1823 = vmatprep.mubr.f32.mxu0 0.0
        %1824 = vmatmul.mubr.f32.gmra.mxu0 %v1734
        %v1825 = vpop.f32.mrf.mxu0
        %v1826 = vadd.f32 0.0, %v1825
        %v1827 = vpop.f32.mrf.mxu0
        %1828 = vmatprep.mubr.f32.mxu0 0.0
        %1829 = vmatmul.mubr.f32.gmra.mxu0 %v1737
        %v1830 = vpop.f32.mrf.mxu0
        %v1831 = vadd.f32 0.0, %v1830
        %v1832 = vpop.f32.mrf.mxu0
        %1833 = vmatprep.mubr.f32.mxu0 0.0
        %1834 = vmatmul.mubr.f32.gmra.mxu0 %v1740
        %v1835 = vpop.f32.mrf.mxu0
        %v1836 = vadd.f32 0.0, %v1835
        %v1837 = vpop.f32.mrf.mxu0
        %1838 = vmatprep.mubr.f32.mxu0 0.0
        %1839 = vmatmul.mubr.f32.gmra.mxu0 %v1743
        %v1840 = vpop.f32.mrf.mxu0
        %v1841 = vadd.f32 0.0, %v1840
        %v1842 = vpop.f32.mrf.mxu0
        %1843 = vmatprep.mubr.f32.mxu0 0.0
        %1844 = vmatmul.mubr.f32.gmra.mxu0 %v1746
        %v1845 = vpop.f32.mrf.mxu0
        %v1846 = vadd.f32 0.0, %v1845
        %v1847 = vpop.f32.mrf.mxu0
        %1848 = vmatprep.mubr.f32.mxu0 0.0
        %1849 = vmatmul.mubr.f32.gmra.mxu0 %v1749
        %v1850 = vpop.f32.mrf.mxu0
        %v1851 = vadd.f32 0.0, %v1850
        %v1852 = vpop.f32.mrf.mxu0
        %1853 = vmatprep.mubr.f32.mxu0 0.0
        %1854 = vmatmul.mubr.f32.gmra.mxu0 %v1752
        %v1855 = vpop.f32.mrf.mxu0
        %v1856 = vadd.f32 0.0, %v1855
        %v1857 = vpop.f32.mrf.mxu0
        %1858 = vdwg.mxu0
        %1859 = vst.msk [vmem:[%s248] sm:$0xff] %vm345, %v1434
        %1860 = vst.msk [vmem:[%s248 + $0x8] sm:$0xff] %vm345, %v1439
        %1861 = vst.msk [vmem:[%s248 + $0x10] sm:$0xff] %vm345, %v1444
        %1862 = vst.msk [vmem:[%s248 + $0x18] sm:$0xff] %vm345, %v1449
        %1863 = vst.msk [vmem:[%s248 + $0x20] sm:$0xff] %vm345, %v1454
        %1864 = vst.msk [vmem:[%s248 + $0x28] sm:$0xff] %vm345, %v1459
        %1865 = vst.msk [vmem:[%s248 + $0x30] sm:$0xff] %vm345, %v1464
        %1866 = vst.msk [vmem:[%s248 + $0x38] sm:$0xff] %vm345, %v1469
        %1867 = vst.msk [vmem:[%s248 + $0x40] sm:$0xff] %vm345, %v1563
        %1868 = vst.msk [vmem:[%s248 + $0x48] sm:$0xff] %vm345, %v1568
        %1869 = vst.msk [vmem:[%s248 + $0x50] sm:$0xff] %vm345, %v1573
        %1870 = vst.msk [vmem:[%s248 + $0x58] sm:$0xff] %vm345, %v1578
        %1871 = vst.msk [vmem:[%s248 + $0x60] sm:$0xff] %vm345, %v1583
        %1872 = vst.msk [vmem:[%s248 + $0x68] sm:$0xff] %vm345, %v1588
        %1873 = vst.msk [vmem:[%s248 + $0x70] sm:$0xff] %vm345, %v1593
        %1874 = vst.msk [vmem:[%s248 + $0x78] sm:$0xff] %vm345, %v1598
        %1875 = vst.msk [vmem:[%s248 + $0x80] sm:$0xff] %vm345, %v1692
        %1876 = vst.msk [vmem:[%s248 + $0x88] sm:$0xff] %vm345, %v1697
        %1877 = vst.msk [vmem:[%s248 + $0x90] sm:$0xff] %vm345, %v1702
        %1878 = vst.msk [vmem:[%s248 + $0x98] sm:$0xff] %vm345, %v1707
        %1879 = vst.msk [vmem:[%s248 + $0xa0] sm:$0xff] %vm345, %v1712
        %1880 = vst.msk [vmem:[%s248 + $0xa8] sm:$0xff] %vm345, %v1717
        %1881 = vst.msk [vmem:[%s248 + $0xb0] sm:$0xff] %vm345, %v1722
        %1882 = vst.msk [vmem:[%s248 + $0xb8] sm:$0xff] %vm345, %v1727
        %1883 = vst.msk [vmem:[%s248 + $0xc0] sm:$0xff] %vm345, %v1821
        %1884 = vst.msk [vmem:[%s248 + $0xc8] sm:$0xff] %vm345, %v1826
        %1885 = vst.msk [vmem:[%s248 + $0xd0] sm:$0xff] %vm345, %v1831
        %1886 = vst.msk [vmem:[%s248 + $0xd8] sm:$0xff] %vm345, %v1836
        %1887 = vst.msk [vmem:[%s248 + $0xe0] sm:$0xff] %vm345, %v1841
        %1888 = vst.msk [vmem:[%s248 + $0xe8] sm:$0xff] %vm345, %v1846
        %1889 = vst.msk [vmem:[%s248 + $0xf0] sm:$0xff] %vm345, %v1851
        %1890 = vst.msk [vmem:[%s248 + $0xf8] sm:$0xff] %vm345, %v1856
        %1891 = vst.msk [vmem:[%s228] sm:$0xff] %vm990, %v1311
        %1892 = vst.msk [vmem:[%s228 + $0x8] sm:$0xff] %vm990, %v1312
        %1893 = vst.msk [vmem:[%s228 + $0x10] sm:$0xff] %vm990, %v1313
        %1894 = vst.msk [vmem:[%s228 + $0x18] sm:$0xff] %vm990, %v1314
        %1895 = vst.msk [vmem:[%s228 + $0x20] sm:$0xff] %vm990, %v1315
        %1896 = vst.msk [vmem:[%s228 + $0x28] sm:$0xff] %vm990, %v1316
        %1897 = vst.msk [vmem:[%s228 + $0x30] sm:$0xff] %vm990, %v1317
        %1898 = vst.msk [vmem:[%s228 + $0x38] sm:$0xff] %vm990, %v1318
        %1899 = vst.msk [vmem:[%s228 + $0x40] sm:$0xff] %vm990, %v1319
        %1900 = vst.msk [vmem:[%s228 + $0x48] sm:$0xff] %vm990, %v1320
        %1901 = vst.msk [vmem:[%s228 + $0x50] sm:$0xff] %vm990, %v1321
        %1902 = vst.msk [vmem:[%s228 + $0x58] sm:$0xff] %vm990, %v1322
        %1903 = vst.msk [vmem:[%s228 + $0x60] sm:$0xff] %vm990, %v1323
        %1904 = vst.msk [vmem:[%s228 + $0x68] sm:$0xff] %vm990, %v1324
        %1905 = vst.msk [vmem:[%s228 + $0x70] sm:$0xff] %vm990, %v1325
        %1906 = vst.msk [vmem:[%s228 + $0x78] sm:$0xff] %vm990, %v1326
        %1907 = vst.msk [vmem:[%s228 + $0x80] sm:$0xff] %vm990, %v1327
        %1908 = vst.msk [vmem:[%s228 + $0x88] sm:$0xff] %vm990, %v1328
        %1909 = vst.msk [vmem:[%s228 + $0x90] sm:$0xff] %vm990, %v1329
        %1910 = vst.msk [vmem:[%s228 + $0x98] sm:$0xff] %vm990, %v1330
        %1911 = vst.msk [vmem:[%s228 + $0xa0] sm:$0xff] %vm990, %v1331
        %1912 = vst.msk [vmem:[%s228 + $0xa8] sm:$0xff] %vm990, %v1332
        %1913 = vst.msk [vmem:[%s228 + $0xb0] sm:$0xff] %vm990, %v1333
        %1914 = vst.msk [vmem:[%s228 + $0xb8] sm:$0xff] %vm990, %v1334
        %1915 = vst.msk [vmem:[%s228 + $0xc0] sm:$0xff] %vm990, %v1335
        %1916 = vst.msk [vmem:[%s228 + $0xc8] sm:$0xff] %vm990, %v1336
        %1917 = vst.msk [vmem:[%s228 + $0xd0] sm:$0xff] %vm990, %v1337
        %1918 = vst.msk [vmem:[%s228 + $0xd8] sm:$0xff] %vm990, %v1338
        %1919 = vst.msk [vmem:[%s228 + $0xe0] sm:$0xff] %vm990, %v1339
        %1920 = vst.msk [vmem:[%s228 + $0xe8] sm:$0xff] %vm990, %v1340
        %1921 = vst.msk [vmem:[%s228 + $0xf0] sm:$0xff] %vm990, %v1341
        %1922 = vst.msk [vmem:[%s228 + $0xf8] sm:$0xff] %vm990, %v1342
        %p1923 = scmp.lt.s32.totalorder %s19, 1
        %s1924 = scalar_select %p1923, %s19, 1
        %s1925 = smul.addr %s1924, 32
        %s1926 = smul.addr %s1925, 8
        %s1927 = scalar_lea.vmem %s3, %s1926
        %s1928 = sand.u32 %s131, 1
        %s1929 = scalar_lea.sflag [#allocation3], %s1928
        %s1930 = sand.u32 %s131, 1
        %s1931 = smul.addr %s1930, 256
        %s1932 = scalar_lea.vmem [#allocation2], %s1931
        // Predicated region
        $region33: #{ed_forward.23} parent=31 // pred_check
          %p1933 = pneg %p115
        $region34: #{ed_forward.23} parent=31 // pred_check_branch
          %1935 = sbr.rel (%p1933) target = $region36
        $region35: #{ed_forward.23} parent=31 // pred_region
          _
        $region36: #{ed_forward.23} parent=31 // pred_fallthru
          _
        // Predicated region
        $region37: #{ed_forward.23} parent=31 // pred_check
          %p1936 = pneg %p141
        $region38: #{ed_forward.23} parent=31 // pred_check_branch
          %1938 = sbr.rel (%p1936) target = $region40
        $region39: #{ed_forward.23} parent=31 // pred_region
          %s1940 = ssub.s32 4096, 4096
          %1941 = vsyncadd %s1929, %s1940
          %s1942 = smul.addr %s19, 32
          %s1943 = smul.addr %s1942, 128
          %s1944 = scalar_lea.hbm %s4, %s1943
          %s1945 = sshll.u32 %s1932, 4
          %s1946 = int_to_ptr.vmem [resolvable:$true] %s1945
          %1951 = dma.vmem_to_hbm [thread:$0]  %s1946, 4096, %s1944, %s1929, 128, 128, 8
        $region40: #{ed_forward.23} parent=31 // pred_fallthru
          _
      $region32: #{ed_forward.23} parent=5 // pred_fallthru
        _
      %p1952 = scmp.le.s32.totalorder 2, %s14
      // Predicated region
      $region41: #{ed_forward.23} parent=5 // pred_check
        %p1953 = pneg %p1952
      $region42: #{ed_forward.23} parent=5 // pred_check_branch
        %1955 = sbr.rel (%p1953) target = $region44
      $region43: #{ed_forward.23} parent=5 // pred_region
        %s1956 = ssub.s32 %s14, 2
        // Predicated region
        $region45: #{ed_forward.23} parent=43 // pred_check
          %p1957 = pneg %p121
        $region46: #{ed_forward.23} parent=43 // pred_check_branch
          %1959 = sbr.rel (%p1957) target = $region48
        $region47: #{ed_forward.23} parent=43 // pred_region
          %p1960 = scmp.lt.s32.totalorder %s20, 1
          %s1961 = scalar_select %p1960, %s20, 1
          %s1962 = smul.addr %s1961, 32
          %s1963 = smul.addr %s1962, 8
          %s1964 = scalar_lea.vmem %s3, %s1963
        $region48: #{ed_forward.23} parent=43 // pred_fallthru
          _
        // Predicated region
        $region49: #{ed_forward.23} parent=43 // pred_check
          %p1965 = pneg %p147
        $region50: #{ed_forward.23} parent=43 // pred_check_branch
          %1967 = sbr.rel (%p1965) target = $region52
        $region51: #{ed_forward.23} parent=43 // pred_region
          %s1968 = sand.u32 %s132, 1
          %s1969 = scalar_lea.sflag [#allocation3], %s1968
          %s1970 = sand.u32 %s132, 1
          %s1971 = smul.addr %s1970, 256
          %s1972 = scalar_lea.vmem [#allocation2], %s1971
          %1973 = dma.done %s1969, 4096
        $region52: #{ed_forward.23} parent=43 // pred_fallthru
          _
      $region44: #{ed_forward.23} parent=5 // pred_fallthru
        _
    $region6: #{ed_forward.23} parent=1 // loop_footer
      %s18 = sadd.s32 1, %s14
    $region7: #{ed_forward.23} parent=1 // loop_footer_branch
      %13 = sbr.rel target = $region3
    $region8: #{ed_forward.23} parent=1 // loop_exit
      _
    %1974 = vsyncpa [#allocation3], 1
    %s1975 = scalar_lea.sflag [#allocation3], 1
    %1976 = vsyncpa %s1975, 1

// kernel: ed_forward.24
$region0: #{ed_forward.24}
  #allocation0 [shape = 'u32[]', space=smem, size = 0x4, offset = 0x4, fixed_abs, tag = 'smem constant byte address 0x4 - core index']
  #allocation1 [shape = 'u32[144,128]{1,0:T(1,128)}', space=vmem, size = 0x12000, scoped, tag = 'internal scratch']
  %s0 = inlined_call_operand.vmem [shape: f32[2,4,64,8], index: 0, kind: input, shape index: {}]
  %s1 = inlined_call_operand.vmem [shape: f32[1,4,64,8], index: 1, kind: input, shape index: {}]
  %s2 = inlined_call_operand.vmem [shape: f32[1,4,64,8], index: 2, kind: input, shape index: {}]
  %s3 = inlined_call_operand.vmem [shape: f32[2,4,64,8], index: 3, kind: output, shape index: {0}]
  %s4 = inlined_call_operand.hbm [shape: f32[2,4,64,64], index: 4, kind: output, shape index: {1}]
  %5 = xla_tuple %s3, %s4
  %s6 = sld [smem:[#allocation0]]
  $region53: #{ed_forward.24} parent=0
    _
  %s8 = ssub.s32 1, %s6
  %s9 = scalar_select 0, %s8, %s6
  $region1: #{ed_forward.24} parent=0
    #allocation2 [shape = 'u8[262144]{0}', space=vmem, size = 0x40000, scoped, tag = 'output window, operand 1']
    #allocation3 [shape = 's32[2]{0}', space=sflag, size = 0x8, scoped, tag = 'scoped memory for ed_forward.24']
    %10 = vsyncpa [#allocation3], 0
    %s11 = scalar_lea.sflag [#allocation3], 1
    %12 = vsyncpa %s11, 0
    loop: start=0, step=1, limit=4
    $region2: #{ed_forward.24} parent=1 // loop_pre_header
      _
    $region3: #{ed_forward.24} parent=1 // loop_header
      %s14 = sphi 0, %s18
      %p15 = scmp.ge.s32.totalorder %s14, 4
      %s24 = sphi 0, %s26
      %s27 = sphi 0, %s24
      %s28 = sphi 0, %s27
      %s44 = sphi 0, %s28
      %s48 = sphi 0, %s48
      %s50 = sphi 0, %s48
      %s51 = sphi 0, %s50
      %s65 = sphi 0, %s51
      %s69 = sphi 0, %s69
      %s71 = sphi 0, %s69
      %s72 = sphi 0, %s71
      %s86 = sphi 0, %s72
      %s92 = sphi 0, %s94
      %s95 = sphi 0, %s92
      %s96 = sphi 0, %s95
      %s112 = sphi 0, %s96
      %s118 = sphi 0, %s120
      %s121 = sphi 0, %s118
      %s122 = sphi 0, %s121
      %s138 = sphi 0, %s122
    $region4: #{ed_forward.24} parent=1 // loop_header_branch
      %17 = sbr.rel (%p15) target = $region8
    $region5: #{ed_forward.24} parent=1 // loop_body
      %s19 = ssub.s32 %s14, 1
      %s20 = ssub.s32 %s14, 2
      %s21 = sadd.s32 %s14, 1
      %s22 = ssub.s32 %s14, %s21
      %p23 = scmp.eq.s32.totalorder %s22, 0
      %s25 = sadd.s32 %s24, 1
      %s26 = scalar_select %p23, %s24, %s25
      %p29 = pneg %p23
      %p30 = scmp.eq.s32.totalorder %s14, 1
      %p31 = por %p29, %p30
      %p32 = scmp.ne.s32.totalorder %s24, %s27
      %p33 = scmp.eq.s32.totalorder %s14, 0
      %p34 = por %p32, %p33
      %p35 = scmp.ne.s32.totalorder %s24, %s27
      %p36 = scmp.eq.s32.totalorder %s19, 1
      %p37 = por %p35, %p36
      %p38 = scmp.ne.s32.totalorder %s27, %s28
      %p39 = scmp.eq.s32.totalorder %s19, 0
      %p40 = por %p38, %p39
      %p41 = scmp.ne.s32.totalorder %s27, %s28
      %p42 = scmp.eq.s32.totalorder %s20, 1
      %p43 = por %p41, %p42
      %p45 = scmp.ne.s32.totalorder %s28, %s44
      %p46 = scmp.eq.s32.totalorder %s20, 0
      %p47 = por %p45, %p46
      %s49 = sadd.s32 %s48, 1
      %p52 = scmp.eq.s32.totalorder %s14, 1
      %p53 = scmp.ne.s32.totalorder %s48, %s50
      %p54 = scmp.eq.s32.totalorder %s14, 0
      %p55 = por %p53, %p54
      %p56 = scmp.ne.s32.totalorder %s48, %s50
      %p57 = scmp.eq.s32.totalorder %s19, 1
      %p58 = por %p56, %p57
      %p59 = scmp.ne.s32.totalorder %s50, %s51
      %p60 = scmp.eq.s32.totalorder %s19, 0
      %p61 = por %p59, %p60
      %p62 = scmp.ne.s32.totalorder %s50, %s51
      %p63 = scmp.eq.s32.totalorder %s20, 1
      %p64 = por %p62, %p63
      %p66 = scmp.ne.s32.totalorder %s51, %s65
      %p67 = scmp.eq.s32.totalorder %s20, 0
      %p68 = por %p66, %p67
      %s70 = sadd.s32 %s69, 1
      %p73 = scmp.eq.s32.totalorder %s14, 1
      %p74 = scmp.ne.s32.totalorder %s69, %s71
      %p75 = scmp.eq.s32.totalorder %s14, 0
      %p76 = por %p74, %p75
      %p77 = scmp.ne.s32.totalorder %s69, %s71
      %p78 = scmp.eq.s32.totalorder %s19, 1
      %p79 = por %p77, %p78
      %p80 = scmp.ne.s32.totalorder %s71, %s72
      %p81 = scmp.eq.s32.totalorder %s19, 0
      %p82 = por %p80, %p81
      %p83 = scmp.ne.s32.totalorder %s71, %s72
      %p84 = scmp.eq.s32.totalorder %s20, 1
      %p85 = por %p83, %p84
      %p87 = scmp.ne.s32.totalorder %s72, %s86
      %p88 = scmp.eq.s32.totalorder %s20, 0
      %p89 = por %p87, %p88
      %s90 = ssub.s32 %s14, %s21
      %p91 = scmp.eq.s32.totalorder %s90, 0
      %s93 = sadd.s32 %s92, 1
      %s94 = scalar_select %p91, %s92, %s93
      %p97 = pneg %p91
      %p98 = scmp.eq.s32.totalorder %s14, 1
      %p99 = por %p97, %p98
      %p100 = scmp.ne.s32.totalorder %s92, %s95
      %p101 = scmp.eq.s32.totalorder %s14, 0
      %p102 = por %p100, %p101
      %p103 = scmp.ne.s32.totalorder %s92, %s95
      %p104 = scmp.eq.s32.totalorder %s19, 1
      %p105 = por %p103, %p104
      %p106 = scmp.ne.s32.totalorder %s95, %s96
      %p107 = scmp.eq.s32.totalorder %s19, 0
      %p108 = por %p106, %p107
      %p109 = scmp.ne.s32.totalorder %s95, %s96
      %p110 = scmp.eq.s32.totalorder %s20, 1
      %p111 = por %p109, %p110
      %p113 = scmp.ne.s32.totalorder %s96, %s112
      %p114 = scmp.eq.s32.totalorder %s20, 0
      %p115 = por %p113, %p114
      %s116 = ssub.s32 %s14, %s21
      %p117 = scmp.eq.s32.totalorder %s116, 0
      %s119 = sadd.s32 %s118, 1
      %s120 = scalar_select %p117, %s118, %s119
      %p123 = pneg %p117
      %p124 = scmp.eq.s32.totalorder %s14, 1
      %p125 = por %p123, %p124
      %p126 = scmp.ne.s32.totalorder %s118, %s121
      %p127 = scmp.eq.s32.totalorder %s14, 0
      %p128 = por %p126, %p127
      %p129 = scmp.ne.s32.totalorder %s118, %s121
      %p130 = scmp.eq.s32.totalorder %s19, 1
      %p131 = por %p129, %p130
      %p132 = scmp.ne.s32.totalorder %s121, %s122
      %p133 = scmp.eq.s32.totalorder %s19, 0
      %p134 = por %p132, %p133
      %p135 = scmp.ne.s32.totalorder %s121, %s122
      %p136 = scmp.eq.s32.totalorder %s20, 1
      %p137 = por %p135, %p136
      %p139 = scmp.ne.s32.totalorder %s122, %s138
      %p140 = scmp.eq.s32.totalorder %s20, 0
      %p141 = por %p139, %p140
      %p142 = scmp.le.s32.totalorder 1, %s14
      %p143 = scmp.lt.s32.totalorder %s14, 3
      %p144 = pnand %p142, %p143
      %p145 = pneg %p144
      // Predicated region
      $region9: #{ed_forward.24} parent=5 // pred_check
        _
      $region10: #{ed_forward.24} parent=5 // pred_check_branch
        %147 = sbr.rel (%p144) target = $region12
      $region11: #{ed_forward.24} parent=5 // pred_region
        %s148 = ssub.s32 %s14, 1
        // Predicated region
        $region13: #{ed_forward.24} parent=11 // pred_check
          %p149 = pneg %p61
        $region14: #{ed_forward.24} parent=11 // pred_check_branch
          %151 = sbr.rel (%p149) target = $region16
        $region15: #{ed_forward.24} parent=11 // pred_region
          _
        $region16: #{ed_forward.24} parent=11 // pred_fallthru
          _
        // Predicated region
        $region17: #{ed_forward.24} parent=11 // pred_check
          %p152 = pneg %p82
        $region18: #{ed_forward.24} parent=11 // pred_check_branch
          %154 = sbr.rel (%p152) target = $region20
        $region19: #{ed_forward.24} parent=11 // pred_region
          _
        $region20: #{ed_forward.24} parent=11 // pred_fallthru
          _
      $region12: #{ed_forward.24} parent=5 // pred_fallthru
        _
      %p155 = scmp.lt.s32.totalorder %s14, 2
      // Predicated region
      $region21: #{ed_forward.24} parent=5 // pred_check
        %p156 = pneg %p155
      $region22: #{ed_forward.24} parent=5 // pred_check_branch
        %158 = sbr.rel (%p156) target = $region24
      $region23: #{ed_forward.24} parent=5 // pred_region
        // Predicated region
        $region25: #{ed_forward.24} parent=23 // pred_check
          %p159 = pneg %p34
        $region26: #{ed_forward.24} parent=23 // pred_check_branch
          %161 = sbr.rel (%p159) target = $region28
        $region27: #{ed_forward.24} parent=23 // pred_region
          %p162 = scmp.lt.s32.totalorder %s14, 1
          %s163 = scalar_select %p162, %s14, 1
          %s164 = smul.addr %s163, 32
          %s165 = smul.addr %s164, 8
          %s166 = scalar_lea.vmem %s0, %s165
        $region28: #{ed_forward.24} parent=23 // pred_fallthru
          _
      $region24: #{ed_forward.24} parent=5 // pred_fallthru
        _
      %p167 = scmp.le.s32.totalorder 1, %s14
      %p168 = scmp.lt.s32.totalorder %s14, 3
      %p169 = pnand %p167, %p168
      %p170 = pneg %p169
      // Predicated region
      $region29: #{ed_forward.24} parent=5 // pred_check
        _
      $region30: #{ed_forward.24} parent=5 // pred_check_branch
        %172 = sbr.rel (%p169) target = $region32
      $region31: #{ed_forward.24} parent=5 // pred_region
        %s173 = ssub.s32 %s14, 1
        %p174 = scmp.lt.s32.totalorder %s19, 1
        %s175 = scalar_select %p174, %s19, 1
        %s176 = smul.addr %s175, 32
        %s177 = smul.addr %s176, 8
        %s178 = scalar_lea.vmem %s0, %s177
        %p179 = pneg %p40
        %p180 = pneg %p37
        %p181 = pneg %p61
        %p182 = pneg %p58
        %p183 = pneg %p82
        %p184 = pneg %p79
        %p185 = pneg %p108
        %p186 = pneg %p105
        %p187 = scmp.lt.s32.totalorder %s19, 1
        %s188 = scalar_select %p187, %s19, 1
        %s189 = smul.addr %s188, 32
        %s190 = smul.addr %s189, 8
        %s191 = scalar_lea.vmem %s3, %s190
        %p192 = pneg %p134
        %p193 = pneg %p131
        %s194 = sand.u32 %s121, 1
        %s195 = scalar_lea.sflag [#allocation3], %s194
        %s196 = sand.u32 %s121, 1
        %s197 = smul.addr %s196, 256
        %s198 = scalar_lea.vmem [#allocation2], %s197
        %p199 = scmp.lt.s32.totalorder %s19, 1
        %s200 = scalar_select %p199, %s19, 1
        %s201 = smul.addr %s200, 32
        %s202 = smul.addr %s201, 8
        %s203 = scalar_lea.vmem %s0, %s202
        %p204 = scmp.lt.s32.totalorder %s19, 1
        %s205 = scalar_select %p204, %s19, 1
        %s206 = smul.addr %s205, 32
        %s207 = smul.addr %s206, 8
        %s208 = scalar_lea.vmem %s3, %s207
        %v209 = vld [vmem:[%s203] sm:$0xff]
        %v210 = vld [vmem:[%s203 + $0x8] sm:$0xff]
        %v211 = vld [vmem:[%s203 + $0x10] sm:$0xff]
        %v212 = vld [vmem:[%s203 + $0x18] sm:$0xff]
        %v213 = vld [vmem:[%s203 + $0x20] sm:$0xff]
        %v214 = vld [vmem:[%s203 + $0x28] sm:$0xff]
        %v215 = vld [vmem:[%s203 + $0x30] sm:$0xff]
        %v216 = vld [vmem:[%s203 + $0x38] sm:$0xff]
        %v217 = vld [vmem:[%s203 + $0x40] sm:$0xff]
        %v218 = vld [vmem:[%s203 + $0x48] sm:$0xff]
        %v219 = vld [vmem:[%s203 + $0x50] sm:$0xff]
        %v220 = vld [vmem:[%s203 + $0x58] sm:$0xff]
        %v221 = vld [vmem:[%s203 + $0x60] sm:$0xff]
        %v222 = vld [vmem:[%s203 + $0x68] sm:$0xff]
        %v223 = vld [vmem:[%s203 + $0x70] sm:$0xff]
        %v224 = vld [vmem:[%s203 + $0x78] sm:$0xff]
        %v225 = vld [vmem:[%s203 + $0x80] sm:$0xff]
        %v226 = vld [vmem:[%s203 + $0x88] sm:$0xff]
        %v227 = vld [vmem:[%s203 + $0x90] sm:$0xff]
        %v228 = vld [vmem:[%s203 + $0x98] sm:$0xff]
        %v229 = vld [vmem:[%s203 + $0xa0] sm:$0xff]
        %v230 = vld [vmem:[%s203 + $0xa8] sm:$0xff]
        %v231 = vld [vmem:[%s203 + $0xb0] sm:$0xff]
        %v232 = vld [vmem:[%s203 + $0xb8] sm:$0xff]
        %v233 = vld [vmem:[%s203 + $0xc0] sm:$0xff]
        %v234 = vld [vmem:[%s203 + $0xc8] sm:$0xff]
        %v235 = vld [vmem:[%s203 + $0xd0] sm:$0xff]
        %v236 = vld [vmem:[%s203 + $0xd8] sm:$0xff]
        %v237 = vld [vmem:[%s203 + $0xe0] sm:$0xff]
        %v238 = vld [vmem:[%s203 + $0xe8] sm:$0xff]
        %v239 = vld [vmem:[%s203 + $0xf0] sm:$0xff]
        %v240 = vld [vmem:[%s203 + $0xf8] sm:$0xff]
        %v241 = vld [vmem:[%s1] sm:$0xff]
        %v242 = vld [vmem:[%s1 + $0x8] sm:$0xff]
        %v243 = vld [vmem:[%s1 + $0x10] sm:$0xff]
        %v244 = vld [vmem:[%s1 + $0x18] sm:$0xff]
        %v245 = vld [vmem:[%s1 + $0x20] sm:$0xff]
        %v246 = vld [vmem:[%s1 + $0x28] sm:$0xff]
        %v247 = vld [vmem:[%s1 + $0x30] sm:$0xff]
        %v248 = vld [vmem:[%s1 + $0x38] sm:$0xff]
        %v249 = vld [vmem:[%s1 + $0x40] sm:$0xff]
        %v250 = vld [vmem:[%s1 + $0x48] sm:$0xff]
        %v251 = vld [vmem:[%s1 + $0x50] sm:$0xff]
        %v252 = vld [vmem:[%s1 + $0x58] sm:$0xff]
        %v253 = vld [vmem:[%s1 + $0x60] sm:$0xff]
        %v254 = vld [vmem:[%s1 + $0x68] sm:$0xff]
        %v255 = vld [vmem:[%s1 + $0x70] sm:$0xff]
        %v256 = vld [vmem:[%s1 + $0x78] sm:$0xff]
        %v257 = vld [vmem:[%s1 + $0x80] sm:$0xff]
        %v258 = vld [vmem:[%s1 + $0x88] sm:$0xff]
        %v259 = vld [vmem:[%s1 + $0x90] sm:$0xff]
        %v260 = vld [vmem:[%s1 + $0x98] sm:$0xff]
        %v261 = vld [vmem:[%s1 + $0xa0] sm:$0xff]
        %v262 = vld [vmem:[%s1 + $0xa8] sm:$0xff]
        %v263 = vld [vmem:[%s1 + $0xb0] sm:$0xff]
        %v264 = vld [vmem:[%s1 + $0xb8] sm:$0xff]
        %v265 = vld [vmem:[%s1 + $0xc0] sm:$0xff]
        %v266 = vld [vmem:[%s1 + $0xc8] sm:$0xff]
        %v267 = vld [vmem:[%s1 + $0xd0] sm:$0xff]
        %v268 = vld [vmem:[%s1 + $0xd8] sm:$0xff]
        %v269 = vld [vmem:[%s1 + $0xe0] sm:$0xff]
        %v270 = vld [vmem:[%s1 + $0xe8] sm:$0xff]
        %v271 = vld [vmem:[%s1 + $0xf0] sm:$0xff]
        %v272 = vld [vmem:[%s1 + $0xf8] sm:$0xff]
        %v273 = vld [vmem:[%s2] sm:$0xff]
        %v274 = vld [vmem:[%s2 + $0x8] sm:$0xff]
        %v275 = vld [vmem:[%s2 + $0x10] sm:$0xff]
        %v276 = vld [vmem:[%s2 + $0x18] sm:$0xff]
        %v277 = vld [vmem:[%s2 + $0x20] sm:$0xff]
        %v278 = vld [vmem:[%s2 + $0x28] sm:$0xff]
        %v279 = vld [vmem:[%s2 + $0x30] sm:$0xff]
        %v280 = vld [vmem:[%s2 + $0x38] sm:$0xff]
        %v281 = vld [vmem:[%s2 + $0x40] sm:$0xff]
        %v282 = vld [vmem:[%s2 + $0x48] sm:$0xff]
        %v283 = vld [vmem:[%s2 + $0x50] sm:$0xff]
        %v284 = vld [vmem:[%s2 + $0x58] sm:$0xff]
        %v285 = vld [vmem:[%s2 + $0x60] sm:$0xff]
        %v286 = vld [vmem:[%s2 + $0x68] sm:$0xff]
        %v287 = vld [vmem:[%s2 + $0x70] sm:$0xff]
        %v288 = vld [vmem:[%s2 + $0x78] sm:$0xff]
        %v289 = vld [vmem:[%s2 + $0x80] sm:$0xff]
        %v290 = vld [vmem:[%s2 + $0x88] sm:$0xff]
        %v291 = vld [vmem:[%s2 + $0x90] sm:$0xff]
        %v292 = vld [vmem:[%s2 + $0x98] sm:$0xff]
        %v293 = vld [vmem:[%s2 + $0xa0] sm:$0xff]
        %v294 = vld [vmem:[%s2 + $0xa8] sm:$0xff]
        %v295 = vld [vmem:[%s2 + $0xb0] sm:$0xff]
        %v296 = vld [vmem:[%s2 + $0xb8] sm:$0xff]
        %v297 = vld [vmem:[%s2 + $0xc0] sm:$0xff]
        %v298 = vld [vmem:[%s2 + $0xc8] sm:$0xff]
        %v299 = vld [vmem:[%s2 + $0xd0] sm:$0xff]
        %v300 = vld [vmem:[%s2 + $0xd8] sm:$0xff]
        %v301 = vld [vmem:[%s2 + $0xe0] sm:$0xff]
        %v302 = vld [vmem:[%s2 + $0xe8] sm:$0xff]
        %v303 = vld [vmem:[%s2 + $0xf0] sm:$0xff]
        %v304 = vld [vmem:[%s2 + $0xf8] sm:$0xff]
        %vm305 = vcmask 64512
        %v307 = vsel %vm305, %v209, 0
        %v310 = vsel %vm305, %v210, 0
        %v313 = vsel %vm305, %v211, 0
        %v316 = vsel %vm305, %v212, 0
        %v319 = vsel %vm305, %v213, 0
        %v322 = vsel %vm305, %v214, 0
        %v325 = vsel %vm305, %v215, 0
        %v328 = vsel %vm305, %v216, 0
        %v331 = vsel %vm305, %v241, 0
        %v334 = vsel %vm305, %v242, 0
        %v337 = vsel %vm305, %v243, 0
        %v340 = vsel %vm305, %v244, 0
        %v343 = vsel %vm305, %v245, 0
        %v346 = vsel %vm305, %v246, 0
        %v349 = vsel %vm305, %v247, 0
        %v352 = vsel %vm305, %v248, 0
        %354 = vmatprep.subr.mxu0 0.0
        %355 = vmatpush1.xpose.msra.mxu0 0.0
        %356 = vmatprep.subr.mxu0 0.0
        %357 = vmatpush1.xpose.msra.mxu0 0.0
        %358 = vmatprep.subr.mxu0 0.0
        %359 = vmatpush1.xpose.msra.mxu0 0.0
        %360 = vmatprep.subr.mxu0 0.0
        %361 = vmatpush1.xpose.msra.mxu0 0.0
        %362 = vmatprep.subr.mxu0 0.0
        %363 = vmatpush1.xpose.msra.mxu0 0.0
        %364 = vmatprep.subr.mxu0 0.0
        %365 = vmatpush1.xpose.msra.mxu0 0.0
        %366 = vmatprep.subr.mxu0 0.0
        %367 = vmatpush1.xpose.msra.mxu0 0.0
        %368 = vmatprep.subr.mxu0 0.0
        %369 = vmatpush1.xpose.msra.mxu0 0.0
        %370 = vmatprep.subr.mxu0 0.0
        %371 = vmatpush1.xpose.msra.mxu0 %v352
        %372 = vmatprep.subr.mxu0 0.0
        %373 = vmatpush1.xpose.msra.mxu0 %v349
        %374 = vmatprep.subr.mxu0 0.0
        %375 = vmatpush1.xpose.msra.mxu0 %v346
        %376 = vmatprep.subr.mxu0 0.0
        %377 = vmatpush1.xpose.msra.mxu0 %v343
        %378 = vmatprep.subr.mxu0 0.0
        %379 = vmatpush1.xpose.msra.mxu0 %v340
        %380 = vmatprep.subr.mxu0 0.0
        %381 = vmatpush1.xpose.msra.mxu0 %v337
        %382 = vmatprep.subr.mxu0 0.0
        %383 = vmatpush1.xpose.msra.mxu0 %v334
        %384 = vmatprep.subr.mxu0 0.0
        %385 = vmatpush1.xpose.msra.mxu0 %v331
        %386 = vmatprep.subr.mxu0 0.0
        %387 = vmatpush2.xpose.msra.mxu0 0.0
        %388 = vmatprep.subr.mxu0 0.0
        %389 = vmatpush2.xpose.msra.mxu0 0.0
        %390 = vmatprep.subr.mxu0 0.0
        %391 = vmatpush2.xpose.msra.mxu0 0.0
        %392 = vmatprep.subr.mxu0 0.0
        %393 = vmatpush2.xpose.msra.mxu0 0.0
        %394 = vmatprep.subr.mxu0 0.0
        %395 = vmatpush2.xpose.msra.mxu0 0.0
        %396 = vmatprep.subr.mxu0 0.0
        %397 = vmatpush2.xpose.msra.mxu0 0.0
        %398 = vmatprep.subr.mxu0 0.0
        %399 = vmatpush2.xpose.msra.mxu0 0.0
        %400 = vmatprep.subr.mxu0 0.0
        %401 = vmatpush2.xpose.msra.mxu0 0.0
        %402 = vmatprep.subr.mxu0 0.0
        %403 = vmatpush2.xpose.msra.mxu0 0.0
        %404 = vmatprep.subr.mxu0 0.0
        %405 = vmatpush2.xpose.msra.mxu0 0.0
        %406 = vmatprep.subr.mxu0 0.0
        %407 = vmatpush2.xpose.msra.mxu0 0.0
        %408 = vmatprep.subr.mxu0 0.0
        %409 = vmatpush2.xpose.msra.mxu0 0.0
        %410 = vmatprep.subr.mxu0 0.0
        %411 = vmatpush2.xpose.msra.mxu0 0.0
        %412 = vmatprep.subr.mxu0 0.0
        %413 = vmatpush2.xpose.msra.mxu0 0.0
        %414 = vmatprep.subr.mxu0 0.0
        %415 = vmatpush2.xpose.msra.mxu0 0.0
        %416 = vmatprep.subr.mxu0 0.0
        %417 = vmatpush2.xpose.msra.mxu0 0.0
        %418 = vmatprep.mubr.f32.mxu0 0.0
        %419 = vmatmul.mubr.f32.gmra.mxu0 %v307
        %v420 = vpop.f32.mrf.mxu0
        %v421 = vadd.f32 0.0, %v420
        %v422 = vpop.f32.mrf.mxu0
        %423 = vmatprep.mubr.f32.mxu0 0.0
        %424 = vmatmul.mubr.f32.gmra.mxu0 %v310
        %v425 = vpop.f32.mrf.mxu0
        %v426 = vadd.f32 0.0, %v425
        %v427 = vpop.f32.mrf.mxu0
        %428 = vmatprep.mubr.f32.mxu0 0.0
        %429 = vmatmul.mubr.f32.gmra.mxu0 %v313
        %v430 = vpop.f32.mrf.mxu0
        %v431 = vadd.f32 0.0, %v430
        %v432 = vpop.f32.mrf.mxu0
        %433 = vmatprep.mubr.f32.mxu0 0.0
        %434 = vmatmul.mubr.f32.gmra.mxu0 %v316
        %v435 = vpop.f32.mrf.mxu0
        %v436 = vadd.f32 0.0, %v435
        %v437 = vpop.f32.mrf.mxu0
        %438 = vmatprep.mubr.f32.mxu0 0.0
        %439 = vmatmul.mubr.f32.gmra.mxu0 %v319
        %v440 = vpop.f32.mrf.mxu0
        %v441 = vadd.f32 0.0, %v440
        %v442 = vpop.f32.mrf.mxu0
        %443 = vmatprep.mubr.f32.mxu0 0.0
        %444 = vmatmul.mubr.f32.gmra.mxu0 %v322
        %v445 = vpop.f32.mrf.mxu0
        %v446 = vadd.f32 0.0, %v445
        %v447 = vpop.f32.mrf.mxu0
        %448 = vmatprep.mubr.f32.mxu0 0.0
        %449 = vmatmul.mubr.f32.gmra.mxu0 %v325
        %v450 = vpop.f32.mrf.mxu0
        %v451 = vadd.f32 0.0, %v450
        %v452 = vpop.f32.mrf.mxu0
        %453 = vmatprep.mubr.f32.mxu0 0.0
        %454 = vmatmul.mubr.f32.gmra.mxu0 %v328
        %v455 = vpop.f32.mrf.mxu0
        %v456 = vadd.f32 0.0, %v455
        %v457 = vpop.f32.mrf.mxu0
        %458 = vdwg.mxu0
        %v460 = vsel %vm305, %v217, 0
        %v463 = vsel %vm305, %v218, 0
        %v466 = vsel %vm305, %v219, 0
        %v469 = vsel %vm305, %v220, 0
        %v472 = vsel %vm305, %v221, 0
        %v475 = vsel %vm305, %v222, 0
        %v478 = vsel %vm305, %v223, 0
        %v481 = vsel %vm305, %v224, 0
        %v484 = vsel %vm305, %v249, 0
        %v487 = vsel %vm305, %v250, 0
        %v490 = vsel %vm305, %v251, 0
        %v493 = vsel %vm305, %v252, 0
        %v496 = vsel %vm305, %v253, 0
        %v499 = vsel %vm305, %v254, 0
        %v502 = vsel %vm305, %v255, 0
        %v505 = vsel %vm305, %v256, 0
        %507 = vmatprep.subr.mxu0 0.0
        %508 = vmatpush1.xpose.msra.mxu0 0.0
        %509 = vmatprep.subr.mxu0 0.0
        %510 = vmatpush1.xpose.msra.mxu0 0.0
        %511 = vmatprep.subr.mxu0 0.0
        %512 = vmatpush1.xpose.msra.mxu0 0.0
        %513 = vmatprep.subr.mxu0 0.0
        %514 = vmatpush1.xpose.msra.mxu0 0.0
        %515 = vmatprep.subr.mxu0 0.0
        %516 = vmatpush1.xpose.msra.mxu0 0.0
        %517 = vmatprep.subr.mxu0 0.0
        %518 = vmatpush1.xpose.msra.mxu0 0.0
        %519 = vmatprep.subr.mxu0 0.0
        %520 = vmatpush1.xpose.msra.mxu0 0.0
        %521 = vmatprep.subr.mxu0 0.0
        %522 = vmatpush1.xpose.msra.mxu0 0.0
        %523 = vmatprep.subr.mxu0 0.0
        %524 = vmatpush1.xpose.msra.mxu0 %v505
        %525 = vmatprep.subr.mxu0 0.0
        %526 = vmatpush1.xpose.msra.mxu0 %v502
        %527 = vmatprep.subr.mxu0 0.0
        %528 = vmatpush1.xpose.msra.mxu0 %v499
        %529 = vmatprep.subr.mxu0 0.0
        %530 = vmatpush1.xpose.msra.mxu0 %v496
        %531 = vmatprep.subr.mxu0 0.0
        %532 = vmatpush1.xpose.msra.mxu0 %v493
        %533 = vmatprep.subr.mxu0 0.0
        %534 = vmatpush1.xpose.msra.mxu0 %v490
        %535 = vmatprep.subr.mxu0 0.0
        %536 = vmatpush1.xpose.msra.mxu0 %v487
        %537 = vmatprep.subr.mxu0 0.0
        %538 = vmatpush1.xpose.msra.mxu0 %v484
        %539 = vmatprep.subr.mxu0 0.0
        %540 = vmatpush2.xpose.msra.mxu0 0.0
        %541 = vmatprep.subr.mxu0 0.0
        %542 = vmatpush2.xpose.msra.mxu0 0.0
        %543 = vmatprep.subr.mxu0 0.0
        %544 = vmatpush2.xpose.msra.mxu0 0.0
        %545 = vmatprep.subr.mxu0 0.0
        %546 = vmatpush2.xpose.msra.mxu0 0.0
        %547 = vmatprep.subr.mxu0 0.0
        %548 = vmatpush2.xpose.msra.mxu0 0.0
        %549 = vmatprep.subr.mxu0 0.0
        %550 = vmatpush2.xpose.msra.mxu0 0.0
        %551 = vmatprep.subr.mxu0 0.0
        %552 = vmatpush2.xpose.msra.mxu0 0.0
        %553 = vmatprep.subr.mxu0 0.0
        %554 = vmatpush2.xpose.msra.mxu0 0.0
        %555 = vmatprep.subr.mxu0 0.0
        %556 = vmatpush2.xpose.msra.mxu0 0.0
        %557 = vmatprep.subr.mxu0 0.0
        %558 = vmatpush2.xpose.msra.mxu0 0.0
        %559 = vmatprep.subr.mxu0 0.0
        %560 = vmatpush2.xpose.msra.mxu0 0.0
        %561 = vmatprep.subr.mxu0 0.0
        %562 = vmatpush2.xpose.msra.mxu0 0.0
        %563 = vmatprep.subr.mxu0 0.0
        %564 = vmatpush2.xpose.msra.mxu0 0.0
        %565 = vmatprep.subr.mxu0 0.0
        %566 = vmatpush2.xpose.msra.mxu0 0.0
        %567 = vmatprep.subr.mxu0 0.0
        %568 = vmatpush2.xpose.msra.mxu0 0.0
        %569 = vmatprep.subr.mxu0 0.0
        %570 = vmatpush2.xpose.msra.mxu0 0.0
        %571 = vmatprep.mubr.f32.mxu0 0.0
        %572 = vmatmul.mubr.f32.gmra.mxu0 %v460
        %v573 = vpop.f32.mrf.mxu0
        %v574 = vadd.f32 0.0, %v573
        %v575 = vpop.f32.mrf.mxu0
        %576 = vmatprep.mubr.f32.mxu0 0.0
        %577 = vmatmul.mubr.f32.gmra.mxu0 %v463
        %v578 = vpop.f32.mrf.mxu0
        %v579 = vadd.f32 0.0, %v578
        %v580 = vpop.f32.mrf.mxu0
        %581 = vmatprep.mubr.f32.mxu0 0.0
        %582 = vmatmul.mubr.f32.gmra.mxu0 %v466
        %v583 = vpop.f32.mrf.mxu0
        %v584 = vadd.f32 0.0, %v583
        %v585 = vpop.f32.mrf.mxu0
        %586 = vmatprep.mubr.f32.mxu0 0.0
        %587 = vmatmul.mubr.f32.gmra.mxu0 %v469
        %v588 = vpop.f32.mrf.mxu0
        %v589 = vadd.f32 0.0, %v588
        %v590 = vpop.f32.mrf.mxu0
        %591 = vmatprep.mubr.f32.mxu0 0.0
        %592 = vmatmul.mubr.f32.gmra.mxu0 %v472
        %v593 = vpop.f32.mrf.mxu0
        %v594 = vadd.f32 0.0, %v593
        %v595 = vpop.f32.mrf.mxu0
        %596 = vmatprep.mubr.f32.mxu0 0.0
        %597 = vmatmul.mubr.f32.gmra.mxu0 %v475
        %v598 = vpop.f32.mrf.mxu0
        %v599 = vadd.f32 0.0, %v598
        %v600 = vpop.f32.mrf.mxu0
        %601 = vmatprep.mubr.f32.mxu0 0.0
        %602 = vmatmul.mubr.f32.gmra.mxu0 %v478
        %v603 = vpop.f32.mrf.mxu0
        %v604 = vadd.f32 0.0, %v603
        %v605 = vpop.f32.mrf.mxu0
        %606 = vmatprep.mubr.f32.mxu0 0.0
        %607 = vmatmul.mubr.f32.gmra.mxu0 %v481
        %v608 = vpop.f32.mrf.mxu0
        %v609 = vadd.f32 0.0, %v608
        %v610 = vpop.f32.mrf.mxu0
        %611 = vdwg.mxu0
        %v613 = vsel %vm305, %v225, 0
        %v616 = vsel %vm305, %v226, 0
        %v619 = vsel %vm305, %v227, 0
        %v622 = vsel %vm305, %v228, 0
        %v625 = vsel %vm305, %v229, 0
        %v628 = vsel %vm305, %v230, 0
        %v631 = vsel %vm305, %v231, 0
        %v634 = vsel %vm305, %v232, 0
        %v637 = vsel %vm305, %v257, 0
        %v640 = vsel %vm305, %v258, 0
        %v643 = vsel %vm305, %v259, 0
        %v646 = vsel %vm305, %v260, 0
        %v649 = vsel %vm305, %v261, 0
        %v652 = vsel %vm305, %v262, 0
        %v655 = vsel %vm305, %v263, 0
        %v658 = vsel %vm305, %v264, 0
        %660 = vmatprep.subr.mxu0 0.0
        %661 = vmatpush1.xpose.msra.mxu0 0.0
        %662 = vmatprep.subr.mxu0 0.0
        %663 = vmatpush1.xpose.msra.mxu0 0.0
        %664 = vmatprep.subr.mxu0 0.0
        %665 = vmatpush1.xpose.msra.mxu0 0.0
        %666 = vmatprep.subr.mxu0 0.0
        %667 = vmatpush1.xpose.msra.mxu0 0.0
        %668 = vmatprep.subr.mxu0 0.0
        %669 = vmatpush1.xpose.msra.mxu0 0.0
        %670 = vmatprep.subr.mxu0 0.0
        %671 = vmatpush1.xpose.msra.mxu0 0.0
        %672 = vmatprep.subr.mxu0 0.0
        %673 = vmatpush1.xpose.msra.mxu0 0.0
        %674 = vmatprep.subr.mxu0 0.0
        %675 = vmatpush1.xpose.msra.mxu0 0.0
        %676 = vmatprep.subr.mxu0 0.0
        %677 = vmatpush1.xpose.msra.mxu0 %v658
        %678 = vmatprep.subr.mxu0 0.0
        %679 = vmatpush1.xpose.msra.mxu0 %v655
        %680 = vmatprep.subr.mxu0 0.0
        %681 = vmatpush1.xpose.msra.mxu0 %v652
        %682 = vmatprep.subr.mxu0 0.0
        %683 = vmatpush1.xpose.msra.mxu0 %v649
        %684 = vmatprep.subr.mxu0 0.0
        %685 = vmatpush1.xpose.msra.mxu0 %v646
        %686 = vmatprep.subr.mxu0 0.0
        %687 = vmatpush1.xpose.msra.mxu0 %v643
        %688 = vmatprep.subr.mxu0 0.0
        %689 = vmatpush1.xpose.msra.mxu0 %v640
        %690 = vmatprep.subr.mxu0 0.0
        %691 = vmatpush1.xpose.msra.mxu0 %v637
        %692 = vmatprep.subr.mxu0 0.0
        %693 = vmatpush2.xpose.msra.mxu0 0.0
        %694 = vmatprep.subr.mxu0 0.0
        %695 = vmatpush2.xpose.msra.mxu0 0.0
        %696 = vmatprep.subr.mxu0 0.0
        %697 = vmatpush2.xpose.msra.mxu0 0.0
        %698 = vmatprep.subr.mxu0 0.0
        %699 = vmatpush2.xpose.msra.mxu0 0.0
        %700 = vmatprep.subr.mxu0 0.0
        %701 = vmatpush2.xpose.msra.mxu0 0.0
        %702 = vmatprep.subr.mxu0 0.0
        %703 = vmatpush2.xpose.msra.mxu0 0.0
        %704 = vmatprep.subr.mxu0 0.0
        %705 = vmatpush2.xpose.msra.mxu0 0.0
        %706 = vmatprep.subr.mxu0 0.0
        %707 = vmatpush2.xpose.msra.mxu0 0.0
        %708 = vmatprep.subr.mxu0 0.0
        %709 = vmatpush2.xpose.msra.mxu0 0.0
        %710 = vmatprep.subr.mxu0 0.0
        %711 = vmatpush2.xpose.msra.mxu0 0.0
        %712 = vmatprep.subr.mxu0 0.0
        %713 = vmatpush2.xpose.msra.mxu0 0.0
        %714 = vmatprep.subr.mxu0 0.0
        %715 = vmatpush2.xpose.msra.mxu0 0.0
        %716 = vmatprep.subr.mxu0 0.0
        %717 = vmatpush2.xpose.msra.mxu0 0.0
        %718 = vmatprep.subr.mxu0 0.0
        %719 = vmatpush2.xpose.msra.mxu0 0.0
        %720 = vmatprep.subr.mxu0 0.0
        %721 = vmatpush2.xpose.msra.mxu0 0.0
        %722 = vmatprep.subr.mxu0 0.0
        %723 = vmatpush2.xpose.msra.mxu0 0.0
        %724 = vmatprep.mubr.f32.mxu0 0.0
        %725 = vmatmul.mubr.f32.gmra.mxu0 %v613
        %v726 = vpop.f32.mrf.mxu0
        %v727 = vadd.f32 0.0, %v726
        %v728 = vpop.f32.mrf.mxu0
        %729 = vmatprep.mubr.f32.mxu0 0.0
        %730 = vmatmul.mubr.f32.gmra.mxu0 %v616
        %v731 = vpop.f32.mrf.mxu0
        %v732 = vadd.f32 0.0, %v731
        %v733 = vpop.f32.mrf.mxu0
        %734 = vmatprep.mubr.f32.mxu0 0.0
        %735 = vmatmul.mubr.f32.gmra.mxu0 %v619
        %v736 = vpop.f32.mrf.mxu0
        %v737 = vadd.f32 0.0, %v736
        %v738 = vpop.f32.mrf.mxu0
        %739 = vmatprep.mubr.f32.mxu0 0.0
        %740 = vmatmul.mubr.f32.gmra.mxu0 %v622
        %v741 = vpop.f32.mrf.mxu0
        %v742 = vadd.f32 0.0, %v741
        %v743 = vpop.f32.mrf.mxu0
        %744 = vmatprep.mubr.f32.mxu0 0.0
        %745 = vmatmul.mubr.f32.gmra.mxu0 %v625
        %v746 = vpop.f32.mrf.mxu0
        %v747 = vadd.f32 0.0, %v746
        %v748 = vpop.f32.mrf.mxu0
        %749 = vmatprep.mubr.f32.mxu0 0.0
        %750 = vmatmul.mubr.f32.gmra.mxu0 %v628
        %v751 = vpop.f32.mrf.mxu0
        %v752 = vadd.f32 0.0, %v751
        %v753 = vpop.f32.mrf.mxu0
        %754 = vmatprep.mubr.f32.mxu0 0.0
        %755 = vmatmul.mubr.f32.gmra.mxu0 %v631
        %v756 = vpop.f32.mrf.mxu0
        %v757 = vadd.f32 0.0, %v756
        %v758 = vpop.f32.mrf.mxu0
        %759 = vmatprep.mubr.f32.mxu0 0.0
        %760 = vmatmul.mubr.f32.gmra.mxu0 %v634
        %v761 = vpop.f32.mrf.mxu0
        %v762 = vadd.f32 0.0, %v761
        %v763 = vpop.f32.mrf.mxu0
        %764 = vdwg.mxu0
        %v766 = vsel %vm305, %v233, 0
        %v769 = vsel %vm305, %v234, 0
        %v772 = vsel %vm305, %v235, 0
        %v775 = vsel %vm305, %v236, 0
        %v778 = vsel %vm305, %v237, 0
        %v781 = vsel %vm305, %v238, 0
        %v784 = vsel %vm305, %v239, 0
        %v787 = vsel %vm305, %v240, 0
        %v790 = vsel %vm305, %v265, 0
        %v793 = vsel %vm305, %v266, 0
        %v796 = vsel %vm305, %v267, 0
        %v799 = vsel %vm305, %v268, 0
        %v802 = vsel %vm305, %v269, 0
        %v805 = vsel %vm305, %v270, 0
        %v808 = vsel %vm305, %v271, 0
        %v811 = vsel %vm305, %v272, 0
        %813 = vmatprep.subr.mxu0 0.0
        %814 = vmatpush1.xpose.msra.mxu0 0.0
        %815 = vmatprep.subr.mxu0 0.0
        %816 = vmatpush1.xpose.msra.mxu0 0.0
        %817 = vmatprep.subr.mxu0 0.0
        %818 = vmatpush1.xpose.msra.mxu0 0.0
        %819 = vmatprep.subr.mxu0 0.0
        %820 = vmatpush1.xpose.msra.mxu0 0.0
        %821 = vmatprep.subr.mxu0 0.0
        %822 = vmatpush1.xpose.msra.mxu0 0.0
        %823 = vmatprep.subr.mxu0 0.0
        %824 = vmatpush1.xpose.msra.mxu0 0.0
        %825 = vmatprep.subr.mxu0 0.0
        %826 = vmatpush1.xpose.msra.mxu0 0.0
        %827 = vmatprep.subr.mxu0 0.0
        %828 = vmatpush1.xpose.msra.mxu0 0.0
        %829 = vmatprep.subr.mxu0 0.0
        %830 = vmatpush1.xpose.msra.mxu0 %v811
        %831 = vmatprep.subr.mxu0 0.0
        %832 = vmatpush1.xpose.msra.mxu0 %v808
        %833 = vmatprep.subr.mxu0 0.0
        %834 = vmatpush1.xpose.msra.mxu0 %v805
        %835 = vmatprep.subr.mxu0 0.0
        %836 = vmatpush1.xpose.msra.mxu0 %v802
        %837 = vmatprep.subr.mxu0 0.0
        %838 = vmatpush1.xpose.msra.mxu0 %v799
        %839 = vmatprep.subr.mxu0 0.0
        %840 = vmatpush1.xpose.msra.mxu0 %v796
        %841 = vmatprep.subr.mxu0 0.0
        %842 = vmatpush1.xpose.msra.mxu0 %v793
        %843 = vmatprep.subr.mxu0 0.0
        %844 = vmatpush1.xpose.msra.mxu0 %v790
        %845 = vmatprep.subr.mxu0 0.0
        %846 = vmatpush2.xpose.msra.mxu0 0.0
        %847 = vmatprep.subr.mxu0 0.0
        %848 = vmatpush2.xpose.msra.mxu0 0.0
        %849 = vmatprep.subr.mxu0 0.0
        %850 = vmatpush2.xpose.msra.mxu0 0.0
        %851 = vmatprep.subr.mxu0 0.0
        %852 = vmatpush2.xpose.msra.mxu0 0.0
        %853 = vmatprep.subr.mxu0 0.0
        %854 = vmatpush2.xpose.msra.mxu0 0.0
        %855 = vmatprep.subr.mxu0 0.0
        %856 = vmatpush2.xpose.msra.mxu0 0.0
        %857 = vmatprep.subr.mxu0 0.0
        %858 = vmatpush2.xpose.msra.mxu0 0.0
        %859 = vmatprep.subr.mxu0 0.0
        %860 = vmatpush2.xpose.msra.mxu0 0.0
        %861 = vmatprep.subr.mxu0 0.0
        %862 = vmatpush2.xpose.msra.mxu0 0.0
        %863 = vmatprep.subr.mxu0 0.0
        %864 = vmatpush2.xpose.msra.mxu0 0.0
        %865 = vmatprep.subr.mxu0 0.0
        %866 = vmatpush2.xpose.msra.mxu0 0.0
        %867 = vmatprep.subr.mxu0 0.0
        %868 = vmatpush2.xpose.msra.mxu0 0.0
        %869 = vmatprep.subr.mxu0 0.0
        %870 = vmatpush2.xpose.msra.mxu0 0.0
        %871 = vmatprep.subr.mxu0 0.0
        %872 = vmatpush2.xpose.msra.mxu0 0.0
        %873 = vmatprep.subr.mxu0 0.0
        %874 = vmatpush2.xpose.msra.mxu0 0.0
        %875 = vmatprep.subr.mxu0 0.0
        %876 = vmatpush2.xpose.msra.mxu0 0.0
        %877 = vmatprep.mubr.f32.mxu0 0.0
        %878 = vmatmul.mubr.f32.gmra.mxu0 %v766
        %v879 = vpop.f32.mrf.mxu0
        %v880 = vadd.f32 0.0, %v879
        %v881 = vpop.f32.mrf.mxu0
        %882 = vmatprep.mubr.f32.mxu0 0.0
        %883 = vmatmul.mubr.f32.gmra.mxu0 %v769
        %v884 = vpop.f32.mrf.mxu0
        %v885 = vadd.f32 0.0, %v884
        %v886 = vpop.f32.mrf.mxu0
        %887 = vmatprep.mubr.f32.mxu0 0.0
        %888 = vmatmul.mubr.f32.gmra.mxu0 %v772
        %v889 = vpop.f32.mrf.mxu0
        %v890 = vadd.f32 0.0, %v889
        %v891 = vpop.f32.mrf.mxu0
        %892 = vmatprep.mubr.f32.mxu0 0.0
        %893 = vmatmul.mubr.f32.gmra.mxu0 %v775
        %v894 = vpop.f32.mrf.mxu0
        %v895 = vadd.f32 0.0, %v894
        %v896 = vpop.f32.mrf.mxu0
        %897 = vmatprep.mubr.f32.mxu0 0.0
        %898 = vmatmul.mubr.f32.gmra.mxu0 %v778
        %v899 = vpop.f32.mrf.mxu0
        %v900 = vadd.f32 0.0, %v899
        %v901 = vpop.f32.mrf.mxu0
        %902 = vmatprep.mubr.f32.mxu0 0.0
        %903 = vmatmul.mubr.f32.gmra.mxu0 %v781
        %v904 = vpop.f32.mrf.mxu0
        %v905 = vadd.f32 0.0, %v904
        %v906 = vpop.f32.mrf.mxu0
        %907 = vmatprep.mubr.f32.mxu0 0.0
        %908 = vmatmul.mubr.f32.gmra.mxu0 %v784
        %v909 = vpop.f32.mrf.mxu0
        %v910 = vadd.f32 0.0, %v909
        %v911 = vpop.f32.mrf.mxu0
        %912 = vmatprep.mubr.f32.mxu0 0.0
        %913 = vmatmul.mubr.f32.gmra.mxu0 %v787
        %v914 = vpop.f32.mrf.mxu0
        %v915 = vadd.f32 0.0, %v914
        %v916 = vpop.f32.mrf.mxu0
        %917 = vdwg.mxu0
        %v918 = vmul.f32 %v421, 0.35355338
        %v919 = vmul.f32 %v426, 0.35355338
        %v920 = vmul.f32 %v431, 0.35355338
        %v921 = vmul.f32 %v436, 0.35355338
        %v922 = vmul.f32 %v441, 0.35355338
        %v923 = vmul.f32 %v446, 0.35355338
        %v924 = vmul.f32 %v451, 0.35355338
        %v925 = vmul.f32 %v456, 0.35355338
        %v926 = vmul.f32 %v574, 0.35355338
        %v927 = vmul.f32 %v579, 0.35355338
        %v928 = vmul.f32 %v584, 0.35355338
        %v929 = vmul.f32 %v589, 0.35355338
        %v930 = vmul.f32 %v594, 0.35355338
        %v931 = vmul.f32 %v599, 0.35355338
        %v932 = vmul.f32 %v604, 0.35355338
        %v933 = vmul.f32 %v609, 0.35355338
        %v934 = vmul.f32 %v727, 0.35355338
        %v935 = vmul.f32 %v732, 0.35355338
        %v936 = vmul.f32 %v737, 0.35355338
        %v937 = vmul.f32 %v742, 0.35355338
        %v938 = vmul.f32 %v747, 0.35355338
        %v939 = vmul.f32 %v752, 0.35355338
        %v940 = vmul.f32 %v757, 0.35355338
        %v941 = vmul.f32 %v762, 0.35355338
        %v942 = vmul.f32 %v880, 0.35355338
        %v943 = vmul.f32 %v885, 0.35355338
        %v944 = vmul.f32 %v890, 0.35355338
        %v945 = vmul.f32 %v895, 0.35355338
        %v946 = vmul.f32 %v900, 0.35355338
        %v947 = vmul.f32 %v905, 0.35355338
        %v948 = vmul.f32 %v910, 0.35355338
        %v949 = vmul.f32 %v915, 0.35355338
        %vm950 = vcmask 523264
        %v951 = vsel %vm950, %v918, -inf
        %952 = vmax.xlane.f32.xlu0 %v951
        %v953 = vpop.xlane.xlu0 %952
        %v954 = vsel %vm950, %v919, -inf
        %955 = vmax.xlane.f32.xlu0 %v954
        %v956 = vpop.xlane.xlu0 %955
        %v957 = vsel %vm950, %v920, -inf
        %958 = vmax.xlane.f32.xlu0 %v957
        %v959 = vpop.xlane.xlu0 %958
        %v960 = vsel %vm950, %v921, -inf
        %961 = vmax.xlane.f32.xlu0 %v960
        %v962 = vpop.xlane.xlu0 %961
        %v963 = vsel %vm950, %v922, -inf
        %964 = vmax.xlane.f32.xlu0 %v963
        %v965 = vpop.xlane.xlu0 %964
        %v966 = vsel %vm950, %v923, -inf
        %967 = vmax.xlane.f32.xlu0 %v966
        %v968 = vpop.xlane.xlu0 %967
        %v969 = vsel %vm950, %v924, -inf
        %970 = vmax.xlane.f32.xlu0 %v969
        %v971 = vpop.xlane.xlu0 %970
        %v972 = vsel %vm950, %v925, -inf
        %973 = vmax.xlane.f32.xlu0 %v972
        %v974 = vpop.xlane.xlu0 %973
        %v975 = vsel %vm950, %v926, -inf
        %976 = vmax.xlane.f32.xlu0 %v975
        %v977 = vpop.xlane.xlu0 %976
        %v978 = vsel %vm950, %v927, -inf
        %979 = vmax.xlane.f32.xlu0 %v978
        %v980 = vpop.xlane.xlu0 %979
        %v981 = vsel %vm950, %v928, -inf
        %982 = vmax.xlane.f32.xlu0 %v981
        %v983 = vpop.xlane.xlu0 %982
        %v984 = vsel %vm950, %v929, -inf
        %985 = vmax.xlane.f32.xlu0 %v984
        %v986 = vpop.xlane.xlu0 %985
        %v987 = vsel %vm950, %v930, -inf
        %988 = vmax.xlane.f32.xlu0 %v987
        %v989 = vpop.xlane.xlu0 %988
        %v990 = vsel %vm950, %v931, -inf
        %991 = vmax.xlane.f32.xlu0 %v990
        %v992 = vpop.xlane.xlu0 %991
        %v993 = vsel %vm950, %v932, -inf
        %994 = vmax.xlane.f32.xlu0 %v993
        %v995 = vpop.xlane.xlu0 %994
        %v996 = vsel %vm950, %v933, -inf
        %997 = vmax.xlane.f32.xlu0 %v996
        %v998 = vpop.xlane.xlu0 %997
        %v999 = vsel %vm950, %v934, -inf
        %1000 = vmax.xlane.f32.xlu0 %v999
        %v1001 = vpop.xlane.xlu0 %1000
        %v1002 = vsel %vm950, %v935, -inf
        %1003 = vmax.xlane.f32.xlu0 %v1002
        %v1004 = vpop.xlane.xlu0 %1003
        %v1005 = vsel %vm950, %v936, -inf
        %1006 = vmax.xlane.f32.xlu0 %v1005
        %v1007 = vpop.xlane.xlu0 %1006
        %v1008 = vsel %vm950, %v937, -inf
        %1009 = vmax.xlane.f32.xlu0 %v1008
        %v1010 = vpop.xlane.xlu0 %1009
        %v1011 = vsel %vm950, %v938, -inf
        %1012 = vmax.xlane.f32.xlu0 %v1011
        %v1013 = vpop.xlane.xlu0 %1012
        %v1014 = vsel %vm950, %v939, -inf
        %1015 = vmax.xlane.f32.xlu0 %v1014
        %v1016 = vpop.xlane.xlu0 %1015
        %v1017 = vsel %vm950, %v940, -inf
        %1018 = vmax.xlane.f32.xlu0 %v1017
        %v1019 = vpop.xlane.xlu0 %1018
        %v1020 = vsel %vm950, %v941, -inf
        %1021 = vmax.xlane.f32.xlu0 %v1020
        %v1022 = vpop.xlane.xlu0 %1021
        %v1023 = vsel %vm950, %v942, -inf
        %1024 = vmax.xlane.f32.xlu0 %v1023
        %v1025 = vpop.xlane.xlu0 %1024
        %v1026 = vsel %vm950, %v943, -inf
        %1027 = vmax.xlane.f32.xlu0 %v1026
        %v1028 = vpop.xlane.xlu0 %1027
        %v1029 = vsel %vm950, %v944, -inf
        %1030 = vmax.xlane.f32.xlu0 %v1029
        %v1031 = vpop.xlane.xlu0 %1030
        %v1032 = vsel %vm950, %v945, -inf
        %1033 = vmax.xlane.f32.xlu0 %v1032
        %v1034 = vpop.xlane.xlu0 %1033
        %v1035 = vsel %vm950, %v946, -inf
        %1036 = vmax.xlane.f32.xlu0 %v1035
        %v1037 = vpop.xlane.xlu0 %1036
        %v1038 = vsel %vm950, %v947, -inf
        %1039 = vmax.xlane.f32.xlu0 %v1038
        %v1040 = vpop.xlane.xlu0 %1039
        %v1041 = vsel %vm950, %v948, -inf
        %1042 = vmax.xlane.f32.xlu0 %v1041
        %v1043 = vpop.xlane.xlu0 %1042
        %v1044 = vsel %vm950, %v949, -inf
        %1045 = vmax.xlane.f32.xlu0 %v1044
        %v1046 = vpop.xlane.xlu0 %1045
        %v1047 = vsub.f32 %v918, %v953
        %v1048 = vsub.f32 %v919, %v956
        %v1049 = vsub.f32 %v920, %v959
        %v1050 = vsub.f32 %v921, %v962
        %v1051 = vsub.f32 %v922, %v965
        %v1052 = vsub.f32 %v923, %v968
        %v1053 = vsub.f32 %v924, %v971
        %v1054 = vsub.f32 %v925, %v974
        %v1055 = vsub.f32 %v926, %v977
        %v1056 = vsub.f32 %v927, %v980
        %v1057 = vsub.f32 %v928, %v983
        %v1058 = vsub.f32 %v929, %v986
        %v1059 = vsub.f32 %v930, %v989
        %v1060 = vsub.f32 %v931, %v992
        %v1061 = vsub.f32 %v932, %v995
        %v1062 = vsub.f32 %v933, %v998
        %v1063 = vsub.f32 %v934, %v1001
        %v1064 = vsub.f32 %v935, %v1004
        %v1065 = vsub.f32 %v936, %v1007
        %v1066 = vsub.f32 %v937, %v1010
        %v1067 = vsub.f32 %v938, %v1013
        %v1068 = vsub.f32 %v939, %v1016
        %v1069 = vsub.f32 %v940, %v1019
        %v1070 = vsub.f32 %v941, %v1022
        %v1071 = vsub.f32 %v942, %v1025
        %v1072 = vsub.f32 %v943, %v1028
        %v1073 = vsub.f32 %v944, %v1031
        %v1074 = vsub.f32 %v945, %v1034
        %v1075 = vsub.f32 %v946, %v1037
        %v1076 = vsub.f32 %v947, %v1040
        %v1077 = vsub.f32 %v948, %v1043
        %v1078 = vsub.f32 %v949, %v1046
        %v1079 = vmul.f32 %v1047, 1.442695
        %v1080 = vpow.pop %v1079
        %v1081 = vmul.f32 %v1048, 1.442695
        %v1082 = vpow.pop %v1081
        %v1083 = vmul.f32 %v1049, 1.442695
        %v1084 = vpow.pop %v1083
        %v1085 = vmul.f32 %v1050, 1.442695
        %v1086 = vpow.pop %v1085
        %v1087 = vmul.f32 %v1051, 1.442695
        %v1088 = vpow.pop %v1087
        %v1089 = vmul.f32 %v1052, 1.442695
        %v1090 = vpow.pop %v1089
        %v1091 = vmul.f32 %v1053, 1.442695
        %v1092 = vpow.pop %v1091
        %v1093 = vmul.f32 %v1054, 1.442695
        %v1094 = vpow.pop %v1093
        %v1095 = vmul.f32 %v1055, 1.442695
        %v1096 = vpow.pop %v1095
        %v1097 = vmul.f32 %v1056, 1.442695
        %v1098 = vpow.pop %v1097
        %v1099 = vmul.f32 %v1057, 1.442695
        %v1100 = vpow.pop %v1099
        %v1101 = vmul.f32 %v1058, 1.442695
        %v1102 = vpow.pop %v1101
        %v1103 = vmul.f32 %v1059, 1.442695
        %v1104 = vpow.pop %v1103
        %v1105 = vmul.f32 %v1060, 1.442695
        %v1106 = vpow.pop %v1105
        %v1107 = vmul.f32 %v1061, 1.442695
        %v1108 = vpow.pop %v1107
        %v1109 = vmul.f32 %v1062, 1.442695
        %v1110 = vpow.pop %v1109
        %v1111 = vmul.f32 %v1063, 1.442695
        %v1112 = vpow.pop %v1111
        %v1113 = vmul.f32 %v1064, 1.442695
        %v1114 = vpow.pop %v1113
        %v1115 = vmul.f32 %v1065, 1.442695
        %v1116 = vpow.pop %v1115
        %v1117 = vmul.f32 %v1066, 1.442695
        %v1118 = vpow.pop %v1117
        %v1119 = vmul.f32 %v1067, 1.442695
        %v1120 = vpow.pop %v1119
        %v1121 = vmul.f32 %v1068, 1.442695
        %v1122 = vpow.pop %v1121
        %v1123 = vmul.f32 %v1069, 1.442695
        %v1124 = vpow.pop %v1123
        %v1125 = vmul.f32 %v1070, 1.442695
        %v1126 = vpow.pop %v1125
        %v1127 = vmul.f32 %v1071, 1.442695
        %v1128 = vpow.pop %v1127
        %v1129 = vmul.f32 %v1072, 1.442695
        %v1130 = vpow.pop %v1129
        %v1131 = vmul.f32 %v1073, 1.442695
        %v1132 = vpow.pop %v1131
        %v1133 = vmul.f32 %v1074, 1.442695
        %v1134 = vpow.pop %v1133
        %v1135 = vmul.f32 %v1075, 1.442695
        %v1136 = vpow.pop %v1135
        %v1137 = vmul.f32 %v1076, 1.442695
        %v1138 = vpow.pop %v1137
        %v1139 = vmul.f32 %v1077, 1.442695
        %v1140 = vpow.pop %v1139
        %v1141 = vmul.f32 %v1078, 1.442695
        %v1142 = vpow.pop %v1141
        %v1143 = vsel %vm950, %v1080, 0.0
        %1144 = vadd.xlane.f32.xlu0 %v1143
        %v1145 = vpop.xlane.xlu0 %1144
        %v1146 = vsel %vm950, %v1082, 0.0
        %1147 = vadd.xlane.f32.xlu0 %v1146
        %v1148 = vpop.xlane.xlu0 %1147
        %v1149 = vsel %vm950, %v1084, 0.0
        %1150 = vadd.xlane.f32.xlu0 %v1149
        %v1151 = vpop.xlane.xlu0 %1150
        %v1152 = vsel %vm950, %v1086, 0.0
        %1153 = vadd.xlane.f32.xlu0 %v1152
        %v1154 = vpop.xlane.xlu0 %1153
        %v1155 = vsel %vm950, %v1088, 0.0
        %1156 = vadd.xlane.f32.xlu0 %v1155
        %v1157 = vpop.xlane.xlu0 %1156
        %v1158 = vsel %vm950, %v1090, 0.0
        %1159 = vadd.xlane.f32.xlu0 %v1158
        %v1160 = vpop.xlane.xlu0 %1159
        %v1161 = vsel %vm950, %v1092, 0.0
        %1162 = vadd.xlane.f32.xlu0 %v1161
        %v1163 = vpop.xlane.xlu0 %1162
        %v1164 = vsel %vm950, %v1094, 0.0
        %1165 = vadd.xlane.f32.xlu0 %v1164
        %v1166 = vpop.xlane.xlu0 %1165
        %v1167 = vsel %vm950, %v1096, 0.0
        %1168 = vadd.xlane.f32.xlu0 %v1167
        %v1169 = vpop.xlane.xlu0 %1168
        %v1170 = vsel %vm950, %v1098, 0.0
        %1171 = vadd.xlane.f32.xlu0 %v1170
        %v1172 = vpop.xlane.xlu0 %1171
        %v1173 = vsel %vm950, %v1100, 0.0
        %1174 = vadd.xlane.f32.xlu0 %v1173
        %v1175 = vpop.xlane.xlu0 %1174
        %v1176 = vsel %vm950, %v1102, 0.0
        %1177 = vadd.xlane.f32.xlu0 %v1176
        %v1178 = vpop.xlane.xlu0 %1177
        %v1179 = vsel %vm950, %v1104, 0.0
        %1180 = vadd.xlane.f32.xlu0 %v1179
        %v1181 = vpop.xlane.xlu0 %1180
        %v1182 = vsel %vm950, %v1106, 0.0
        %1183 = vadd.xlane.f32.xlu0 %v1182
        %v1184 = vpop.xlane.xlu0 %1183
        %v1185 = vsel %vm950, %v1108, 0.0
        %1186 = vadd.xlane.f32.xlu0 %v1185
        %v1187 = vpop.xlane.xlu0 %1186
        %v1188 = vsel %vm950, %v1110, 0.0
        %1189 = vadd.xlane.f32.xlu0 %v1188
        %v1190 = vpop.xlane.xlu0 %1189
        %v1191 = vsel %vm950, %v1112, 0.0
        %1192 = vadd.xlane.f32.xlu0 %v1191
        %v1193 = vpop.xlane.xlu0 %1192
        %v1194 = vsel %vm950, %v1114, 0.0
        %1195 = vadd.xlane.f32.xlu0 %v1194
        %v1196 = vpop.xlane.xlu0 %1195
        %v1197 = vsel %vm950, %v1116, 0.0
        %1198 = vadd.xlane.f32.xlu0 %v1197
        %v1199 = vpop.xlane.xlu0 %1198
        %v1200 = vsel %vm950, %v1118, 0.0
        %1201 = vadd.xlane.f32.xlu0 %v1200
        %v1202 = vpop.xlane.xlu0 %1201
        %v1203 = vsel %vm950, %v1120, 0.0
        %1204 = vadd.xlane.f32.xlu0 %v1203
        %v1205 = vpop.xlane.xlu0 %1204
        %v1206 = vsel %vm950, %v1122, 0.0
        %1207 = vadd.xlane.f32.xlu0 %v1206
        %v1208 = vpop.xlane.xlu0 %1207
        %v1209 = vsel %vm950, %v1124, 0.0
        %1210 = vadd.xlane.f32.xlu0 %v1209
        %v1211 = vpop.xlane.xlu0 %1210
        %v1212 = vsel %vm950, %v1126, 0.0
        %1213 = vadd.xlane.f32.xlu0 %v1212
        %v1214 = vpop.xlane.xlu0 %1213
        %v1215 = vsel %vm950, %v1128, 0.0
        %1216 = vadd.xlane.f32.xlu0 %v1215
        %v1217 = vpop.xlane.xlu0 %1216
        %v1218 = vsel %vm950, %v1130, 0.0
        %1219 = vadd.xlane.f32.xlu0 %v1218
        %v1220 = vpop.xlane.xlu0 %1219
        %v1221 = vsel %vm950, %v1132, 0.0
        %1222 = vadd.xlane.f32.xlu0 %v1221
        %v1223 = vpop.xlane.xlu0 %1222
        %v1224 = vsel %vm950, %v1134, 0.0
        %1225 = vadd.xlane.f32.xlu0 %v1224
        %v1226 = vpop.xlane.xlu0 %1225
        %v1227 = vsel %vm950, %v1136, 0.0
        %1228 = vadd.xlane.f32.xlu0 %v1227
        %v1229 = vpop.xlane.xlu0 %1228
        %v1230 = vsel %vm950, %v1138, 0.0
        %1231 = vadd.xlane.f32.xlu0 %v1230
        %v1232 = vpop.xlane.xlu0 %1231
        %v1233 = vsel %vm950, %v1140, 0.0
        %1234 = vadd.xlane.f32.xlu0 %v1233
        %v1235 = vpop.xlane.xlu0 %1234
        %v1236 = vsel %vm950, %v1142, 0.0
        %1237 = vadd.xlane.f32.xlu0 %v1236
        %v1238 = vpop.xlane.xlu0 %1237
        %v1239 = vrcp.pop %v1145
        %v1240 = vrcp.pop %v1148
        %v1241 = vrcp.pop %v1151
        %v1242 = vrcp.pop %v1154
        %v1243 = vrcp.pop %v1157
        %v1244 = vrcp.pop %v1160
        %v1245 = vrcp.pop %v1163
        %v1246 = vrcp.pop %v1166
        %v1247 = vrcp.pop %v1169
        %v1248 = vrcp.pop %v1172
        %v1249 = vrcp.pop %v1175
        %v1250 = vrcp.pop %v1178
        %v1251 = vrcp.pop %v1181
        %v1252 = vrcp.pop %v1184
        %v1253 = vrcp.pop %v1187
        %v1254 = vrcp.pop %v1190
        %v1255 = vrcp.pop %v1193
        %v1256 = vrcp.pop %v1196
        %v1257 = vrcp.pop %v1199
        %v1258 = vrcp.pop %v1202
        %v1259 = vrcp.pop %v1205
        %v1260 = vrcp.pop %v1208
        %v1261 = vrcp.pop %v1211
        %v1262 = vrcp.pop %v1214
        %v1263 = vrcp.pop %v1217
        %v1264 = vrcp.pop %v1220
        %v1265 = vrcp.pop %v1223
        %v1266 = vrcp.pop %v1226
        %v1267 = vrcp.pop %v1229
        %v1268 = vrcp.pop %v1232
        %v1269 = vrcp.pop %v1235
        %v1270 = vrcp.pop %v1238
        %v1271 = vmul.f32 %v1080, %v1239
        %v1272 = vmul.f32 %v1082, %v1240
        %v1273 = vmul.f32 %v1084, %v1241
        %v1274 = vmul.f32 %v1086, %v1242
        %v1275 = vmul.f32 %v1088, %v1243
        %v1276 = vmul.f32 %v1090, %v1244
        %v1277 = vmul.f32 %v1092, %v1245
        %v1278 = vmul.f32 %v1094, %v1246
        %v1279 = vmul.f32 %v1096, %v1247
        %v1280 = vmul.f32 %v1098, %v1248
        %v1281 = vmul.f32 %v1100, %v1249
        %v1282 = vmul.f32 %v1102, %v1250
        %v1283 = vmul.f32 %v1104, %v1251
        %v1284 = vmul.f32 %v1106, %v1252
        %v1285 = vmul.f32 %v1108, %v1253
        %v1286 = vmul.f32 %v1110, %v1254
        %v1287 = vmul.f32 %v1112, %v1255
        %v1288 = vmul.f32 %v1114, %v1256
        %v1289 = vmul.f32 %v1116, %v1257
        %v1290 = vmul.f32 %v1118, %v1258
        %v1291 = vmul.f32 %v1120, %v1259
        %v1292 = vmul.f32 %v1122, %v1260
        %v1293 = vmul.f32 %v1124, %v1261
        %v1294 = vmul.f32 %v1126, %v1262
        %v1295 = vmul.f32 %v1128, %v1263
        %v1296 = vmul.f32 %v1130, %v1264
        %v1297 = vmul.f32 %v1132, %v1265
        %v1298 = vmul.f32 %v1134, %v1266
        %v1299 = vmul.f32 %v1136, %v1267
        %v1300 = vmul.f32 %v1138, %v1268
        %v1301 = vmul.f32 %v1140, %v1269
        %v1302 = vmul.f32 %v1142, %v1270
        %v1304 = vsel %vm950, %v1271, 0
        %v1307 = vsel %vm950, %v1272, 0
        %v1310 = vsel %vm950, %v1273, 0
        %v1313 = vsel %vm950, %v1274, 0
        %v1316 = vsel %vm950, %v1275, 0
        %v1319 = vsel %vm950, %v1276, 0
        %v1322 = vsel %vm950, %v1277, 0
        %v1325 = vsel %vm950, %v1278, 0
        %1327 = vmatprep.subr.mxu0 0.0
        %1328 = vmatpush1.msra.mxu0 0.0
        %1329 = vmatprep.subr.mxu0 0.0
        %1330 = vmatpush1.msra.mxu0 0.0
        %1331 = vmatprep.subr.mxu0 0.0
        %1332 = vmatpush1.msra.mxu0 0.0
        %1333 = vmatprep.subr.mxu0 0.0
        %1334 = vmatpush1.msra.mxu0 0.0
        %1335 = vmatprep.subr.mxu0 0.0
        %1336 = vmatpush1.msra.mxu0 0.0
        %1337 = vmatprep.subr.mxu0 0.0
        %1338 = vmatpush1.msra.mxu0 0.0
        %1339 = vmatprep.subr.mxu0 0.0
        %1340 = vmatpush1.msra.mxu0 0.0
        %1341 = vmatprep.subr.mxu0 0.0
        %1342 = vmatpush1.msra.mxu0 0.0
        %1343 = vmatprep.subr.mxu0 0.0
        %1344 = vmatpush1.msra.mxu0 %v280
        %1345 = vmatprep.subr.mxu0 0.0
        %1346 = vmatpush1.msra.mxu0 %v279
        %1347 = vmatprep.subr.mxu0 0.0
        %1348 = vmatpush1.msra.mxu0 %v278
        %1349 = vmatprep.subr.mxu0 0.0
        %1350 = vmatpush1.msra.mxu0 %v277
        %1351 = vmatprep.subr.mxu0 0.0
        %1352 = vmatpush1.msra.mxu0 %v276
        %1353 = vmatprep.subr.mxu0 0.0
        %1354 = vmatpush1.msra.mxu0 %v275
        %1355 = vmatprep.subr.mxu0 0.0
        %1356 = vmatpush1.msra.mxu0 %v274
        %1357 = vmatprep.subr.mxu0 0.0
        %1358 = vmatpush1.msra.mxu0 %v273
        %1359 = vmatprep.subr.mxu0 0.0
        %1360 = vmatpush2.msra.mxu0 0.0
        %1361 = vmatprep.subr.mxu0 0.0
        %1362 = vmatpush2.msra.mxu0 0.0
        %1363 = vmatprep.subr.mxu0 0.0
        %1364 = vmatpush2.msra.mxu0 0.0
        %1365 = vmatprep.subr.mxu0 0.0
        %1366 = vmatpush2.msra.mxu0 0.0
        %1367 = vmatprep.subr.mxu0 0.0
        %1368 = vmatpush2.msra.mxu0 0.0
        %1369 = vmatprep.subr.mxu0 0.0
        %1370 = vmatpush2.msra.mxu0 0.0
        %1371 = vmatprep.subr.mxu0 0.0
        %1372 = vmatpush2.msra.mxu0 0.0
        %1373 = vmatprep.subr.mxu0 0.0
        %1374 = vmatpush2.msra.mxu0 0.0
        %1375 = vmatprep.subr.mxu0 0.0
        %1376 = vmatpush2.msra.mxu0 0.0
        %1377 = vmatprep.subr.mxu0 0.0
        %1378 = vmatpush2.msra.mxu0 0.0
        %1379 = vmatprep.subr.mxu0 0.0
        %1380 = vmatpush2.msra.mxu0 0.0
        %1381 = vmatprep.subr.mxu0 0.0
        %1382 = vmatpush2.msra.mxu0 0.0
        %1383 = vmatprep.subr.mxu0 0.0
        %1384 = vmatpush2.msra.mxu0 0.0
        %1385 = vmatprep.subr.mxu0 0.0
        %1386 = vmatpush2.msra.mxu0 0.0
        %1387 = vmatprep.subr.mxu0 0.0
        %1388 = vmatpush2.msra.mxu0 0.0
        %1389 = vmatprep.subr.mxu0 0.0
        %1390 = vmatpush2.msra.mxu0 0.0
        %1391 = vmatprep.mubr.f32.mxu0 0.0
        %1392 = vmatmul.mubr.f32.gmra.mxu0 %v1304
        %v1393 = vpop.f32.mrf.mxu0
        %v1394 = vadd.f32 0.0, %v1393
        %v1395 = vpop.f32.mrf.mxu0
        %1396 = vmatprep.mubr.f32.mxu0 0.0
        %1397 = vmatmul.mubr.f32.gmra.mxu0 %v1307
        %v1398 = vpop.f32.mrf.mxu0
        %v1399 = vadd.f32 0.0, %v1398
        %v1400 = vpop.f32.mrf.mxu0
        %1401 = vmatprep.mubr.f32.mxu0 0.0
        %1402 = vmatmul.mubr.f32.gmra.mxu0 %v1310
        %v1403 = vpop.f32.mrf.mxu0
        %v1404 = vadd.f32 0.0, %v1403
        %v1405 = vpop.f32.mrf.mxu0
        %1406 = vmatprep.mubr.f32.mxu0 0.0
        %1407 = vmatmul.mubr.f32.gmra.mxu0 %v1313
        %v1408 = vpop.f32.mrf.mxu0
        %v1409 = vadd.f32 0.0, %v1408
        %v1410 = vpop.f32.mrf.mxu0
        %1411 = vmatprep.mubr.f32.mxu0 0.0
        %1412 = vmatmul.mubr.f32.gmra.mxu0 %v1316
        %v1413 = vpop.f32.mrf.mxu0
        %v1414 = vadd.f32 0.0, %v1413
        %v1415 = vpop.f32.mrf.mxu0
        %1416 = vmatprep.mubr.f32.mxu0 0.0
        %1417 = vmatmul.mubr.f32.gmra.mxu0 %v1319
        %v1418 = vpop.f32.mrf.mxu0
        %v1419 = vadd.f32 0.0, %v1418
        %v1420 = vpop.f32.mrf.mxu0
        %1421 = vmatprep.mubr.f32.mxu0 0.0
        %1422 = vmatmul.mubr.f32.gmra.mxu0 %v1322
        %v1423 = vpop.f32.mrf.mxu0
        %v1424 = vadd.f32 0.0, %v1423
        %v1425 = vpop.f32.mrf.mxu0
        %1426 = vmatprep.mubr.f32.mxu0 0.0
        %1427 = vmatmul.mubr.f32.gmra.mxu0 %v1325
        %v1428 = vpop.f32.mrf.mxu0
        %v1429 = vadd.f32 0.0, %v1428
        %v1430 = vpop.f32.mrf.mxu0
        %1431 = vdwg.mxu0
        %v1433 = vsel %vm950, %v1279, 0
        %v1436 = vsel %vm950, %v1280, 0
        %v1439 = vsel %vm950, %v1281, 0
        %v1442 = vsel %vm950, %v1282, 0
        %v1445 = vsel %vm950, %v1283, 0
        %v1448 = vsel %vm950, %v1284, 0
        %v1451 = vsel %vm950, %v1285, 0
        %v1454 = vsel %vm950, %v1286, 0
        %1456 = vmatprep.subr.mxu0 0.0
        %1457 = vmatpush1.msra.mxu0 0.0
        %1458 = vmatprep.subr.mxu0 0.0
        %1459 = vmatpush1.msra.mxu0 0.0
        %1460 = vmatprep.subr.mxu0 0.0
        %1461 = vmatpush1.msra.mxu0 0.0
        %1462 = vmatprep.subr.mxu0 0.0
        %1463 = vmatpush1.msra.mxu0 0.0
        %1464 = vmatprep.subr.mxu0 0.0
        %1465 = vmatpush1.msra.mxu0 0.0
        %1466 = vmatprep.subr.mxu0 0.0
        %1467 = vmatpush1.msra.mxu0 0.0
        %1468 = vmatprep.subr.mxu0 0.0
        %1469 = vmatpush1.msra.mxu0 0.0
        %1470 = vmatprep.subr.mxu0 0.0
        %1471 = vmatpush1.msra.mxu0 0.0
        %1472 = vmatprep.subr.mxu0 0.0
        %1473 = vmatpush1.msra.mxu0 %v288
        %1474 = vmatprep.subr.mxu0 0.0
        %1475 = vmatpush1.msra.mxu0 %v287
        %1476 = vmatprep.subr.mxu0 0.0
        %1477 = vmatpush1.msra.mxu0 %v286
        %1478 = vmatprep.subr.mxu0 0.0
        %1479 = vmatpush1.msra.mxu0 %v285
        %1480 = vmatprep.subr.mxu0 0.0
        %1481 = vmatpush1.msra.mxu0 %v284
        %1482 = vmatprep.subr.mxu0 0.0
        %1483 = vmatpush1.msra.mxu0 %v283
        %1484 = vmatprep.subr.mxu0 0.0
        %1485 = vmatpush1.msra.mxu0 %v282
        %1486 = vmatprep.subr.mxu0 0.0
        %1487 = vmatpush1.msra.mxu0 %v281
        %1488 = vmatprep.subr.mxu0 0.0
        %1489 = vmatpush2.msra.mxu0 0.0
        %1490 = vmatprep.subr.mxu0 0.0
        %1491 = vmatpush2.msra.mxu0 0.0
        %1492 = vmatprep.subr.mxu0 0.0
        %1493 = vmatpush2.msra.mxu0 0.0
        %1494 = vmatprep.subr.mxu0 0.0
        %1495 = vmatpush2.msra.mxu0 0.0
        %1496 = vmatprep.subr.mxu0 0.0
        %1497 = vmatpush2.msra.mxu0 0.0
        %1498 = vmatprep.subr.mxu0 0.0
        %1499 = vmatpush2.msra.mxu0 0.0
        %1500 = vmatprep.subr.mxu0 0.0
        %1501 = vmatpush2.msra.mxu0 0.0
        %1502 = vmatprep.subr.mxu0 0.0
        %1503 = vmatpush2.msra.mxu0 0.0
        %1504 = vmatprep.subr.mxu0 0.0
        %1505 = vmatpush2.msra.mxu0 0.0
        %1506 = vmatprep.subr.mxu0 0.0
        %1507 = vmatpush2.msra.mxu0 0.0
        %1508 = vmatprep.subr.mxu0 0.0
        %1509 = vmatpush2.msra.mxu0 0.0
        %1510 = vmatprep.subr.mxu0 0.0
        %1511 = vmatpush2.msra.mxu0 0.0
        %1512 = vmatprep.subr.mxu0 0.0
        %1513 = vmatpush2.msra.mxu0 0.0
        %1514 = vmatprep.subr.mxu0 0.0
        %1515 = vmatpush2.msra.mxu0 0.0
        %1516 = vmatprep.subr.mxu0 0.0
        %1517 = vmatpush2.msra.mxu0 0.0
        %1518 = vmatprep.subr.mxu0 0.0
        %1519 = vmatpush2.msra.mxu0 0.0
        %1520 = vmatprep.mubr.f32.mxu0 0.0
        %1521 = vmatmul.mubr.f32.gmra.mxu0 %v1433
        %v1522 = vpop.f32.mrf.mxu0
        %v1523 = vadd.f32 0.0, %v1522
        %v1524 = vpop.f32.mrf.mxu0
        %1525 = vmatprep.mubr.f32.mxu0 0.0
        %1526 = vmatmul.mubr.f32.gmra.mxu0 %v1436
        %v1527 = vpop.f32.mrf.mxu0
        %v1528 = vadd.f32 0.0, %v1527
        %v1529 = vpop.f32.mrf.mxu0
        %1530 = vmatprep.mubr.f32.mxu0 0.0
        %1531 = vmatmul.mubr.f32.gmra.mxu0 %v1439
        %v1532 = vpop.f32.mrf.mxu0
        %v1533 = vadd.f32 0.0, %v1532
        %v1534 = vpop.f32.mrf.mxu0
        %1535 = vmatprep.mubr.f32.mxu0 0.0
        %1536 = vmatmul.mubr.f32.gmra.mxu0 %v1442
        %v1537 = vpop.f32.mrf.mxu0
        %v1538 = vadd.f32 0.0, %v1537
        %v1539 = vpop.f32.mrf.mxu0
        %1540 = vmatprep.mubr.f32.mxu0 0.0
        %1541 = vmatmul.mubr.f32.gmra.mxu0 %v1445
        %v1542 = vpop.f32.mrf.mxu0
        %v1543 = vadd.f32 0.0, %v1542
        %v1544 = vpop.f32.mrf.mxu0
        %1545 = vmatprep.mubr.f32.mxu0 0.0
        %1546 = vmatmul.mubr.f32.gmra.mxu0 %v1448
        %v1547 = vpop.f32.mrf.mxu0
        %v1548 = vadd.f32 0.0, %v1547
        %v1549 = vpop.f32.mrf.mxu0
        %1550 = vmatprep.mubr.f32.mxu0 0.0
        %1551 = vmatmul.mubr.f32.gmra.mxu0 %v1451
        %v1552 = vpop.f32.mrf.mxu0
        %v1553 = vadd.f32 0.0, %v1552
        %v1554 = vpop.f32.mrf.mxu0
        %1555 = vmatprep.mubr.f32.mxu0 0.0
        %1556 = vmatmul.mubr.f32.gmra.mxu0 %v1454
        %v1557 = vpop.f32.mrf.mxu0
        %v1558 = vadd.f32 0.0, %v1557
        %v1559 = vpop.f32.mrf.mxu0
        %1560 = vdwg.mxu0
        %v1562 = vsel %vm950, %v1287, 0
        %v1565 = vsel %vm950, %v1288, 0
        %v1568 = vsel %vm950, %v1289, 0
        %v1571 = vsel %vm950, %v1290, 0
        %v1574 = vsel %vm950, %v1291, 0
        %v1577 = vsel %vm950, %v1292, 0
        %v1580 = vsel %vm950, %v1293, 0
        %v1583 = vsel %vm950, %v1294, 0
        %1585 = vmatprep.subr.mxu0 0.0
        %1586 = vmatpush1.msra.mxu0 0.0
        %1587 = vmatprep.subr.mxu0 0.0
        %1588 = vmatpush1.msra.mxu0 0.0
        %1589 = vmatprep.subr.mxu0 0.0
        %1590 = vmatpush1.msra.mxu0 0.0
        %1591 = vmatprep.subr.mxu0 0.0
        %1592 = vmatpush1.msra.mxu0 0.0
        %1593 = vmatprep.subr.mxu0 0.0
        %1594 = vmatpush1.msra.mxu0 0.0
        %1595 = vmatprep.subr.mxu0 0.0
        %1596 = vmatpush1.msra.mxu0 0.0
        %1597 = vmatprep.subr.mxu0 0.0
        %1598 = vmatpush1.msra.mxu0 0.0
        %1599 = vmatprep.subr.mxu0 0.0
        %1600 = vmatpush1.msra.mxu0 0.0
        %1601 = vmatprep.subr.mxu0 0.0
        %1602 = vmatpush1.msra.mxu0 %v296
        %1603 = vmatprep.subr.mxu0 0.0
        %1604 = vmatpush1.msra.mxu0 %v295
        %1605 = vmatprep.subr.mxu0 0.0
        %1606 = vmatpush1.msra.mxu0 %v294
        %1607 = vmatprep.subr.mxu0 0.0
        %1608 = vmatpush1.msra.mxu0 %v293
        %1609 = vmatprep.subr.mxu0 0.0
        %1610 = vmatpush1.msra.mxu0 %v292
        %1611 = vmatprep.subr.mxu0 0.0
        %1612 = vmatpush1.msra.mxu0 %v291
        %1613 = vmatprep.subr.mxu0 0.0
        %1614 = vmatpush1.msra.mxu0 %v290
        %1615 = vmatprep.subr.mxu0 0.0
        %1616 = vmatpush1.msra.mxu0 %v289
        %1617 = vmatprep.subr.mxu0 0.0
        %1618 = vmatpush2.msra.mxu0 0.0
        %1619 = vmatprep.subr.mxu0 0.0
        %1620 = vmatpush2.msra.mxu0 0.0
        %1621 = vmatprep.subr.mxu0 0.0
        %1622 = vmatpush2.msra.mxu0 0.0
        %1623 = vmatprep.subr.mxu0 0.0
        %1624 = vmatpush2.msra.mxu0 0.0
        %1625 = vmatprep.subr.mxu0 0.0
        %1626 = vmatpush2.msra.mxu0 0.0
        %1627 = vmatprep.subr.mxu0 0.0
        %1628 = vmatpush2.msra.mxu0 0.0
        %1629 = vmatprep.subr.mxu0 0.0
        %1630 = vmatpush2.msra.mxu0 0.0
        %1631 = vmatprep.subr.mxu0 0.0
        %1632 = vmatpush2.msra.mxu0 0.0
        %1633 = vmatprep.subr.mxu0 0.0
        %1634 = vmatpush2.msra.mxu0 0.0
        %1635 = vmatprep.subr.mxu0 0.0
        %1636 = vmatpush2.msra.mxu0 0.0
        %1637 = vmatprep.subr.mxu0 0.0
        %1638 = vmatpush2.msra.mxu0 0.0
        %1639 = vmatprep.subr.mxu0 0.0
        %1640 = vmatpush2.msra.mxu0 0.0
        %1641 = vmatprep.subr.mxu0 0.0
        %1642 = vmatpush2.msra.mxu0 0.0
        %1643 = vmatprep.subr.mxu0 0.0
        %1644 = vmatpush2.msra.mxu0 0.0
        %1645 = vmatprep.subr.mxu0 0.0
        %1646 = vmatpush2.msra.mxu0 0.0
        %1647 = vmatprep.subr.mxu0 0.0
        %1648 = vmatpush2.msra.mxu0 0.0
        %1649 = vmatprep.mubr.f32.mxu0 0.0
        %1650 = vmatmul.mubr.f32.gmra.mxu0 %v1562
        %v1651 = vpop.f32.mrf.mxu0
        %v1652 = vadd.f32 0.0, %v1651
        %v1653 = vpop.f32.mrf.mxu0
        %1654 = vmatprep.mubr.f32.mxu0 0.0
        %1655 = vmatmul.mubr.f32.gmra.mxu0 %v1565
        %v1656 = vpop.f32.mrf.mxu0
        %v1657 = vadd.f32 0.0, %v1656
        %v1658 = vpop.f32.mrf.mxu0
        %1659 = vmatprep.mubr.f32.mxu0 0.0
        %1660 = vmatmul.mubr.f32.gmra.mxu0 %v1568
        %v1661 = vpop.f32.mrf.mxu0
        %v1662 = vadd.f32 0.0, %v1661
        %v1663 = vpop.f32.mrf.mxu0
        %1664 = vmatprep.mubr.f32.mxu0 0.0
        %1665 = vmatmul.mubr.f32.gmra.mxu0 %v1571
        %v1666 = vpop.f32.mrf.mxu0
        %v1667 = vadd.f32 0.0, %v1666
        %v1668 = vpop.f32.mrf.mxu0
        %1669 = vmatprep.mubr.f32.mxu0 0.0
        %1670 = vmatmul.mubr.f32.gmra.mxu0 %v1574
        %v1671 = vpop.f32.mrf.mxu0
        %v1672 = vadd.f32 0.0, %v1671
        %v1673 = vpop.f32.mrf.mxu0
        %1674 = vmatprep.mubr.f32.mxu0 0.0
        %1675 = vmatmul.mubr.f32.gmra.mxu0 %v1577
        %v1676 = vpop.f32.mrf.mxu0
        %v1677 = vadd.f32 0.0, %v1676
        %v1678 = vpop.f32.mrf.mxu0
        %1679 = vmatprep.mubr.f32.mxu0 0.0
        %1680 = vmatmul.mubr.f32.gmra.mxu0 %v1580
        %v1681 = vpop.f32.mrf.mxu0
        %v1682 = vadd.f32 0.0, %v1681
        %v1683 = vpop.f32.mrf.mxu0
        %1684 = vmatprep.mubr.f32.mxu0 0.0
        %1685 = vmatmul.mubr.f32.gmra.mxu0 %v1583
        %v1686 = vpop.f32.mrf.mxu0
        %v1687 = vadd.f32 0.0, %v1686
        %v1688 = vpop.f32.mrf.mxu0
        %1689 = vdwg.mxu0
        %v1691 = vsel %vm950, %v1295, 0
        %v1694 = vsel %vm950, %v1296, 0
        %v1697 = vsel %vm950, %v1297, 0
        %v1700 = vsel %vm950, %v1298, 0
        %v1703 = vsel %vm950, %v1299, 0
        %v1706 = vsel %vm950, %v1300, 0
        %v1709 = vsel %vm950, %v1301, 0
        %v1712 = vsel %vm950, %v1302, 0
        %1714 = vmatprep.subr.mxu0 0.0
        %1715 = vmatpush1.msra.mxu0 0.0
        %1716 = vmatprep.subr.mxu0 0.0
        %1717 = vmatpush1.msra.mxu0 0.0
        %1718 = vmatprep.subr.mxu0 0.0
        %1719 = vmatpush1.msra.mxu0 0.0
        %1720 = vmatprep.subr.mxu0 0.0
        %1721 = vmatpush1.msra.mxu0 0.0
        %1722 = vmatprep.subr.mxu0 0.0
        %1723 = vmatpush1.msra.mxu0 0.0
        %1724 = vmatprep.subr.mxu0 0.0
        %1725 = vmatpush1.msra.mxu0 0.0
        %1726 = vmatprep.subr.mxu0 0.0
        %1727 = vmatpush1.msra.mxu0 0.0
        %1728 = vmatprep.subr.mxu0 0.0
        %1729 = vmatpush1.msra.mxu0 0.0
        %1730 = vmatprep.subr.mxu0 0.0
        %1731 = vmatpush1.msra.mxu0 %v304
        %1732 = vmatprep.subr.mxu0 0.0
        %1733 = vmatpush1.msra.mxu0 %v303
        %1734 = vmatprep.subr.mxu0 0.0
        %1735 = vmatpush1.msra.mxu0 %v302
        %1736 = vmatprep.subr.mxu0 0.0
        %1737 = vmatpush1.msra.mxu0 %v301
        %1738 = vmatprep.subr.mxu0 0.0
        %1739 = vmatpush1.msra.mxu0 %v300
        %1740 = vmatprep.subr.mxu0 0.0
        %1741 = vmatpush1.msra.mxu0 %v299
        %1742 = vmatprep.subr.mxu0 0.0
        %1743 = vmatpush1.msra.mxu0 %v298
        %1744 = vmatprep.subr.mxu0 0.0
        %1745 = vmatpush1.msra.mxu0 %v297
        %1746 = vmatprep.subr.mxu0 0.0
        %1747 = vmatpush2.msra.mxu0 0.0
        %1748 = vmatprep.subr.mxu0 0.0
        %1749 = vmatpush2.msra.mxu0 0.0
        %1750 = vmatprep.subr.mxu0 0.0
        %1751 = vmatpush2.msra.mxu0 0.0
        %1752 = vmatprep.subr.mxu0 0.0
        %1753 = vmatpush2.msra.mxu0 0.0
        %1754 = vmatprep.subr.mxu0 0.0
        %1755 = vmatpush2.msra.mxu0 0.0
        %1756 = vmatprep.subr.mxu0 0.0
        %1757 = vmatpush2.msra.mxu0 0.0
        %1758 = vmatprep.subr.mxu0 0.0
        %1759 = vmatpush2.msra.mxu0 0.0
        %1760 = vmatprep.subr.mxu0 0.0
        %1761 = vmatpush2.msra.mxu0 0.0
        %1762 = vmatprep.subr.mxu0 0.0
        %1763 = vmatpush2.msra.mxu0 0.0
        %1764 = vmatprep.subr.mxu0 0.0
        %1765 = vmatpush2.msra.mxu0 0.0
        %1766 = vmatprep.subr.mxu0 0.0
        %1767 = vmatpush2.msra.mxu0 0.0
        %1768 = vmatprep.subr.mxu0 0.0
        %1769 = vmatpush2.msra.mxu0 0.0
        %1770 = vmatprep.subr.mxu0 0.0
        %1771 = vmatpush2.msra.mxu0 0.0
        %1772 = vmatprep.subr.mxu0 0.0
        %1773 = vmatpush2.msra.mxu0 0.0
        %1774 = vmatprep.subr.mxu0 0.0
        %1775 = vmatpush2.msra.mxu0 0.0
        %1776 = vmatprep.subr.mxu0 0.0
        %1777 = vmatpush2.msra.mxu0 0.0
        %1778 = vmatprep.mubr.f32.mxu0 0.0
        %1779 = vmatmul.mubr.f32.gmra.mxu0 %v1691
        %v1780 = vpop.f32.mrf.mxu0
        %v1781 = vadd.f32 0.0, %v1780
        %v1782 = vpop.f32.mrf.mxu0
        %1783 = vmatprep.mubr.f32.mxu0 0.0
        %1784 = vmatmul.mubr.f32.gmra.mxu0 %v1694
        %v1785 = vpop.f32.mrf.mxu0
        %v1786 = vadd.f32 0.0, %v1785
        %v1787 = vpop.f32.mrf.mxu0
        %1788 = vmatprep.mubr.f32.mxu0 0.0
        %1789 = vmatmul.mubr.f32.gmra.mxu0 %v1697
        %v1790 = vpop.f32.mrf.mxu0
        %v1791 = vadd.f32 0.0, %v1790
        %v1792 = vpop.f32.mrf.mxu0
        %1793 = vmatprep.mubr.f32.mxu0 0.0
        %1794 = vmatmul.mubr.f32.gmra.mxu0 %v1700
        %v1795 = vpop.f32.mrf.mxu0
        %v1796 = vadd.f32 0.0, %v1795
        %v1797 = vpop.f32.mrf.mxu0
        %1798 = vmatprep.mubr.f32.mxu0 0.0
        %1799 = vmatmul.mubr.f32.gmra.mxu0 %v1703
        %v1800 = vpop.f32.mrf.mxu0
        %v1801 = vadd.f32 0.0, %v1800
        %v1802 = vpop.f32.mrf.mxu0
        %1803 = vmatprep.mubr.f32.mxu0 0.0
        %1804 = vmatmul.mubr.f32.gmra.mxu0 %v1706
        %v1805 = vpop.f32.mrf.mxu0
        %v1806 = vadd.f32 0.0, %v1805
        %v1807 = vpop.f32.mrf.mxu0
        %1808 = vmatprep.mubr.f32.mxu0 0.0
        %1809 = vmatmul.mubr.f32.gmra.mxu0 %v1709
        %v1810 = vpop.f32.mrf.mxu0
        %v1811 = vadd.f32 0.0, %v1810
        %v1812 = vpop.f32.mrf.mxu0
        %1813 = vmatprep.mubr.f32.mxu0 0.0
        %1814 = vmatmul.mubr.f32.gmra.mxu0 %v1712
        %v1815 = vpop.f32.mrf.mxu0
        %v1816 = vadd.f32 0.0, %v1815
        %v1817 = vpop.f32.mrf.mxu0
        %1818 = vdwg.mxu0
        %1819 = vst.msk [vmem:[%s208] sm:$0xff] %vm305, %v1394
        %1820 = vst.msk [vmem:[%s208 + $0x8] sm:$0xff] %vm305, %v1399
        %1821 = vst.msk [vmem:[%s208 + $0x10] sm:$0xff] %vm305, %v1404
        %1822 = vst.msk [vmem:[%s208 + $0x18] sm:$0xff] %vm305, %v1409
        %1823 = vst.msk [vmem:[%s208 + $0x20] sm:$0xff] %vm305, %v1414
        %1824 = vst.msk [vmem:[%s208 + $0x28] sm:$0xff] %vm305, %v1419
        %1825 = vst.msk [vmem:[%s208 + $0x30] sm:$0xff] %vm305, %v1424
        %1826 = vst.msk [vmem:[%s208 + $0x38] sm:$0xff] %vm305, %v1429
        %1827 = vst.msk [vmem:[%s208 + $0x40] sm:$0xff] %vm305, %v1523
        %1828 = vst.msk [vmem:[%s208 + $0x48] sm:$0xff] %vm305, %v1528
        %1829 = vst.msk [vmem:[%s208 + $0x50] sm:$0xff] %vm305, %v1533
        %1830 = vst.msk [vmem:[%s208 + $0x58] sm:$0xff] %vm305, %v1538
        %1831 = vst.msk [vmem:[%s208 + $0x60] sm:$0xff] %vm305, %v1543
        %1832 = vst.msk [vmem:[%s208 + $0x68] sm:$0xff] %vm305, %v1548
        %1833 = vst.msk [vmem:[%s208 + $0x70] sm:$0xff] %vm305, %v1553
        %1834 = vst.msk [vmem:[%s208 + $0x78] sm:$0xff] %vm305, %v1558
        %1835 = vst.msk [vmem:[%s208 + $0x80] sm:$0xff] %vm305, %v1652
        %1836 = vst.msk [vmem:[%s208 + $0x88] sm:$0xff] %vm305, %v1657
        %1837 = vst.msk [vmem:[%s208 + $0x90] sm:$0xff] %vm305, %v1662
        %1838 = vst.msk [vmem:[%s208 + $0x98] sm:$0xff] %vm305, %v1667
        %1839 = vst.msk [vmem:[%s208 + $0xa0] sm:$0xff] %vm305, %v1672
        %1840 = vst.msk [vmem:[%s208 + $0xa8] sm:$0xff] %vm305, %v1677
        %1841 = vst.msk [vmem:[%s208 + $0xb0] sm:$0xff] %vm305, %v1682
        %1842 = vst.msk [vmem:[%s208 + $0xb8] sm:$0xff] %vm305, %v1687
        %1843 = vst.msk [vmem:[%s208 + $0xc0] sm:$0xff] %vm305, %v1781
        %1844 = vst.msk [vmem:[%s208 + $0xc8] sm:$0xff] %vm305, %v1786
        %1845 = vst.msk [vmem:[%s208 + $0xd0] sm:$0xff] %vm305, %v1791
        %1846 = vst.msk [vmem:[%s208 + $0xd8] sm:$0xff] %vm305, %v1796
        %1847 = vst.msk [vmem:[%s208 + $0xe0] sm:$0xff] %vm305, %v1801
        %1848 = vst.msk [vmem:[%s208 + $0xe8] sm:$0xff] %vm305, %v1806
        %1849 = vst.msk [vmem:[%s208 + $0xf0] sm:$0xff] %vm305, %v1811
        %1850 = vst.msk [vmem:[%s208 + $0xf8] sm:$0xff] %vm305, %v1816
        %1851 = vst.msk [vmem:[%s198] sm:$0xff] %vm950, %v1271
        %1852 = vst.msk [vmem:[%s198 + $0x8] sm:$0xff] %vm950, %v1272
        %1853 = vst.msk [vmem:[%s198 + $0x10] sm:$0xff] %vm950, %v1273
        %1854 = vst.msk [vmem:[%s198 + $0x18] sm:$0xff] %vm950, %v1274
        %1855 = vst.msk [vmem:[%s198 + $0x20] sm:$0xff] %vm950, %v1275
        %1856 = vst.msk [vmem:[%s198 + $0x28] sm:$0xff] %vm950, %v1276
        %1857 = vst.msk [vmem:[%s198 + $0x30] sm:$0xff] %vm950, %v1277
        %1858 = vst.msk [vmem:[%s198 + $0x38] sm:$0xff] %vm950, %v1278
        %1859 = vst.msk [vmem:[%s198 + $0x40] sm:$0xff] %vm950, %v1279
        %1860 = vst.msk [vmem:[%s198 + $0x48] sm:$0xff] %vm950, %v1280
        %1861 = vst.msk [vmem:[%s198 + $0x50] sm:$0xff] %vm950, %v1281
        %1862 = vst.msk [vmem:[%s198 + $0x58] sm:$0xff] %vm950, %v1282
        %1863 = vst.msk [vmem:[%s198 + $0x60] sm:$0xff] %vm950, %v1283
        %1864 = vst.msk [vmem:[%s198 + $0x68] sm:$0xff] %vm950, %v1284
        %1865 = vst.msk [vmem:[%s198 + $0x70] sm:$0xff] %vm950, %v1285
        %1866 = vst.msk [vmem:[%s198 + $0x78] sm:$0xff] %vm950, %v1286
        %1867 = vst.msk [vmem:[%s198 + $0x80] sm:$0xff] %vm950, %v1287
        %1868 = vst.msk [vmem:[%s198 + $0x88] sm:$0xff] %vm950, %v1288
        %1869 = vst.msk [vmem:[%s198 + $0x90] sm:$0xff] %vm950, %v1289
        %1870 = vst.msk [vmem:[%s198 + $0x98] sm:$0xff] %vm950, %v1290
        %1871 = vst.msk [vmem:[%s198 + $0xa0] sm:$0xff] %vm950, %v1291
        %1872 = vst.msk [vmem:[%s198 + $0xa8] sm:$0xff] %vm950, %v1292
        %1873 = vst.msk [vmem:[%s198 + $0xb0] sm:$0xff] %vm950, %v1293
        %1874 = vst.msk [vmem:[%s198 + $0xb8] sm:$0xff] %vm950, %v1294
        %1875 = vst.msk [vmem:[%s198 + $0xc0] sm:$0xff] %vm950, %v1295
        %1876 = vst.msk [vmem:[%s198 + $0xc8] sm:$0xff] %vm950, %v1296
        %1877 = vst.msk [vmem:[%s198 + $0xd0] sm:$0xff] %vm950, %v1297
        %1878 = vst.msk [vmem:[%s198 + $0xd8] sm:$0xff] %vm950, %v1298
        %1879 = vst.msk [vmem:[%s198 + $0xe0] sm:$0xff] %vm950, %v1299
        %1880 = vst.msk [vmem:[%s198 + $0xe8] sm:$0xff] %vm950, %v1300
        %1881 = vst.msk [vmem:[%s198 + $0xf0] sm:$0xff] %vm950, %v1301
        %1882 = vst.msk [vmem:[%s198 + $0xf8] sm:$0xff] %vm950, %v1302
        %p1883 = scmp.lt.s32.totalorder %s19, 1
        %s1884 = scalar_select %p1883, %s19, 1
        %s1885 = smul.addr %s1884, 32
        %s1886 = smul.addr %s1885, 8
        %s1887 = scalar_lea.vmem %s3, %s1886
        %s1888 = sand.u32 %s121, 1
        %s1889 = scalar_lea.sflag [#allocation3], %s1888
        %s1890 = sand.u32 %s121, 1
        %s1891 = smul.addr %s1890, 256
        %s1892 = scalar_lea.vmem [#allocation2], %s1891
        // Predicated region
        $region33: #{ed_forward.24} parent=31 // pred_check
          %p1893 = pneg %p105
        $region34: #{ed_forward.24} parent=31 // pred_check_branch
          %1895 = sbr.rel (%p1893) target = $region36
        $region35: #{ed_forward.24} parent=31 // pred_region
          _
        $region36: #{ed_forward.24} parent=31 // pred_fallthru
          _
        // Predicated region
        $region37: #{ed_forward.24} parent=31 // pred_check
          %p1896 = pneg %p131
        $region38: #{ed_forward.24} parent=31 // pred_check_branch
          %1898 = sbr.rel (%p1896) target = $region40
        $region39: #{ed_forward.24} parent=31 // pred_region
          %s1900 = ssub.s32 4096, 4096
          %1901 = vsyncadd %s1889, %s1900
          %s1902 = smul.addr %s19, 32
          %s1903 = smul.addr %s1902, 128
          %s1904 = scalar_lea.hbm %s4, %s1903
          %s1905 = sshll.u32 %s1892, 4
          %s1906 = int_to_ptr.vmem [resolvable:$true] %s1905
          %1911 = dma.vmem_to_hbm [thread:$0]  %s1906, 4096, %s1904, %s1889, 128, 128, 8
        $region40: #{ed_forward.24} parent=31 // pred_fallthru
          _
      $region32: #{ed_forward.24} parent=5 // pred_fallthru
        _
      %p1912 = scmp.le.s32.totalorder 2, %s14
      // Predicated region
      $region41: #{ed_forward.24} parent=5 // pred_check
        %p1913 = pneg %p1912
      $region42: #{ed_forward.24} parent=5 // pred_check_branch
        %1915 = sbr.rel (%p1913) target = $region44
      $region43: #{ed_forward.24} parent=5 // pred_region
        %s1916 = ssub.s32 %s14, 2
        // Predicated region
        $region45: #{ed_forward.24} parent=43 // pred_check
          %p1917 = pneg %p111
        $region46: #{ed_forward.24} parent=43 // pred_check_branch
          %1919 = sbr.rel (%p1917) target = $region48
        $region47: #{ed_forward.24} parent=43 // pred_region
          %p1920 = scmp.lt.s32.totalorder %s20, 1
          %s1921 = scalar_select %p1920, %s20, 1
          %s1922 = smul.addr %s1921, 32
          %s1923 = smul.addr %s1922, 8
          %s1924 = scalar_lea.vmem %s3, %s1923
        $region48: #{ed_forward.24} parent=43 // pred_fallthru
          _
        // Predicated region
        $region49: #{ed_forward.24} parent=43 // pred_check
          %p1925 = pneg %p137
        $region50: #{ed_forward.24} parent=43 // pred_check_branch
          %1927 = sbr.rel (%p1925) target = $region52
        $region51: #{ed_forward.24} parent=43 // pred_region
          %s1928 = sand.u32 %s122, 1
          %s1929 = scalar_lea.sflag [#allocation3], %s1928
          %s1930 = sand.u32 %s122, 1
          %s1931 = smul.addr %s1930, 256
          %s1932 = scalar_lea.vmem [#allocation2], %s1931
          %1933 = dma.done %s1929, 4096
        $region52: #{ed_forward.24} parent=43 // pred_fallthru
          _
      $region44: #{ed_forward.24} parent=5 // pred_fallthru
        _
    $region6: #{ed_forward.24} parent=1 // loop_footer
      %s18 = sadd.s32 1, %s14
    $region7: #{ed_forward.24} parent=1 // loop_footer_branch
      %13 = sbr.rel target = $region3
    $region8: #{ed_forward.24} parent=1 // loop_exit
      _
    %1934 = vsyncpa [#allocation3], 1
    %s1935 = scalar_lea.sflag [#allocation3], 1
    %1936 = vsyncpa %s1935, 1

// kernel: ed_forward.25
$region0: #{ed_forward.25}
  #allocation0 [shape = 'u32[]', space=smem, size = 0x4, offset = 0x4, fixed_abs, tag = 'smem constant byte address 0x4 - core index']
  #allocation1 [shape = 'u32[144,128]{1,0:T(1,128)}', space=vmem, size = 0x12000, scoped, tag = 'internal scratch']
  %s0 = inlined_call_operand.vmem [shape: f32[128,32], index: 0, kind: input, shape index: {}]
  %s1 = inlined_call_operand.vmem [shape: f32[128,32], index: 1, kind: input, shape index: {}]
  %s2 = inlined_call_operand.vmem [shape: f32[128,32], index: 2, kind: input, shape index: {}]
  %s3 = inlined_call_operand.vmem [shape: f32[32,32], index: 3, kind: input, shape index: {}]
  %s4 = inlined_call_operand.vmem [shape: f32[1,32], index: 4, kind: input, shape index: {}]
  %s5 = inlined_call_operand.vmem [shape: f32[32,32], index: 5, kind: input, shape index: {}]
  %s6 = inlined_call_operand.vmem [shape: f32[1,32], index: 6, kind: input, shape index: {}]
  %s7 = inlined_call_operand.vmem [shape: f32[32,128], index: 7, kind: input, shape index: {}]
  %s8 = inlined_call_operand.vmem [shape: f32[32,128], index: 8, kind: input, shape index: {}]
  %s9 = inlined_call_operand.vmem [shape: f32[1,128], index: 9, kind: input, shape index: {}]
  %s10 = inlined_call_operand.vmem [shape: f32[128,32], index: 10, kind: input, shape index: {}]
  %s11 = inlined_call_operand.vmem [shape: f32[1,32], index: 11, kind: input, shape index: {}]
  %s12 = inlined_call_operand.vmem [shape: f32[1,32], index: 12, kind: input, shape index: {}]
  %s13 = inlined_call_operand.vmem [shape: f32[1,32], index: 13, kind: input, shape index: {}]
  %s14 = inlined_call_operand.vmem [shape: f32[128,32], index: 14, kind: output, shape index: {}]
  %s15 = sld [smem:[#allocation0]]
  $region89: #{ed_forward.25} parent=0
    _
  %s17 = ssub.s32 1, %s15
  %s18 = scalar_select 0, %s17, %s15
  loop: start=0, step=1, limit=4
  $region2: #{ed_forward.25} parent=0 // loop_pre_header
    _
  $region3: #{ed_forward.25} parent=0 // loop_header
    %s20 = sphi 0, %s24
    %p21 = scmp.ge.s32.totalorder %s20, 4
    %s30 = sphi 0, %s32
    %s33 = sphi 0, %s30
    %s34 = sphi 0, %s33
    %s50 = sphi 0, %s34
    %s56 = sphi 0, %s58
    %s59 = sphi 0, %s56
    %s60 = sphi 0, %s59
    %s76 = sphi 0, %s60
    %s82 = sphi 0, %s84
    %s85 = sphi 0, %s82
    %s86 = sphi 0, %s85
    %s102 = sphi 0, %s86
    %s106 = sphi 0, %s106
    %s108 = sphi 0, %s106
    %s109 = sphi 0, %s108
    %s123 = sphi 0, %s109
    %s127 = sphi 0, %s127
    %s129 = sphi 0, %s127
    %s130 = sphi 0, %s129
    %s144 = sphi 0, %s130
    %s148 = sphi 0, %s148
    %s150 = sphi 0, %s148
    %s151 = sphi 0, %s150
    %s165 = sphi 0, %s151
    %s169 = sphi 0, %s169
    %s171 = sphi 0, %s169
    %s172 = sphi 0, %s171
    %s186 = sphi 0, %s172
    %s190 = sphi 0, %s190
    %s192 = sphi 0, %s190
    %s193 = sphi 0, %s192
    %s207 = sphi 0, %s193
    %s211 = sphi 0, %s211
    %s213 = sphi 0, %s211
    %s214 = sphi 0, %s213
    %s228 = sphi 0, %s214
    %s232 = sphi 0, %s232
    %s234 = sphi 0, %s232
    %s235 = sphi 0, %s234
    %s249 = sphi 0, %s235
    %s253 = sphi 0, %s253
    %s255 = sphi 0, %s253
    %s256 = sphi 0, %s255
    %s270 = sphi 0, %s256
    %s274 = sphi 0, %s274
    %s276 = sphi 0, %s274
    %s277 = sphi 0, %s276
    %s291 = sphi 0, %s277
    %s295 = sphi 0, %s295
    %s297 = sphi 0, %s295
    %s298 = sphi 0, %s297
    %s312 = sphi 0, %s298
    %s316 = sphi 0, %s316
    %s318 = sphi 0, %s316
    %s319 = sphi 0, %s318
    %s333 = sphi 0, %s319
    %s339 = sphi 0, %s341
    %s342 = sphi 0, %s339
    %s343 = sphi 0, %s342
    %s359 = sphi 0, %s343
  $region4: #{ed_forward.25} parent=0 // loop_header_branch
    %23 = sbr.rel (%p21) target = $region8
  $region5: #{ed_forward.25} parent=0 // loop_body
    %s25 = ssub.s32 %s20, 1
    %s26 = ssub.s32 %s20, 2
    %s27 = sadd.s32 %s20, 1
    %s28 = ssub.s32 %s20, %s27
    %p29 = scmp.eq.s32.totalorder %s28, 0
    %s31 = sadd.s32 %s30, 1
    %s32 = scalar_select %p29, %s30, %s31
    %p35 = pneg %p29
    %p36 = scmp.eq.s32.totalorder %s20, 1
    %p37 = por %p35, %p36
    %p38 = scmp.ne.s32.totalorder %s30, %s33
    %p39 = scmp.eq.s32.totalorder %s20, 0
    %p40 = por %p38, %p39
    %p41 = scmp.ne.s32.totalorder %s30, %s33
    %p42 = scmp.eq.s32.totalorder %s25, 1
    %p43 = por %p41, %p42
    %p44 = scmp.ne.s32.totalorder %s33, %s34
    %p45 = scmp.eq.s32.totalorder %s25, 0
    %p46 = por %p44, %p45
    %p47 = scmp.ne.s32.totalorder %s33, %s34
    %p48 = scmp.eq.s32.totalorder %s26, 1
    %p49 = por %p47, %p48
    %p51 = scmp.ne.s32.totalorder %s34, %s50
    %p52 = scmp.eq.s32.totalorder %s26, 0
    %p53 = por %p51, %p52
    %s54 = ssub.s32 %s20, %s27
    %p55 = scmp.eq.s32.totalorder %s54, 0
    %s57 = sadd.s32 %s56, 1
    %s58 = scalar_select %p55, %s56, %s57
    %p61 = pneg %p55
    %p62 = scmp.eq.s32.totalorder %s20, 1
    %p63 = por %p61, %p62
    %p64 = scmp.ne.s32.totalorder %s56, %s59
    %p65 = scmp.eq.s32.totalorder %s20, 0
    %p66 = por %p64, %p65
    %p67 = scmp.ne.s32.totalorder %s56, %s59
    %p68 = scmp.eq.s32.totalorder %s25, 1
    %p69 = por %p67, %p68
    %p70 = scmp.ne.s32.totalorder %s59, %s60
    %p71 = scmp.eq.s32.totalorder %s25, 0
    %p72 = por %p70, %p71
    %p73 = scmp.ne.s32.totalorder %s59, %s60
    %p74 = scmp.eq.s32.totalorder %s26, 1
    %p75 = por %p73, %p74
    %p77 = scmp.ne.s32.totalorder %s60, %s76
    %p78 = scmp.eq.s32.totalorder %s26, 0
    %p79 = por %p77, %p78
    %s80 = ssub.s32 %s20, %s27
    %p81 = scmp.eq.s32.totalorder %s80, 0
    %s83 = sadd.s32 %s82, 1
    %s84 = scalar_select %p81, %s82, %s83
    %p87 = pneg %p81
    %p88 = scmp.eq.s32.totalorder %s20, 1
    %p89 = por %p87, %p88
    %p90 = scmp.ne.s32.totalorder %s82, %s85
    %p91 = scmp.eq.s32.totalorder %s20, 0
    %p92 = por %p90, %p91
    %p93 = scmp.ne.s32.totalorder %s82, %s85
    %p94 = scmp.eq.s32.totalorder %s25, 1
    %p95 = por %p93, %p94
    %p96 = scmp.ne.s32.totalorder %s85, %s86
    %p97 = scmp.eq.s32.totalorder %s25, 0
    %p98 = por %p96, %p97
    %p99 = scmp.ne.s32.totalorder %s85, %s86
    %p100 = scmp.eq.s32.totalorder %s26, 1
    %p101 = por %p99, %p100
    %p103 = scmp.ne.s32.totalorder %s86, %s102
    %p104 = scmp.eq.s32.totalorder %s26, 0
    %p105 = por %p103, %p104
    %s107 = sadd.s32 %s106, 1
    %p110 = scmp.eq.s32.totalorder %s20, 1
    %p111 = scmp.ne.s32.totalorder %s106, %s108
    %p112 = scmp.eq.s32.totalorder %s20, 0
    %p113 = por %p111, %p112
    %p114 = scmp.ne.s32.totalorder %s106, %s108
    %p115 = scmp.eq.s32.totalorder %s25, 1
    %p116 = por %p114, %p115
    %p117 = scmp.ne.s32.totalorder %s108, %s109
    %p118 = scmp.eq.s32.totalorder %s25, 0
    %p119 = por %p117, %p118
    %p120 = scmp.ne.s32.totalorder %s108, %s109
    %p121 = scmp.eq.s32.totalorder %s26, 1
    %p122 = por %p120, %p121
    %p124 = scmp.ne.s32.totalorder %s109, %s123
    %p125 = scmp.eq.s32.totalorder %s26, 0
    %p126 = por %p124, %p125
    %s128 = sadd.s32 %s127, 1
    %p131 = scmp.eq.s32.totalorder %s20, 1
    %p132 = scmp.ne.s32.totalorder %s127, %s129
    %p133 = scmp.eq.s32.totalorder %s20, 0
    %p134 = por %p132, %p133
    %p135 = scmp.ne.s32.totalorder %s127, %s129
    %p136 = scmp.eq.s32.totalorder %s25, 1
    %p137 = por %p135, %p136
    %p138 = scmp.ne.s32.totalorder %s129, %s130
    %p139 = scmp.eq.s32.totalorder %s25, 0
    %p140 = por %p138, %p139
    %p141 = scmp.ne.s32.totalorder %s129, %s130
    %p142 = scmp.eq.s32.totalorder %s26, 1
    %p143 = por %p141, %p142
    %p145 = scmp.ne.s32.totalorder %s130, %s144
    %p146 = scmp.eq.s32.totalorder %s26, 0
    %p147 = por %p145, %p146
    %s149 = sadd.s32 %s148, 1
    %p152 = scmp.eq.s32.totalorder %s20, 1
    %p153 = scmp.ne.s32.totalorder %s148, %s150
    %p154 = scmp.eq.s32.totalorder %s20, 0
    %p155 = por %p153, %p154
    %p156 = scmp.ne.s32.totalorder %s148, %s150
    %p157 = scmp.eq.s32.totalorder %s25, 1
    %p158 = por %p156, %p157
    %p159 = scmp.ne.s32.totalorder %s150, %s151
    %p160 = scmp.eq.s32.totalorder %s25, 0
    %p161 = por %p159, %p160
    %p162 = scmp.ne.s32.totalorder %s150, %s151
    %p163 = scmp.eq.s32.totalorder %s26, 1
    %p164 = por %p162, %p163
    %p166 = scmp.ne.s32.totalorder %s151, %s165
    %p167 = scmp.eq.s32.totalorder %s26, 0
    %p168 = por %p166, %p167
    %s170 = sadd.s32 %s169, 1
    %p173 = scmp.eq.s32.totalorder %s20, 1
    %p174 = scmp.ne.s32.totalorder %s169, %s171
    %p175 = scmp.eq.s32.totalorder %s20, 0
    %p176 = por %p174, %p175
    %p177 = scmp.ne.s32.totalorder %s169, %s171
    %p178 = scmp.eq.s32.totalorder %s25, 1
    %p179 = por %p177, %p178
    %p180 = scmp.ne.s32.totalorder %s171, %s172
    %p181 = scmp.eq.s32.totalorder %s25, 0
    %p182 = por %p180, %p181
    %p183 = scmp.ne.s32.totalorder %s171, %s172
    %p184 = scmp.eq.s32.totalorder %s26, 1
    %p185 = por %p183, %p184
    %p187 = scmp.ne.s32.totalorder %s172, %s186
    %p188 = scmp.eq.s32.totalorder %s26, 0
    %p189 = por %p187, %p188
    %s191 = sadd.s32 %s190, 1
    %p194 = scmp.eq.s32.totalorder %s20, 1
    %p195 = scmp.ne.s32.totalorder %s190, %s192
    %p196 = scmp.eq.s32.totalorder %s20, 0
    %p197 = por %p195, %p196
    %p198 = scmp.ne.s32.totalorder %s190, %s192
    %p199 = scmp.eq.s32.totalorder %s25, 1
    %p200 = por %p198, %p199
    %p201 = scmp.ne.s32.totalorder %s192, %s193
    %p202 = scmp.eq.s32.totalorder %s25, 0
    %p203 = por %p201, %p202
    %p204 = scmp.ne.s32.totalorder %s192, %s193
    %p205 = scmp.eq.s32.totalorder %s26, 1
    %p206 = por %p204, %p205
    %p208 = scmp.ne.s32.totalorder %s193, %s207
    %p209 = scmp.eq.s32.totalorder %s26, 0
    %p210 = por %p208, %p209
    %s212 = sadd.s32 %s211, 1
    %p215 = scmp.eq.s32.totalorder %s20, 1
    %p216 = scmp.ne.s32.totalorder %s211, %s213
    %p217 = scmp.eq.s32.totalorder %s20, 0
    %p218 = por %p216, %p217
    %p219 = scmp.ne.s32.totalorder %s211, %s213
    %p220 = scmp.eq.s32.totalorder %s25, 1
    %p221 = por %p219, %p220
    %p222 = scmp.ne.s32.totalorder %s213, %s214
    %p223 = scmp.eq.s32.totalorder %s25, 0
    %p224 = por %p222, %p223
    %p225 = scmp.ne.s32.totalorder %s213, %s214
    %p226 = scmp.eq.s32.totalorder %s26, 1
    %p227 = por %p225, %p226
    %p229 = scmp.ne.s32.totalorder %s214, %s228
    %p230 = scmp.eq.s32.totalorder %s26, 0
    %p231 = por %p229, %p230
    %s233 = sadd.s32 %s232, 1
    %p236 = scmp.eq.s32.totalorder %s20, 1
    %p237 = scmp.ne.s32.totalorder %s232, %s234
    %p238 = scmp.eq.s32.totalorder %s20, 0
    %p239 = por %p237, %p238
    %p240 = scmp.ne.s32.totalorder %s232, %s234
    %p241 = scmp.eq.s32.totalorder %s25, 1
    %p242 = por %p240, %p241
    %p243 = scmp.ne.s32.totalorder %s234, %s235
    %p244 = scmp.eq.s32.totalorder %s25, 0
    %p245 = por %p243, %p244
    %p246 = scmp.ne.s32.totalorder %s234, %s235
    %p247 = scmp.eq.s32.totalorder %s26, 1
    %p248 = por %p246, %p247
    %p250 = scmp.ne.s32.totalorder %s235, %s249
    %p251 = scmp.eq.s32.totalorder %s26, 0
    %p252 = por %p250, %p251
    %s254 = sadd.s32 %s253, 1
    %p257 = scmp.eq.s32.totalorder %s20, 1
    %p258 = scmp.ne.s32.totalorder %s253, %s255
    %p259 = scmp.eq.s32.totalorder %s20, 0
    %p260 = por %p258, %p259
    %p261 = scmp.ne.s32.totalorder %s253, %s255
    %p262 = scmp.eq.s32.totalorder %s25, 1
    %p263 = por %p261, %p262
    %p264 = scmp.ne.s32.totalorder %s255, %s256
    %p265 = scmp.eq.s32.totalorder %s25, 0
    %p266 = por %p264, %p265
    %p267 = scmp.ne.s32.totalorder %s255, %s256
    %p268 = scmp.eq.s32.totalorder %s26, 1
    %p269 = por %p267, %p268
    %p271 = scmp.ne.s32.totalorder %s256, %s270
    %p272 = scmp.eq.s32.totalorder %s26, 0
    %p273 = por %p271, %p272
    %s275 = sadd.s32 %s274, 1
    %p278 = scmp.eq.s32.totalorder %s20, 1
    %p279 = scmp.ne.s32.totalorder %s274, %s276
    %p280 = scmp.eq.s32.totalorder %s20, 0
    %p281 = por %p279, %p280
    %p282 = scmp.ne.s32.totalorder %s274, %s276
    %p283 = scmp.eq.s32.totalorder %s25, 1
    %p284 = por %p282, %p283
    %p285 = scmp.ne.s32.totalorder %s276, %s277
    %p286 = scmp.eq.s32.totalorder %s25, 0
    %p287 = por %p285, %p286
    %p288 = scmp.ne.s32.totalorder %s276, %s277
    %p289 = scmp.eq.s32.totalorder %s26, 1
    %p290 = por %p288, %p289
    %p292 = scmp.ne.s32.totalorder %s277, %s291
    %p293 = scmp.eq.s32.totalorder %s26, 0
    %p294 = por %p292, %p293
    %s296 = sadd.s32 %s295, 1
    %p299 = scmp.eq.s32.totalorder %s20, 1
    %p300 = scmp.ne.s32.totalorder %s295, %s297
    %p301 = scmp.eq.s32.totalorder %s20, 0
    %p302 = por %p300, %p301
    %p303 = scmp.ne.s32.totalorder %s295, %s297
    %p304 = scmp.eq.s32.totalorder %s25, 1
    %p305 = por %p303, %p304
    %p306 = scmp.ne.s32.totalorder %s297, %s298
    %p307 = scmp.eq.s32.totalorder %s25, 0
    %p308 = por %p306, %p307
    %p309 = scmp.ne.s32.totalorder %s297, %s298
    %p310 = scmp.eq.s32.totalorder %s26, 1
    %p311 = por %p309, %p310
    %p313 = scmp.ne.s32.totalorder %s298, %s312
    %p314 = scmp.eq.s32.totalorder %s26, 0
    %p315 = por %p313, %p314
    %s317 = sadd.s32 %s316, 1
    %p320 = scmp.eq.s32.totalorder %s20, 1
    %p321 = scmp.ne.s32.totalorder %s316, %s318
    %p322 = scmp.eq.s32.totalorder %s20, 0
    %p323 = por %p321, %p322
    %p324 = scmp.ne.s32.totalorder %s316, %s318
    %p325 = scmp.eq.s32.totalorder %s25, 1
    %p326 = por %p324, %p325
    %p327 = scmp.ne.s32.totalorder %s318, %s319
    %p328 = scmp.eq.s32.totalorder %s25, 0
    %p329 = por %p327, %p328
    %p330 = scmp.ne.s32.totalorder %s318, %s319
    %p331 = scmp.eq.s32.totalorder %s26, 1
    %p332 = por %p330, %p331
    %p334 = scmp.ne.s32.totalorder %s319, %s333
    %p335 = scmp.eq.s32.totalorder %s26, 0
    %p336 = por %p334, %p335
    %s337 = ssub.s32 %s20, %s27
    %p338 = scmp.eq.s32.totalorder %s337, 0
    %s340 = sadd.s32 %s339, 1
    %s341 = scalar_select %p338, %s339, %s340
    %p344 = pneg %p338
    %p345 = scmp.eq.s32.totalorder %s20, 1
    %p346 = por %p344, %p345
    %p347 = scmp.ne.s32.totalorder %s339, %s342
    %p348 = scmp.eq.s32.totalorder %s20, 0
    %p349 = por %p347, %p348
    %p350 = scmp.ne.s32.totalorder %s339, %s342
    %p351 = scmp.eq.s32.totalorder %s25, 1
    %p352 = por %p350, %p351
    %p353 = scmp.ne.s32.totalorder %s342, %s343
    %p354 = scmp.eq.s32.totalorder %s25, 0
    %p355 = por %p353, %p354
    %p356 = scmp.ne.s32.totalorder %s342, %s343
    %p357 = scmp.eq.s32.totalorder %s26, 1
    %p358 = por %p356, %p357
    %p360 = scmp.ne.s32.totalorder %s343, %s359
    %p361 = scmp.eq.s32.totalorder %s26, 0
    %p362 = por %p360, %p361
    %p363 = scmp.le.s32.totalorder 1, %s20
    %p364 = scmp.lt.s32.totalorder %s20, 3
    %p365 = pnand %p363, %p364
    %p366 = pneg %p365
    // Predicated region
    $region9: #{ed_forward.25} parent=5 // pred_check
      _
    $region10: #{ed_forward.25} parent=5 // pred_check_branch
      %368 = sbr.rel (%p365) target = $region12
    $region11: #{ed_forward.25} parent=5 // pred_region
      %s369 = ssub.s32 %s20, 1
      // Predicated region
      $region13: #{ed_forward.25} parent=11 // pred_check
        %p370 = pneg %p119
      $region14: #{ed_forward.25} parent=11 // pred_check_branch
        %372 = sbr.rel (%p370) target = $region16
      $region15: #{ed_forward.25} parent=11 // pred_region
        _
      $region16: #{ed_forward.25} parent=11 // pred_fallthru
        _
      // Predicated region
      $region17: #{ed_forward.25} parent=11 // pred_check
        %p373 = pneg %p140
      $region18: #{ed_forward.25} parent=11 // pred_check_branch
        %375 = sbr.rel (%p373) target = $region20
      $region19: #{ed_forward.25} parent=11 // pred_region
        _
      $region20: #{ed_forward.25} parent=11 // pred_fallthru
        _
      // Predicated region
      $region21: #{ed_forward.25} parent=11 // pred_check
        %p376 = pneg %p161
      $region22: #{ed_forward.25} parent=11 // pred_check_branch
        %378 = sbr.rel (%p376) target = $region24
      $region23: #{ed_forward.25} parent=11 // pred_region
        _
      $region24: #{ed_forward.25} parent=11 // pred_fallthru
        _
      // Predicated region
      $region25: #{ed_forward.25} parent=11 // pred_check
        %p379 = pneg %p182
      $region26: #{ed_forward.25} parent=11 // pred_check_branch
        %381 = sbr.rel (%p379) target = $region28
      $region27: #{ed_forward.25} parent=11 // pred_region
        _
      $region28: #{ed_forward.25} parent=11 // pred_fallthru
        _
      // Predicated region
      $region29: #{ed_forward.25} parent=11 // pred_check
        %p382 = pneg %p203
      $region30: #{ed_forward.25} parent=11 // pred_check_branch
        %384 = sbr.rel (%p382) target = $region32
      $region31: #{ed_forward.25} parent=11 // pred_region
        _
      $region32: #{ed_forward.25} parent=11 // pred_fallthru
        _
      // Predicated region
      $region33: #{ed_forward.25} parent=11 // pred_check
        %p385 = pneg %p224
      $region34: #{ed_forward.25} parent=11 // pred_check_branch
        %387 = sbr.rel (%p385) target = $region36
      $region35: #{ed_forward.25} parent=11 // pred_region
        _
      $region36: #{ed_forward.25} parent=11 // pred_fallthru
        _
      // Predicated region
      $region37: #{ed_forward.25} parent=11 // pred_check
        %p388 = pneg %p245
      $region38: #{ed_forward.25} parent=11 // pred_check_branch
        %390 = sbr.rel (%p388) target = $region40
      $region39: #{ed_forward.25} parent=11 // pred_region
        _
      $region40: #{ed_forward.25} parent=11 // pred_fallthru
        _
      // Predicated region
      $region41: #{ed_forward.25} parent=11 // pred_check
        %p391 = pneg %p266
      $region42: #{ed_forward.25} parent=11 // pred_check_branch
        %393 = sbr.rel (%p391) target = $region44
      $region43: #{ed_forward.25} parent=11 // pred_region
        _
      $region44: #{ed_forward.25} parent=11 // pred_fallthru
        _
      // Predicated region
      $region45: #{ed_forward.25} parent=11 // pred_check
        %p394 = pneg %p287
      $region46: #{ed_forward.25} parent=11 // pred_check_branch
        %396 = sbr.rel (%p394) target = $region48
      $region47: #{ed_forward.25} parent=11 // pred_region
        _
      $region48: #{ed_forward.25} parent=11 // pred_fallthru
        _
      // Predicated region
      $region49: #{ed_forward.25} parent=11 // pred_check
        %p397 = pneg %p308
      $region50: #{ed_forward.25} parent=11 // pred_check_branch
        %399 = sbr.rel (%p397) target = $region52
      $region51: #{ed_forward.25} parent=11 // pred_region
        _
      $region52: #{ed_forward.25} parent=11 // pred_fallthru
        _
      // Predicated region
      $region53: #{ed_forward.25} parent=11 // pred_check
        %p400 = pneg %p329
      $region54: #{ed_forward.25} parent=11 // pred_check_branch
        %402 = sbr.rel (%p400) target = $region56
      $region55: #{ed_forward.25} parent=11 // pred_region
        _
      $region56: #{ed_forward.25} parent=11 // pred_fallthru
        _
    $region12: #{ed_forward.25} parent=5 // pred_fallthru
      _
    %p403 = scmp.lt.s32.totalorder %s20, 2
    // Predicated region
    $region57: #{ed_forward.25} parent=5 // pred_check
      %p404 = pneg %p403
    $region58: #{ed_forward.25} parent=5 // pred_check_branch
      %406 = sbr.rel (%p404) target = $region60
    $region59: #{ed_forward.25} parent=5 // pred_region
      // Predicated region
      $region61: #{ed_forward.25} parent=59 // pred_check
        %p407 = pneg %p40
      $region62: #{ed_forward.25} parent=59 // pred_check_branch
        %409 = sbr.rel (%p407) target = $region64
      $region63: #{ed_forward.25} parent=59 // pred_region
        %s410 = smul.u32 8, %s20
        %p411 = scmp.lt.s32.totalorder %s410, 15
        %s412 = scalar_select %p411, %s410, 15
        %s413 = smul.addr %s412, 8
        %s414 = scalar_lea.vmem %s0, %s413
        %s415 = smul.u32 8, %s20
      $region64: #{ed_forward.25} parent=59 // pred_fallthru
        _
      // Predicated region
      $region65: #{ed_forward.25} parent=59 // pred_check
        %p416 = pneg %p66
      $region66: #{ed_forward.25} parent=59 // pred_check_branch
        %418 = sbr.rel (%p416) target = $region68
      $region67: #{ed_forward.25} parent=59 // pred_region
        %s419 = smul.u32 8, %s20
        %p420 = scmp.lt.s32.totalorder %s419, 15
        %s421 = scalar_select %p420, %s419, 15
        %s422 = smul.addr %s421, 8
        %s423 = scalar_lea.vmem %s1, %s422
        %s424 = smul.u32 8, %s20
      $region68: #{ed_forward.25} parent=59 // pred_fallthru
        _
      // Predicated region
      $region69: #{ed_forward.25} parent=59 // pred_check
        %p425 = pneg %p92
      $region70: #{ed_forward.25} parent=59 // pred_check_branch
        %427 = sbr.rel (%p425) target = $region72
      $region71: #{ed_forward.25} parent=59 // pred_region
        %s428 = smul.u32 8, %s20
        %p429 = scmp.lt.s32.totalorder %s428, 15
        %s430 = scalar_select %p429, %s428, 15
        %s431 = smul.addr %s430, 8
        %s432 = scalar_lea.vmem %s2, %s431
        %s433 = smul.u32 8, %s20
      $region72: #{ed_forward.25} parent=59 // pred_fallthru
        _
    $region60: #{ed_forward.25} parent=5 // pred_fallthru
      _
    %p434 = scmp.le.s32.totalorder 1, %s20
    %p435 = scmp.lt.s32.totalorder %s20, 3
    %p436 = pnand %p434, %p435
    %p437 = pneg %p436
    // Predicated region
    $region73: #{ed_forward.25} parent=5 // pred_check
      _
    $region74: #{ed_forward.25} parent=5 // pred_check_branch
      %439 = sbr.rel (%p436) target = $region76
    $region75: #{ed_forward.25} parent=5 // pred_region
      %s440 = ssub.s32 %s20, 1
      %s441 = smul.u32 8, %s25
      %p442 = scmp.lt.s32.totalorder %s441, 15
      %s443 = scalar_select %p442, %s441, 15
      %s444 = smul.addr %s443, 8
      %s445 = scalar_lea.vmem %s0, %s444
      %p446 = pneg %p46
      %p447 = pneg %p43
      %s448 = smul.u32 8, %s25
      %p449 = scmp.lt.s32.totalorder %s448, 15
      %s450 = scalar_select %p449, %s448, 15
      %s451 = smul.addr %s450, 8
      %s452 = scalar_lea.vmem %s1, %s451
      %p453 = pneg %p72
      %p454 = pneg %p69
      %s455 = smul.u32 8, %s25
      %p456 = scmp.lt.s32.totalorder %s455, 15
      %s457 = scalar_select %p456, %s455, 15
      %s458 = smul.addr %s457, 8
      %s459 = scalar_lea.vmem %s2, %s458
      %p460 = pneg %p98
      %p461 = pneg %p95
      %p462 = pneg %p119
      %p463 = pneg %p116
      %p464 = pneg %p140
      %p465 = pneg %p137
      %p466 = pneg %p161
      %p467 = pneg %p158
      %p468 = pneg %p182
      %p469 = pneg %p179
      %p470 = pneg %p203
      %p471 = pneg %p200
      %p472 = pneg %p224
      %p473 = pneg %p221
      %p474 = pneg %p245
      %p475 = pneg %p242
      %p476 = pneg %p266
      %p477 = pneg %p263
      %p478 = pneg %p287
      %p479 = pneg %p284
      %p480 = pneg %p308
      %p481 = pneg %p305
      %p482 = pneg %p329
      %p483 = pneg %p326
      %p484 = pneg %p355
      %p485 = pneg %p352
      %s486 = smul.u32 8, %s25
      %p487 = scmp.lt.s32.totalorder %s486, 15
      %s488 = scalar_select %p487, %s486, 15
      %s489 = smul.addr %s488, 8
      %s490 = scalar_lea.vmem %s14, %s489
      %s491 = smul.u32 8, %s25
      %p492 = scmp.lt.s32.totalorder %s491, 15
      %s493 = scalar_select %p492, %s491, 15
      %s494 = smul.addr %s493, 8
      %s495 = scalar_lea.vmem %s0, %s494
      %s496 = smul.u32 8, %s25
      %s497 = smul.u32 8, %s25
      %p498 = scmp.lt.s32.totalorder %s497, 15
      %s499 = scalar_select %p498, %s497, 15
      %s500 = smul.addr %s499, 8
      %s501 = scalar_lea.vmem %s1, %s500
      %s502 = smul.u32 8, %s25
      %s503 = smul.u32 8, %s25
      %p504 = scmp.lt.s32.totalorder %s503, 15
      %s505 = scalar_select %p504, %s503, 15
      %s506 = smul.addr %s505, 8
      %s507 = scalar_lea.vmem %s2, %s506
      %s508 = smul.u32 8, %s25
      %s509 = smul.u32 8, %s25
      %p510 = scmp.lt.s32.totalorder %s509, 15
      %s511 = scalar_select %p510, %s509, 15
      %s512 = smul.addr %s511, 8
      %s513 = scalar_lea.vmem %s14, %s512
      %s514 = smul.u32 8, %s25
      %v515 = vld [vmem:[%s495] sm:$0xff]
      %v516 = vld [vmem:[%s495 + $0x8] sm:$0xff]
      %v517 = vld [vmem:[%s495 + $0x10] sm:$0xff]
      %v518 = vld [vmem:[%s495 + $0x18] sm:$0xff]
      %v519 = vld [vmem:[%s495 + $0x20] sm:$0xff]
      %v520 = vld [vmem:[%s495 + $0x28] sm:$0xff]
      %v521 = vld [vmem:[%s495 + $0x30] sm:$0xff]
      %v522 = vld [vmem:[%s495 + $0x38] sm:$0xff]
      %v523 = vld [vmem:[%s501] sm:$0xff]
      %v524 = vld [vmem:[%s501 + $0x8] sm:$0xff]
      %v525 = vld [vmem:[%s501 + $0x10] sm:$0xff]
      %v526 = vld [vmem:[%s501 + $0x18] sm:$0xff]
      %v527 = vld [vmem:[%s501 + $0x20] sm:$0xff]
      %v528 = vld [vmem:[%s501 + $0x28] sm:$0xff]
      %v529 = vld [vmem:[%s501 + $0x30] sm:$0xff]
      %v530 = vld [vmem:[%s501 + $0x38] sm:$0xff]
      %v531 = vld [vmem:[%s3] sm:$0xff]
      %v532 = vld [vmem:[%s3 + $0x8] sm:$0xff]
      %v533 = vld [vmem:[%s3 + $0x10] sm:$0xff]
      %v534 = vld [vmem:[%s3 + $0x18] sm:$0xff]
      %v535 = vld [vmem:[%s4] sm:$0x1]
      %v537 = vlaneseq
      %v538 = vshrl.u32 %v537, 7
      %v539 = vsub.s32 0, %v538
      %v540 = vrot.slane %v535, %v539
      %vm542 = vcmask 261120
      %v544 = vsel %vm542, %v523, 0
      %v547 = vsel %vm542, %v524, 0
      %v550 = vsel %vm542, %v525, 0
      %v553 = vsel %vm542, %v526, 0
      %v556 = vsel %vm542, %v527, 0
      %v559 = vsel %vm542, %v528, 0
      %v562 = vsel %vm542, %v529, 0
      %v565 = vsel %vm542, %v530, 0
      %567 = vmatprep.subr.mxu0 0.0
      %568 = vmatpush1.msra.mxu0 0.0
      %569 = vmatprep.subr.mxu0 0.0
      %570 = vmatpush1.msra.mxu0 0.0
      %571 = vmatprep.subr.mxu0 0.0
      %572 = vmatpush1.msra.mxu0 0.0
      %573 = vmatprep.subr.mxu0 0.0
      %574 = vmatpush1.msra.mxu0 0.0
      %575 = vmatprep.subr.mxu0 0.0
      %576 = vmatpush1.msra.mxu0 0.0
      %577 = vmatprep.subr.mxu0 0.0
      %578 = vmatpush1.msra.mxu0 0.0
      %579 = vmatprep.subr.mxu0 0.0
      %580 = vmatpush1.msra.mxu0 0.0
      %581 = vmatprep.subr.mxu0 0.0
      %582 = vmatpush1.msra.mxu0 0.0
      %583 = vmatprep.subr.mxu0 0.0
      %584 = vmatpush1.msra.mxu0 0.0
      %585 = vmatprep.subr.mxu0 0.0
      %586 = vmatpush1.msra.mxu0 0.0
      %587 = vmatprep.subr.mxu0 0.0
      %588 = vmatpush1.msra.mxu0 0.0
      %589 = vmatprep.subr.mxu0 0.0
      %590 = vmatpush1.msra.mxu0 0.0
      %591 = vmatprep.subr.mxu0 0.0
      %592 = vmatpush1.msra.mxu0 %v534
      %593 = vmatprep.subr.mxu0 0.0
      %594 = vmatpush1.msra.mxu0 %v533
      %595 = vmatprep.subr.mxu0 0.0
      %596 = vmatpush1.msra.mxu0 %v532
      %597 = vmatprep.subr.mxu0 0.0
      %598 = vmatpush1.msra.mxu0 %v531
      %599 = vmatprep.subr.mxu0 0.0
      %600 = vmatpush2.msra.mxu0 0.0
      %601 = vmatprep.subr.mxu0 0.0
      %602 = vmatpush2.msra.mxu0 0.0
      %603 = vmatprep.subr.mxu0 0.0
      %604 = vmatpush2.msra.mxu0 0.0
      %605 = vmatprep.subr.mxu0 0.0
      %606 = vmatpush2.msra.mxu0 0.0
      %607 = vmatprep.subr.mxu0 0.0
      %608 = vmatpush2.msra.mxu0 0.0
      %609 = vmatprep.subr.mxu0 0.0
      %610 = vmatpush2.msra.mxu0 0.0
      %611 = vmatprep.subr.mxu0 0.0
      %612 = vmatpush2.msra.mxu0 0.0
      %613 = vmatprep.subr.mxu0 0.0
      %614 = vmatpush2.msra.mxu0 0.0
      %615 = vmatprep.subr.mxu0 0.0
      %616 = vmatpush2.msra.mxu0 0.0
      %617 = vmatprep.subr.mxu0 0.0
      %618 = vmatpush2.msra.mxu0 0.0
      %619 = vmatprep.subr.mxu0 0.0
      %620 = vmatpush2.msra.mxu0 0.0
      %621 = vmatprep.subr.mxu0 0.0
      %622 = vmatpush2.msra.mxu0 0.0
      %623 = vmatprep.subr.mxu0 0.0
      %624 = vmatpush2.msra.mxu0 0.0
      %625 = vmatprep.subr.mxu0 0.0
      %626 = vmatpush2.msra.mxu0 0.0
      %627 = vmatprep.subr.mxu0 0.0
      %628 = vmatpush2.msra.mxu0 0.0
      %629 = vmatprep.subr.mxu0 0.0
      %630 = vmatpush2.msra.mxu0 0.0
      %631 = vmatprep.mubr.f32.mxu0 0.0
      %632 = vmatmul.mubr.f32.gmra.mxu0 %v544
      %v633 = vpop.f32.mrf.mxu0
      %v634 = vadd.f32 %v540, %v633
      %v635 = vpop.f32.mrf.mxu0
      %636 = vmatprep.mubr.f32.mxu0 0.0
      %637 = vmatmul.mubr.f32.gmra.mxu0 %v547
      %v638 = vpop.f32.mrf.mxu0
      %v639 = vadd.f32 %v540, %v638
      %v640 = vpop.f32.mrf.mxu0
      %641 = vmatprep.mubr.f32.mxu0 0.0
      %642 = vmatmul.mubr.f32.gmra.mxu0 %v550
      %v643 = vpop.f32.mrf.mxu0
      %v644 = vadd.f32 %v540, %v643
      %v645 = vpop.f32.mrf.mxu0
      %646 = vmatprep.mubr.f32.mxu0 0.0
      %647 = vmatmul.mubr.f32.gmra.mxu0 %v553
      %v648 = vpop.f32.mrf.mxu0
      %v649 = vadd.f32 %v540, %v648
      %v650 = vpop.f32.mrf.mxu0
      %651 = vmatprep.mubr.f32.mxu0 0.0
      %652 = vmatmul.mubr.f32.gmra.mxu0 %v556
      %v653 = vpop.f32.mrf.mxu0
      %v654 = vadd.f32 %v540, %v653
      %v655 = vpop.f32.mrf.mxu0
      %656 = vmatprep.mubr.f32.mxu0 0.0
      %657 = vmatmul.mubr.f32.gmra.mxu0 %v559
      %v658 = vpop.f32.mrf.mxu0
      %v659 = vadd.f32 %v540, %v658
      %v660 = vpop.f32.mrf.mxu0
      %661 = vmatprep.mubr.f32.mxu0 0.0
      %662 = vmatmul.mubr.f32.gmra.mxu0 %v562
      %v663 = vpop.f32.mrf.mxu0
      %v664 = vadd.f32 %v540, %v663
      %v665 = vpop.f32.mrf.mxu0
      %666 = vmatprep.mubr.f32.mxu0 0.0
      %667 = vmatmul.mubr.f32.gmra.mxu0 %v565
      %v668 = vpop.f32.mrf.mxu0
      %v669 = vadd.f32 %v540, %v668
      %v670 = vpop.f32.mrf.mxu0
      %671 = vdwg.mxu0
      %v672 = vld [vmem:[%s507] sm:$0xff]
      %v673 = vld [vmem:[%s507 + $0x8] sm:$0xff]
      %v674 = vld [vmem:[%s507 + $0x10] sm:$0xff]
      %v675 = vld [vmem:[%s507 + $0x18] sm:$0xff]
      %v676 = vld [vmem:[%s507 + $0x20] sm:$0xff]
      %v677 = vld [vmem:[%s507 + $0x28] sm:$0xff]
      %v678 = vld [vmem:[%s507 + $0x30] sm:$0xff]
      %v679 = vld [vmem:[%s507 + $0x38] sm:$0xff]
      %v680 = vld [vmem:[%s5] sm:$0xff]
      %v681 = vld [vmem:[%s5 + $0x8] sm:$0xff]
      %v682 = vld [vmem:[%s5 + $0x10] sm:$0xff]
      %v683 = vld [vmem:[%s5 + $0x18] sm:$0xff]
      %v684 = vld [vmem:[%s6] sm:$0x1]
      %v686 = vlaneseq
      %v687 = vshrl.u32 %v686, 7
      %v688 = vsub.s32 0, %v687
      %v689 = vrot.slane %v684, %v688
      %v692 = vsel %vm542, %v672, 0
      %v695 = vsel %vm542, %v673, 0
      %v698 = vsel %vm542, %v674, 0
      %v701 = vsel %vm542, %v675, 0
      %v704 = vsel %vm542, %v676, 0
      %v707 = vsel %vm542, %v677, 0
      %v710 = vsel %vm542, %v678, 0
      %v713 = vsel %vm542, %v679, 0
      %715 = vmatprep.subr.mxu0 0.0
      %716 = vmatpush1.msra.mxu0 0.0
      %717 = vmatprep.subr.mxu0 0.0
      %718 = vmatpush1.msra.mxu0 0.0
      %719 = vmatprep.subr.mxu0 0.0
      %720 = vmatpush1.msra.mxu0 0.0
      %721 = vmatprep.subr.mxu0 0.0
      %722 = vmatpush1.msra.mxu0 0.0
      %723 = vmatprep.subr.mxu0 0.0
      %724 = vmatpush1.msra.mxu0 0.0
      %725 = vmatprep.subr.mxu0 0.0
      %726 = vmatpush1.msra.mxu0 0.0
      %727 = vmatprep.subr.mxu0 0.0
      %728 = vmatpush1.msra.mxu0 0.0
      %729 = vmatprep.subr.mxu0 0.0
      %730 = vmatpush1.msra.mxu0 0.0
      %731 = vmatprep.subr.mxu0 0.0
      %732 = vmatpush1.msra.mxu0 0.0
      %733 = vmatprep.subr.mxu0 0.0
      %734 = vmatpush1.msra.mxu0 0.0
      %735 = vmatprep.subr.mxu0 0.0
      %736 = vmatpush1.msra.mxu0 0.0
      %737 = vmatprep.subr.mxu0 0.0
      %738 = vmatpush1.msra.mxu0 0.0
      %739 = vmatprep.subr.mxu0 0.0
      %740 = vmatpush1.msra.mxu0 %v683
      %741 = vmatprep.subr.mxu0 0.0
      %742 = vmatpush1.msra.mxu0 %v682
      %743 = vmatprep.subr.mxu0 0.0
      %744 = vmatpush1.msra.mxu0 %v681
      %745 = vmatprep.subr.mxu0 0.0
      %746 = vmatpush1.msra.mxu0 %v680
      %747 = vmatprep.subr.mxu0 0.0
      %748 = vmatpush2.msra.mxu0 0.0
      %749 = vmatprep.subr.mxu0 0.0
      %750 = vmatpush2.msra.mxu0 0.0
      %751 = vmatprep.subr.mxu0 0.0
      %752 = vmatpush2.msra.mxu0 0.0
      %753 = vmatprep.subr.mxu0 0.0
      %754 = vmatpush2.msra.mxu0 0.0
      %755 = vmatprep.subr.mxu0 0.0
      %756 = vmatpush2.msra.mxu0 0.0
      %757 = vmatprep.subr.mxu0 0.0
      %758 = vmatpush2.msra.mxu0 0.0
      %759 = vmatprep.subr.mxu0 0.0
      %760 = vmatpush2.msra.mxu0 0.0
      %761 = vmatprep.subr.mxu0 0.0
      %762 = vmatpush2.msra.mxu0 0.0
      %763 = vmatprep.subr.mxu0 0.0
      %764 = vmatpush2.msra.mxu0 0.0
      %765 = vmatprep.subr.mxu0 0.0
      %766 = vmatpush2.msra.mxu0 0.0
      %767 = vmatprep.subr.mxu0 0.0
      %768 = vmatpush2.msra.mxu0 0.0
      %769 = vmatprep.subr.mxu0 0.0
      %770 = vmatpush2.msra.mxu0 0.0
      %771 = vmatprep.subr.mxu0 0.0
      %772 = vmatpush2.msra.mxu0 0.0
      %773 = vmatprep.subr.mxu0 0.0
      %774 = vmatpush2.msra.mxu0 0.0
      %775 = vmatprep.subr.mxu0 0.0
      %776 = vmatpush2.msra.mxu0 0.0
      %777 = vmatprep.subr.mxu0 0.0
      %778 = vmatpush2.msra.mxu0 0.0
      %779 = vmatprep.mubr.f32.mxu0 0.0
      %780 = vmatmul.mubr.f32.gmra.mxu0 %v692
      %v781 = vpop.f32.mrf.mxu0
      %v782 = vadd.f32 %v689, %v781
      %v783 = vpop.f32.mrf.mxu0
      %784 = vmatprep.mubr.f32.mxu0 0.0
      %785 = vmatmul.mubr.f32.gmra.mxu0 %v695
      %v786 = vpop.f32.mrf.mxu0
      %v787 = vadd.f32 %v689, %v786
      %v788 = vpop.f32.mrf.mxu0
      %789 = vmatprep.mubr.f32.mxu0 0.0
      %790 = vmatmul.mubr.f32.gmra.mxu0 %v698
      %v791 = vpop.f32.mrf.mxu0
      %v792 = vadd.f32 %v689, %v791
      %v793 = vpop.f32.mrf.mxu0
      %794 = vmatprep.mubr.f32.mxu0 0.0
      %795 = vmatmul.mubr.f32.gmra.mxu0 %v701
      %v796 = vpop.f32.mrf.mxu0
      %v797 = vadd.f32 %v689, %v796
      %v798 = vpop.f32.mrf.mxu0
      %799 = vmatprep.mubr.f32.mxu0 0.0
      %800 = vmatmul.mubr.f32.gmra.mxu0 %v704
      %v801 = vpop.f32.mrf.mxu0
      %v802 = vadd.f32 %v689, %v801
      %v803 = vpop.f32.mrf.mxu0
      %804 = vmatprep.mubr.f32.mxu0 0.0
      %805 = vmatmul.mubr.f32.gmra.mxu0 %v707
      %v806 = vpop.f32.mrf.mxu0
      %v807 = vadd.f32 %v689, %v806
      %v808 = vpop.f32.mrf.mxu0
      %809 = vmatprep.mubr.f32.mxu0 0.0
      %810 = vmatmul.mubr.f32.gmra.mxu0 %v710
      %v811 = vpop.f32.mrf.mxu0
      %v812 = vadd.f32 %v689, %v811
      %v813 = vpop.f32.mrf.mxu0
      %814 = vmatprep.mubr.f32.mxu0 0.0
      %815 = vmatmul.mubr.f32.gmra.mxu0 %v713
      %v816 = vpop.f32.mrf.mxu0
      %v817 = vadd.f32 %v689, %v816
      %v818 = vpop.f32.mrf.mxu0
      %819 = vdwg.mxu0
      %v820 = vadd.f32 %v515, %v634
      %v821 = vadd.f32 %v516, %v639
      %v822 = vadd.f32 %v517, %v644
      %v823 = vadd.f32 %v518, %v649
      %v824 = vadd.f32 %v519, %v654
      %v825 = vadd.f32 %v520, %v659
      %v826 = vadd.f32 %v521, %v664
      %v827 = vadd.f32 %v522, %v669
      %v828 = vadd.f32 %v515, %v782
      %v829 = vadd.f32 %v516, %v787
      %v830 = vadd.f32 %v517, %v792
      %v831 = vadd.f32 %v518, %v797
      %v832 = vadd.f32 %v519, %v802
      %v833 = vadd.f32 %v520, %v807
      %v834 = vadd.f32 %v521, %v812
      %v835 = vadd.f32 %v522, %v817
      %v836 = vld [vmem:[%s7] sm:$0xff]
      %v837 = vld [vmem:[%s7 + $0x8] sm:$0xff]
      %v838 = vld [vmem:[%s7 + $0x10] sm:$0xff]
      %v839 = vld [vmem:[%s7 + $0x18] sm:$0xff]
      %v840 = vld [vmem:[%s8] sm:$0xff]
      %v841 = vld [vmem:[%s8 + $0x8] sm:$0xff]
      %v842 = vld [vmem:[%s8 + $0x10] sm:$0xff]
      %v843 = vld [vmem:[%s8 + $0x18] sm:$0xff]
      %v845 = vsel %vm542, %v828, 0
      %v848 = vsel %vm542, %v829, 0
      %v851 = vsel %vm542, %v830, 0
      %v854 = vsel %vm542, %v831, 0
      %v857 = vsel %vm542, %v832, 0
      %v860 = vsel %vm542, %v833, 0
      %v863 = vsel %vm542, %v834, 0
      %v866 = vsel %vm542, %v835, 0
      %868 = vmatprep.subr.mxu0 0.0
      %869 = vmatpush1.msra.mxu0 0.0
      %870 = vmatprep.subr.mxu0 0.0
      %871 = vmatpush1.msra.mxu0 0.0
      %872 = vmatprep.subr.mxu0 0.0
      %873 = vmatpush1.msra.mxu0 0.0
      %874 = vmatprep.subr.mxu0 0.0
      %875 = vmatpush1.msra.mxu0 0.0
      %876 = vmatprep.subr.mxu0 0.0
      %877 = vmatpush1.msra.mxu0 0.0
      %878 = vmatprep.subr.mxu0 0.0
      %879 = vmatpush1.msra.mxu0 0.0
      %880 = vmatprep.subr.mxu0 0.0
      %881 = vmatpush1.msra.mxu0 0.0
      %882 = vmatprep.subr.mxu0 0.0
      %883 = vmatpush1.msra.mxu0 0.0
      %884 = vmatprep.subr.mxu0 0.0
      %885 = vmatpush1.msra.mxu0 0.0
      %886 = vmatprep.subr.mxu0 0.0
      %887 = vmatpush1.msra.mxu0 0.0
      %888 = vmatprep.subr.mxu0 0.0
      %889 = vmatpush1.msra.mxu0 0.0
      %890 = vmatprep.subr.mxu0 0.0
      %891 = vmatpush1.msra.mxu0 0.0
      %892 = vmatprep.subr.mxu0 0.0
      %893 = vmatpush1.msra.mxu0 %v843
      %894 = vmatprep.subr.mxu0 0.0
      %895 = vmatpush1.msra.mxu0 %v842
      %896 = vmatprep.subr.mxu0 0.0
      %897 = vmatpush1.msra.mxu0 %v841
      %898 = vmatprep.subr.mxu0 0.0
      %899 = vmatpush1.msra.mxu0 %v840
      %900 = vmatprep.subr.mxu0 0.0
      %901 = vmatpush2.msra.mxu0 0.0
      %902 = vmatprep.subr.mxu0 0.0
      %903 = vmatpush2.msra.mxu0 0.0
      %904 = vmatprep.subr.mxu0 0.0
      %905 = vmatpush2.msra.mxu0 0.0
      %906 = vmatprep.subr.mxu0 0.0
      %907 = vmatpush2.msra.mxu0 0.0
      %908 = vmatprep.subr.mxu0 0.0
      %909 = vmatpush2.msra.mxu0 0.0
      %910 = vmatprep.subr.mxu0 0.0
      %911 = vmatpush2.msra.mxu0 0.0
      %912 = vmatprep.subr.mxu0 0.0
      %913 = vmatpush2.msra.mxu0 0.0
      %914 = vmatprep.subr.mxu0 0.0
      %915 = vmatpush2.msra.mxu0 0.0
      %916 = vmatprep.subr.mxu0 0.0
      %917 = vmatpush2.msra.mxu0 0.0
      %918 = vmatprep.subr.mxu0 0.0
      %919 = vmatpush2.msra.mxu0 0.0
      %920 = vmatprep.subr.mxu0 0.0
      %921 = vmatpush2.msra.mxu0 0.0
      %922 = vmatprep.subr.mxu0 0.0
      %923 = vmatpush2.msra.mxu0 0.0
      %924 = vmatprep.subr.mxu0 0.0
      %925 = vmatpush2.msra.mxu0 0.0
      %926 = vmatprep.subr.mxu0 0.0
      %927 = vmatpush2.msra.mxu0 0.0
      %928 = vmatprep.subr.mxu0 0.0
      %929 = vmatpush2.msra.mxu0 0.0
      %930 = vmatprep.subr.mxu0 0.0
      %931 = vmatpush2.msra.mxu0 0.0
      %932 = vmatprep.mubr.f32.mxu0 0.0
      %933 = vmatmul.mubr.f32.gmra.mxu0 %v845
      %v934 = vpop.f32.mrf.mxu0
      %v935 = vadd.f32 0.0, %v934
      %v936 = vpop.f32.mrf.mxu0
      %937 = vmatprep.mubr.f32.mxu0 0.0
      %938 = vmatmul.mubr.f32.gmra.mxu0 %v848
      %v939 = vpop.f32.mrf.mxu0
      %v940 = vadd.f32 0.0, %v939
      %v941 = vpop.f32.mrf.mxu0
      %942 = vmatprep.mubr.f32.mxu0 0.0
      %943 = vmatmul.mubr.f32.gmra.mxu0 %v851
      %v944 = vpop.f32.mrf.mxu0
      %v945 = vadd.f32 0.0, %v944
      %v946 = vpop.f32.mrf.mxu0
      %947 = vmatprep.mubr.f32.mxu0 0.0
      %948 = vmatmul.mubr.f32.gmra.mxu0 %v854
      %v949 = vpop.f32.mrf.mxu0
      %v950 = vadd.f32 0.0, %v949
      %v951 = vpop.f32.mrf.mxu0
      %952 = vmatprep.mubr.f32.mxu0 0.0
      %953 = vmatmul.mubr.f32.gmra.mxu0 %v857
      %v954 = vpop.f32.mrf.mxu0
      %v955 = vadd.f32 0.0, %v954
      %v956 = vpop.f32.mrf.mxu0
      %957 = vmatprep.mubr.f32.mxu0 0.0
      %958 = vmatmul.mubr.f32.gmra.mxu0 %v860
      %v959 = vpop.f32.mrf.mxu0
      %v960 = vadd.f32 0.0, %v959
      %v961 = vpop.f32.mrf.mxu0
      %962 = vmatprep.mubr.f32.mxu0 0.0
      %963 = vmatmul.mubr.f32.gmra.mxu0 %v863
      %v964 = vpop.f32.mrf.mxu0
      %v965 = vadd.f32 0.0, %v964
      %v966 = vpop.f32.mrf.mxu0
      %967 = vmatprep.mubr.f32.mxu0 0.0
      %968 = vmatmul.mubr.f32.gmra.mxu0 %v866
      %v969 = vpop.f32.mrf.mxu0
      %v970 = vadd.f32 0.0, %v969
      %v971 = vpop.f32.mrf.mxu0
      %972 = vdwg.mxu0
      %v974 = vsel %vm542, %v820, 0
      %v977 = vsel %vm542, %v821, 0
      %v980 = vsel %vm542, %v822, 0
      %v983 = vsel %vm542, %v823, 0
      %v986 = vsel %vm542, %v824, 0
      %v989 = vsel %vm542, %v825, 0
      %v992 = vsel %vm542, %v826, 0
      %v995 = vsel %vm542, %v827, 0
      %997 = vmatprep.subr.mxu0 0.0
      %998 = vmatpush1.msra.mxu0 0.0
      %999 = vmatprep.subr.mxu0 0.0
      %1000 = vmatpush1.msra.mxu0 0.0
      %1001 = vmatprep.subr.mxu0 0.0
      %1002 = vmatpush1.msra.mxu0 0.0
      %1003 = vmatprep.subr.mxu0 0.0
      %1004 = vmatpush1.msra.mxu0 0.0
      %1005 = vmatprep.subr.mxu0 0.0
      %1006 = vmatpush1.msra.mxu0 0.0
      %1007 = vmatprep.subr.mxu0 0.0
      %1008 = vmatpush1.msra.mxu0 0.0
      %1009 = vmatprep.subr.mxu0 0.0
      %1010 = vmatpush1.msra.mxu0 0.0
      %1011 = vmatprep.subr.mxu0 0.0
      %1012 = vmatpush1.msra.mxu0 0.0
      %1013 = vmatprep.subr.mxu0 0.0
      %1014 = vmatpush1.msra.mxu0 0.0
      %1015 = vmatprep.subr.mxu0 0.0
      %1016 = vmatpush1.msra.mxu0 0.0
      %1017 = vmatprep.subr.mxu0 0.0
      %1018 = vmatpush1.msra.mxu0 0.0
      %1019 = vmatprep.subr.mxu0 0.0
      %1020 = vmatpush1.msra.mxu0 0.0
      %1021 = vmatprep.subr.mxu0 0.0
      %1022 = vmatpush1.msra.mxu0 %v839
      %1023 = vmatprep.subr.mxu0 0.0
      %1024 = vmatpush1.msra.mxu0 %v838
      %1025 = vmatprep.subr.mxu0 0.0
      %1026 = vmatpush1.msra.mxu0 %v837
      %1027 = vmatprep.subr.mxu0 0.0
      %1028 = vmatpush1.msra.mxu0 %v836
      %1029 = vmatprep.subr.mxu0 0.0
      %1030 = vmatpush2.msra.mxu0 0.0
      %1031 = vmatprep.subr.mxu0 0.0
      %1032 = vmatpush2.msra.mxu0 0.0
      %1033 = vmatprep.subr.mxu0 0.0
      %1034 = vmatpush2.msra.mxu0 0.0
      %1035 = vmatprep.subr.mxu0 0.0
      %1036 = vmatpush2.msra.mxu0 0.0
      %1037 = vmatprep.subr.mxu0 0.0
      %1038 = vmatpush2.msra.mxu0 0.0
      %1039 = vmatprep.subr.mxu0 0.0
      %1040 = vmatpush2.msra.mxu0 0.0
      %1041 = vmatprep.subr.mxu0 0.0
      %1042 = vmatpush2.msra.mxu0 0.0
      %1043 = vmatprep.subr.mxu0 0.0
      %1044 = vmatpush2.msra.mxu0 0.0
      %1045 = vmatprep.subr.mxu0 0.0
      %1046 = vmatpush2.msra.mxu0 0.0
      %1047 = vmatprep.subr.mxu0 0.0
      %1048 = vmatpush2.msra.mxu0 0.0
      %1049 = vmatprep.subr.mxu0 0.0
      %1050 = vmatpush2.msra.mxu0 0.0
      %1051 = vmatprep.subr.mxu0 0.0
      %1052 = vmatpush2.msra.mxu0 0.0
      %1053 = vmatprep.subr.mxu0 0.0
      %1054 = vmatpush2.msra.mxu0 0.0
      %1055 = vmatprep.subr.mxu0 0.0
      %1056 = vmatpush2.msra.mxu0 0.0
      %1057 = vmatprep.subr.mxu0 0.0
      %1058 = vmatpush2.msra.mxu0 0.0
      %1059 = vmatprep.subr.mxu0 0.0
      %1060 = vmatpush2.msra.mxu0 0.0
      %1061 = vmatprep.mubr.f32.mxu0 0.0
      %1062 = vmatmul.mubr.f32.gmra.mxu0 %v974
      %v1063 = vpop.f32.mrf.mxu0
      %v1064 = vadd.f32 %v935, %v1063
      %v1065 = vpop.f32.mrf.mxu0
      %1066 = vmatprep.mubr.f32.mxu0 0.0
      %1067 = vmatmul.mubr.f32.gmra.mxu0 %v977
      %v1068 = vpop.f32.mrf.mxu0
      %v1069 = vadd.f32 %v940, %v1068
      %v1070 = vpop.f32.mrf.mxu0
      %1071 = vmatprep.mubr.f32.mxu0 0.0
      %1072 = vmatmul.mubr.f32.gmra.mxu0 %v980
      %v1073 = vpop.f32.mrf.mxu0
      %v1074 = vadd.f32 %v945, %v1073
      %v1075 = vpop.f32.mrf.mxu0
      %1076 = vmatprep.mubr.f32.mxu0 0.0
      %1077 = vmatmul.mubr.f32.gmra.mxu0 %v983
      %v1078 = vpop.f32.mrf.mxu0
      %v1079 = vadd.f32 %v950, %v1078
      %v1080 = vpop.f32.mrf.mxu0
      %1081 = vmatprep.mubr.f32.mxu0 0.0
      %1082 = vmatmul.mubr.f32.gmra.mxu0 %v986
      %v1083 = vpop.f32.mrf.mxu0
      %v1084 = vadd.f32 %v955, %v1083
      %v1085 = vpop.f32.mrf.mxu0
      %1086 = vmatprep.mubr.f32.mxu0 0.0
      %1087 = vmatmul.mubr.f32.gmra.mxu0 %v989
      %v1088 = vpop.f32.mrf.mxu0
      %v1089 = vadd.f32 %v960, %v1088
      %v1090 = vpop.f32.mrf.mxu0
      %1091 = vmatprep.mubr.f32.mxu0 0.0
      %1092 = vmatmul.mubr.f32.gmra.mxu0 %v992
      %v1093 = vpop.f32.mrf.mxu0
      %v1094 = vadd.f32 %v965, %v1093
      %v1095 = vpop.f32.mrf.mxu0
      %1096 = vmatprep.mubr.f32.mxu0 0.0
      %1097 = vmatmul.mubr.f32.gmra.mxu0 %v995
      %v1098 = vpop.f32.mrf.mxu0
      %v1099 = vadd.f32 %v970, %v1098
      %v1100 = vpop.f32.mrf.mxu0
      %1101 = vdwg.mxu0
      %v1102 = vld [vmem:[%s9] sm:$0x1]
      %v1104 = vlaneseq
      %v1105 = vshrl.u32 %v1104, 7
      %v1106 = vsub.s32 0, %v1105
      %v1107 = vrot.slane %v1102, %v1106
      %v1109 = vadd.f32 %v1064, %v1107
      %v1110 = vadd.f32 %v1069, %v1107
      %v1111 = vadd.f32 %v1074, %v1107
      %v1112 = vadd.f32 %v1079, %v1107
      %v1113 = vadd.f32 %v1084, %v1107
      %v1114 = vadd.f32 %v1089, %v1107
      %v1115 = vadd.f32 %v1094, %v1107
      %v1116 = vadd.f32 %v1099, %v1107
      %v1117 = vmax.f32 %v1109, 0.0
      %v1118 = vmax.f32 %v1110, 0.0
      %v1119 = vmax.f32 %v1111, 0.0
      %v1120 = vmax.f32 %v1112, 0.0
      %v1121 = vmax.f32 %v1113, 0.0
      %v1122 = vmax.f32 %v1114, 0.0
      %v1123 = vmax.f32 %v1115, 0.0
      %v1124 = vmax.f32 %v1116, 0.0
      %v1125 = vld [vmem:[%s10] sm:$0xff]
      %v1126 = vld [vmem:[%s10 + $0x8] sm:$0xff]
      %v1127 = vld [vmem:[%s10 + $0x10] sm:$0xff]
      %v1128 = vld [vmem:[%s10 + $0x18] sm:$0xff]
      %v1129 = vld [vmem:[%s10 + $0x20] sm:$0xff]
      %v1130 = vld [vmem:[%s10 + $0x28] sm:$0xff]
      %v1131 = vld [vmem:[%s10 + $0x30] sm:$0xff]
      %v1132 = vld [vmem:[%s10 + $0x38] sm:$0xff]
      %v1133 = vld [vmem:[%s10 + $0x40] sm:$0xff]
      %v1134 = vld [vmem:[%s10 + $0x48] sm:$0xff]
      %v1135 = vld [vmem:[%s10 + $0x50] sm:$0xff]
      %v1136 = vld [vmem:[%s10 + $0x58] sm:$0xff]
      %v1137 = vld [vmem:[%s10 + $0x60] sm:$0xff]
      %v1138 = vld [vmem:[%s10 + $0x68] sm:$0xff]
      %v1139 = vld [vmem:[%s10 + $0x70] sm:$0xff]
      %v1140 = vld [vmem:[%s10 + $0x78] sm:$0xff]
      %v1141 = vld [vmem:[%s11] sm:$0x1]
      %v1143 = vlaneseq
      %v1144 = vshrl.u32 %v1143, 7
      %v1145 = vsub.s32 0, %v1144
      %v1146 = vrot.slane %v1141, %v1145
      %1148 = vmatprep.subr.mxu0 0.0
      %1149 = vmatpush1.msra.mxu0 %v1140
      %1150 = vmatprep.subr.mxu0 0.0
      %1151 = vmatpush1.msra.mxu0 %v1139
      %1152 = vmatprep.subr.mxu0 0.0
      %1153 = vmatpush1.msra.mxu0 %v1138
      %1154 = vmatprep.subr.mxu0 0.0
      %1155 = vmatpush1.msra.mxu0 %v1137
      %1156 = vmatprep.subr.mxu0 0.0
      %1157 = vmatpush1.msra.mxu0 %v1136
      %1158 = vmatprep.subr.mxu0 0.0
      %1159 = vmatpush1.msra.mxu0 %v1135
      %1160 = vmatprep.subr.mxu0 0.0
      %1161 = vmatpush1.msra.mxu0 %v1134
      %1162 = vmatprep.subr.mxu0 0.0
      %1163 = vmatpush1.msra.mxu0 %v1133
      %1164 = vmatprep.subr.mxu0 0.0
      %1165 = vmatpush1.msra.mxu0 %v1132
      %1166 = vmatprep.subr.mxu0 0.0
      %1167 = vmatpush1.msra.mxu0 %v1131
      %1168 = vmatprep.subr.mxu0 0.0
      %1169 = vmatpush1.msra.mxu0 %v1130
      %1170 = vmatprep.subr.mxu0 0.0
      %1171 = vmatpush1.msra.mxu0 %v1129
      %1172 = vmatprep.subr.mxu0 0.0
      %1173 = vmatpush1.msra.mxu0 %v1128
      %1174 = vmatprep.subr.mxu0 0.0
      %1175 = vmatpush1.msra.mxu0 %v1127
      %1176 = vmatprep.subr.mxu0 0.0
      %1177 = vmatpush1.msra.mxu0 %v1126
      %1178 = vmatprep.subr.mxu0 0.0
      %1179 = vmatpush1.msra.mxu0 %v1125
      %1180 = vmatprep.subr.mxu0 0.0
      %1181 = vmatpush2.msra.mxu0 0.0
      %1182 = vmatprep.subr.mxu0 0.0
      %1183 = vmatpush2.msra.mxu0 0.0
      %1184 = vmatprep.subr.mxu0 0.0
      %1185 = vmatpush2.msra.mxu0 0.0
      %1186 = vmatprep.subr.mxu0 0.0
      %1187 = vmatpush2.msra.mxu0 0.0
      %1188 = vmatprep.subr.mxu0 0.0
      %1189 = vmatpush2.msra.mxu0 0.0
      %1190 = vmatprep.subr.mxu0 0.0
      %1191 = vmatpush2.msra.mxu0 0.0
      %1192 = vmatprep.subr.mxu0 0.0
      %1193 = vmatpush2.msra.mxu0 0.0
      %1194 = vmatprep.subr.mxu0 0.0
      %1195 = vmatpush2.msra.mxu0 0.0
      %1196 = vmatprep.subr.mxu0 0.0
      %1197 = vmatpush2.msra.mxu0 0.0
      %1198 = vmatprep.subr.mxu0 0.0
      %1199 = vmatpush2.msra.mxu0 0.0
      %1200 = vmatprep.subr.mxu0 0.0
      %1201 = vmatpush2.msra.mxu0 0.0
      %1202 = vmatprep.subr.mxu0 0.0
      %1203 = vmatpush2.msra.mxu0 0.0
      %1204 = vmatprep.subr.mxu0 0.0
      %1205 = vmatpush2.msra.mxu0 0.0
      %1206 = vmatprep.subr.mxu0 0.0
      %1207 = vmatpush2.msra.mxu0 0.0
      %1208 = vmatprep.subr.mxu0 0.0
      %1209 = vmatpush2.msra.mxu0 0.0
      %1210 = vmatprep.subr.mxu0 0.0
      %1211 = vmatpush2.msra.mxu0 0.0
      %1212 = vmatprep.mubr.f32.mxu0 0.0
      %1213 = vmatmul.mubr.f32.gmra.mxu0 %v1117
      %v1214 = vpop.f32.mrf.mxu0
      %v1215 = vadd.f32 %v1146, %v1214
      %v1216 = vpop.f32.mrf.mxu0
      %1217 = vmatprep.mubr.f32.mxu0 0.0
      %1218 = vmatmul.mubr.f32.gmra.mxu0 %v1118
      %v1219 = vpop.f32.mrf.mxu0
      %v1220 = vadd.f32 %v1146, %v1219
      %v1221 = vpop.f32.mrf.mxu0
      %1222 = vmatprep.mubr.f32.mxu0 0.0
      %1223 = vmatmul.mubr.f32.gmra.mxu0 %v1119
      %v1224 = vpop.f32.mrf.mxu0
      %v1225 = vadd.f32 %v1146, %v1224
      %v1226 = vpop.f32.mrf.mxu0
      %1227 = vmatprep.mubr.f32.mxu0 0.0
      %1228 = vmatmul.mubr.f32.gmra.mxu0 %v1120
      %v1229 = vpop.f32.mrf.mxu0
      %v1230 = vadd.f32 %v1146, %v1229
      %v1231 = vpop.f32.mrf.mxu0
      %1232 = vmatprep.mubr.f32.mxu0 0.0
      %1233 = vmatmul.mubr.f32.gmra.mxu0 %v1121
      %v1234 = vpop.f32.mrf.mxu0
      %v1235 = vadd.f32 %v1146, %v1234
      %v1236 = vpop.f32.mrf.mxu0
      %1237 = vmatprep.mubr.f32.mxu0 0.0
      %1238 = vmatmul.mubr.f32.gmra.mxu0 %v1122
      %v1239 = vpop.f32.mrf.mxu0
      %v1240 = vadd.f32 %v1146, %v1239
      %v1241 = vpop.f32.mrf.mxu0
      %1242 = vmatprep.mubr.f32.mxu0 0.0
      %1243 = vmatmul.mubr.f32.gmra.mxu0 %v1123
      %v1244 = vpop.f32.mrf.mxu0
      %v1245 = vadd.f32 %v1146, %v1244
      %v1246 = vpop.f32.mrf.mxu0
      %1247 = vmatprep.mubr.f32.mxu0 0.0
      %1248 = vmatmul.mubr.f32.gmra.mxu0 %v1124
      %v1249 = vpop.f32.mrf.mxu0
      %v1250 = vadd.f32 %v1146, %v1249
      %v1251 = vpop.f32.mrf.mxu0
      %1252 = vdwg.mxu0
      %v1253 = vsel %vm542, %v1215, 0.0
      %1254 = vadd.xlane.f32.xlu0 %v1253
      %v1255 = vpop.xlane.xlu0 %1254
      %v1256 = vsel %vm542, %v1220, 0.0
      %1257 = vadd.xlane.f32.xlu0 %v1256
      %v1258 = vpop.xlane.xlu0 %1257
      %v1259 = vsel %vm542, %v1225, 0.0
      %1260 = vadd.xlane.f32.xlu0 %v1259
      %v1261 = vpop.xlane.xlu0 %1260
      %v1262 = vsel %vm542, %v1230, 0.0
      %1263 = vadd.xlane.f32.xlu0 %v1262
      %v1264 = vpop.xlane.xlu0 %1263
      %v1265 = vsel %vm542, %v1235, 0.0
      %1266 = vadd.xlane.f32.xlu0 %v1265
      %v1267 = vpop.xlane.xlu0 %1266
      %v1268 = vsel %vm542, %v1240, 0.0
      %1269 = vadd.xlane.f32.xlu0 %v1268
      %v1270 = vpop.xlane.xlu0 %1269
      %v1271 = vsel %vm542, %v1245, 0.0
      %1272 = vadd.xlane.f32.xlu0 %v1271
      %v1273 = vpop.xlane.xlu0 %1272
      %v1274 = vsel %vm542, %v1250, 0.0
      %1275 = vadd.xlane.f32.xlu0 %v1274
      %v1276 = vpop.xlane.xlu0 %1275
      %v1277 = vrcp.pop 32.0
      %v1278 = vmul.f32 %v1255, %v1277
      %v1279 = vmul.f32 %v1258, %v1277
      %v1280 = vmul.f32 %v1261, %v1277
      %v1281 = vmul.f32 %v1264, %v1277
      %v1282 = vmul.f32 %v1267, %v1277
      %v1283 = vmul.f32 %v1270, %v1277
      %v1284 = vmul.f32 %v1273, %v1277
      %v1285 = vmul.f32 %v1276, %v1277
      %v1286 = vsub.f32 %v1215, %v1278
      %v1287 = vsub.f32 %v1220, %v1279
      %v1288 = vsub.f32 %v1225, %v1280
      %v1289 = vsub.f32 %v1230, %v1281
      %v1290 = vsub.f32 %v1235, %v1282
      %v1291 = vsub.f32 %v1240, %v1283
      %v1292 = vsub.f32 %v1245, %v1284
      %v1293 = vsub.f32 %v1250, %v1285
      %v1294 = vmul.f32 %v1286, %v1286
      %v1295 = vmul.f32 %v1287, %v1287
      %v1296 = vmul.f32 %v1288, %v1288
      %v1297 = vmul.f32 %v1289, %v1289
      %v1298 = vmul.f32 %v1290, %v1290
      %v1299 = vmul.f32 %v1291, %v1291
      %v1300 = vmul.f32 %v1292, %v1292
      %v1301 = vmul.f32 %v1293, %v1293
      %v1302 = vsel %vm542, %v1294, 0.0
      %1303 = vadd.xlane.f32.xlu0 %v1302
      %v1304 = vpop.xlane.xlu0 %1303
      %v1305 = vsel %vm542, %v1295, 0.0
      %1306 = vadd.xlane.f32.xlu0 %v1305
      %v1307 = vpop.xlane.xlu0 %1306
      %v1308 = vsel %vm542, %v1296, 0.0
      %1309 = vadd.xlane.f32.xlu0 %v1308
      %v1310 = vpop.xlane.xlu0 %1309
      %v1311 = vsel %vm542, %v1297, 0.0
      %1312 = vadd.xlane.f32.xlu0 %v1311
      %v1313 = vpop.xlane.xlu0 %1312
      %v1314 = vsel %vm542, %v1298, 0.0
      %1315 = vadd.xlane.f32.xlu0 %v1314
      %v1316 = vpop.xlane.xlu0 %1315
      %v1317 = vsel %vm542, %v1299, 0.0
      %1318 = vadd.xlane.f32.xlu0 %v1317
      %v1319 = vpop.xlane.xlu0 %1318
      %v1320 = vsel %vm542, %v1300, 0.0
      %1321 = vadd.xlane.f32.xlu0 %v1320
      %v1322 = vpop.xlane.xlu0 %1321
      %v1323 = vsel %vm542, %v1301, 0.0
      %1324 = vadd.xlane.f32.xlu0 %v1323
      %v1325 = vpop.xlane.xlu0 %1324
      %v1326 = vmul.f32 %v1304, %v1277
      %v1327 = vmul.f32 %v1307, %v1277
      %v1328 = vmul.f32 %v1310, %v1277
      %v1329 = vmul.f32 %v1313, %v1277
      %v1330 = vmul.f32 %v1316, %v1277
      %v1331 = vmul.f32 %v1319, %v1277
      %v1332 = vmul.f32 %v1322, %v1277
      %v1333 = vmul.f32 %v1325, %v1277
      %v1334 = vadd.f32 %v1326, 1e-05
      %v1335 = vadd.f32 %v1327, 1e-05
      %v1336 = vadd.f32 %v1328, 1e-05
      %v1337 = vadd.f32 %v1329, 1e-05
      %v1338 = vadd.f32 %v1330, 1e-05
      %v1339 = vadd.f32 %v1331, 1e-05
      %v1340 = vadd.f32 %v1332, 1e-05
      %v1341 = vadd.f32 %v1333, 1e-05
      %v1342 = vrsqrt.pop %v1334
      %v1343 = vrsqrt.pop %v1335
      %v1344 = vrsqrt.pop %v1336
      %v1345 = vrsqrt.pop %v1337
      %v1346 = vrsqrt.pop %v1338
      %v1347 = vrsqrt.pop %v1339
      %v1348 = vrsqrt.pop %v1340
      %v1349 = vrsqrt.pop %v1341
      %v1350 = vmul.f32 %v1286, %v1342
      %v1351 = vmul.f32 %v1287, %v1343
      %v1352 = vmul.f32 %v1288, %v1344
      %v1353 = vmul.f32 %v1289, %v1345
      %v1354 = vmul.f32 %v1290, %v1346
      %v1355 = vmul.f32 %v1291, %v1347
      %v1356 = vmul.f32 %v1292, %v1348
      %v1357 = vmul.f32 %v1293, %v1349
      %v1358 = vld [vmem:[%s12] sm:$0x1]
      %v1360 = vlaneseq
      %v1361 = vshrl.u32 %v1360, 7
      %v1362 = vsub.s32 0, %v1361
      %v1363 = vrot.slane %v1358, %v1362
      %v1365 = vmul.f32 %v1350, %v1363
      %v1366 = vmul.f32 %v1351, %v1363
      %v1367 = vmul.f32 %v1352, %v1363
      %v1368 = vmul.f32 %v1353, %v1363
      %v1369 = vmul.f32 %v1354, %v1363
      %v1370 = vmul.f32 %v1355, %v1363
      %v1371 = vmul.f32 %v1356, %v1363
      %v1372 = vmul.f32 %v1357, %v1363
      %v1373 = vld [vmem:[%s13] sm:$0x1]
      %v1375 = vlaneseq
      %v1376 = vshrl.u32 %v1375, 7
      %v1377 = vsub.s32 0, %v1376
      %v1378 = vrot.slane %v1373, %v1377
      %v1380 = vadd.f32 %v1365, %v1378
      %v1381 = vadd.f32 %v1366, %v1378
      %v1382 = vadd.f32 %v1367, %v1378
      %v1383 = vadd.f32 %v1368, %v1378
      %v1384 = vadd.f32 %v1369, %v1378
      %v1385 = vadd.f32 %v1370, %v1378
      %v1386 = vadd.f32 %v1371, %v1378
      %v1387 = vadd.f32 %v1372, %v1378
      %1388 = vst.msk [vmem:[%s513] sm:$0xff] %vm542, %v1380
      %1389 = vst.msk [vmem:[%s513 + $0x8] sm:$0xff] %vm542, %v1381
      %1390 = vst.msk [vmem:[%s513 + $0x10] sm:$0xff] %vm542, %v1382
      %1391 = vst.msk [vmem:[%s513 + $0x18] sm:$0xff] %vm542, %v1383
      %1392 = vst.msk [vmem:[%s513 + $0x20] sm:$0xff] %vm542, %v1384
      %1393 = vst.msk [vmem:[%s513 + $0x28] sm:$0xff] %vm542, %v1385
      %1394 = vst.msk [vmem:[%s513 + $0x30] sm:$0xff] %vm542, %v1386
      %1395 = vst.msk [vmem:[%s513 + $0x38] sm:$0xff] %vm542, %v1387
      %s1396 = smul.u32 8, %s25
      %p1397 = scmp.lt.s32.totalorder %s1396, 15
      %s1398 = scalar_select %p1397, %s1396, 15
      %s1399 = smul.addr %s1398, 8
      %s1400 = scalar_lea.vmem %s14, %s1399
      // Predicated region
      $region77: #{ed_forward.25} parent=75 // pred_check
        %p1401 = pneg %p352
      $region78: #{ed_forward.25} parent=75 // pred_check_branch
        %1403 = sbr.rel (%p1401) target = $region80
      $region79: #{ed_forward.25} parent=75 // pred_region
        %s1404 = smul.u32 8, %s25
      $region80: #{ed_forward.25} parent=75 // pred_fallthru
        _
    $region76: #{ed_forward.25} parent=5 // pred_fallthru
      _
    %p1405 = scmp.le.s32.totalorder 2, %s20
    // Predicated region
    $region81: #{ed_forward.25} parent=5 // pred_check
      %p1406 = pneg %p1405
    $region82: #{ed_forward.25} parent=5 // pred_check_branch
      %1408 = sbr.rel (%p1406) target = $region84
    $region83: #{ed_forward.25} parent=5 // pred_region
      %s1409 = ssub.s32 %s20, 2
      // Predicated region
      $region85: #{ed_forward.25} parent=83 // pred_check
        %p1410 = pneg %p358
      $region86: #{ed_forward.25} parent=83 // pred_check_branch
        %1412 = sbr.rel (%p1410) target = $region88
      $region87: #{ed_forward.25} parent=83 // pred_region
        %s1413 = smul.u32 8, %s26
        %p1414 = scmp.lt.s32.totalorder %s1413, 15
        %s1415 = scalar_select %p1414, %s1413, 15
        %s1416 = smul.addr %s1415, 8
        %s1417 = scalar_lea.vmem %s14, %s1416
      $region88: #{ed_forward.25} parent=83 // pred_fallthru
        _
    $region84: #{ed_forward.25} parent=5 // pred_fallthru
      _
  $region6: #{ed_forward.25} parent=0 // loop_footer
    %s24 = sadd.s32 1, %s20
  $region7: #{ed_forward.25} parent=0 // loop_footer_branch
    %19 = sbr.rel target = $region3
  $region8: #{ed_forward.25} parent=0 // loop_exit
    _

// kernel: ed_forward.27
$region0: #{ed_forward.27}
  #allocation0 [shape = 'u32[]', space=smem, size = 0x4, offset = 0x4, fixed_abs, tag = 'smem constant byte address 0x4 - core index']
  #allocation1 [shape = 'u32[144,128]{1,0:T(1,128)}', space=vmem, size = 0x12000, scoped, tag = 'internal scratch']
  %s0 = inlined_call_operand.vmem [shape: f32[2,10,10,128], index: 0, kind: input, shape index: {}]
  %s1 = inlined_call_operand.vmem [shape: f32[3,3,1,128], index: 1, kind: input, shape index: {}]
  %s2 = inlined_call_operand.vmem [shape: f32[1,1,128], index: 2, kind: input, shape index: {}]
  %s3 = inlined_call_operand.vmem [shape: f32[2,8,8,128], index: 3, kind: output, shape index: {}]
  %s4 = sld [smem:[#allocation0]]
  $region45: #{ed_forward.27} parent=0
    _
  %s6 = ssub.s32 1, %s4
  %s7 = scalar_select 0, %s6, %s4
  loop: start=0, step=1, limit=4
  $region2: #{ed_forward.27} parent=0 // loop_pre_header
    _
  $region3: #{ed_forward.27} parent=0 // loop_header
    %s9 = sphi 0, %s13
    %p10 = scmp.ge.s32.totalorder %s9, 4
    %s19 = sphi 0, %s21
    %s22 = sphi 0, %s19
    %s23 = sphi 0, %s22
    %s39 = sphi 0, %s23
    %s43 = sphi 0, %s43
    %s45 = sphi 0, %s43
    %s46 = sphi 0, %s45
    %s60 = sphi 0, %s46
    %s64 = sphi 0, %s64
    %s66 = sphi 0, %s64
    %s67 = sphi 0, %s66
    %s81 = sphi 0, %s67
    %s87 = sphi 0, %s89
    %s90 = sphi 0, %s87
    %s91 = sphi 0, %s90
    %s107 = sphi 0, %s91
  $region4: #{ed_forward.27} parent=0 // loop_header_branch
    %12 = sbr.rel (%p10) target = $region8
  $region5: #{ed_forward.27} parent=0 // loop_body
    %s14 = ssub.s32 %s9, 1
    %s15 = ssub.s32 %s9, 2
    %s16 = sadd.s32 %s9, 1
    %s17 = ssub.s32 %s9, %s16
    %p18 = scmp.eq.s32.totalorder %s17, 0
    %s20 = sadd.s32 %s19, 1
    %s21 = scalar_select %p18, %s19, %s20
    %p24 = pneg %p18
    %p25 = scmp.eq.s32.totalorder %s9, 1
    %p26 = por %p24, %p25
    %p27 = scmp.ne.s32.totalorder %s19, %s22
    %p28 = scmp.eq.s32.totalorder %s9, 0
    %p29 = por %p27, %p28
    %p30 = scmp.ne.s32.totalorder %s19, %s22
    %p31 = scmp.eq.s32.totalorder %s14, 1
    %p32 = por %p30, %p31
    %p33 = scmp.ne.s32.totalorder %s22, %s23
    %p34 = scmp.eq.s32.totalorder %s14, 0
    %p35 = por %p33, %p34
    %p36 = scmp.ne.s32.totalorder %s22, %s23
    %p37 = scmp.eq.s32.totalorder %s15, 1
    %p38 = por %p36, %p37
    %p40 = scmp.ne.s32.totalorder %s23, %s39
    %p41 = scmp.eq.s32.totalorder %s15, 0
    %p42 = por %p40, %p41
    %s44 = sadd.s32 %s43, 1
    %p47 = scmp.eq.s32.totalorder %s9, 1
    %p48 = scmp.ne.s32.totalorder %s43, %s45
    %p49 = scmp.eq.s32.totalorder %s9, 0
    %p50 = por %p48, %p49
    %p51 = scmp.ne.s32.totalorder %s43, %s45
    %p52 = scmp.eq.s32.totalorder %s14, 1
    %p53 = por %p51, %p52
    %p54 = scmp.ne.s32.totalorder %s45, %s46
    %p55 = scmp.eq.s32.totalorder %s14, 0
    %p56 = por %p54, %p55
    %p57 = scmp.ne.s32.totalorder %s45, %s46
    %p58 = scmp.eq.s32.totalorder %s15, 1
    %p59 = por %p57, %p58
    %p61 = scmp.ne.s32.totalorder %s46, %s60
    %p62 = scmp.eq.s32.totalorder %s15, 0
    %p63 = por %p61, %p62
    %s65 = sadd.s32 %s64, 1
    %p68 = scmp.eq.s32.totalorder %s9, 1
    %p69 = scmp.ne.s32.totalorder %s64, %s66
    %p70 = scmp.eq.s32.totalorder %s9, 0
    %p71 = por %p69, %p70
    %p72 = scmp.ne.s32.totalorder %s64, %s66
    %p73 = scmp.eq.s32.totalorder %s14, 1
    %p74 = por %p72, %p73
    %p75 = scmp.ne.s32.totalorder %s66, %s67
    %p76 = scmp.eq.s32.totalorder %s14, 0
    %p77 = por %p75, %p76
    %p78 = scmp.ne.s32.totalorder %s66, %s67
    %p79 = scmp.eq.s32.totalorder %s15, 1
    %p80 = por %p78, %p79
    %p82 = scmp.ne.s32.totalorder %s67, %s81
    %p83 = scmp.eq.s32.totalorder %s15, 0
    %p84 = por %p82, %p83
    %s85 = ssub.s32 %s9, %s16
    %p86 = scmp.eq.s32.totalorder %s85, 0
    %s88 = sadd.s32 %s87, 1
    %s89 = scalar_select %p86, %s87, %s88
    %p92 = pneg %p86
    %p93 = scmp.eq.s32.totalorder %s9, 1
    %p94 = por %p92, %p93
    %p95 = scmp.ne.s32.totalorder %s87, %s90
    %p96 = scmp.eq.s32.totalorder %s9, 0
    %p97 = por %p95, %p96
    %p98 = scmp.ne.s32.totalorder %s87, %s90
    %p99 = scmp.eq.s32.totalorder %s14, 1
    %p100 = por %p98, %p99
    %p101 = scmp.ne.s32.totalorder %s90, %s91
    %p102 = scmp.eq.s32.totalorder %s14, 0
    %p103 = por %p101, %p102
    %p104 = scmp.ne.s32.totalorder %s90, %s91
    %p105 = scmp.eq.s32.totalorder %s15, 1
    %p106 = por %p104, %p105
    %p108 = scmp.ne.s32.totalorder %s91, %s107
    %p109 = scmp.eq.s32.totalorder %s15, 0
    %p110 = por %p108, %p109
    %p111 = scmp.le.s32.totalorder 1, %s9
    %p112 = scmp.lt.s32.totalorder %s9, 3
    %p113 = pnand %p111, %p112
    %p114 = pneg %p113
    // Predicated region
    $region9: #{ed_forward.27} parent=5 // pred_check
      _
    $region10: #{ed_forward.27} parent=5 // pred_check_branch
      %116 = sbr.rel (%p113) target = $region12
    $region11: #{ed_forward.27} parent=5 // pred_region
      %s117 = ssub.s32 %s9, 1
      // Predicated region
      $region13: #{ed_forward.27} parent=11 // pred_check
        %p118 = pneg %p56
      $region14: #{ed_forward.27} parent=11 // pred_check_branch
        %120 = sbr.rel (%p118) target = $region16
      $region15: #{ed_forward.27} parent=11 // pred_region
        _
      $region16: #{ed_forward.27} parent=11 // pred_fallthru
        _
      // Predicated region
      $region17: #{ed_forward.27} parent=11 // pred_check
        %p121 = pneg %p77
      $region18: #{ed_forward.27} parent=11 // pred_check_branch
        %123 = sbr.rel (%p121) target = $region20
      $region19: #{ed_forward.27} parent=11 // pred_region
        _
      $region20: #{ed_forward.27} parent=11 // pred_fallthru
        _
    $region12: #{ed_forward.27} parent=5 // pred_fallthru
      _
    %p124 = scmp.lt.s32.totalorder %s9, 2
    // Predicated region
    $region21: #{ed_forward.27} parent=5 // pred_check
      %p125 = pneg %p124
    $region22: #{ed_forward.27} parent=5 // pred_check_branch
      %127 = sbr.rel (%p125) target = $region24
    $region23: #{ed_forward.27} parent=5 // pred_region
      // Predicated region
      $region25: #{ed_forward.27} parent=23 // pred_check
        %p128 = pneg %p29
      $region26: #{ed_forward.27} parent=23 // pred_check_branch
        %130 = sbr.rel (%p128) target = $region28
      $region27: #{ed_forward.27} parent=23 // pred_region
        %p131 = scmp.lt.s32.totalorder %s9, 1
        %s132 = scalar_select %p131, %s9, 1
        %s133 = smul.addr %s132, 20
        %s134 = smul.addr %s133, 8
        %s135 = scalar_lea.vmem %s0, %s134
      $region28: #{ed_forward.27} parent=23 // pred_fallthru
        _
    $region24: #{ed_forward.27} parent=5 // pred_fallthru
      _
    %p136 = scmp.le.s32.totalorder 1, %s9
    %p137 = scmp.lt.s32.totalorder %s9, 3
    %p138 = pnand %p136, %p137
    %p139 = pneg %p138
    // Predicated region
    $region29: #{ed_forward.27} parent=5 // pred_check
      _
    $region30: #{ed_forward.27} parent=5 // pred_check_branch
      %141 = sbr.rel (%p138) target = $region32
    $region31: #{ed_forward.27} parent=5 // pred_region
      %s142 = ssub.s32 %s9, 1
      %p143 = scmp.lt.s32.totalorder %s14, 1
      %s144 = scalar_select %p143, %s14, 1
      %s145 = smul.addr %s144, 20
      %s146 = smul.addr %s145, 8
      %s147 = scalar_lea.vmem %s0, %s146
      %p148 = pneg %p35
      %p149 = pneg %p32
      %p150 = pneg %p56
      %p151 = pneg %p53
      %p152 = pneg %p77
      %p153 = pneg %p74
      %p154 = pneg %p103
      %p155 = pneg %p100
      %p156 = scmp.lt.s32.totalorder %s14, 1
      %s157 = scalar_select %p156, %s14, 1
      %s158 = smul.addr %s157, 8
      %s159 = smul.addr %s158, 8
      %s160 = scalar_lea.vmem %s3, %s159
      %p161 = scmp.lt.s32.totalorder %s14, 1
      %s162 = scalar_select %p161, %s14, 1
      %s163 = smul.addr %s162, 20
      %s164 = smul.addr %s163, 8
      %s165 = scalar_lea.vmem %s0, %s164
      %p166 = scmp.lt.s32.totalorder %s14, 1
      %s167 = scalar_select %p166, %s14, 1
      %s168 = smul.addr %s167, 8
      %s169 = smul.addr %s168, 8
      %s170 = scalar_lea.vmem %s3, %s169
      %v171 = vld [vmem:[%s165] sm:$0xff]
      %v172 = vld [vmem:[%s165 + $0x8] sm:$0x3]
      %v173 = vld [vmem:[%s165 + $0x10] sm:$0xff]
      %v174 = vld [vmem:[%s165 + $0x18] sm:$0x3]
      %v175 = vld [vmem:[%s165 + $0x20] sm:$0xff]
      %v176 = vld [vmem:[%s165 + $0x28] sm:$0x3]
      %v177 = vld [vmem:[%s165 + $0x30] sm:$0xff]
      %v178 = vld [vmem:[%s165 + $0x38] sm:$0x3]
      %v179 = vld [vmem:[%s165 + $0x40] sm:$0xff]
      %v180 = vld [vmem:[%s165 + $0x48] sm:$0x3]
      %v181 = vld [vmem:[%s165 + $0x50] sm:$0xff]
      %v182 = vld [vmem:[%s165 + $0x58] sm:$0x3]
      %v183 = vld [vmem:[%s165 + $0x60] sm:$0xff]
      %v184 = vld [vmem:[%s165 + $0x68] sm:$0x3]
      %v185 = vld [vmem:[%s165 + $0x70] sm:$0xff]
      %v186 = vld [vmem:[%s165 + $0x78] sm:$0x3]
      %v187 = vld [vmem:[%s165 + $0x80] sm:$0xff]
      %v188 = vld [vmem:[%s165 + $0x88] sm:$0x3]
      %v189 = vld [vmem:[%s165 + $0x90] sm:$0xff]
      %v190 = vld [vmem:[%s165 + $0x98] sm:$0x3]
      %v191 = vld [vmem:[%s1] sm:$0x1]
      %v193 = vlaneseq
      %v194 = vshrl.u32 %v193, 7
      %v195 = vsub.s32 0, %v194
      %v196 = vrot.slane %v191, %v195
      %v198 = vmul.f32 %v171, %v196
      %v199 = vmul.f32 %v173, %v196
      %v200 = vmul.f32 %v175, %v196
      %v201 = vmul.f32 %v177, %v196
      %v202 = vmul.f32 %v179, %v196
      %v203 = vmul.f32 %v181, %v196
      %v204 = vmul.f32 %v183, %v196
      %v205 = vmul.f32 %v185, %v196
      %v206 = vadd.f32 %v198, 0.0
      %v207 = vadd.f32 %v199, 0.0
      %v208 = vadd.f32 %v200, 0.0
      %v209 = vadd.f32 %v201, 0.0
      %v210 = vadd.f32 %v202, 0.0
      %v211 = vadd.f32 %v203, 0.0
      %v212 = vadd.f32 %v204, 0.0
      %v213 = vadd.f32 %v205, 0.0
      %s214 = scalar_lea.vmem %s1, 1
      %v215 = vld [vmem:[%s214] sm:$0x1]
      %v217 = vlaneseq
      %v218 = vshrl.u32 %v217, 7
      %v219 = vsub.s32 0, %v218
      %v220 = vrot.slane %v215, %v219
      %v222 = vmul.f32 %v171, %v220
      %v223 = vmul.f32 %v172, %v220
      %v224 = vmul.f32 %v173, %v220
      %v225 = vmul.f32 %v174, %v220
      %v226 = vmul.f32 %v175, %v220
      %v227 = vmul.f32 %v176, %v220
      %v228 = vmul.f32 %v177, %v220
      %v229 = vmul.f32 %v178, %v220
      %v230 = vmul.f32 %v179, %v220
      %v231 = vmul.f32 %v180, %v220
      %v232 = vmul.f32 %v181, %v220
      %v233 = vmul.f32 %v182, %v220
      %v234 = vmul.f32 %v183, %v220
      %v235 = vmul.f32 %v184, %v220
      %v236 = vmul.f32 %v185, %v220
      %v237 = vmul.f32 %v186, %v220
      %vm254 = vcmask 1046528
      %v255 = vrot.slane %v222, 1
      %v256 = vrot.slane %v223, 1
      %v257 = vsel %vm254, %v255, %v256
      %v258 = vrot.slane %v224, 1
      %v259 = vrot.slane %v225, 1
      %v260 = vsel %vm254, %v258, %v259
      %v261 = vrot.slane %v226, 1
      %v262 = vrot.slane %v227, 1
      %v263 = vsel %vm254, %v261, %v262
      %v264 = vrot.slane %v228, 1
      %v265 = vrot.slane %v229, 1
      %v266 = vsel %vm254, %v264, %v265
      %v267 = vrot.slane %v230, 1
      %v268 = vrot.slane %v231, 1
      %v269 = vsel %vm254, %v267, %v268
      %v270 = vrot.slane %v232, 1
      %v271 = vrot.slane %v233, 1
      %v272 = vsel %vm254, %v270, %v271
      %v273 = vrot.slane %v234, 1
      %v274 = vrot.slane %v235, 1
      %v275 = vsel %vm254, %v273, %v274
      %v276 = vrot.slane %v236, 1
      %v277 = vrot.slane %v237, 1
      %v278 = vsel %vm254, %v276, %v277
      %v287 = vadd.f32 %v206, %v257
      %v288 = vadd.f32 %v207, %v260
      %v289 = vadd.f32 %v208, %v263
      %v290 = vadd.f32 %v209, %v266
      %v291 = vadd.f32 %v210, %v269
      %v292 = vadd.f32 %v211, %v272
      %v293 = vadd.f32 %v212, %v275
      %v294 = vadd.f32 %v213, %v278
      %s295 = scalar_lea.vmem %s1, 2
      %v296 = vld [vmem:[%s295] sm:$0x1]
      %v298 = vlaneseq
      %v299 = vshrl.u32 %v298, 7
      %v300 = vsub.s32 0, %v299
      %v301 = vrot.slane %v296, %v300
      %v303 = vmul.f32 %v171, %v301
      %v304 = vmul.f32 %v172, %v301
      %v305 = vmul.f32 %v173, %v301
      %v306 = vmul.f32 %v174, %v301
      %v307 = vmul.f32 %v175, %v301
      %v308 = vmul.f32 %v176, %v301
      %v309 = vmul.f32 %v177, %v301
      %v310 = vmul.f32 %v178, %v301
      %v311 = vmul.f32 %v179, %v301
      %v312 = vmul.f32 %v180, %v301
      %v313 = vmul.f32 %v181, %v301
      %v314 = vmul.f32 %v182, %v301
      %v315 = vmul.f32 %v183, %v301
      %v316 = vmul.f32 %v184, %v301
      %v317 = vmul.f32 %v185, %v301
      %v318 = vmul.f32 %v186, %v301
      %vm335 = vcmask 1045504
      %v336 = vrot.slane %v303, 2
      %v337 = vrot.slane %v304, 2
      %v338 = vsel %vm335, %v336, %v337
      %v339 = vrot.slane %v305, 2
      %v340 = vrot.slane %v306, 2
      %v341 = vsel %vm335, %v339, %v340
      %v342 = vrot.slane %v307, 2
      %v343 = vrot.slane %v308, 2
      %v344 = vsel %vm335, %v342, %v343
      %v345 = vrot.slane %v309, 2
      %v346 = vrot.slane %v310, 2
      %v347 = vsel %vm335, %v345, %v346
      %v348 = vrot.slane %v311, 2
      %v349 = vrot.slane %v312, 2
      %v350 = vsel %vm335, %v348, %v349
      %v351 = vrot.slane %v313, 2
      %v352 = vrot.slane %v314, 2
      %v353 = vsel %vm335, %v351, %v352
      %v354 = vrot.slane %v315, 2
      %v355 = vrot.slane %v316, 2
      %v356 = vsel %vm335, %v354, %v355
      %v357 = vrot.slane %v317, 2
      %v358 = vrot.slane %v318, 2
      %v359 = vsel %vm335, %v357, %v358
      %v368 = vadd.f32 %v287, %v338
      %v369 = vadd.f32 %v288, %v341
      %v370 = vadd.f32 %v289, %v344
      %v371 = vadd.f32 %v290, %v347
      %v372 = vadd.f32 %v291, %v350
      %v373 = vadd.f32 %v292, %v353
      %v374 = vadd.f32 %v293, %v356
      %v375 = vadd.f32 %v294, %v359
      %s376 = scalar_lea.vmem %s1, 3
      %v377 = vld [vmem:[%s376] sm:$0x1]
      %v379 = vlaneseq
      %v380 = vshrl.u32 %v379, 7
      %v381 = vsub.s32 0, %v380
      %v382 = vrot.slane %v377, %v381
      %v384 = vmul.f32 %v173, %v382
      %v385 = vmul.f32 %v175, %v382
      %v386 = vmul.f32 %v177, %v382
      %v387 = vmul.f32 %v179, %v382
      %v388 = vmul.f32 %v181, %v382
      %v389 = vmul.f32 %v183, %v382
      %v390 = vmul.f32 %v185, %v382
      %v391 = vmul.f32 %v187, %v382
      %v392 = vadd.f32 %v368, %v384
      %v393 = vadd.f32 %v369, %v385
      %v394 = vadd.f32 %v370, %v386
      %v395 = vadd.f32 %v371, %v387
      %v396 = vadd.f32 %v372, %v388
      %v397 = vadd.f32 %v373, %v389
      %v398 = vadd.f32 %v374, %v390
      %v399 = vadd.f32 %v375, %v391
      %s400 = scalar_lea.vmem %s1, 4
      %v401 = vld [vmem:[%s400] sm:$0x1]
      %v403 = vlaneseq
      %v404 = vshrl.u32 %v403, 7
      %v405 = vsub.s32 0, %v404
      %v406 = vrot.slane %v401, %v405
      %v408 = vmul.f32 %v173, %v406
      %v409 = vmul.f32 %v174, %v406
      %v410 = vmul.f32 %v175, %v406
      %v411 = vmul.f32 %v176, %v406
      %v412 = vmul.f32 %v177, %v406
      %v413 = vmul.f32 %v178, %v406
      %v414 = vmul.f32 %v179, %v406
      %v415 = vmul.f32 %v180, %v406
      %v416 = vmul.f32 %v181, %v406
      %v417 = vmul.f32 %v182, %v406
      %v418 = vmul.f32 %v183, %v406
      %v419 = vmul.f32 %v184, %v406
      %v420 = vmul.f32 %v185, %v406
      %v421 = vmul.f32 %v186, %v406
      %v422 = vmul.f32 %v187, %v406
      %v423 = vmul.f32 %v188, %v406
      %v440 = vrot.slane %v408, 1
      %v441 = vrot.slane %v409, 1
      %v442 = vsel %vm254, %v440, %v441
      %v443 = vrot.slane %v410, 1
      %v444 = vrot.slane %v411, 1
      %v445 = vsel %vm254, %v443, %v444
      %v446 = vrot.slane %v412, 1
      %v447 = vrot.slane %v413, 1
      %v448 = vsel %vm254, %v446, %v447
      %v449 = vrot.slane %v414, 1
      %v450 = vrot.slane %v415, 1
      %v451 = vsel %vm254, %v449, %v450
      %v452 = vrot.slane %v416, 1
      %v453 = vrot.slane %v417, 1
      %v454 = vsel %vm254, %v452, %v453
      %v455 = vrot.slane %v418, 1
      %v456 = vrot.slane %v419, 1
      %v457 = vsel %vm254, %v455, %v456
      %v458 = vrot.slane %v420, 1
      %v459 = vrot.slane %v421, 1
      %v460 = vsel %vm254, %v458, %v459
      %v461 = vrot.slane %v422, 1
      %v462 = vrot.slane %v423, 1
      %v463 = vsel %vm254, %v461, %v462
      %v472 = vadd.f32 %v392, %v442
      %v473 = vadd.f32 %v393, %v445
      %v474 = vadd.f32 %v394, %v448
      %v475 = vadd.f32 %v395, %v451
      %v476 = vadd.f32 %v396, %v454
      %v477 = vadd.f32 %v397, %v457
      %v478 = vadd.f32 %v398, %v460
      %v479 = vadd.f32 %v399, %v463
      %s480 = scalar_lea.vmem %s1, 5
      %v481 = vld [vmem:[%s480] sm:$0x1]
      %v483 = vlaneseq
      %v484 = vshrl.u32 %v483, 7
      %v485 = vsub.s32 0, %v484
      %v486 = vrot.slane %v481, %v485
      %v488 = vmul.f32 %v173, %v486
      %v489 = vmul.f32 %v174, %v486
      %v490 = vmul.f32 %v175, %v486
      %v491 = vmul.f32 %v176, %v486
      %v492 = vmul.f32 %v177, %v486
      %v493 = vmul.f32 %v178, %v486
      %v494 = vmul.f32 %v179, %v486
      %v495 = vmul.f32 %v180, %v486
      %v496 = vmul.f32 %v181, %v486
      %v497 = vmul.f32 %v182, %v486
      %v498 = vmul.f32 %v183, %v486
      %v499 = vmul.f32 %v184, %v486
      %v500 = vmul.f32 %v185, %v486
      %v501 = vmul.f32 %v186, %v486
      %v502 = vmul.f32 %v187, %v486
      %v503 = vmul.f32 %v188, %v486
      %v520 = vrot.slane %v488, 2
      %v521 = vrot.slane %v489, 2
      %v522 = vsel %vm335, %v520, %v521
      %v523 = vrot.slane %v490, 2
      %v524 = vrot.slane %v491, 2
      %v525 = vsel %vm335, %v523, %v524
      %v526 = vrot.slane %v492, 2
      %v527 = vrot.slane %v493, 2
      %v528 = vsel %vm335, %v526, %v527
      %v529 = vrot.slane %v494, 2
      %v530 = vrot.slane %v495, 2
      %v531 = vsel %vm335, %v529, %v530
      %v532 = vrot.slane %v496, 2
      %v533 = vrot.slane %v497, 2
      %v534 = vsel %vm335, %v532, %v533
      %v535 = vrot.slane %v498, 2
      %v536 = vrot.slane %v499, 2
      %v537 = vsel %vm335, %v535, %v536
      %v538 = vrot.slane %v500, 2
      %v539 = vrot.slane %v501, 2
      %v540 = vsel %vm335, %v538, %v539
      %v541 = vrot.slane %v502, 2
      %v542 = vrot.slane %v503, 2
      %v543 = vsel %vm335, %v541, %v542
      %v552 = vadd.f32 %v472, %v522
      %v553 = vadd.f32 %v473, %v525
      %v554 = vadd.f32 %v474, %v528
      %v555 = vadd.f32 %v475, %v531
      %v556 = vadd.f32 %v476, %v534
      %v557 = vadd.f32 %v477, %v537
      %v558 = vadd.f32 %v478, %v540
      %v559 = vadd.f32 %v479, %v543
      %s560 = scalar_lea.vmem %s1, 6
      %v561 = vld [vmem:[%s560] sm:$0x1]
      %v563 = vlaneseq
      %v564 = vshrl.u32 %v563, 7
      %v565 = vsub.s32 0, %v564
      %v566 = vrot.slane %v561, %v565
      %v568 = vmul.f32 %v175, %v566
      %v569 = vmul.f32 %v177, %v566
      %v570 = vmul.f32 %v179, %v566
      %v571 = vmul.f32 %v181, %v566
      %v572 = vmul.f32 %v183, %v566
      %v573 = vmul.f32 %v185, %v566
      %v574 = vmul.f32 %v187, %v566
      %v575 = vmul.f32 %v189, %v566
      %v576 = vadd.f32 %v552, %v568
      %v577 = vadd.f32 %v553, %v569
      %v578 = vadd.f32 %v554, %v570
      %v579 = vadd.f32 %v555, %v571
      %v580 = vadd.f32 %v556, %v572
      %v581 = vadd.f32 %v557, %v573
      %v582 = vadd.f32 %v558, %v574
      %v583 = vadd.f32 %v559, %v575
      %s584 = scalar_lea.vmem %s1, 7
      %v585 = vld [vmem:[%s584] sm:$0x1]
      %v587 = vlaneseq
      %v588 = vshrl.u32 %v587, 7
      %v589 = vsub.s32 0, %v588
      %v590 = vrot.slane %v585, %v589
      %v592 = vmul.f32 %v175, %v590
      %v593 = vmul.f32 %v176, %v590
      %v594 = vmul.f32 %v177, %v590
      %v595 = vmul.f32 %v178, %v590
      %v596 = vmul.f32 %v179, %v590
      %v597 = vmul.f32 %v180, %v590
      %v598 = vmul.f32 %v181, %v590
      %v599 = vmul.f32 %v182, %v590
      %v600 = vmul.f32 %v183, %v590
      %v601 = vmul.f32 %v184, %v590
      %v602 = vmul.f32 %v185, %v590
      %v603 = vmul.f32 %v186, %v590
      %v604 = vmul.f32 %v187, %v590
      %v605 = vmul.f32 %v188, %v590
      %v606 = vmul.f32 %v189, %v590
      %v607 = vmul.f32 %v190, %v590
      %v624 = vrot.slane %v592, 1
      %v625 = vrot.slane %v593, 1
      %v626 = vsel %vm254, %v624, %v625
      %v627 = vrot.slane %v594, 1
      %v628 = vrot.slane %v595, 1
      %v629 = vsel %vm254, %v627, %v628
      %v630 = vrot.slane %v596, 1
      %v631 = vrot.slane %v597, 1
      %v632 = vsel %vm254, %v630, %v631
      %v633 = vrot.slane %v598, 1
      %v634 = vrot.slane %v599, 1
      %v635 = vsel %vm254, %v633, %v634
      %v636 = vrot.slane %v600, 1
      %v637 = vrot.slane %v601, 1
      %v638 = vsel %vm254, %v636, %v637
      %v639 = vrot.slane %v602, 1
      %v640 = vrot.slane %v603, 1
      %v641 = vsel %vm254, %v639, %v640
      %v642 = vrot.slane %v604, 1
      %v643 = vrot.slane %v605, 1
      %v644 = vsel %vm254, %v642, %v643
      %v645 = vrot.slane %v606, 1
      %v646 = vrot.slane %v607, 1
      %v647 = vsel %vm254, %v645, %v646
      %v656 = vadd.f32 %v576, %v626
      %v657 = vadd.f32 %v577, %v629
      %v658 = vadd.f32 %v578, %v632
      %v659 = vadd.f32 %v579, %v635
      %v660 = vadd.f32 %v580, %v638
      %v661 = vadd.f32 %v581, %v641
      %v662 = vadd.f32 %v582, %v644
      %v663 = vadd.f32 %v583, %v647
      %s664 = scalar_lea.vmem %s1, 8
      %v665 = vld [vmem:[%s664] sm:$0x1]
      %v667 = vlaneseq
      %v668 = vshrl.u32 %v667, 7
      %v669 = vsub.s32 0, %v668
      %v670 = vrot.slane %v665, %v669
      %v672 = vmul.f32 %v175, %v670
      %v673 = vmul.f32 %v176, %v670
      %v674 = vmul.f32 %v177, %v670
      %v675 = vmul.f32 %v178, %v670
      %v676 = vmul.f32 %v179, %v670
      %v677 = vmul.f32 %v180, %v670
      %v678 = vmul.f32 %v181, %v670
      %v679 = vmul.f32 %v182, %v670
      %v680 = vmul.f32 %v183, %v670
      %v681 = vmul.f32 %v184, %v670
      %v682 = vmul.f32 %v185, %v670
      %v683 = vmul.f32 %v186, %v670
      %v684 = vmul.f32 %v187, %v670
      %v685 = vmul.f32 %v188, %v670
      %v686 = vmul.f32 %v189, %v670
      %v687 = vmul.f32 %v190, %v670
      %v704 = vrot.slane %v672, 2
      %v705 = vrot.slane %v673, 2
      %v706 = vsel %vm335, %v704, %v705
      %v707 = vrot.slane %v674, 2
      %v708 = vrot.slane %v675, 2
      %v709 = vsel %vm335, %v707, %v708
      %v710 = vrot.slane %v676, 2
      %v711 = vrot.slane %v677, 2
      %v712 = vsel %vm335, %v710, %v711
      %v713 = vrot.slane %v678, 2
      %v714 = vrot.slane %v679, 2
      %v715 = vsel %vm335, %v713, %v714
      %v716 = vrot.slane %v680, 2
      %v717 = vrot.slane %v681, 2
      %v718 = vsel %vm335, %v716, %v717
      %v719 = vrot.slane %v682, 2
      %v720 = vrot.slane %v683, 2
      %v721 = vsel %vm335, %v719, %v720
      %v722 = vrot.slane %v684, 2
      %v723 = vrot.slane %v685, 2
      %v724 = vsel %vm335, %v722, %v723
      %v725 = vrot.slane %v686, 2
      %v726 = vrot.slane %v687, 2
      %v727 = vsel %vm335, %v725, %v726
      %v736 = vadd.f32 %v656, %v706
      %v737 = vadd.f32 %v657, %v709
      %v738 = vadd.f32 %v658, %v712
      %v739 = vadd.f32 %v659, %v715
      %v740 = vadd.f32 %v660, %v718
      %v741 = vadd.f32 %v661, %v721
      %v742 = vadd.f32 %v662, %v724
      %v743 = vadd.f32 %v663, %v727
      %v744 = vld [vmem:[%s2] sm:$0x1]
      %v746 = vlaneseq
      %v747 = vshrl.u32 %v746, 7
      %v748 = vsub.s32 0, %v747
      %v749 = vrot.slane %v744, %v748
      %v751 = vadd.f32 %v736, %v749
      %v752 = vadd.f32 %v737, %v749
      %v753 = vadd.f32 %v738, %v749
      %v754 = vadd.f32 %v739, %v749
      %v755 = vadd.f32 %v740, %v749
      %v756 = vadd.f32 %v741, %v749
      %v757 = vadd.f32 %v742, %v749
      %v758 = vadd.f32 %v743, %v749
      %v759 = vmul.f32 %v751, 0.5
      %v760 = vmul.f32 %v752, 0.5
      %v761 = vmul.f32 %v753, 0.5
      %v762 = vmul.f32 %v754, 0.5
      %v763 = vmul.f32 %v755, 0.5
      %v764 = vmul.f32 %v756, 0.5
      %v765 = vmul.f32 %v757, 0.5
      %v766 = vmul.f32 %v758, 0.5
      %v767 = vmul.f32 %v751, 0.70710677
      %v768 = vmul.f32 %v752, 0.70710677
      %v769 = vmul.f32 %v753, 0.70710677
      %v770 = vmul.f32 %v754, 0.70710677
      %v771 = vmul.f32 %v755, 0.70710677
      %v772 = vmul.f32 %v756, 0.70710677
      %v773 = vmul.f32 %v757, 0.70710677
      %v774 = vmul.f32 %v758, 0.70710677
      %v775 = verf.f32.pop %v767
      %v776 = verf.f32.pop %v768
      %v777 = verf.f32.pop %v769
      %v778 = verf.f32.pop %v770
      %v779 = verf.f32.pop %v771
      %v780 = verf.f32.pop %v772
      %v781 = verf.f32.pop %v773
      %v782 = verf.f32.pop %v774
      %v783 = vadd.f32 %v775, 1.0
      %v784 = vadd.f32 %v776, 1.0
      %v785 = vadd.f32 %v777, 1.0
      %v786 = vadd.f32 %v778, 1.0
      %v787 = vadd.f32 %v779, 1.0
      %v788 = vadd.f32 %v780, 1.0
      %v789 = vadd.f32 %v781, 1.0
      %v790 = vadd.f32 %v782, 1.0
      %v791 = vmul.f32 %v759, %v783
      %v792 = vmul.f32 %v760, %v784
      %v793 = vmul.f32 %v761, %v785
      %v794 = vmul.f32 %v762, %v786
      %v795 = vmul.f32 %v763, %v787
      %v796 = vmul.f32 %v764, %v788
      %v797 = vmul.f32 %v765, %v789
      %v798 = vmul.f32 %v766, %v790
      %799 = vst [vmem:[%s170] sm:$0xff] %v791
      %800 = vst [vmem:[%s170 + $0x8] sm:$0xff] %v792
      %801 = vst [vmem:[%s170 + $0x10] sm:$0xff] %v793
      %802 = vst [vmem:[%s170 + $0x18] sm:$0xff] %v794
      %803 = vst [vmem:[%s170 + $0x20] sm:$0xff] %v795
      %804 = vst [vmem:[%s170 + $0x28] sm:$0xff] %v796
      %805 = vst [vmem:[%s170 + $0x30] sm:$0xff] %v797
      %806 = vst [vmem:[%s170 + $0x38] sm:$0xff] %v798
      %p807 = scmp.lt.s32.totalorder %s14, 1
      %s808 = scalar_select %p807, %s14, 1
      %s809 = smul.addr %s808, 8
      %s810 = smul.addr %s809, 8
      %s811 = scalar_lea.vmem %s3, %s810
      // Predicated region
      $region33: #{ed_forward.27} parent=31 // pred_check
        %p812 = pneg %p100
      $region34: #{ed_forward.27} parent=31 // pred_check_branch
        %814 = sbr.rel (%p812) target = $region36
      $region35: #{ed_forward.27} parent=31 // pred_region
        _
      $region36: #{ed_forward.27} parent=31 // pred_fallthru
        _
    $region32: #{ed_forward.27} parent=5 // pred_fallthru
      _
    %p815 = scmp.le.s32.totalorder 2, %s9
    // Predicated region
    $region37: #{ed_forward.27} parent=5 // pred_check
      %p816 = pneg %p815
    $region38: #{ed_forward.27} parent=5 // pred_check_branch
      %818 = sbr.rel (%p816) target = $region40
    $region39: #{ed_forward.27} parent=5 // pred_region
      %s819 = ssub.s32 %s9, 2
      // Predicated region
      $region41: #{ed_forward.27} parent=39 // pred_check
        %p820 = pneg %p106
      $region42: #{ed_forward.27} parent=39 // pred_check_branch
        %822 = sbr.rel (%p820) target = $region44
      $region43: #{ed_forward.27} parent=39 // pred_region
        %p823 = scmp.lt.s32.totalorder %s15, 1
        %s824 = scalar_select %p823, %s15, 1
        %s825 = smul.addr %s824, 8
        %s826 = smul.addr %s825, 8
        %s827 = scalar_lea.vmem %s3, %s826
      $region44: #{ed_forward.27} parent=39 // pred_fallthru
        _
    $region40: #{ed_forward.27} parent=5 // pred_fallthru
      _
  $region6: #{ed_forward.27} parent=0 // loop_footer
    %s13 = sadd.s32 1, %s9
  $region7: #{ed_forward.27} parent=0 // loop_footer_branch
    %8 = sbr.rel target = $region3
  $region8: #{ed_forward.27} parent=0 // loop_exit
    _

// kernel: ed_forward.28
$region0: #{ed_forward.28}
  #allocation0 [shape = 'u32[]', space=smem, size = 0x4, offset = 0x4, fixed_abs, tag = 'smem constant byte address 0x4 - core index']
  #allocation1 [shape = 'u32[144,128]{1,0:T(1,128)}', space=vmem, size = 0x12000, scoped, tag = 'internal scratch']
  %s0 = inlined_call_operand.vmem [shape: f32[2,64,128], index: 0, kind: input, shape index: {}]
  %s1 = inlined_call_operand.vmem [shape: f32[2,1,128], index: 1, kind: input, shape index: {}]
  %s2 = inlined_call_operand.vmem [shape: f32[1,128], index: 2, kind: input, shape index: {}]
  %s3 = inlined_call_operand.vmem [shape: f32[2,64,32], index: 3, kind: input, shape index: {}]
  %s4 = inlined_call_operand.vmem [shape: f32[128,32], index: 4, kind: input, shape index: {}]
  %s5 = inlined_call_operand.vmem [shape: f32[1,32], index: 5, kind: input, shape index: {}]
  %s6 = inlined_call_operand.vmem [shape: f32[1,32], index: 6, kind: input, shape index: {}]
  %s7 = inlined_call_operand.vmem [shape: f32[1,32], index: 7, kind: input, shape index: {}]
  %s8 = inlined_call_operand.vmem [shape: f32[2,64,32], index: 8, kind: output, shape index: {}]
  %s9 = sld [smem:[#allocation0]]
  $region65: #{ed_forward.28} parent=0
    _
  %s11 = ssub.s32 1, %s9
  %s12 = scalar_select 0, %s11, %s9
  loop: start=0, step=1, limit=4
  $region2: #{ed_forward.28} parent=0 // loop_pre_header
    _
  $region3: #{ed_forward.28} parent=0 // loop_header
    %s14 = sphi 0, %s18
    %p15 = scmp.ge.s32.totalorder %s14, 4
    %s24 = sphi 0, %s26
    %s27 = sphi 0, %s24
    %s28 = sphi 0, %s27
    %s44 = sphi 0, %s28
    %s50 = sphi 0, %s52
    %s53 = sphi 0, %s50
    %s54 = sphi 0, %s53
    %s70 = sphi 0, %s54
    %s74 = sphi 0, %s74
    %s76 = sphi 0, %s74
    %s77 = sphi 0, %s76
    %s91 = sphi 0, %s77
    %s97 = sphi 0, %s99
    %s100 = sphi 0, %s97
    %s101 = sphi 0, %s100
    %s117 = sphi 0, %s101
    %s121 = sphi 0, %s121
    %s123 = sphi 0, %s121
    %s124 = sphi 0, %s123
    %s138 = sphi 0, %s124
    %s142 = sphi 0, %s142
    %s144 = sphi 0, %s142
    %s145 = sphi 0, %s144
    %s159 = sphi 0, %s145
    %s163 = sphi 0, %s163
    %s165 = sphi 0, %s163
    %s166 = sphi 0, %s165
    %s180 = sphi 0, %s166
    %s184 = sphi 0, %s184
    %s186 = sphi 0, %s184
    %s187 = sphi 0, %s186
    %s201 = sphi 0, %s187
    %s207 = sphi 0, %s209
    %s210 = sphi 0, %s207
    %s211 = sphi 0, %s210
    %s227 = sphi 0, %s211
  $region4: #{ed_forward.28} parent=0 // loop_header_branch
    %17 = sbr.rel (%p15) target = $region8
  $region5: #{ed_forward.28} parent=0 // loop_body
    %s19 = ssub.s32 %s14, 1
    %s20 = ssub.s32 %s14, 2
    %s21 = sadd.s32 %s14, 1
    %s22 = ssub.s32 %s14, %s21
    %p23 = scmp.eq.s32.totalorder %s22, 0
    %s25 = sadd.s32 %s24, 1
    %s26 = scalar_select %p23, %s24, %s25
    %p29 = pneg %p23
    %p30 = scmp.eq.s32.totalorder %s14, 1
    %p31 = por %p29, %p30
    %p32 = scmp.ne.s32.totalorder %s24, %s27
    %p33 = scmp.eq.s32.totalorder %s14, 0
    %p34 = por %p32, %p33
    %p35 = scmp.ne.s32.totalorder %s24, %s27
    %p36 = scmp.eq.s32.totalorder %s19, 1
    %p37 = por %p35, %p36
    %p38 = scmp.ne.s32.totalorder %s27, %s28
    %p39 = scmp.eq.s32.totalorder %s19, 0
    %p40 = por %p38, %p39
    %p41 = scmp.ne.s32.totalorder %s27, %s28
    %p42 = scmp.eq.s32.totalorder %s20, 1
    %p43 = por %p41, %p42
    %p45 = scmp.ne.s32.totalorder %s28, %s44
    %p46 = scmp.eq.s32.totalorder %s20, 0
    %p47 = por %p45, %p46
    %s48 = ssub.s32 %s14, %s21
    %p49 = scmp.eq.s32.totalorder %s48, 0
    %s51 = sadd.s32 %s50, 1
    %s52 = scalar_select %p49, %s50, %s51
    %p55 = pneg %p49
    %p56 = scmp.eq.s32.totalorder %s14, 1
    %p57 = por %p55, %p56
    %p58 = scmp.ne.s32.totalorder %s50, %s53
    %p59 = scmp.eq.s32.totalorder %s14, 0
    %p60 = por %p58, %p59
    %p61 = scmp.ne.s32.totalorder %s50, %s53
    %p62 = scmp.eq.s32.totalorder %s19, 1
    %p63 = por %p61, %p62
    %p64 = scmp.ne.s32.totalorder %s53, %s54
    %p65 = scmp.eq.s32.totalorder %s19, 0
    %p66 = por %p64, %p65
    %p67 = scmp.ne.s32.totalorder %s53, %s54
    %p68 = scmp.eq.s32.totalorder %s20, 1
    %p69 = por %p67, %p68
    %p71 = scmp.ne.s32.totalorder %s54, %s70
    %p72 = scmp.eq.s32.totalorder %s20, 0
    %p73 = por %p71, %p72
    %s75 = sadd.s32 %s74, 1
    %p78 = scmp.eq.s32.totalorder %s14, 1
    %p79 = scmp.ne.s32.totalorder %s74, %s76
    %p80 = scmp.eq.s32.totalorder %s14, 0
    %p81 = por %p79, %p80
    %p82 = scmp.ne.s32.totalorder %s74, %s76
    %p83 = scmp.eq.s32.totalorder %s19, 1
    %p84 = por %p82, %p83
    %p85 = scmp.ne.s32.totalorder %s76, %s77
    %p86 = scmp.eq.s32.totalorder %s19, 0
    %p87 = por %p85, %p86
    %p88 = scmp.ne.s32.totalorder %s76, %s77
    %p89 = scmp.eq.s32.totalorder %s20, 1
    %p90 = por %p88, %p89
    %p92 = scmp.ne.s32.totalorder %s77, %s91
    %p93 = scmp.eq.s32.totalorder %s20, 0
    %p94 = por %p92, %p93
    %s95 = ssub.s32 %s14, %s21
    %p96 = scmp.eq.s32.totalorder %s95, 0
    %s98 = sadd.s32 %s97, 1
    %s99 = scalar_select %p96, %s97, %s98
    %p102 = pneg %p96
    %p103 = scmp.eq.s32.totalorder %s14, 1
    %p104 = por %p102, %p103
    %p105 = scmp.ne.s32.totalorder %s97, %s100
    %p106 = scmp.eq.s32.totalorder %s14, 0
    %p107 = por %p105, %p106
    %p108 = scmp.ne.s32.totalorder %s97, %s100
    %p109 = scmp.eq.s32.totalorder %s19, 1
    %p110 = por %p108, %p109
    %p111 = scmp.ne.s32.totalorder %s100, %s101
    %p112 = scmp.eq.s32.totalorder %s19, 0
    %p113 = por %p111, %p112
    %p114 = scmp.ne.s32.totalorder %s100, %s101
    %p115 = scmp.eq.s32.totalorder %s20, 1
    %p116 = por %p114, %p115
    %p118 = scmp.ne.s32.totalorder %s101, %s117
    %p119 = scmp.eq.s32.totalorder %s20, 0
    %p120 = por %p118, %p119
    %s122 = sadd.s32 %s121, 1
    %p125 = scmp.eq.s32.totalorder %s14, 1
    %p126 = scmp.ne.s32.totalorder %s121, %s123
    %p127 = scmp.eq.s32.totalorder %s14, 0
    %p128 = por %p126, %p127
    %p129 = scmp.ne.s32.totalorder %s121, %s123
    %p130 = scmp.eq.s32.totalorder %s19, 1
    %p131 = por %p129, %p130
    %p132 = scmp.ne.s32.totalorder %s123, %s124
    %p133 = scmp.eq.s32.totalorder %s19, 0
    %p134 = por %p132, %p133
    %p135 = scmp.ne.s32.totalorder %s123, %s124
    %p136 = scmp.eq.s32.totalorder %s20, 1
    %p137 = por %p135, %p136
    %p139 = scmp.ne.s32.totalorder %s124, %s138
    %p140 = scmp.eq.s32.totalorder %s20, 0
    %p141 = por %p139, %p140
    %s143 = sadd.s32 %s142, 1
    %p146 = scmp.eq.s32.totalorder %s14, 1
    %p147 = scmp.ne.s32.totalorder %s142, %s144
    %p148 = scmp.eq.s32.totalorder %s14, 0
    %p149 = por %p147, %p148
    %p150 = scmp.ne.s32.totalorder %s142, %s144
    %p151 = scmp.eq.s32.totalorder %s19, 1
    %p152 = por %p150, %p151
    %p153 = scmp.ne.s32.totalorder %s144, %s145
    %p154 = scmp.eq.s32.totalorder %s19, 0
    %p155 = por %p153, %p154
    %p156 = scmp.ne.s32.totalorder %s144, %s145
    %p157 = scmp.eq.s32.totalorder %s20, 1
    %p158 = por %p156, %p157
    %p160 = scmp.ne.s32.totalorder %s145, %s159
    %p161 = scmp.eq.s32.totalorder %s20, 0
    %p162 = por %p160, %p161
    %s164 = sadd.s32 %s163, 1
    %p167 = scmp.eq.s32.totalorder %s14, 1
    %p168 = scmp.ne.s32.totalorder %s163, %s165
    %p169 = scmp.eq.s32.totalorder %s14, 0
    %p170 = por %p168, %p169
    %p171 = scmp.ne.s32.totalorder %s163, %s165
    %p172 = scmp.eq.s32.totalorder %s19, 1
    %p173 = por %p171, %p172
    %p174 = scmp.ne.s32.totalorder %s165, %s166
    %p175 = scmp.eq.s32.totalorder %s19, 0
    %p176 = por %p174, %p175
    %p177 = scmp.ne.s32.totalorder %s165, %s166
    %p178 = scmp.eq.s32.totalorder %s20, 1
    %p179 = por %p177, %p178
    %p181 = scmp.ne.s32.totalorder %s166, %s180
    %p182 = scmp.eq.s32.totalorder %s20, 0
    %p183 = por %p181, %p182
    %s185 = sadd.s32 %s184, 1
    %p188 = scmp.eq.s32.totalorder %s14, 1
    %p189 = scmp.ne.s32.totalorder %s184, %s186
    %p190 = scmp.eq.s32.totalorder %s14, 0
    %p191 = por %p189, %p190
    %p192 = scmp.ne.s32.totalorder %s184, %s186
    %p193 = scmp.eq.s32.totalorder %s19, 1
    %p194 = por %p192, %p193
    %p195 = scmp.ne.s32.totalorder %s186, %s187
    %p196 = scmp.eq.s32.totalorder %s19, 0
    %p197 = por %p195, %p196
    %p198 = scmp.ne.s32.totalorder %s186, %s187
    %p199 = scmp.eq.s32.totalorder %s20, 1
    %p200 = por %p198, %p199
    %p202 = scmp.ne.s32.totalorder %s187, %s201
    %p203 = scmp.eq.s32.totalorder %s20, 0
    %p204 = por %p202, %p203
    %s205 = ssub.s32 %s14, %s21
    %p206 = scmp.eq.s32.totalorder %s205, 0
    %s208 = sadd.s32 %s207, 1
    %s209 = scalar_select %p206, %s207, %s208
    %p212 = pneg %p206
    %p213 = scmp.eq.s32.totalorder %s14, 1
    %p214 = por %p212, %p213
    %p215 = scmp.ne.s32.totalorder %s207, %s210
    %p216 = scmp.eq.s32.totalorder %s14, 0
    %p217 = por %p215, %p216
    %p218 = scmp.ne.s32.totalorder %s207, %s210
    %p219 = scmp.eq.s32.totalorder %s19, 1
    %p220 = por %p218, %p219
    %p221 = scmp.ne.s32.totalorder %s210, %s211
    %p222 = scmp.eq.s32.totalorder %s19, 0
    %p223 = por %p221, %p222
    %p224 = scmp.ne.s32.totalorder %s210, %s211
    %p225 = scmp.eq.s32.totalorder %s20, 1
    %p226 = por %p224, %p225
    %p228 = scmp.ne.s32.totalorder %s211, %s227
    %p229 = scmp.eq.s32.totalorder %s20, 0
    %p230 = por %p228, %p229
    %p231 = scmp.le.s32.totalorder 1, %s14
    %p232 = scmp.lt.s32.totalorder %s14, 3
    %p233 = pnand %p231, %p232
    %p234 = pneg %p233
    // Predicated region
    $region9: #{ed_forward.28} parent=5 // pred_check
      _
    $region10: #{ed_forward.28} parent=5 // pred_check_branch
      %236 = sbr.rel (%p233) target = $region12
    $region11: #{ed_forward.28} parent=5 // pred_region
      %s237 = ssub.s32 %s14, 1
      // Predicated region
      $region13: #{ed_forward.28} parent=11 // pred_check
        %p238 = pneg %p87
      $region14: #{ed_forward.28} parent=11 // pred_check_branch
        %240 = sbr.rel (%p238) target = $region16
      $region15: #{ed_forward.28} parent=11 // pred_region
        _
      $region16: #{ed_forward.28} parent=11 // pred_fallthru
        _
      // Predicated region
      $region17: #{ed_forward.28} parent=11 // pred_check
        %p241 = pneg %p134
      $region18: #{ed_forward.28} parent=11 // pred_check_branch
        %243 = sbr.rel (%p241) target = $region20
      $region19: #{ed_forward.28} parent=11 // pred_region
        _
      $region20: #{ed_forward.28} parent=11 // pred_fallthru
        _
      // Predicated region
      $region21: #{ed_forward.28} parent=11 // pred_check
        %p244 = pneg %p155
      $region22: #{ed_forward.28} parent=11 // pred_check_branch
        %246 = sbr.rel (%p244) target = $region24
      $region23: #{ed_forward.28} parent=11 // pred_region
        _
      $region24: #{ed_forward.28} parent=11 // pred_fallthru
        _
      // Predicated region
      $region25: #{ed_forward.28} parent=11 // pred_check
        %p247 = pneg %p176
      $region26: #{ed_forward.28} parent=11 // pred_check_branch
        %249 = sbr.rel (%p247) target = $region28
      $region27: #{ed_forward.28} parent=11 // pred_region
        _
      $region28: #{ed_forward.28} parent=11 // pred_fallthru
        _
      // Predicated region
      $region29: #{ed_forward.28} parent=11 // pred_check
        %p250 = pneg %p197
      $region30: #{ed_forward.28} parent=11 // pred_check_branch
        %252 = sbr.rel (%p250) target = $region32
      $region31: #{ed_forward.28} parent=11 // pred_region
        _
      $region32: #{ed_forward.28} parent=11 // pred_fallthru
        _
    $region12: #{ed_forward.28} parent=5 // pred_fallthru
      _
    %p253 = scmp.lt.s32.totalorder %s14, 2
    // Predicated region
    $region33: #{ed_forward.28} parent=5 // pred_check
      %p254 = pneg %p253
    $region34: #{ed_forward.28} parent=5 // pred_check_branch
      %256 = sbr.rel (%p254) target = $region36
    $region35: #{ed_forward.28} parent=5 // pred_region
      // Predicated region
      $region37: #{ed_forward.28} parent=35 // pred_check
        %p257 = pneg %p34
      $region38: #{ed_forward.28} parent=35 // pred_check_branch
        %259 = sbr.rel (%p257) target = $region40
      $region39: #{ed_forward.28} parent=35 // pred_region
        %p260 = scmp.lt.s32.totalorder %s14, 1
        %s261 = scalar_select %p260, %s14, 1
        %s262 = smul.addr %s261, 8
        %s263 = smul.addr %s262, 8
        %s264 = scalar_lea.vmem %s0, %s263
      $region40: #{ed_forward.28} parent=35 // pred_fallthru
        _
      // Predicated region
      $region41: #{ed_forward.28} parent=35 // pred_check
        %p265 = pneg %p60
      $region42: #{ed_forward.28} parent=35 // pred_check_branch
        %267 = sbr.rel (%p265) target = $region44
      $region43: #{ed_forward.28} parent=35 // pred_region
        %p268 = scmp.lt.s32.totalorder %s14, 1
        %s269 = scalar_select %p268, %s14, 1
        %s270 = scalar_lea.vmem %s1, %s269
      $region44: #{ed_forward.28} parent=35 // pred_fallthru
        _
      // Predicated region
      $region45: #{ed_forward.28} parent=35 // pred_check
        %p271 = pneg %p107
      $region46: #{ed_forward.28} parent=35 // pred_check_branch
        %273 = sbr.rel (%p271) target = $region48
      $region47: #{ed_forward.28} parent=35 // pred_region
        %p274 = scmp.lt.s32.totalorder %s14, 1
        %s275 = scalar_select %p274, %s14, 1
        %s276 = smul.addr %s275, 8
        %s277 = smul.addr %s276, 8
        %s278 = scalar_lea.vmem %s3, %s277
      $region48: #{ed_forward.28} parent=35 // pred_fallthru
        _
    $region36: #{ed_forward.28} parent=5 // pred_fallthru
      _
    %p279 = scmp.le.s32.totalorder 1, %s14
    %p280 = scmp.lt.s32.totalorder %s14, 3
    %p281 = pnand %p279, %p280
    %p282 = pneg %p281
    // Predicated region
    $region49: #{ed_forward.28} parent=5 // pred_check
      _
    $region50: #{ed_forward.28} parent=5 // pred_check_branch
      %284 = sbr.rel (%p281) target = $region52
    $region51: #{ed_forward.28} parent=5 // pred_region
      %s285 = ssub.s32 %s14, 1
      %p286 = scmp.lt.s32.totalorder %s19, 1
      %s287 = scalar_select %p286, %s19, 1
      %s288 = smul.addr %s287, 8
      %s289 = smul.addr %s288, 8
      %s290 = scalar_lea.vmem %s0, %s289
      %p291 = pneg %p40
      %p292 = pneg %p37
      %p293 = scmp.lt.s32.totalorder %s19, 1
      %s294 = scalar_select %p293, %s19, 1
      %s295 = scalar_lea.vmem %s1, %s294
      %p296 = pneg %p66
      %p297 = pneg %p63
      %p298 = pneg %p87
      %p299 = pneg %p84
      %p300 = scmp.lt.s32.totalorder %s19, 1
      %s301 = scalar_select %p300, %s19, 1
      %s302 = smul.addr %s301, 8
      %s303 = smul.addr %s302, 8
      %s304 = scalar_lea.vmem %s3, %s303
      %p305 = pneg %p113
      %p306 = pneg %p110
      %p307 = pneg %p134
      %p308 = pneg %p131
      %p309 = pneg %p155
      %p310 = pneg %p152
      %p311 = pneg %p176
      %p312 = pneg %p173
      %p313 = pneg %p197
      %p314 = pneg %p194
      %p315 = pneg %p223
      %p316 = pneg %p220
      %p317 = scmp.lt.s32.totalorder %s19, 1
      %s318 = scalar_select %p317, %s19, 1
      %s319 = smul.addr %s318, 8
      %s320 = smul.addr %s319, 8
      %s321 = scalar_lea.vmem %s8, %s320
      %p322 = scmp.lt.s32.totalorder %s19, 1
      %s323 = scalar_select %p322, %s19, 1
      %s324 = smul.addr %s323, 8
      %s325 = smul.addr %s324, 8
      %s326 = scalar_lea.vmem %s0, %s325
      %p327 = scmp.lt.s32.totalorder %s19, 1
      %s328 = scalar_select %p327, %s19, 1
      %s329 = scalar_lea.vmem %s1, %s328
      %p330 = scmp.lt.s32.totalorder %s19, 1
      %s331 = scalar_select %p330, %s19, 1
      %s332 = smul.addr %s331, 8
      %s333 = smul.addr %s332, 8
      %s334 = scalar_lea.vmem %s3, %s333
      %p335 = scmp.lt.s32.totalorder %s19, 1
      %s336 = scalar_select %p335, %s19, 1
      %s337 = smul.addr %s336, 8
      %s338 = smul.addr %s337, 8
      %s339 = scalar_lea.vmem %s8, %s338
      %v340 = vld [vmem:[%s326] sm:$0xff]
      %v341 = vld [vmem:[%s326 + $0x8] sm:$0xff]
      %v342 = vld [vmem:[%s326 + $0x10] sm:$0xff]
      %v343 = vld [vmem:[%s326 + $0x18] sm:$0xff]
      %v344 = vld [vmem:[%s326 + $0x20] sm:$0xff]
      %v345 = vld [vmem:[%s326 + $0x28] sm:$0xff]
      %v346 = vld [vmem:[%s326 + $0x30] sm:$0xff]
      %v347 = vld [vmem:[%s326 + $0x38] sm:$0xff]
      %v348 = vld [vmem:[%s2] sm:$0x1]
      %v349 = vld [vmem:[%s329] sm:$0x1]
      %v350 = vmul.f32 %v348, %v349
      %v352 = vlaneseq
      %v353 = vshrl.u32 %v352, 7
      %v354 = vsub.s32 0, %v353
      %v355 = vrot.slane %v350, %v354
      %v357 = vadd.f32 %v340, %v355
      %v358 = vadd.f32 %v341, %v355
      %v359 = vadd.f32 %v342, %v355
      %v360 = vadd.f32 %v343, %v355
      %v361 = vadd.f32 %v344, %v355
      %v362 = vadd.f32 %v345, %v355
      %v363 = vadd.f32 %v346, %v355
      %v364 = vadd.f32 %v347, %v355
      %v365 = vld [vmem:[%s4] sm:$0xff]
      %v366 = vld [vmem:[%s4 + $0x8] sm:$0xff]
      %v367 = vld [vmem:[%s4 + $0x10] sm:$0xff]
      %v368 = vld [vmem:[%s4 + $0x18] sm:$0xff]
      %v369 = vld [vmem:[%s4 + $0x20] sm:$0xff]
      %v370 = vld [vmem:[%s4 + $0x28] sm:$0xff]
      %v371 = vld [vmem:[%s4 + $0x30] sm:$0xff]
      %v372 = vld [vmem:[%s4 + $0x38] sm:$0xff]
      %v373 = vld [vmem:[%s4 + $0x40] sm:$0xff]
      %v374 = vld [vmem:[%s4 + $0x48] sm:$0xff]
      %v375 = vld [vmem:[%s4 + $0x50] sm:$0xff]
      %v376 = vld [vmem:[%s4 + $0x58] sm:$0xff]
      %v377 = vld [vmem:[%s4 + $0x60] sm:$0xff]
      %v378 = vld [vmem:[%s4 + $0x68] sm:$0xff]
      %v379 = vld [vmem:[%s4 + $0x70] sm:$0xff]
      %v380 = vld [vmem:[%s4 + $0x78] sm:$0xff]
      %v381 = vld [vmem:[%s5] sm:$0x1]
      %v383 = vlaneseq
      %v384 = vshrl.u32 %v383, 7
      %v385 = vsub.s32 0, %v384
      %v386 = vrot.slane %v381, %v385
      %388 = vmatprep.subr.mxu0 0.0
      %389 = vmatpush1.msra.mxu0 %v380
      %390 = vmatprep.subr.mxu0 0.0
      %391 = vmatpush1.msra.mxu0 %v379
      %392 = vmatprep.subr.mxu0 0.0
      %393 = vmatpush1.msra.mxu0 %v378
      %394 = vmatprep.subr.mxu0 0.0
      %395 = vmatpush1.msra.mxu0 %v377
      %396 = vmatprep.subr.mxu0 0.0
      %397 = vmatpush1.msra.mxu0 %v376
      %398 = vmatprep.subr.mxu0 0.0
      %399 = vmatpush1.msra.mxu0 %v375
      %400 = vmatprep.subr.mxu0 0.0
      %401 = vmatpush1.msra.mxu0 %v374
      %402 = vmatprep.subr.mxu0 0.0
      %403 = vmatpush1.msra.mxu0 %v373
      %404 = vmatprep.subr.mxu0 0.0
      %405 = vmatpush1.msra.mxu0 %v372
      %406 = vmatprep.subr.mxu0 0.0
      %407 = vmatpush1.msra.mxu0 %v371
      %408 = vmatprep.subr.mxu0 0.0
      %409 = vmatpush1.msra.mxu0 %v370
      %410 = vmatprep.subr.mxu0 0.0
      %411 = vmatpush1.msra.mxu0 %v369
      %412 = vmatprep.subr.mxu0 0.0
      %413 = vmatpush1.msra.mxu0 %v368
      %414 = vmatprep.subr.mxu0 0.0
      %415 = vmatpush1.msra.mxu0 %v367
      %416 = vmatprep.subr.mxu0 0.0
      %417 = vmatpush1.msra.mxu0 %v366
      %418 = vmatprep.subr.mxu0 0.0
      %419 = vmatpush1.msra.mxu0 %v365
      %420 = vmatprep.subr.mxu0 0.0
      %421 = vmatpush2.msra.mxu0 0.0
      %422 = vmatprep.subr.mxu0 0.0
      %423 = vmatpush2.msra.mxu0 0.0
      %424 = vmatprep.subr.mxu0 0.0
      %425 = vmatpush2.msra.mxu0 0.0
      %426 = vmatprep.subr.mxu0 0.0
      %427 = vmatpush2.msra.mxu0 0.0
      %428 = vmatprep.subr.mxu0 0.0
      %429 = vmatpush2.msra.mxu0 0.0
      %430 = vmatprep.subr.mxu0 0.0
      %431 = vmatpush2.msra.mxu0 0.0
      %432 = vmatprep.subr.mxu0 0.0
      %433 = vmatpush2.msra.mxu0 0.0
      %434 = vmatprep.subr.mxu0 0.0
      %435 = vmatpush2.msra.mxu0 0.0
      %436 = vmatprep.subr.mxu0 0.0
      %437 = vmatpush2.msra.mxu0 0.0
      %438 = vmatprep.subr.mxu0 0.0
      %439 = vmatpush2.msra.mxu0 0.0
      %440 = vmatprep.subr.mxu0 0.0
      %441 = vmatpush2.msra.mxu0 0.0
      %442 = vmatprep.subr.mxu0 0.0
      %443 = vmatpush2.msra.mxu0 0.0
      %444 = vmatprep.subr.mxu0 0.0
      %445 = vmatpush2.msra.mxu0 0.0
      %446 = vmatprep.subr.mxu0 0.0
      %447 = vmatpush2.msra.mxu0 0.0
      %448 = vmatprep.subr.mxu0 0.0
      %449 = vmatpush2.msra.mxu0 0.0
      %450 = vmatprep.subr.mxu0 0.0
      %451 = vmatpush2.msra.mxu0 0.0
      %452 = vmatprep.mubr.f32.mxu0 0.0
      %453 = vmatmul.mubr.f32.gmra.mxu0 %v357
      %v454 = vpop.f32.mrf.mxu0
      %v455 = vadd.f32 %v386, %v454
      %v456 = vpop.f32.mrf.mxu0
      %457 = vmatprep.mubr.f32.mxu0 0.0
      %458 = vmatmul.mubr.f32.gmra.mxu0 %v358
      %v459 = vpop.f32.mrf.mxu0
      %v460 = vadd.f32 %v386, %v459
      %v461 = vpop.f32.mrf.mxu0
      %462 = vmatprep.mubr.f32.mxu0 0.0
      %463 = vmatmul.mubr.f32.gmra.mxu0 %v359
      %v464 = vpop.f32.mrf.mxu0
      %v465 = vadd.f32 %v386, %v464
      %v466 = vpop.f32.mrf.mxu0
      %467 = vmatprep.mubr.f32.mxu0 0.0
      %468 = vmatmul.mubr.f32.gmra.mxu0 %v360
      %v469 = vpop.f32.mrf.mxu0
      %v470 = vadd.f32 %v386, %v469
      %v471 = vpop.f32.mrf.mxu0
      %472 = vmatprep.mubr.f32.mxu0 0.0
      %473 = vmatmul.mubr.f32.gmra.mxu0 %v361
      %v474 = vpop.f32.mrf.mxu0
      %v475 = vadd.f32 %v386, %v474
      %v476 = vpop.f32.mrf.mxu0
      %477 = vmatprep.mubr.f32.mxu0 0.0
      %478 = vmatmul.mubr.f32.gmra.mxu0 %v362
      %v479 = vpop.f32.mrf.mxu0
      %v480 = vadd.f32 %v386, %v479
      %v481 = vpop.f32.mrf.mxu0
      %482 = vmatprep.mubr.f32.mxu0 0.0
      %483 = vmatmul.mubr.f32.gmra.mxu0 %v363
      %v484 = vpop.f32.mrf.mxu0
      %v485 = vadd.f32 %v386, %v484
      %v486 = vpop.f32.mrf.mxu0
      %487 = vmatprep.mubr.f32.mxu0 0.0
      %488 = vmatmul.mubr.f32.gmra.mxu0 %v364
      %v489 = vpop.f32.mrf.mxu0
      %v490 = vadd.f32 %v386, %v489
      %v491 = vpop.f32.mrf.mxu0
      %492 = vdwg.mxu0
      %v493 = vld [vmem:[%s334] sm:$0xff]
      %v494 = vld [vmem:[%s334 + $0x8] sm:$0xff]
      %v495 = vld [vmem:[%s334 + $0x10] sm:$0xff]
      %v496 = vld [vmem:[%s334 + $0x18] sm:$0xff]
      %v497 = vld [vmem:[%s334 + $0x20] sm:$0xff]
      %v498 = vld [vmem:[%s334 + $0x28] sm:$0xff]
      %v499 = vld [vmem:[%s334 + $0x30] sm:$0xff]
      %v500 = vld [vmem:[%s334 + $0x38] sm:$0xff]
      %v501 = vadd.f32 %v455, %v493
      %v502 = vadd.f32 %v460, %v494
      %v503 = vadd.f32 %v465, %v495
      %v504 = vadd.f32 %v470, %v496
      %v505 = vadd.f32 %v475, %v497
      %v506 = vadd.f32 %v480, %v498
      %v507 = vadd.f32 %v485, %v499
      %v508 = vadd.f32 %v490, %v500
      %vm509 = vcmask 261120
      %v510 = vsel %vm509, %v501, 0.0
      %511 = vadd.xlane.f32.xlu0 %v510
      %v512 = vpop.xlane.xlu0 %511
      %v513 = vsel %vm509, %v502, 0.0
      %514 = vadd.xlane.f32.xlu0 %v513
      %v515 = vpop.xlane.xlu0 %514
      %v516 = vsel %vm509, %v503, 0.0
      %517 = vadd.xlane.f32.xlu0 %v516
      %v518 = vpop.xlane.xlu0 %517
      %v519 = vsel %vm509, %v504, 0.0
      %520 = vadd.xlane.f32.xlu0 %v519
      %v521 = vpop.xlane.xlu0 %520
      %v522 = vsel %vm509, %v505, 0.0
      %523 = vadd.xlane.f32.xlu0 %v522
      %v524 = vpop.xlane.xlu0 %523
      %v525 = vsel %vm509, %v506, 0.0
      %526 = vadd.xlane.f32.xlu0 %v525
      %v527 = vpop.xlane.xlu0 %526
      %v528 = vsel %vm509, %v507, 0.0
      %529 = vadd.xlane.f32.xlu0 %v528
      %v530 = vpop.xlane.xlu0 %529
      %v531 = vsel %vm509, %v508, 0.0
      %532 = vadd.xlane.f32.xlu0 %v531
      %v533 = vpop.xlane.xlu0 %532
      %v534 = vrcp.pop 32.0
      %v535 = vmul.f32 %v512, %v534
      %v536 = vmul.f32 %v515, %v534
      %v537 = vmul.f32 %v518, %v534
      %v538 = vmul.f32 %v521, %v534
      %v539 = vmul.f32 %v524, %v534
      %v540 = vmul.f32 %v527, %v534
      %v541 = vmul.f32 %v530, %v534
      %v542 = vmul.f32 %v533, %v534
      %v543 = vsub.f32 %v501, %v535
      %v544 = vsub.f32 %v502, %v536
      %v545 = vsub.f32 %v503, %v537
      %v546 = vsub.f32 %v504, %v538
      %v547 = vsub.f32 %v505, %v539
      %v548 = vsub.f32 %v506, %v540
      %v549 = vsub.f32 %v507, %v541
      %v550 = vsub.f32 %v508, %v542
      %v551 = vmul.f32 %v543, %v543
      %v552 = vmul.f32 %v544, %v544
      %v553 = vmul.f32 %v545, %v545
      %v554 = vmul.f32 %v546, %v546
      %v555 = vmul.f32 %v547, %v547
      %v556 = vmul.f32 %v548, %v548
      %v557 = vmul.f32 %v549, %v549
      %v558 = vmul.f32 %v550, %v550
      %v559 = vsel %vm509, %v551, 0.0
      %560 = vadd.xlane.f32.xlu0 %v559
      %v561 = vpop.xlane.xlu0 %560
      %v562 = vsel %vm509, %v552, 0.0
      %563 = vadd.xlane.f32.xlu0 %v562
      %v564 = vpop.xlane.xlu0 %563
      %v565 = vsel %vm509, %v553, 0.0
      %566 = vadd.xlane.f32.xlu0 %v565
      %v567 = vpop.xlane.xlu0 %566
      %v568 = vsel %vm509, %v554, 0.0
      %569 = vadd.xlane.f32.xlu0 %v568
      %v570 = vpop.xlane.xlu0 %569
      %v571 = vsel %vm509, %v555, 0.0
      %572 = vadd.xlane.f32.xlu0 %v571
      %v573 = vpop.xlane.xlu0 %572
      %v574 = vsel %vm509, %v556, 0.0
      %575 = vadd.xlane.f32.xlu0 %v574
      %v576 = vpop.xlane.xlu0 %575
      %v577 = vsel %vm509, %v557, 0.0
      %578 = vadd.xlane.f32.xlu0 %v577
      %v579 = vpop.xlane.xlu0 %578
      %v580 = vsel %vm509, %v558, 0.0
      %581 = vadd.xlane.f32.xlu0 %v580
      %v582 = vpop.xlane.xlu0 %581
      %v583 = vmul.f32 %v561, %v534
      %v584 = vmul.f32 %v564, %v534
      %v585 = vmul.f32 %v567, %v534
      %v586 = vmul.f32 %v570, %v534
      %v587 = vmul.f32 %v573, %v534
      %v588 = vmul.f32 %v576, %v534
      %v589 = vmul.f32 %v579, %v534
      %v590 = vmul.f32 %v582, %v534
      %v591 = vadd.f32 %v583, 1e-05
      %v592 = vadd.f32 %v584, 1e-05
      %v593 = vadd.f32 %v585, 1e-05
      %v594 = vadd.f32 %v586, 1e-05
      %v595 = vadd.f32 %v587, 1e-05
      %v596 = vadd.f32 %v588, 1e-05
      %v597 = vadd.f32 %v589, 1e-05
      %v598 = vadd.f32 %v590, 1e-05
      %v599 = vrsqrt.pop %v591
      %v600 = vrsqrt.pop %v592
      %v601 = vrsqrt.pop %v593
      %v602 = vrsqrt.pop %v594
      %v603 = vrsqrt.pop %v595
      %v604 = vrsqrt.pop %v596
      %v605 = vrsqrt.pop %v597
      %v606 = vrsqrt.pop %v598
      %v607 = vmul.f32 %v543, %v599
      %v608 = vmul.f32 %v544, %v600
      %v609 = vmul.f32 %v545, %v601
      %v610 = vmul.f32 %v546, %v602
      %v611 = vmul.f32 %v547, %v603
      %v612 = vmul.f32 %v548, %v604
      %v613 = vmul.f32 %v549, %v605
      %v614 = vmul.f32 %v550, %v606
      %v615 = vld [vmem:[%s6] sm:$0x1]
      %v617 = vlaneseq
      %v618 = vshrl.u32 %v617, 7
      %v619 = vsub.s32 0, %v618
      %v620 = vrot.slane %v615, %v619
      %v622 = vmul.f32 %v607, %v620
      %v623 = vmul.f32 %v608, %v620
      %v624 = vmul.f32 %v609, %v620
      %v625 = vmul.f32 %v610, %v620
      %v626 = vmul.f32 %v611, %v620
      %v627 = vmul.f32 %v612, %v620
      %v628 = vmul.f32 %v613, %v620
      %v629 = vmul.f32 %v614, %v620
      %v630 = vld [vmem:[%s7] sm:$0x1]
      %v632 = vlaneseq
      %v633 = vshrl.u32 %v632, 7
      %v634 = vsub.s32 0, %v633
      %v635 = vrot.slane %v630, %v634
      %v637 = vadd.f32 %v622, %v635
      %v638 = vadd.f32 %v623, %v635
      %v639 = vadd.f32 %v624, %v635
      %v640 = vadd.f32 %v625, %v635
      %v641 = vadd.f32 %v626, %v635
      %v642 = vadd.f32 %v627, %v635
      %v643 = vadd.f32 %v628, %v635
      %v644 = vadd.f32 %v629, %v635
      %645 = vst.msk [vmem:[%s339] sm:$0xff] %vm509, %v637
      %646 = vst.msk [vmem:[%s339 + $0x8] sm:$0xff] %vm509, %v638
      %647 = vst.msk [vmem:[%s339 + $0x10] sm:$0xff] %vm509, %v639
      %648 = vst.msk [vmem:[%s339 + $0x18] sm:$0xff] %vm509, %v640
      %649 = vst.msk [vmem:[%s339 + $0x20] sm:$0xff] %vm509, %v641
      %650 = vst.msk [vmem:[%s339 + $0x28] sm:$0xff] %vm509, %v642
      %651 = vst.msk [vmem:[%s339 + $0x30] sm:$0xff] %vm509, %v643
      %652 = vst.msk [vmem:[%s339 + $0x38] sm:$0xff] %vm509, %v644
      %p653 = scmp.lt.s32.totalorder %s19, 1
      %s654 = scalar_select %p653, %s19, 1
      %s655 = smul.addr %s654, 8
      %s656 = smul.addr %s655, 8
      %s657 = scalar_lea.vmem %s8, %s656
      // Predicated region
      $region53: #{ed_forward.28} parent=51 // pred_check
        %p658 = pneg %p220
      $region54: #{ed_forward.28} parent=51 // pred_check_branch
        %660 = sbr.rel (%p658) target = $region56
      $region55: #{ed_forward.28} parent=51 // pred_region
        _
      $region56: #{ed_forward.28} parent=51 // pred_fallthru
        _
    $region52: #{ed_forward.28} parent=5 // pred_fallthru
      _
    %p661 = scmp.le.s32.totalorder 2, %s14
    // Predicated region
    $region57: #{ed_forward.28} parent=5 // pred_check
      %p662 = pneg %p661
    $region58: #{ed_forward.28} parent=5 // pred_check_branch
      %664 = sbr.rel (%p662) target = $region60
    $region59: #{ed_forward.28} parent=5 // pred_region
      %s665 = ssub.s32 %s14, 2
      // Predicated region
      $region61: #{ed_forward.28} parent=59 // pred_check
        %p666 = pneg %p226
      $region62: #{ed_forward.28} parent=59 // pred_check_branch
        %668 = sbr.rel (%p666) target = $region64
      $region63: #{ed_forward.28} parent=59 // pred_region
        %p669 = scmp.lt.s32.totalorder %s20, 1
        %s670 = scalar_select %p669, %s20, 1
        %s671 = smul.addr %s670, 8
        %s672 = smul.addr %s671, 8
        %s673 = scalar_lea.vmem %s8, %s672
      $region64: #{ed_forward.28} parent=59 // pred_fallthru
        _
    $region60: #{ed_forward.28} parent=5 // pred_fallthru
      _
  $region6: #{ed_forward.28} parent=0 // loop_footer
    %s18 = sadd.s32 1, %s14
  $region7: #{ed_forward.28} parent=0 // loop_footer_branch
    %13 = sbr.rel target = $region3
  $region8: #{ed_forward.28} parent=0 // loop_exit
    _

// kernel: ed_forward.37
$region0: #{ed_forward.37}
  #allocation0 [shape = 'u32[]', space=smem, size = 0x4, offset = 0x4, fixed_abs, tag = 'smem constant byte address 0x4 - core index']
  #allocation1 [shape = 'u32[144,128]{1,0:T(1,128)}', space=vmem, size = 0x12000, scoped, tag = 'internal scratch']
  %s0 = inlined_call_operand.vmem [shape: f32[128,32], index: 0, kind: input, shape index: {}]
  %s1 = inlined_call_operand.vmem [shape: f32[1,32], index: 1, kind: input, shape index: {}]
  %s2 = inlined_call_operand.vmem [shape: f32[1,32], index: 2, kind: input, shape index: {}]
  %s3 = inlined_call_operand.vmem [shape: f32[32,4], index: 3, kind: input, shape index: {}]
  %s4 = inlined_call_operand.vmem [shape: f32[1,4], index: 4, kind: input, shape index: {}]
  %s5 = inlined_call_operand.vmem [shape: f32[128,4], index: 5, kind: output, shape index: {}]
  %s6 = sld [smem:[#allocation0]]
  $region53: #{ed_forward.37} parent=0
    _
  %s8 = ssub.s32 1, %s6
  %s9 = scalar_select 0, %s8, %s6
  loop: start=0, step=1, limit=4
  $region2: #{ed_forward.37} parent=0 // loop_pre_header
    _
  $region3: #{ed_forward.37} parent=0 // loop_header
    %s11 = sphi 0, %s15
    %p12 = scmp.ge.s32.totalorder %s11, 4
    %s21 = sphi 0, %s23
    %s24 = sphi 0, %s21
    %s25 = sphi 0, %s24
    %s41 = sphi 0, %s25
    %s45 = sphi 0, %s45
    %s47 = sphi 0, %s45
    %s48 = sphi 0, %s47
    %s62 = sphi 0, %s48
    %s66 = sphi 0, %s66
    %s68 = sphi 0, %s66
    %s69 = sphi 0, %s68
    %s83 = sphi 0, %s69
    %s87 = sphi 0, %s87
    %s89 = sphi 0, %s87
    %s90 = sphi 0, %s89
    %s104 = sphi 0, %s90
    %s108 = sphi 0, %s108
    %s110 = sphi 0, %s108
    %s111 = sphi 0, %s110
    %s125 = sphi 0, %s111
    %s131 = sphi 0, %s133
    %s134 = sphi 0, %s131
    %s135 = sphi 0, %s134
    %s151 = sphi 0, %s135
  $region4: #{ed_forward.37} parent=0 // loop_header_branch
    %14 = sbr.rel (%p12) target = $region8
  $region5: #{ed_forward.37} parent=0 // loop_body
    %s16 = ssub.s32 %s11, 1
    %s17 = ssub.s32 %s11, 2
    %s18 = sadd.s32 %s11, 1
    %s19 = ssub.s32 %s11, %s18
    %p20 = scmp.eq.s32.totalorder %s19, 0
    %s22 = sadd.s32 %s21, 1
    %s23 = scalar_select %p20, %s21, %s22
    %p26 = pneg %p20
    %p27 = scmp.eq.s32.totalorder %s11, 1
    %p28 = por %p26, %p27
    %p29 = scmp.ne.s32.totalorder %s21, %s24
    %p30 = scmp.eq.s32.totalorder %s11, 0
    %p31 = por %p29, %p30
    %p32 = scmp.ne.s32.totalorder %s21, %s24
    %p33 = scmp.eq.s32.totalorder %s16, 1
    %p34 = por %p32, %p33
    %p35 = scmp.ne.s32.totalorder %s24, %s25
    %p36 = scmp.eq.s32.totalorder %s16, 0
    %p37 = por %p35, %p36
    %p38 = scmp.ne.s32.totalorder %s24, %s25
    %p39 = scmp.eq.s32.totalorder %s17, 1
    %p40 = por %p38, %p39
    %p42 = scmp.ne.s32.totalorder %s25, %s41
    %p43 = scmp.eq.s32.totalorder %s17, 0
    %p44 = por %p42, %p43
    %s46 = sadd.s32 %s45, 1
    %p49 = scmp.eq.s32.totalorder %s11, 1
    %p50 = scmp.ne.s32.totalorder %s45, %s47
    %p51 = scmp.eq.s32.totalorder %s11, 0
    %p52 = por %p50, %p51
    %p53 = scmp.ne.s32.totalorder %s45, %s47
    %p54 = scmp.eq.s32.totalorder %s16, 1
    %p55 = por %p53, %p54
    %p56 = scmp.ne.s32.totalorder %s47, %s48
    %p57 = scmp.eq.s32.totalorder %s16, 0
    %p58 = por %p56, %p57
    %p59 = scmp.ne.s32.totalorder %s47, %s48
    %p60 = scmp.eq.s32.totalorder %s17, 1
    %p61 = por %p59, %p60
    %p63 = scmp.ne.s32.totalorder %s48, %s62
    %p64 = scmp.eq.s32.totalorder %s17, 0
    %p65 = por %p63, %p64
    %s67 = sadd.s32 %s66, 1
    %p70 = scmp.eq.s32.totalorder %s11, 1
    %p71 = scmp.ne.s32.totalorder %s66, %s68
    %p72 = scmp.eq.s32.totalorder %s11, 0
    %p73 = por %p71, %p72
    %p74 = scmp.ne.s32.totalorder %s66, %s68
    %p75 = scmp.eq.s32.totalorder %s16, 1
    %p76 = por %p74, %p75
    %p77 = scmp.ne.s32.totalorder %s68, %s69
    %p78 = scmp.eq.s32.totalorder %s16, 0
    %p79 = por %p77, %p78
    %p80 = scmp.ne.s32.totalorder %s68, %s69
    %p81 = scmp.eq.s32.totalorder %s17, 1
    %p82 = por %p80, %p81
    %p84 = scmp.ne.s32.totalorder %s69, %s83
    %p85 = scmp.eq.s32.totalorder %s17, 0
    %p86 = por %p84, %p85
    %s88 = sadd.s32 %s87, 1
    %p91 = scmp.eq.s32.totalorder %s11, 1
    %p92 = scmp.ne.s32.totalorder %s87, %s89
    %p93 = scmp.eq.s32.totalorder %s11, 0
    %p94 = por %p92, %p93
    %p95 = scmp.ne.s32.totalorder %s87, %s89
    %p96 = scmp.eq.s32.totalorder %s16, 1
    %p97 = por %p95, %p96
    %p98 = scmp.ne.s32.totalorder %s89, %s90
    %p99 = scmp.eq.s32.totalorder %s16, 0
    %p100 = por %p98, %p99
    %p101 = scmp.ne.s32.totalorder %s89, %s90
    %p102 = scmp.eq.s32.totalorder %s17, 1
    %p103 = por %p101, %p102
    %p105 = scmp.ne.s32.totalorder %s90, %s104
    %p106 = scmp.eq.s32.totalorder %s17, 0
    %p107 = por %p105, %p106
    %s109 = sadd.s32 %s108, 1
    %p112 = scmp.eq.s32.totalorder %s11, 1
    %p113 = scmp.ne.s32.totalorder %s108, %s110
    %p114 = scmp.eq.s32.totalorder %s11, 0
    %p115 = por %p113, %p114
    %p116 = scmp.ne.s32.totalorder %s108, %s110
    %p117 = scmp.eq.s32.totalorder %s16, 1
    %p118 = por %p116, %p117
    %p119 = scmp.ne.s32.totalorder %s110, %s111
    %p120 = scmp.eq.s32.totalorder %s16, 0
    %p121 = por %p119, %p120
    %p122 = scmp.ne.s32.totalorder %s110, %s111
    %p123 = scmp.eq.s32.totalorder %s17, 1
    %p124 = por %p122, %p123
    %p126 = scmp.ne.s32.totalorder %s111, %s125
    %p127 = scmp.eq.s32.totalorder %s17, 0
    %p128 = por %p126, %p127
    %s129 = ssub.s32 %s11, %s18
    %p130 = scmp.eq.s32.totalorder %s129, 0
    %s132 = sadd.s32 %s131, 1
    %s133 = scalar_select %p130, %s131, %s132
    %p136 = pneg %p130
    %p137 = scmp.eq.s32.totalorder %s11, 1
    %p138 = por %p136, %p137
    %p139 = scmp.ne.s32.totalorder %s131, %s134
    %p140 = scmp.eq.s32.totalorder %s11, 0
    %p141 = por %p139, %p140
    %p142 = scmp.ne.s32.totalorder %s131, %s134
    %p143 = scmp.eq.s32.totalorder %s16, 1
    %p144 = por %p142, %p143
    %p145 = scmp.ne.s32.totalorder %s134, %s135
    %p146 = scmp.eq.s32.totalorder %s16, 0
    %p147 = por %p145, %p146
    %p148 = scmp.ne.s32.totalorder %s134, %s135
    %p149 = scmp.eq.s32.totalorder %s17, 1
    %p150 = por %p148, %p149
    %p152 = scmp.ne.s32.totalorder %s135, %s151
    %p153 = scmp.eq.s32.totalorder %s17, 0
    %p154 = por %p152, %p153
    %p155 = scmp.le.s32.totalorder 1, %s11
    %p156 = scmp.lt.s32.totalorder %s11, 3
    %p157 = pnand %p155, %p156
    %p158 = pneg %p157
    // Predicated region
    $region9: #{ed_forward.37} parent=5 // pred_check
      _
    $region10: #{ed_forward.37} parent=5 // pred_check_branch
      %160 = sbr.rel (%p157) target = $region12
    $region11: #{ed_forward.37} parent=5 // pred_region
      %s161 = ssub.s32 %s11, 1
      // Predicated region
      $region13: #{ed_forward.37} parent=11 // pred_check
        %p162 = pneg %p58
      $region14: #{ed_forward.37} parent=11 // pred_check_branch
        %164 = sbr.rel (%p162) target = $region16
      $region15: #{ed_forward.37} parent=11 // pred_region
        _
      $region16: #{ed_forward.37} parent=11 // pred_fallthru
        _
      // Predicated region
      $region17: #{ed_forward.37} parent=11 // pred_check
        %p165 = pneg %p79
      $region18: #{ed_forward.37} parent=11 // pred_check_branch
        %167 = sbr.rel (%p165) target = $region20
      $region19: #{ed_forward.37} parent=11 // pred_region
        _
      $region20: #{ed_forward.37} parent=11 // pred_fallthru
        _
      // Predicated region
      $region21: #{ed_forward.37} parent=11 // pred_check
        %p168 = pneg %p100
      $region22: #{ed_forward.37} parent=11 // pred_check_branch
        %170 = sbr.rel (%p168) target = $region24
      $region23: #{ed_forward.37} parent=11 // pred_region
        _
      $region24: #{ed_forward.37} parent=11 // pred_fallthru
        _
      // Predicated region
      $region25: #{ed_forward.37} parent=11 // pred_check
        %p171 = pneg %p121
      $region26: #{ed_forward.37} parent=11 // pred_check_branch
        %173 = sbr.rel (%p171) target = $region28
      $region27: #{ed_forward.37} parent=11 // pred_region
        _
      $region28: #{ed_forward.37} parent=11 // pred_fallthru
        _
    $region12: #{ed_forward.37} parent=5 // pred_fallthru
      _
    %p174 = scmp.lt.s32.totalorder %s11, 2
    // Predicated region
    $region29: #{ed_forward.37} parent=5 // pred_check
      %p175 = pneg %p174
    $region30: #{ed_forward.37} parent=5 // pred_check_branch
      %177 = sbr.rel (%p175) target = $region32
    $region31: #{ed_forward.37} parent=5 // pred_region
      // Predicated region
      $region33: #{ed_forward.37} parent=31 // pred_check
        %p178 = pneg %p31
      $region34: #{ed_forward.37} parent=31 // pred_check_branch
        %180 = sbr.rel (%p178) target = $region36
      $region35: #{ed_forward.37} parent=31 // pred_region
        %s181 = smul.u32 8, %s11
        %p182 = scmp.lt.s32.totalorder %s181, 15
        %s183 = scalar_select %p182, %s181, 15
        %s184 = smul.addr %s183, 8
        %s185 = scalar_lea.vmem %s0, %s184
        %s186 = smul.u32 8, %s11
      $region36: #{ed_forward.37} parent=31 // pred_fallthru
        _
    $region32: #{ed_forward.37} parent=5 // pred_fallthru
      _
    %p187 = scmp.le.s32.totalorder 1, %s11
    %p188 = scmp.lt.s32.totalorder %s11, 3
    %p189 = pnand %p187, %p188
    %p190 = pneg %p189
    // Predicated region
    $region37: #{ed_forward.37} parent=5 // pred_check
      _
    $region38: #{ed_forward.37} parent=5 // pred_check_branch
      %192 = sbr.rel (%p189) target = $region40
    $region39: #{ed_forward.37} parent=5 // pred_region
      %s193 = ssub.s32 %s11, 1
      %s194 = smul.u32 8, %s16
      %p195 = scmp.lt.s32.totalorder %s194, 15
      %s196 = scalar_select %p195, %s194, 15
      %s197 = smul.addr %s196, 8
      %s198 = scalar_lea.vmem %s0, %s197
      %p199 = pneg %p37
      %p200 = pneg %p34
      %p201 = pneg %p58
      %p202 = pneg %p55
      %p203 = pneg %p79
      %p204 = pneg %p76
      %p205 = pneg %p100
      %p206 = pneg %p97
      %p207 = pneg %p121
      %p208 = pneg %p118
      %p209 = pneg %p147
      %p210 = pneg %p144
      %s211 = smul.u32 8, %s16
      %p212 = scmp.lt.s32.totalorder %s211, 15
      %s213 = scalar_select %p212, %s211, 15
      %s214 = smul.addr %s213, 8
      %s215 = scalar_lea.vmem %s5, %s214
      %s216 = smul.u32 8, %s16
      %p217 = scmp.lt.s32.totalorder %s216, 15
      %s218 = scalar_select %p217, %s216, 15
      %s219 = smul.addr %s218, 8
      %s220 = scalar_lea.vmem %s0, %s219
      %s221 = smul.u32 8, %s16
      %s222 = smul.u32 8, %s16
      %p223 = scmp.lt.s32.totalorder %s222, 15
      %s224 = scalar_select %p223, %s222, 15
      %s225 = smul.addr %s224, 8
      %s226 = scalar_lea.vmem %s5, %s225
      %s227 = smul.u32 8, %s16
      %v228 = vld [vmem:[%s220] sm:$0xff]
      %v229 = vld [vmem:[%s220 + $0x8] sm:$0xff]
      %v230 = vld [vmem:[%s220 + $0x10] sm:$0xff]
      %v231 = vld [vmem:[%s220 + $0x18] sm:$0xff]
      %v232 = vld [vmem:[%s220 + $0x20] sm:$0xff]
      %v233 = vld [vmem:[%s220 + $0x28] sm:$0xff]
      %v234 = vld [vmem:[%s220 + $0x30] sm:$0xff]
      %v235 = vld [vmem:[%s220 + $0x38] sm:$0xff]
      %vm236 = vcmask 261120
      %v237 = vsel %vm236, %v228, 0.0
      %238 = vadd.xlane.f32.xlu0 %v237
      %v239 = vpop.xlane.xlu0 %238
      %v240 = vsel %vm236, %v229, 0.0
      %241 = vadd.xlane.f32.xlu0 %v240
      %v242 = vpop.xlane.xlu0 %241
      %v243 = vsel %vm236, %v230, 0.0
      %244 = vadd.xlane.f32.xlu0 %v243
      %v245 = vpop.xlane.xlu0 %244
      %v246 = vsel %vm236, %v231, 0.0
      %247 = vadd.xlane.f32.xlu0 %v246
      %v248 = vpop.xlane.xlu0 %247
      %v249 = vsel %vm236, %v232, 0.0
      %250 = vadd.xlane.f32.xlu0 %v249
      %v251 = vpop.xlane.xlu0 %250
      %v252 = vsel %vm236, %v233, 0.0
      %253 = vadd.xlane.f32.xlu0 %v252
      %v254 = vpop.xlane.xlu0 %253
      %v255 = vsel %vm236, %v234, 0.0
      %256 = vadd.xlane.f32.xlu0 %v255
      %v257 = vpop.xlane.xlu0 %256
      %v258 = vsel %vm236, %v235, 0.0
      %259 = vadd.xlane.f32.xlu0 %v258
      %v260 = vpop.xlane.xlu0 %259
      %v261 = vrcp.pop 32.0
      %v262 = vmul.f32 %v239, %v261
      %v263 = vmul.f32 %v242, %v261
      %v264 = vmul.f32 %v245, %v261
      %v265 = vmul.f32 %v248, %v261
      %v266 = vmul.f32 %v251, %v261
      %v267 = vmul.f32 %v254, %v261
      %v268 = vmul.f32 %v257, %v261
      %v269 = vmul.f32 %v260, %v261
      %v270 = vsub.f32 %v228, %v262
      %v271 = vsub.f32 %v229, %v263
      %v272 = vsub.f32 %v230, %v264
      %v273 = vsub.f32 %v231, %v265
      %v274 = vsub.f32 %v232, %v266
      %v275 = vsub.f32 %v233, %v267
      %v276 = vsub.f32 %v234, %v268
      %v277 = vsub.f32 %v235, %v269
      %v278 = vmul.f32 %v270, %v270
      %v279 = vmul.f32 %v271, %v271
      %v280 = vmul.f32 %v272, %v272
      %v281 = vmul.f32 %v273, %v273
      %v282 = vmul.f32 %v274, %v274
      %v283 = vmul.f32 %v275, %v275
      %v284 = vmul.f32 %v276, %v276
      %v285 = vmul.f32 %v277, %v277
      %v286 = vsel %vm236, %v278, 0.0
      %287 = vadd.xlane.f32.xlu0 %v286
      %v288 = vpop.xlane.xlu0 %287
      %v289 = vsel %vm236, %v279, 0.0
      %290 = vadd.xlane.f32.xlu0 %v289
      %v291 = vpop.xlane.xlu0 %290
      %v292 = vsel %vm236, %v280, 0.0
      %293 = vadd.xlane.f32.xlu0 %v292
      %v294 = vpop.xlane.xlu0 %293
      %v295 = vsel %vm236, %v281, 0.0
      %296 = vadd.xlane.f32.xlu0 %v295
      %v297 = vpop.xlane.xlu0 %296
      %v298 = vsel %vm236, %v282, 0.0
      %299 = vadd.xlane.f32.xlu0 %v298
      %v300 = vpop.xlane.xlu0 %299
      %v301 = vsel %vm236, %v283, 0.0
      %302 = vadd.xlane.f32.xlu0 %v301
      %v303 = vpop.xlane.xlu0 %302
      %v304 = vsel %vm236, %v284, 0.0
      %305 = vadd.xlane.f32.xlu0 %v304
      %v306 = vpop.xlane.xlu0 %305
      %v307 = vsel %vm236, %v285, 0.0
      %308 = vadd.xlane.f32.xlu0 %v307
      %v309 = vpop.xlane.xlu0 %308
      %v310 = vmul.f32 %v288, %v261
      %v311 = vmul.f32 %v291, %v261
      %v312 = vmul.f32 %v294, %v261
      %v313 = vmul.f32 %v297, %v261
      %v314 = vmul.f32 %v300, %v261
      %v315 = vmul.f32 %v303, %v261
      %v316 = vmul.f32 %v306, %v261
      %v317 = vmul.f32 %v309, %v261
      %v318 = vadd.f32 %v310, 1e-05
      %v319 = vadd.f32 %v311, 1e-05
      %v320 = vadd.f32 %v312, 1e-05
      %v321 = vadd.f32 %v313, 1e-05
      %v322 = vadd.f32 %v314, 1e-05
      %v323 = vadd.f32 %v315, 1e-05
      %v324 = vadd.f32 %v316, 1e-05
      %v325 = vadd.f32 %v317, 1e-05
      %v326 = vrsqrt.pop %v318
      %v327 = vrsqrt.pop %v319
      %v328 = vrsqrt.pop %v320
      %v329 = vrsqrt.pop %v321
      %v330 = vrsqrt.pop %v322
      %v331 = vrsqrt.pop %v323
      %v332 = vrsqrt.pop %v324
      %v333 = vrsqrt.pop %v325
      %v334 = vmul.f32 %v270, %v326
      %v335 = vmul.f32 %v271, %v327
      %v336 = vmul.f32 %v272, %v328
      %v337 = vmul.f32 %v273, %v329
      %v338 = vmul.f32 %v274, %v330
      %v339 = vmul.f32 %v275, %v331
      %v340 = vmul.f32 %v276, %v332
      %v341 = vmul.f32 %v277, %v333
      %v342 = vld [vmem:[%s1] sm:$0x1]
      %v344 = vlaneseq
      %v345 = vshrl.u32 %v344, 7
      %v346 = vsub.s32 0, %v345
      %v347 = vrot.slane %v342, %v346
      %v349 = vmul.f32 %v334, %v347
      %v350 = vmul.f32 %v335, %v347
      %v351 = vmul.f32 %v336, %v347
      %v352 = vmul.f32 %v337, %v347
      %v353 = vmul.f32 %v338, %v347
      %v354 = vmul.f32 %v339, %v347
      %v355 = vmul.f32 %v340, %v347
      %v356 = vmul.f32 %v341, %v347
      %v357 = vld [vmem:[%s2] sm:$0x1]
      %v359 = vlaneseq
      %v360 = vshrl.u32 %v359, 7
      %v361 = vsub.s32 0, %v360
      %v362 = vrot.slane %v357, %v361
      %v364 = vadd.f32 %v349, %v362
      %v365 = vadd.f32 %v350, %v362
      %v366 = vadd.f32 %v351, %v362
      %v367 = vadd.f32 %v352, %v362
      %v368 = vadd.f32 %v353, %v362
      %v369 = vadd.f32 %v354, %v362
      %v370 = vadd.f32 %v355, %v362
      %v371 = vadd.f32 %v356, %v362
      %v372 = vld [vmem:[%s3] sm:$0xff]
      %v373 = vld [vmem:[%s3 + $0x8] sm:$0xff]
      %v374 = vld [vmem:[%s3 + $0x10] sm:$0xff]
      %v375 = vld [vmem:[%s3 + $0x18] sm:$0xff]
      %v376 = vld [vmem:[%s4] sm:$0x1]
      %v378 = vlaneseq
      %v379 = vshrl.u32 %v378, 7
      %v380 = vsub.s32 0, %v379
      %v381 = vrot.slane %v376, %v380
      %v384 = vsel %vm236, %v364, 0
      %v387 = vsel %vm236, %v365, 0
      %v390 = vsel %vm236, %v366, 0
      %v393 = vsel %vm236, %v367, 0
      %v396 = vsel %vm236, %v368, 0
      %v399 = vsel %vm236, %v369, 0
      %v402 = vsel %vm236, %v370, 0
      %v405 = vsel %vm236, %v371, 0
      %407 = vmatprep.subr.mxu0 0.0
      %408 = vmatpush1.msra.mxu0 0.0
      %409 = vmatprep.subr.mxu0 0.0
      %410 = vmatpush1.msra.mxu0 0.0
      %411 = vmatprep.subr.mxu0 0.0
      %412 = vmatpush1.msra.mxu0 0.0
      %413 = vmatprep.subr.mxu0 0.0
      %414 = vmatpush1.msra.mxu0 0.0
      %415 = vmatprep.subr.mxu0 0.0
      %416 = vmatpush1.msra.mxu0 0.0
      %417 = vmatprep.subr.mxu0 0.0
      %418 = vmatpush1.msra.mxu0 0.0
      %419 = vmatprep.subr.mxu0 0.0
      %420 = vmatpush1.msra.mxu0 0.0
      %421 = vmatprep.subr.mxu0 0.0
      %422 = vmatpush1.msra.mxu0 0.0
      %423 = vmatprep.subr.mxu0 0.0
      %424 = vmatpush1.msra.mxu0 0.0
      %425 = vmatprep.subr.mxu0 0.0
      %426 = vmatpush1.msra.mxu0 0.0
      %427 = vmatprep.subr.mxu0 0.0
      %428 = vmatpush1.msra.mxu0 0.0
      %429 = vmatprep.subr.mxu0 0.0
      %430 = vmatpush1.msra.mxu0 0.0
      %431 = vmatprep.subr.mxu0 0.0
      %432 = vmatpush1.msra.mxu0 %v375
      %433 = vmatprep.subr.mxu0 0.0
      %434 = vmatpush1.msra.mxu0 %v374
      %435 = vmatprep.subr.mxu0 0.0
      %436 = vmatpush1.msra.mxu0 %v373
      %437 = vmatprep.subr.mxu0 0.0
      %438 = vmatpush1.msra.mxu0 %v372
      %439 = vmatprep.subr.mxu0 0.0
      %440 = vmatpush2.msra.mxu0 0.0
      %441 = vmatprep.subr.mxu0 0.0
      %442 = vmatpush2.msra.mxu0 0.0
      %443 = vmatprep.subr.mxu0 0.0
      %444 = vmatpush2.msra.mxu0 0.0
      %445 = vmatprep.subr.mxu0 0.0
      %446 = vmatpush2.msra.mxu0 0.0
      %447 = vmatprep.subr.mxu0 0.0
      %448 = vmatpush2.msra.mxu0 0.0
      %449 = vmatprep.subr.mxu0 0.0
      %450 = vmatpush2.msra.mxu0 0.0
      %451 = vmatprep.subr.mxu0 0.0
      %452 = vmatpush2.msra.mxu0 0.0
      %453 = vmatprep.subr.mxu0 0.0
      %454 = vmatpush2.msra.mxu0 0.0
      %455 = vmatprep.subr.mxu0 0.0
      %456 = vmatpush2.msra.mxu0 0.0
      %457 = vmatprep.subr.mxu0 0.0
      %458 = vmatpush2.msra.mxu0 0.0
      %459 = vmatprep.subr.mxu0 0.0
      %460 = vmatpush2.msra.mxu0 0.0
      %461 = vmatprep.subr.mxu0 0.0
      %462 = vmatpush2.msra.mxu0 0.0
      %463 = vmatprep.subr.mxu0 0.0
      %464 = vmatpush2.msra.mxu0 0.0
      %465 = vmatprep.subr.mxu0 0.0
      %466 = vmatpush2.msra.mxu0 0.0
      %467 = vmatprep.subr.mxu0 0.0
      %468 = vmatpush2.msra.mxu0 0.0
      %469 = vmatprep.subr.mxu0 0.0
      %470 = vmatpush2.msra.mxu0 0.0
      %471 = vmatprep.mubr.f32.mxu0 0.0
      %472 = vmatmul.mubr.f32.gmra.mxu0 %v384
      %v473 = vpop.f32.mrf.mxu0
      %v474 = vadd.f32 %v381, %v473
      %v475 = vpop.f32.mrf.mxu0
      %476 = vmatprep.mubr.f32.mxu0 0.0
      %477 = vmatmul.mubr.f32.gmra.mxu0 %v387
      %v478 = vpop.f32.mrf.mxu0
      %v479 = vadd.f32 %v381, %v478
      %v480 = vpop.f32.mrf.mxu0
      %481 = vmatprep.mubr.f32.mxu0 0.0
      %482 = vmatmul.mubr.f32.gmra.mxu0 %v390
      %v483 = vpop.f32.mrf.mxu0
      %v484 = vadd.f32 %v381, %v483
      %v485 = vpop.f32.mrf.mxu0
      %486 = vmatprep.mubr.f32.mxu0 0.0
      %487 = vmatmul.mubr.f32.gmra.mxu0 %v393
      %v488 = vpop.f32.mrf.mxu0
      %v489 = vadd.f32 %v381, %v488
      %v490 = vpop.f32.mrf.mxu0
      %491 = vmatprep.mubr.f32.mxu0 0.0
      %492 = vmatmul.mubr.f32.gmra.mxu0 %v396
      %v493 = vpop.f32.mrf.mxu0
      %v494 = vadd.f32 %v381, %v493
      %v495 = vpop.f32.mrf.mxu0
      %496 = vmatprep.mubr.f32.mxu0 0.0
      %497 = vmatmul.mubr.f32.gmra.mxu0 %v399
      %v498 = vpop.f32.mrf.mxu0
      %v499 = vadd.f32 %v381, %v498
      %v500 = vpop.f32.mrf.mxu0
      %501 = vmatprep.mubr.f32.mxu0 0.0
      %502 = vmatmul.mubr.f32.gmra.mxu0 %v402
      %v503 = vpop.f32.mrf.mxu0
      %v504 = vadd.f32 %v381, %v503
      %v505 = vpop.f32.mrf.mxu0
      %506 = vmatprep.mubr.f32.mxu0 0.0
      %507 = vmatmul.mubr.f32.gmra.mxu0 %v405
      %v508 = vpop.f32.mrf.mxu0
      %v509 = vadd.f32 %v381, %v508
      %v510 = vpop.f32.mrf.mxu0
      %511 = vdwg.mxu0
      %vm512 = vcmask 31744
      %513 = vst.msk [vmem:[%s226] sm:$0xff] %vm512, %v474
      %514 = vst.msk [vmem:[%s226 + $0x8] sm:$0xff] %vm512, %v479
      %515 = vst.msk [vmem:[%s226 + $0x10] sm:$0xff] %vm512, %v484
      %516 = vst.msk [vmem:[%s226 + $0x18] sm:$0xff] %vm512, %v489
      %517 = vst.msk [vmem:[%s226 + $0x20] sm:$0xff] %vm512, %v494
      %518 = vst.msk [vmem:[%s226 + $0x28] sm:$0xff] %vm512, %v499
      %519 = vst.msk [vmem:[%s226 + $0x30] sm:$0xff] %vm512, %v504
      %520 = vst.msk [vmem:[%s226 + $0x38] sm:$0xff] %vm512, %v509
      %s521 = smul.u32 8, %s16
      %p522 = scmp.lt.s32.totalorder %s521, 15
      %s523 = scalar_select %p522, %s521, 15
      %s524 = smul.addr %s523, 8
      %s525 = scalar_lea.vmem %s5, %s524
      // Predicated region
      $region41: #{ed_forward.37} parent=39 // pred_check
        %p526 = pneg %p144
      $region42: #{ed_forward.37} parent=39 // pred_check_branch
        %528 = sbr.rel (%p526) target = $region44
      $region43: #{ed_forward.37} parent=39 // pred_region
        %s529 = smul.u32 8, %s16
      $region44: #{ed_forward.37} parent=39 // pred_fallthru
        _
    $region40: #{ed_forward.37} parent=5 // pred_fallthru
      _
    %p530 = scmp.le.s32.totalorder 2, %s11
    // Predicated region
    $region45: #{ed_forward.37} parent=5 // pred_check
      %p531 = pneg %p530
    $region46: #{ed_forward.37} parent=5 // pred_check_branch
      %533 = sbr.rel (%p531) target = $region48
    $region47: #{ed_forward.37} parent=5 // pred_region
      %s534 = ssub.s32 %s11, 2
      // Predicated region
      $region49: #{ed_forward.37} parent=47 // pred_check
        %p535 = pneg %p150
      $region50: #{ed_forward.37} parent=47 // pred_check_branch
        %537 = sbr.rel (%p535) target = $region52
      $region51: #{ed_forward.37} parent=47 // pred_region
        %s538 = smul.u32 8, %s17
        %p539 = scmp.lt.s32.totalorder %s538, 15
        %s540 = scalar_select %p539, %s538, 15
        %s541 = smul.addr %s540, 8
        %s542 = scalar_lea.vmem %s5, %s541
      $region52: #{ed_forward.37} parent=47 // pred_fallthru
        _
    $region48: #{ed_forward.37} parent=5 // pred_fallthru
      _
  $region6: #{ed_forward.37} parent=0 // loop_footer
    %s15 = sadd.s32 1, %s11
  $region7: #{ed_forward.37} parent=0 // loop_footer_branch
    %10 = sbr.rel target = $region3
  $region8: #{ed_forward.37} parent=0 // loop_exit
    _

</llo_original>
